<compile_context>
chip_gen: v7x
topology: tpu7x:2x2x1
jax: 0.10.0
libtpu: 0.0.40
codegen_flags: <defaults>
</compile_context>

<pallas_src>
from collections import Counter

import numpy as np
import jax
import jax.numpy as jnp
from jax.experimental import pallas as pl
from jax.experimental.pallas import tpu as pltpu

SIGMAS = (0.5, 1.0, 2.0, 4.0, 8.0)
FILTER_SIZE = int(4 * SIGMAS[-1] + 1)   # 33
PAD = int(2 * SIGMAS[-1])               # 16
C1 = 0.01 ** 2
C2 = 0.03 ** 2
ALPHA = 0.1
NUM_SIGMAS = len(SIGMAS)
NUM_FILTERS = 3 * NUM_SIGMAS            # 15 output channels (groups=3 conv)

# bf16 matmul operands + f32 accumulation.  Flip to jnp.float32 if bit-level
# agreement with an f32 reference is required (conv(x^2) - mu^2 is
# cancellation-prone, approx reciprocals add ~1e-3 relative error, and the
# bf16 Gaussian rows no longer sum exactly to 1).
MATMUL_DTYPE = jnp.bfloat16

# --- reproduce the reference module's (input-channel, sigma) wiring ---------
# F.conv2d(groups=3): output channel k reads input channel k // 5 and uses the
# filter whose sigma index is k // 3 (faithful to the reference module).
CS_MULT = dict(Counter((k // 5, k // 3) for k in range(NUM_FILTERS)))
# lM multiplies l of output channels -1, -2, -3 -> all map to (ic=2, s=4).
L_MULT = dict(Counter((k // 5, k // 3)
                      for k in (NUM_FILTERS - 1, NUM_FILTERS - 2, NUM_FILTERS - 3)))
CHANNELS_FOR_SIGMA = tuple(
    tuple(sorted({ic for (ic, s) in CS_MULT if s == sg}))
    for sg in range(NUM_SIGMAS))
# Row-stacked moment images per sigma: 5 per channel (+3 |x-y| for last sigma).
STACK_SIZES = tuple(
    5 * len(CHANNELS_FOR_SIGMA[s]) + (3 if s == NUM_SIGMAS - 1 else 0)
    for s in range(NUM_SIGMAS))
MAX_STACK = max(STACK_SIZES)            # == 10

# The kernel computes the luminance / gaussian-L1 terms only on the final
# (sigma, channel) step; assert the reference wiring really puts them there.
assert set(L_MULT) == {(2, NUM_SIGMAS - 1)}
assert CHANNELS_FOR_SIGMA[NUM_SIGMAS - 1] == (2,)


def _gauss_1d(size, sigma):
    coords = np.arange(size, dtype=np.float32) - size // 2
    g = np.exp(-(coords ** 2) / (2.0 * sigma ** 2))
    return (g / g.sum()).astype(np.float32)


def _width_matrices(w):
    """Banded Toeplitz matrices (zero padding baked in) for the width pass:
    conv1d_w(img, g, padding=PAD) == img @ gw[s] for an unpadded (H, W) image."""
    gw = np.zeros((NUM_SIGMAS, w, w), np.float32)    # (sigma, in_col, out_col)
    for s, sigma in enumerate(SIGMAS):
        g = _gauss_1d(FILTER_SIZE, sigma)
        for o in range(w):
            for tap in range(FILTER_SIZE):
                j = o - PAD + tap
                if 0 <= j < w:
                    gw[s, j, o] = g[tap]
    return gw


def _row_tile(h):
    """Row-tile size for the banded height pass.  Prefer T=128 (K = T + 32 =
    160 keeps the MXU fed and gives ~3.2x fewer row-pass FLOPs at H=512);
    fall back to the full height for small H / no suitable divisor."""
    for t in (128, 256, 192, 160, 96, 64):
        if h % t == 0 and t + 2 * PAD <= h:
            return t
    return h


def _band_matrices(h, t_tile):
    """Per-row-tile banded Toeplitz matrices for the height pass.

    Output rows [t*T, (t+1)*T) of the Gaussian height conv are
    gb[s, t] @ col[w0_t : w0_t + KB, :], where KB = min(H, T + 2*PAD) and
    w0_t = clip(t*T - PAD, 0, H - KB).  Zero padding / boundary clipping is
    baked into the band entries, so no padded buffers are needed and the
    T == H case degenerates to the full (H, H) Toeplitz matrix."""
    nt = h // t_tile
    kb = min(h, t_tile + 2 * PAD)
    starts = tuple(min(max(t * t_tile - PAD, 0), h - kb) for t in range(nt))
    gb = np.zeros((NUM_SIGMAS, nt, t_tile, kb), np.float32)
    for s, sigma in enumerate(SIGMAS):
        g = _gauss_1d(FILTER_SIZE, sigma)
        for t in range(nt):
            w0 = starts[t]
            for o in range(t_tile):
                r = t * t_tile + o
                for tap in range(FILTER_SIZE):
                    src = r - PAD + tap
                    if 0 <= src < h:
                        j = src - w0
                        assert 0 <= j < kb
                        gb[s, t, o, j] = g[tap]
    return gb.reshape(NUM_SIGMAS * nt, t_tile, kb), starts, kb, nt


def _make_kernel(h, t_tile, nt, kb, row_starts):
    def kernel(x_ref, y_ref, gw_ref, gb_ref, out_ref, stack_ref, pics_ref):
        for s in range(NUM_SIGMAS):
            chans = CHANNELS_FOR_SIGMA[s]
            is_last = (s == NUM_SIGMAS - 1)

            # ---- stage the row-stacked bf16 moment images for this sigma ----
            idx = 0
            for ic in chans:
                xc = x_ref[0, ic]
                yc = y_ref[0, ic]
                for m in (xc, yc, xc * xc, yc * yc, xc * yc):
                    stack_ref[idx * h:(idx + 1) * h, :] = m.astype(MATMUL_DTYPE)
                    idx += 1
            if is_last:
                for j in range(3):
                    stack_ref[idx * h:(idx + 1) * h, :] = jnp.abs(
                        x_ref[0, j] - y_ref[0, j]).astype(MATMUL_DTYPE)
                    idx += 1
            n = idx

            # ---- width pass: ONE batched MXU matmul, result kept in bf16 ----
            gw_s = gw_ref[s]                                    # (W, W)
            col = jnp.dot(stack_ref[0:n * h, :], gw_s,
                          preferred_element_type=jnp.float32
                          ).astype(MATMUL_DTYPE)                # (n*H, W) bf16

            # ---- banded height pass + SSIM math, one row tile at a time ----
            for t in range(nt):
                r0 = t * t_tile
                w0 = row_starts[t]
                gb_t = gb_ref[s * nt + t]                       # (T, KB) bf16

                def conv_rows(i, gb_t=gb_t, w0=w0):
                    # rows [r0, r0+T) of the Gaussian conv of moment image i
                    return jnp.dot(gb_t, col[i * h + w0:i * h + w0 + kb, :],
                                   preferred_element_type=jnp.float32)

                for ci, ic in enumerate(chans):
                    base = 5 * ci
                    mux = conv_rows(base + 0)
                    muy = conv_rows(base + 1)
                    mux2 = mux * mux
                    muy2 = muy * muy
                    muxy = mux * muy
                    sigmax2 = conv_rows(base + 2) - mux2
                    sigmay2 = conv_rows(base + 3) - muy2
                    sigmaxy = conv_rows(base + 4) - muxy

                    cs = (2.0 * sigmaxy + C2) * pl.reciprocal(
                        sigmax2 + sigmay2 + C2, approx=True)
                    cs_pow = cs
                    for _ in range(CS_MULT[(ic, s)] - 1):
                        cs_pow = cs_pow * cs
                    if s == 0 and ci == 0:
                        pics_tile = cs_pow          # first factor: overwrite
                    else:
                        pics_tile = pics_ref[r0:r0 + t_tile, :] * cs_pow

                    if is_last and ci == len(chans) - 1:
                        # last (sigma, channel): luminance, gaussian L1, output
                        l = (2.0 * muxy + C1) * pl.reciprocal(
                            mux2 + muy2 + C1, approx=True)
                        lm = l
                        for _ in range(L_MULT[(ic, s)] - 1):
                            lm = lm * l
                        base_l1 = 5 * len(chans)
                        gl1 = (conv_rows(base_l1 + 0) + conv_rows(base_l1 + 1) +
                               conv_rows(base_l1 + 2)) * (1.0 / 3.0)
                        loss_ms_ssim = 1.0 - lm * pics_tile
                        out_ref[0, r0:r0 + t_tile, :] = (
                            ALPHA * loss_ms_ssim + (1.0 - ALPHA) * gl1)
                    else:
                        pics_ref[r0:r0 + t_tile, :] = pics_tile
    return kernel


def _physical_vmem_bytes():
    try:
        return int(pltpu.get_tpu_info().vmem_capacity_bytes)
    except Exception:
        return 64 * 1024 * 1024     # conservative: v7x per-core VMEM


def _vmem_limit_bytes(h, w, nt, t_tile, kb):
    f32 = 4
    mm = jnp.dtype(MATMUL_DTYPE).itemsize
    inputs = 2 * 2 * 3 * h * w * f32                  # x, y (<= double buffered)
    outputs = 2 * h * w * f32                         # output block (double buffered)
    gw_b = NUM_SIGMAS * w * w * mm                    # width Toeplitz (single buffer)
    gb_b = NUM_SIGMAS * nt * t_tile * kb * mm         # height band matrices
    stack = MAX_STACK * h * w * mm                    # bf16 moment stack scratch
    pics = h * w * f32                                # running cs-product scratch
    col = MAX_STACK * h * w * (mm + f32)              # bf16 col + transient f32 dot out
    temps = 12 * t_tile * w * f32                     # per-tile f32 SSIM temporaries
    need = int(1.4 * (inputs + outputs + gw_b + gb_b + stack + pics + col + temps))
    cap = _physical_vmem_bytes() - 8 * 1024 * 1024    # leave headroom below physical
    return int(max(32 * 1024 * 1024, min(need, cap)))


def ms_ssim_l1_loss(x, y):
    b, c, h, w = x.shape
    assert c == 3, "MS_SSIM_L1_LOSS expects 3-channel input (groups=3 conv)."

    t_tile = _row_tile(h)
    gb_np, row_starts, kb, nt = _band_matrices(h, t_tile)
    gw_np = _width_matrices(w)
    gw = jnp.asarray(gw_np, dtype=MATMUL_DTYPE)
    gb = jnp.asarray(gb_np, dtype=MATMUL_DTYPE)
    x32 = x.astype(jnp.float32)
    y32 = y.astype(jnp.float32)

    kernel = _make_kernel(h, t_tile, nt, kb, row_starts)
    single_buffer_xy = (h * w >= 256 * 256)   # reclaim VMEM on large images

    def build(use_pipeline_mode):
        def spec(shape, index_map, single):
            if use_pipeline_mode and single:
                return pl.BlockSpec(shape, index_map, pipeline_mode=pl.Buffered(1))
            return pl.BlockSpec(shape, index_map)

        return pl.pallas_call(
            kernel,
            out_shape=jax.ShapeDtypeStruct((b, h, w), jnp.float32),
            grid_spec=pltpu.PrefetchScalarGridSpec(
                num_scalar_prefetch=0,
                grid=(b,),
                in_specs=[
                    spec((1, 3, h, w), lambda i: (i, 0, 0, 0), single_buffer_xy),
                    spec((1, 3, h, w), lambda i: (i, 0, 0, 0), single_buffer_xy),
                    # constant index_map -> blocks are DMA'd once; single buffer
                    spec((NUM_SIGMAS, w, w), lambda i: (0, 0, 0), True),
                    spec((NUM_SIGMAS * nt, t_tile, kb), lambda i: (0, 0, 0), True),
                ],
                out_specs=pl.BlockSpec((1, h, w), lambda i: (i, 0, 0)),
                scratch_shapes=[
                    pltpu.VMEM((MAX_STACK * h, w), MATMUL_DTYPE),   # moment stack
                    pltpu.VMEM((h, w), jnp.float32),                # cs product
                ],
            ),
            compiler_params=pltpu.CompilerParams(
                dimension_semantics=("parallel",),
                vmem_limit_bytes=_vmem_limit_bytes(h, w, nt, t_tile, kb)),
        )

    try:
        loss_map = build(True)(x32, y32, gw, gb)
        jax.block_until_ready(loss_map)
    except Exception:
        # pipeline_mode=pl.Buffered(1) not supported by this jax version ->
        # fall back to default buffering (identical semantics).
        loss_map = build(False)(x32, y32, gw, gb)

    # final scalar reduction (trivial) stays in plain JAX
    return loss_map.mean()


if __name__ == "__main__":
    key = jax.random.PRNGKey(0)
    kx, ky = jax.random.split(key)

    # Small smoke test (single row tile: T == H path, as in the module spec).
    x = jax.random.uniform(kx, (2, 3, 16, 16), dtype=jnp.float32)
    y = jax.random.uniform(ky, (2, 3, 16, 16), dtype=jnp.float32)
    loss = ms_ssim_l1_loss(x, y)
    jax.block_until_ready(loss)
    assert loss.shape == () and bool(jnp.isfinite(loss))

    # Exercise the banded multi-row-tile path (T=64, 2 tiles, 32-row halo).
    x2 = jax.random.uniform(kx, (1, 3, 128, 128), dtype=jnp.float32)
    y2 = jax.random.uniform(ky, (1, 3, 128, 128), dtype=jnp.float32)
    loss2 = ms_ssim_l1_loss(x2, y2)
    jax.block_until_ready(loss2)
    assert loss2.shape == () and bool(jnp.isfinite(loss2))

    print("KERNEL_OK")
</pallas_src>

<mosaic_0001>
module attributes {stable_mosaic.version = 11 : i64} {
  func.func @kernel(%arg0: i32, %arg1: memref<1x3x16x16xf32, #tpu.memory_space<vmem>>, %arg2: memref<1x3x16x16xf32, #tpu.memory_space<vmem>>, %arg3: memref<5x16x16xbf16, #tpu.memory_space<vmem>>, %arg4: memref<5x16x16xbf16, #tpu.memory_space<vmem>>, %arg5: memref<1x16x16xf32, #tpu.memory_space<vmem>>, %arg6: memref<160x16xbf16, #tpu.memory_space<vmem>>, %arg7: memref<16x16xf32, #tpu.memory_space<vmem>>) attributes {dimension_semantics = [#tpu.dimension_semantics<parallel>], iteration_bounds = array<i64: 2>, scalar_prefetch = 0 : i64, scratch_operands = 2 : i64, tpu.core_type = #tpu.core_type<tc>, window_params = [{transform_indices = @transform_0, window_bounds = array<i64: 1, 3, 16, 16>}, {transform_indices = @transform_1, window_bounds = array<i64: 1, 3, 16, 16>}, {pipeline_mode = #tpu.pipeline_mode<synchronous>, transform_indices = @transform_2, window_bounds = array<i64: 5, 16, 16>}, {pipeline_mode = #tpu.pipeline_mode<synchronous>, transform_indices = @transform_3, window_bounds = array<i64: 5, 16, 16>}, {transform_indices = @transform_4, window_bounds = array<i64: 1, 16, 16>}]} {
    %c0 = arith.constant 0 : index
    %c0_0 = arith.constant 0 : index
    %c0_1 = arith.constant 0 : index
    %c0_2 = arith.constant 0 : index
    %0 = vector.load %arg1[%c0, %c0_0, %c0_1, %c0_2] : memref<1x3x16x16xf32, #tpu.memory_space<vmem>>, vector<1x1x16x16xf32>
    %1 = vector.shape_cast %0 : vector<1x1x16x16xf32> to vector<16x16xf32>
    %c0_3 = arith.constant 0 : index
    %c0_4 = arith.constant 0 : index
    %c0_5 = arith.constant 0 : index
    %c0_6 = arith.constant 0 : index
    %2 = vector.load %arg2[%c0_3, %c0_4, %c0_5, %c0_6] : memref<1x3x16x16xf32, #tpu.memory_space<vmem>>, vector<1x1x16x16xf32>
    %3 = vector.shape_cast %2 : vector<1x1x16x16xf32> to vector<16x16xf32>
    %4 = arith.mulf %1, %1 : vector<16x16xf32>
    %5 = arith.mulf %3, %3 : vector<16x16xf32>
    %6 = arith.mulf %1, %3 : vector<16x16xf32>
    %7 = arith.truncf %1 : vector<16x16xf32> to vector<16x16xbf16>
    %c0_7 = arith.constant 0 : index
    %c0_8 = arith.constant 0 : index
    %8 = vector.load %arg6[%c0_7, %c0_8] : memref<160x16xbf16, #tpu.memory_space<vmem>>, vector<16x16xbf16>
    tpu.vector_store %arg6[%c0_7, %c0_8], %7 {strides = array<i32>} : memref<160x16xbf16, #tpu.memory_space<vmem>>, vector<16x16xbf16>,
    %9 = arith.truncf %3 : vector<16x16xf32> to vector<16x16xbf16>
    %c16 = arith.constant 16 : index
    %c0_9 = arith.constant 0 : index
    %10 = vector.load %arg6[%c16, %c0_9] : memref<160x16xbf16, #tpu.memory_space<vmem>>, vector<16x16xbf16>
    tpu.vector_store %arg6[%c16, %c0_9], %9 {strides = array<i32>} : memref<160x16xbf16, #tpu.memory_space<vmem>>, vector<16x16xbf16>,
    %11 = arith.truncf %4 : vector<16x16xf32> to vector<16x16xbf16>
    %c32 = arith.constant 32 : index
    %c0_10 = arith.constant 0 : index
    %12 = vector.load %arg6[%c32, %c0_10] : memref<160x16xbf16, #tpu.memory_space<vmem>>, vector<16x16xbf16>
    tpu.vector_store %arg6[%c32, %c0_10], %11 {strides = array<i32>} : memref<160x16xbf16, #tpu.memory_space<vmem>>, vector<16x16xbf16>,
    %13 = arith.truncf %5 : vector<16x16xf32> to vector<16x16xbf16>
    %c48 = arith.constant 48 : index
    %c0_11 = arith.constant 0 : index
    %14 = vector.load %arg6[%c48, %c0_11] : memref<160x16xbf16, #tpu.memory_space<vmem>>, vector<16x16xbf16>
    tpu.vector_store %arg6[%c48, %c0_11], %13 {strides = array<i32>} : memref<160x16xbf16, #tpu.memory_space<vmem>>, vector<16x16xbf16>,
    %15 = arith.truncf %6 : vector<16x16xf32> to vector<16x16xbf16>
    %c64 = arith.constant 64 : index
    %c0_12 = arith.constant 0 : index
    %16 = vector.load %arg6[%c64, %c0_12] : memref<160x16xbf16, #tpu.memory_space<vmem>>, vector<16x16xbf16>
    tpu.vector_store %arg6[%c64, %c0_12], %15 {strides = array<i32>} : memref<160x16xbf16, #tpu.memory_space<vmem>>, vector<16x16xbf16>,
    %c0_13 = arith.constant 0 : index
    %c0_14 = arith.constant 0 : index
    %c0_15 = arith.constant 0 : index
    %17 = vector.load %arg3[%c0_13, %c0_14, %c0_15] : memref<5x16x16xbf16, #tpu.memory_space<vmem>>, vector<1x16x16xbf16>
    %18 = vector.shape_cast %17 : vector<1x16x16xbf16> to vector<16x16xbf16>
    %c0_16 = arith.constant 0 : index
    %c0_17 = arith.constant 0 : index
    %19 = vector.load %arg6[%c0_16, %c0_17] : memref<160x16xbf16, #tpu.memory_space<vmem>>, vector<80x16xbf16>
    %cst = arith.constant dense<0.000000e+00> : vector<80x16xf32>
    %20 = tpu.matmul %19, %18, %cst {dimension_numbers = #tpu.dot_dimension_numbers<[1], [0], [0], [1], [0, 0, 1, 1], [], []>} : vector<80x16xbf16>, vector<16x16xbf16>, vector<80x16xf32> -> vector<80x16xf32>
    %21 = arith.truncf %20 : vector<80x16xf32> to vector<80x16xbf16>
    %c0_18 = arith.constant 0 : index
    %c0_19 = arith.constant 0 : index
    %c0_20 = arith.constant 0 : index
    %22 = vector.load %arg4[%c0_18, %c0_19, %c0_20] : memref<5x16x16xbf16, #tpu.memory_space<vmem>>, vector<1x16x16xbf16>
    %23 = vector.shape_cast %22 : vector<1x16x16xbf16> to vector<16x16xbf16>
    %24 = vector.extract_strided_slice %21 {offsets = [0, 0], sizes = [16, 16], strides = [1, 1]} : vector<80x16xbf16> to vector<16x16xbf16>
    %cst_21 = arith.constant dense<0.000000e+00> : vector<16x16xf32>
    %25 = tpu.matmul %23, %24, %cst_21 {dimension_numbers = #tpu.dot_dimension_numbers<[1], [0], [0], [1], [0, 0, 1, 1], [], []>} : vector<16x16xbf16>, vector<16x16xbf16>, vector<16x16xf32> -> vector<16x16xf32>
    %26 = vector.extract_strided_slice %21 {offsets = [16, 0], sizes = [16, 16], strides = [1, 1]} : vector<80x16xbf16> to vector<16x16xbf16>
    %cst_22 = arith.constant dense<0.000000e+00> : vector<16x16xf32>
    %27 = tpu.matmul %23, %26, %cst_22 {dimension_numbers = #tpu.dot_dimension_numbers<[1], [0], [0], [1], [0, 0, 1, 1], [], []>} : vector<16x16xbf16>, vector<16x16xbf16>, vector<16x16xf32> -> vector<16x16xf32>
    %28 = arith.mulf %25, %25 : vector<16x16xf32>
    %29 = arith.mulf %27, %27 : vector<16x16xf32>
    %30 = arith.mulf %25, %27 : vector<16x16xf32>
    %31 = vector.extract_strided_slice %21 {offsets = [32, 0], sizes = [16, 16], strides = [1, 1]} : vector<80x16xbf16> to vector<16x16xbf16>
    %cst_23 = arith.constant dense<0.000000e+00> : vector<16x16xf32>
    %32 = tpu.matmul %23, %31, %cst_23 {dimension_numbers = #tpu.dot_dimension_numbers<[1], [0], [0], [1], [0, 0, 1, 1], [], []>} : vector<16x16xbf16>, vector<16x16xbf16>, vector<16x16xf32> -> vector<16x16xf32>
    %33 = arith.subf %32, %28 : vector<16x16xf32>
    %34 = vector.extract_strided_slice %21 {offsets = [48, 0], sizes = [16, 16], strides = [1, 1]} : vector<80x16xbf16> to vector<16x16xbf16>
    %cst_24 = arith.constant dense<0.000000e+00> : vector<16x16xf32>
    %35 = tpu.matmul %23, %34, %cst_24 {dimension_numbers = #tpu.dot_dimension_numbers<[1], [0], [0], [1], [0, 0, 1, 1], [], []>} : vector<16x16xbf16>, vector<16x16xbf16>, vector<16x16xf32> -> vector<16x16xf32>
    %36 = arith.subf %35, %29 : vector<16x16xf32>
    %37 = vector.extract_strided_slice %21 {offsets = [64, 0], sizes = [16, 16], strides = [1, 1]} : vector<80x16xbf16> to vector<16x16xbf16>
    %cst_25 = arith.constant dense<0.000000e+00> : vector<16x16xf32>
    %38 = tpu.matmul %23, %37, %cst_25 {dimension_numbers = #tpu.dot_dimension_numbers<[1], [0], [0], [1], [0, 0, 1, 1], [], []>} : vector<16x16xbf16>, vector<16x16xbf16>, vector<16x16xf32> -> vector<16x16xf32>
    %39 = arith.subf %38, %30 : vector<16x16xf32>
    %cst_26 = arith.constant 2.000000e+00 : f32
    %40 = vector.broadcast %cst_26 : f32 to vector<16x16xf32>
    %41 = arith.mulf %40, %39 : vector<16x16xf32>
    %cst_27 = arith.constant 8.99999984E-4 : f32
    %42 = vector.broadcast %cst_27 : f32 to vector<16x16xf32>
    %43 = arith.addf %41, %42 : vector<16x16xf32>
    %44 = arith.addf %33, %36 : vector<16x16xf32>
    %cst_28 = arith.constant 8.99999984E-4 : f32
    %45 = vector.broadcast %cst_28 : f32 to vector<16x16xf32>
    %46 = arith.addf %44, %45 : vector<16x16xf32>
    %47 = tpu.reciprocal %46 {approx = true} : vector<16x16xf32> -> vector<16x16xf32>
    %48 = arith.mulf %43, %47 : vector<16x16xf32>
    %49 = arith.mulf %48, %48 : vector<16x16xf32>
    %50 = arith.mulf %49, %48 : vector<16x16xf32>
    %c0_29 = arith.constant 0 : index
    %c0_30 = arith.constant 0 : index
    %51 = vector.load %arg7[%c0_29, %c0_30] : memref<16x16xf32, #tpu.memory_space<vmem>>, vector<16x16xf32>
    tpu.vector_store %arg7[%c0_29, %c0_30], %50 {strides = array<i32>} : memref<16x16xf32, #tpu.memory_space<vmem>>, vector<16x16xf32>,
    %c0_31 = arith.constant 0 : index
    %c0_32 = arith.constant 0 : index
    %c0_33 = arith.constant 0 : index
    %c0_34 = arith.constant 0 : index
    %52 = vector.load %arg1[%c0_31, %c0_32, %c0_33, %c0_34] : memref<1x3x16x16xf32, #tpu.memory_space<vmem>>, vector<1x1x16x16xf32>
    %53 = vector.shape_cast %52 : vector<1x1x16x16xf32> to vector<16x16xf32>
    %c0_35 = arith.constant 0 : index
    %c0_36 = arith.constant 0 : index
    %c0_37 = arith.constant 0 : index
    %c0_38 = arith.constant 0 : index
    %54 = vector.load %arg2[%c0_35, %c0_36, %c0_37, %c0_38] : memref<1x3x16x16xf32, #tpu.memory_space<vmem>>, vector<1x1x16x16xf32>
    %55 = vector.shape_cast %54 : vector<1x1x16x16xf32> to vector<16x16xf32>
    %56 = arith.mulf %53, %53 : vector<16x16xf32>
    %57 = arith.mulf %55, %55 : vector<16x16xf32>
    %58 = arith.mulf %53, %55 : vector<16x16xf32>
    %59 = arith.truncf %53 : vector<16x16xf32> to vector<16x16xbf16>
    %c0_39 = arith.constant 0 : index
    %c0_40 = arith.constant 0 : index
    %60 = vector.load %arg6[%c0_39, %c0_40] : memref<160x16xbf16, #tpu.memory_space<vmem>>, vector<16x16xbf16>
    tpu.vector_store %arg6[%c0_39, %c0_40], %59 {strides = array<i32>} : memref<160x16xbf16, #tpu.memory_space<vmem>>, vector<16x16xbf16>,
    %61 = arith.truncf %55 : vector<16x16xf32> to vector<16x16xbf16>
    %c16_41 = arith.constant 16 : index
    %c0_42 = arith.constant 0 : index
    %62 = vector.load %arg6[%c16_41, %c0_42] : memref<160x16xbf16, #tpu.memory_space<vmem>>, vector<16x16xbf16>
    tpu.vector_store %arg6[%c16_41, %c0_42], %61 {strides = array<i32>} : memref<160x16xbf16, #tpu.memory_space<vmem>>, vector<16x16xbf16>,
    %63 = arith.truncf %56 : vector<16x16xf32> to vector<16x16xbf16>
    %c32_43 = arith.constant 32 : index
    %c0_44 = arith.constant 0 : index
    %64 = vector.load %arg6[%c32_43, %c0_44] : memref<160x16xbf16, #tpu.memory_space<vmem>>, vector<16x16xbf16>
    tpu.vector_store %arg6[%c32_43, %c0_44], %63 {strides = array<i32>} : memref<160x16xbf16, #tpu.memory_space<vmem>>, vector<16x16xbf16>,
    %65 = arith.truncf %57 : vector<16x16xf32> to vector<16x16xbf16>
    %c48_45 = arith.constant 48 : index
    %c0_46 = arith.constant 0 : index
    %66 = vector.load %arg6[%c48_45, %c0_46] : memref<160x16xbf16, #tpu.memory_space<vmem>>, vector<16x16xbf16>
    tpu.vector_store %arg6[%c48_45, %c0_46], %65 {strides = array<i32>} : memref<160x16xbf16, #tpu.memory_space<vmem>>, vector<16x16xbf16>,
    %67 = arith.truncf %58 : vector<16x16xf32> to vector<16x16xbf16>
    %c64_47 = arith.constant 64 : index
    %c0_48 = arith.constant 0 : index
    %68 = vector.load %arg6[%c64_47, %c0_48] : memref<160x16xbf16, #tpu.memory_space<vmem>>, vector<16x16xbf16>
    tpu.vector_store %arg6[%c64_47, %c0_48], %67 {strides = array<i32>} : memref<160x16xbf16, #tpu.memory_space<vmem>>, vector<16x16xbf16>,
    %c0_49 = arith.constant 0 : index
    %c1 = arith.constant 1 : index
    %c0_50 = arith.constant 0 : index
    %c0_51 = arith.constant 0 : index
    %69 = vector.load %arg1[%c0_49, %c1, %c0_50, %c0_51] : memref<1x3x16x16xf32, #tpu.memory_space<vmem>>, vector<1x1x16x16xf32>
    %70 = vector.shape_cast %69 : vector<1x1x16x16xf32> to vector<16x16xf32>
    %c0_52 = arith.constant 0 : index
    %c1_53 = arith.constant 1 : index
    %c0_54 = arith.constant 0 : index
    %c0_55 = arith.constant 0 : index
    %71 = vector.load %arg2[%c0_52, %c1_53, %c0_54, %c0_55] : memref<1x3x16x16xf32, #tpu.memory_space<vmem>>, vector<1x1x16x16xf32>
    %72 = vector.shape_cast %71 : vector<1x1x16x16xf32> to vector<16x16xf32>
    %73 = arith.mulf %70, %70 : vector<16x16xf32>
    %74 = arith.mulf %72, %72 : vector<16x16xf32>
    %75 = arith.mulf %70, %72 : vector<16x16xf32>
    %76 = arith.truncf %70 : vector<16x16xf32> to vector<16x16xbf16>
    %c80 = arith.constant 80 : index
    %c0_56 = arith.constant 0 : index
    %77 = vector.load %arg6[%c80, %c0_56] : memref<160x16xbf16, #tpu.memory_space<vmem>>, vector<16x16xbf16>
    tpu.vector_store %arg6[%c80, %c0_56], %76 {strides = array<i32>} : memref<160x16xbf16, #tpu.memory_space<vmem>>, vector<16x16xbf16>,
    %78 = arith.truncf %72 : vector<16x16xf32> to vector<16x16xbf16>
    %c96 = arith.constant 96 : index
    %c0_57 = arith.constant 0 : index
    %79 = vector.load %arg6[%c96, %c0_57] : memref<160x16xbf16, #tpu.memory_space<vmem>>, vector<16x16xbf16>
    tpu.vector_store %arg6[%c96, %c0_57], %78 {strides = array<i32>} : memref<160x16xbf16, #tpu.memory_space<vmem>>, vector<16x16xbf16>,
    %80 = arith.truncf %73 : vector<16x16xf32> to vector<16x16xbf16>
    %c112 = arith.constant 112 : index
    %c0_58 = arith.constant 0 : index
    %81 = vector.load %arg6[%c112, %c0_58] : memref<160x16xbf16, #tpu.memory_space<vmem>>, vector<16x16xbf16>
    tpu.vector_store %arg6[%c112, %c0_58], %80 {strides = array<i32>} : memref<160x16xbf16, #tpu.memory_space<vmem>>, vector<16x16xbf16>,
    %82 = arith.truncf %74 : vector<16x16xf32> to vector<16x16xbf16>
    %c128 = arith.constant 128 : index
    %c0_59 = arith.constant 0 : index
    %83 = vector.load %arg6[%c128, %c0_59] : memref<160x16xbf16, #tpu.memory_space<vmem>>, vector<16x16xbf16>
    tpu.vector_store %arg6[%c128, %c0_59], %82 {strides = array<i32>} : memref<160x16xbf16, #tpu.memory_space<vmem>>, vector<16x16xbf16>,
    %84 = arith.truncf %75 : vector<16x16xf32> to vector<16x16xbf16>
    %c144 = arith.constant 144 : index
    %c0_60 = arith.constant 0 : index
    %85 = vector.load %arg6[%c144, %c0_60] : memref<160x16xbf16, #tpu.memory_space<vmem>>, vector<16x16xbf16>
    tpu.vector_store %arg6[%c144, %c0_60], %84 {strides = array<i32>} : memref<160x16xbf16, #tpu.memory_space<vmem>>, vector<16x16xbf16>,
    %c1_61 = arith.constant 1 : index
    %c0_62 = arith.constant 0 : index
    %c0_63 = arith.constant 0 : index
    %86 = vector.load %arg3[%c1_61, %c0_62, %c0_63] : memref<5x16x16xbf16, #tpu.memory_space<vmem>>, vector<1x16x16xbf16>
    %87 = vector.shape_cast %86 : vector<1x16x16xbf16> to vector<16x16xbf16>
    %c0_64 = arith.constant 0 : index
    %c0_65 = arith.constant 0 : index
    %88 = vector.load %arg6[%c0_64, %c0_65] : memref<160x16xbf16, #tpu.memory_space<vmem>>, vector<160x16xbf16>
    %cst_66 = arith.constant dense<0.000000e+00> : vector<160x16xf32>
    %89 = tpu.matmul %88, %87, %cst_66 {dimension_numbers = #tpu.dot_dimension_numbers<[1], [0], [0], [1], [0, 0, 1, 1], [], []>} : vector<160x16xbf16>, vector<16x16xbf16>, vector<160x16xf32> -> vector<160x16xf32>
    %90 = arith.truncf %89 : vector<160x16xf32> to vector<160x16xbf16>
    %c1_67 = arith.constant 1 : index
    %c0_68 = arith.constant 0 : index
    %c0_69 = arith.constant 0 : index
    %91 = vector.load %arg4[%c1_67, %c0_68, %c0_69] : memref<5x16x16xbf16, #tpu.memory_space<vmem>>, vector<1x16x16xbf16>
    %92 = vector.shape_cast %91 : vector<1x16x16xbf16> to vector<16x16xbf16>
    %93 = vector.extract_strided_slice %90 {offsets = [0, 0], sizes = [16, 16], strides = [1, 1]} : vector<160x16xbf16> to vector<16x16xbf16>
    %cst_70 = arith.constant dense<0.000000e+00> : vector<16x16xf32>
    %94 = tpu.matmul %92, %93, %cst_70 {dimension_numbers = #tpu.dot_dimension_numbers<[1], [0], [0], [1], [0, 0, 1, 1], [], []>} : vector<16x16xbf16>, vector<16x16xbf16>, vector<16x16xf32> -> vector<16x16xf32>
    %95 = vector.extract_strided_slice %90 {offsets = [16, 0], sizes = [16, 16], strides = [1, 1]} : vector<160x16xbf16> to vector<16x16xbf16>
    %cst_71 = arith.constant dense<0.000000e+00> : vector<16x16xf32>
    %96 = tpu.matmul %92, %95, %cst_71 {dimension_numbers = #tpu.dot_dimension_numbers<[1], [0], [0], [1], [0, 0, 1, 1], [], []>} : vector<16x16xbf16>, vector<16x16xbf16>, vector<16x16xf32> -> vector<16x16xf32>
    %97 = arith.mulf %94, %94 : vector<16x16xf32>
    %98 = arith.mulf %96, %96 : vector<16x16xf32>
    %99 = arith.mulf %94, %96 : vector<16x16xf32>
    %100 = vector.extract_strided_slice %90 {offsets = [32, 0], sizes = [16, 16], strides = [1, 1]} : vector<160x16xbf16> to vector<16x16xbf16>
    %cst_72 = arith.constant dense<0.000000e+00> : vector<16x16xf32>
    %101 = tpu.matmul %92, %100, %cst_72 {dimension_numbers = #tpu.dot_dimension_numbers<[1], [0], [0], [1], [0, 0, 1, 1], [], []>} : vector<16x16xbf16>, vector<16x16xbf16>, vector<16x16xf32> -> vector<16x16xf32>
    %102 = arith.subf %101, %97 : vector<16x16xf32>
    %103 = vector.extract_strided_slice %90 {offsets = [48, 0], sizes = [16, 16], strides = [1, 1]} : vector<160x16xbf16> to vector<16x16xbf16>
    %cst_73 = arith.constant dense<0.000000e+00> : vector<16x16xf32>
    %104 = tpu.matmul %92, %103, %cst_73 {dimension_numbers = #tpu.dot_dimension_numbers<[1], [0], [0], [1], [0, 0, 1, 1], [], []>} : vector<16x16xbf16>, vector<16x16xbf16>, vector<16x16xf32> -> vector<16x16xf32>
    %105 = arith.subf %104, %98 : vector<16x16xf32>
    %106 = vector.extract_strided_slice %90 {offsets = [64, 0], sizes = [16, 16], strides = [1, 1]} : vector<160x16xbf16> to vector<16x16xbf16>
    %cst_74 = arith.constant dense<0.000000e+00> : vector<16x16xf32>
    %107 = tpu.matmul %92, %106, %cst_74 {dimension_numbers = #tpu.dot_dimension_numbers<[1], [0], [0], [1], [0, 0, 1, 1], [], []>} : vector<16x16xbf16>, vector<16x16xbf16>, vector<16x16xf32> -> vector<16x16xf32>
    %108 = arith.subf %107, %99 : vector<16x16xf32>
    %cst_75 = arith.constant 2.000000e+00 : f32
    %109 = vector.broadcast %cst_75 : f32 to vector<16x16xf32>
    %110 = arith.mulf %109, %108 : vector<16x16xf32>
    %cst_76 = arith.constant 8.99999984E-4 : f32
    %111 = vector.broadcast %cst_76 : f32 to vector<16x16xf32>
    %112 = arith.addf %110, %111 : vector<16x16xf32>
    %113 = arith.addf %102, %105 : vector<16x16xf32>
    %cst_77 = arith.constant 8.99999984E-4 : f32
    %114 = vector.broadcast %cst_77 : f32 to vector<16x16xf32>
    %115 = arith.addf %113, %114 : vector<16x16xf32>
    %116 = tpu.reciprocal %115 {approx = true} : vector<16x16xf32> -> vector<16x16xf32>
    %117 = arith.mulf %112, %116 : vector<16x16xf32>
    %118 = arith.mulf %117, %117 : vector<16x16xf32>
    %c0_78 = arith.constant 0 : index
    %c0_79 = arith.constant 0 : index
    %119 = vector.load %arg7[%c0_78, %c0_79] : memref<16x16xf32, #tpu.memory_space<vmem>>, vector<16x16xf32>
    %120 = arith.mulf %119, %118 : vector<16x16xf32>
    %c0_80 = arith.constant 0 : index
    %c0_81 = arith.constant 0 : index
    %121 = vector.load %arg7[%c0_80, %c0_81] : memref<16x16xf32, #tpu.memory_space<vmem>>, vector<16x16xf32>
    tpu.vector_store %arg7[%c0_80, %c0_81], %120 {strides = array<i32>} : memref<16x16xf32, #tpu.memory_space<vmem>>, vector<16x16xf32>,
    %122 = vector.extract_strided_slice %90 {offsets = [80, 0], sizes = [16, 16], strides = [1, 1]} : vector<160x16xbf16> to vector<16x16xbf16>
    %cst_82 = arith.constant dense<0.000000e+00> : vector<16x16xf32>
    %123 = tpu.matmul %92, %122, %cst_82 {dimension_numbers = #tpu.dot_dimension_numbers<[1], [0], [0], [1], [0, 0, 1, 1], [], []>} : vector<16x16xbf16>, vector<16x16xbf16>, vector<16x16xf32> -> vector<16x16xf32>
    %124 = vector.extract_strided_slice %90 {offsets = [96, 0], sizes = [16, 16], strides = [1, 1]} : vector<160x16xbf16> to vector<16x16xbf16>
    %cst_83 = arith.constant dense<0.000000e+00> : vector<16x16xf32>
    %125 = tpu.matmul %92, %124, %cst_83 {dimension_numbers = #tpu.dot_dimension_numbers<[1], [0], [0], [1], [0, 0, 1, 1], [], []>} : vector<16x16xbf16>, vector<16x16xbf16>, vector<16x16xf32> -> vector<16x16xf32>
    %126 = arith.mulf %123, %123 : vector<16x16xf32>
    %127 = arith.mulf %125, %125 : vector<16x16xf32>
    %128 = arith.mulf %123, %125 : vector<16x16xf32>
    %129 = vector.extract_strided_slice %90 {offsets = [112, 0], sizes = [16, 16], strides = [1, 1]} : vector<160x16xbf16> to vector<16x16xbf16>
    %cst_84 = arith.constant dense<0.000000e+00> : vector<16x16xf32>
    %130 = tpu.matmul %92, %129, %cst_84 {dimension_numbers = #tpu.dot_dimension_numbers<[1], [0], [0], [1], [0, 0, 1, 1], [], []>} : vector<16x16xbf16>, vector<16x16xbf16>, vector<16x16xf32> -> vector<16x16xf32>
    %131 = arith.subf %130, %126 : vector<16x16xf32>
    %132 = vector.extract_strided_slice %90 {offsets = [128, 0], sizes = [16, 16], strides = [1, 1]} : vector<160x16xbf16> to vector<16x16xbf16>
    %cst_85 = arith.constant dense<0.000000e+00> : vector<16x16xf32>
    %133 = tpu.matmul %92, %132, %cst_85 {dimension_numbers = #tpu.dot_dimension_numbers<[1], [0], [0], [1], [0, 0, 1, 1], [], []>} : vector<16x16xbf16>, vector<16x16xbf16>, vector<16x16xf32> -> vector<16x16xf32>
    %134 = arith.subf %133, %127 : vector<16x16xf32>
    %135 = vector.extract_strided_slice %90 {offsets = [144, 0], sizes = [16, 16], strides = [1, 1]} : vector<160x16xbf16> to vector<16x16xbf16>
    %cst_86 = arith.constant dense<0.000000e+00> : vector<16x16xf32>
    %136 = tpu.matmul %92, %135, %cst_86 {dimension_numbers = #tpu.dot_dimension_numbers<[1], [0], [0], [1], [0, 0, 1, 1], [], []>} : vector<16x16xbf16>, vector<16x16xbf16>, vector<16x16xf32> -> vector<16x16xf32>
    %137 = arith.subf %136, %128 : vector<16x16xf32>
    %cst_87 = arith.constant 2.000000e+00 : f32
    %138 = vector.broadcast %cst_87 : f32 to vector<16x16xf32>
    %139 = arith.mulf %138, %137 : vector<16x16xf32>
    %cst_88 = arith.constant 8.99999984E-4 : f32
    %140 = vector.broadcast %cst_88 : f32 to vector<16x16xf32>
    %141 = arith.addf %139, %140 : vector<16x16xf32>
    %142 = arith.addf %131, %134 : vector<16x16xf32>
    %cst_89 = arith.constant 8.99999984E-4 : f32
    %143 = vector.broadcast %cst_89 : f32 to vector<16x16xf32>
    %144 = arith.addf %142, %143 : vector<16x16xf32>
    %145 = tpu.reciprocal %144 {approx = true} : vector<16x16xf32> -> vector<16x16xf32>
    %146 = arith.mulf %141, %145 : vector<16x16xf32>
    %c0_90 = arith.constant 0 : index
    %c0_91 = arith.constant 0 : index
    %147 = vector.load %arg7[%c0_90, %c0_91] : memref<16x16xf32, #tpu.memory_space<vmem>>, vector<16x16xf32>
    %148 = arith.mulf %147, %146 : vector<16x16xf32>
    %c0_92 = arith.constant 0 : index
    %c0_93 = arith.constant 0 : index
    %149 = vector.load %arg7[%c0_92, %c0_93] : memref<16x16xf32, #tpu.memory_space<vmem>>, vector<16x16xf32>
    tpu.vector_store %arg7[%c0_92, %c0_93], %148 {strides = array<i32>} : memref<16x16xf32, #tpu.memory_space<vmem>>, vector<16x16xf32>,
    %c0_94 = arith.constant 0 : index
    %c1_95 = arith.constant 1 : index
    %c0_96 = arith.constant 0 : index
    %c0_97 = arith.constant 0 : index
    %150 = vector.load %arg1[%c0_94, %c1_95, %c0_96, %c0_97] : memref<1x3x16x16xf32, #tpu.memory_space<vmem>>, vector<1x1x16x16xf32>
    %151 = vector.shape_cast %150 : vector<1x1x16x16xf32> to vector<16x16xf32>
    %c0_98 = arith.constant 0 : index
    %c1_99 = arith.constant 1 : index
    %c0_100 = arith.constant 0 : index
    %c0_101 = arith.constant 0 : index
    %152 = vector.load %arg2[%c0_98, %c1_99, %c0_100, %c0_101] : memref<1x3x16x16xf32, #tpu.memory_space<vmem>>, vector<1x1x16x16xf32>
    %153 = vector.shape_cast %152 : vector<1x1x16x16xf32> to vector<16x16xf32>
    %154 = arith.mulf %151, %151 : vector<16x16xf32>
    %155 = arith.mulf %153, %153 : vector<16x16xf32>
    %156 = arith.mulf %151, %153 : vector<16x16xf32>
    %157 = arith.truncf %151 : vector<16x16xf32> to vector<16x16xbf16>
    %c0_102 = arith.constant 0 : index
    %c0_103 = arith.constant 0 : index
    %158 = vector.load %arg6[%c0_102, %c0_103] : memref<160x16xbf16, #tpu.memory_space<vmem>>, vector<16x16xbf16>
    tpu.vector_store %arg6[%c0_102, %c0_103], %157 {strides = array<i32>} : memref<160x16xbf16, #tpu.memory_space<vmem>>, vector<16x16xbf16>,
    %159 = arith.truncf %153 : vector<16x16xf32> to vector<16x16xbf16>
    %c16_104 = arith.constant 16 : index
    %c0_105 = arith.constant 0 : index
    %160 = vector.load %arg6[%c16_104, %c0_105] : memref<160x16xbf16, #tpu.memory_space<vmem>>, vector<16x16xbf16>
    tpu.vector_store %arg6[%c16_104, %c0_105], %159 {strides = array<i32>} : memref<160x16xbf16, #tpu.memory_space<vmem>>, vector<16x16xbf16>,
    %161 = arith.truncf %154 : vector<16x16xf32> to vector<16x16xbf16>
    %c32_106 = arith.constant 32 : index
    %c0_107 = arith.constant 0 : index
    %162 = vector.load %arg6[%c32_106, %c0_107] : memref<160x16xbf16, #tpu.memory_space<vmem>>, vector<16x16xbf16>
    tpu.vector_store %arg6[%c32_106, %c0_107], %161 {strides = array<i32>} : memref<160x16xbf16, #tpu.memory_space<vmem>>, vector<16x16xbf16>,
    %163 = arith.truncf %155 : vector<16x16xf32> to vector<16x16xbf16>
    %c48_108 = arith.constant 48 : index
    %c0_109 = arith.constant 0 : index
    %164 = vector.load %arg6[%c48_108, %c0_109] : memref<160x16xbf16, #tpu.memory_space<vmem>>, vector<16x16xbf16>
    tpu.vector_store %arg6[%c48_108, %c0_109], %163 {strides = array<i32>} : memref<160x16xbf16, #tpu.memory_space<vmem>>, vector<16x16xbf16>,
    %165 = arith.truncf %156 : vector<16x16xf32> to vector<16x16xbf16>
    %c64_110 = arith.constant 64 : index
    %c0_111 = arith.constant 0 : index
    %166 = vector.load %arg6[%c64_110, %c0_111] : memref<160x16xbf16, #tpu.memory_space<vmem>>, vector<16x16xbf16>
    tpu.vector_store %arg6[%c64_110, %c0_111], %165 {strides = array<i32>} : memref<160x16xbf16, #tpu.memory_space<vmem>>, vector<16x16xbf16>,
    %c2 = arith.constant 2 : index
    %c0_112 = arith.constant 0 : index
    %c0_113 = arith.constant 0 : index
    %167 = vector.load %arg3[%c2, %c0_112, %c0_113] : memref<5x16x16xbf16, #tpu.memory_space<vmem>>, vector<1x16x16xbf16>
    %168 = vector.shape_cast %167 : vector<1x16x16xbf16> to vector<16x16xbf16>
    %c0_114 = arith.constant 0 : index
    %c0_115 = arith.constant 0 : index
    %169 = vector.load %arg6[%c0_114, %c0_115] : memref<160x16xbf16, #tpu.memory_space<vmem>>, vector<80x16xbf16>
    %cst_116 = arith.constant dense<0.000000e+00> : vector<80x16xf32>
    %170 = tpu.matmul %169, %168, %cst_116 {dimension_numbers = #tpu.dot_dimension_numbers<[1], [0], [0], [1], [0, 0, 1, 1], [], []>} : vector<80x16xbf16>, vector<16x16xbf16>, vector<80x16xf32> -> vector<80x16xf32>
    %171 = arith.truncf %170 : vector<80x16xf32> to vector<80x16xbf16>
    %c2_117 = arith.constant 2 : index
    %c0_118 = arith.constant 0 : index
    %c0_119 = arith.constant 0 : index
    %172 = vector.load %arg4[%c2_117, %c0_118, %c0_119] : memref<5x16x16xbf16, #tpu.memory_space<vmem>>, vector<1x16x16xbf16>
    %173 = vector.shape_cast %172 : vector<1x16x16xbf16> to vector<16x16xbf16>
    %174 = vector.extract_strided_slice %171 {offsets = [0, 0], sizes = [16, 16], strides = [1, 1]} : vector<80x16xbf16> to vector<16x16xbf16>
    %cst_120 = arith.constant dense<0.000000e+00> : vector<16x16xf32>
    %175 = tpu.matmul %173, %174, %cst_120 {dimension_numbers = #tpu.dot_dimension_numbers<[1], [0], [0], [1], [0, 0, 1, 1], [], []>} : vector<16x16xbf16>, vector<16x16xbf16>, vector<16x16xf32> -> vector<16x16xf32>
    %176 = vector.extract_strided_slice %171 {offsets = [16, 0], sizes = [16, 16], strides = [1, 1]} : vector<80x16xbf16> to vector<16x16xbf16>
    %cst_121 = arith.constant dense<0.000000e+00> : vector<16x16xf32>
    %177 = tpu.matmul %173, %176, %cst_121 {dimension_numbers = #tpu.dot_dimension_numbers<[1], [0], [0], [1], [0, 0, 1, 1], [], []>} : vector<16x16xbf16>, vector<16x16xbf16>, vector<16x16xf32> -> vector<16x16xf32>
    %178 = arith.mulf %175, %175 : vector<16x16xf32>
    %179 = arith.mulf %177, %177 : vector<16x16xf32>
    %180 = arith.mulf %175, %177 : vector<16x16xf32>
    %181 = vector.extract_strided_slice %171 {offsets = [32, 0], sizes = [16, 16], strides = [1, 1]} : vector<80x16xbf16> to vector<16x16xbf16>
    %cst_122 = arith.constant dense<0.000000e+00> : vector<16x16xf32>
    %182 = tpu.matmul %173, %181, %cst_122 {dimension_numbers = #tpu.dot_dimension_numbers<[1], [0], [0], [1], [0, 0, 1, 1], [], []>} : vector<16x16xbf16>, vector<16x16xbf16>, vector<16x16xf32> -> vector<16x16xf32>
    %183 = arith.subf %182, %178 : vector<16x16xf32>
    %184 = vector.extract_strided_slice %171 {offsets = [48, 0], sizes = [16, 16], strides = [1, 1]} : vector<80x16xbf16> to vector<16x16xbf16>
    %cst_123 = arith.constant dense<0.000000e+00> : vector<16x16xf32>
    %185 = tpu.matmul %173, %184, %cst_123 {dimension_numbers = #tpu.dot_dimension_numbers<[1], [0], [0], [1], [0, 0, 1, 1], [], []>} : vector<16x16xbf16>, vector<16x16xbf16>, vector<16x16xf32> -> vector<16x16xf32>
    %186 = arith.subf %185, %179 : vector<16x16xf32>
    %187 = vector.extract_strided_slice %171 {offsets = [64, 0], sizes = [16, 16], strides = [1, 1]} : vector<80x16xbf16> to vector<16x16xbf16>
    %cst_124 = arith.constant dense<0.000000e+00> : vector<16x16xf32>
    %188 = tpu.matmul %173, %187, %cst_124 {dimension_numbers = #tpu.dot_dimension_numbers<[1], [0], [0], [1], [0, 0, 1, 1], [], []>} : vector<16x16xbf16>, vector<16x16xbf16>, vector<16x16xf32> -> vector<16x16xf32>
    %189 = arith.subf %188, %180 : vector<16x16xf32>
    %cst_125 = arith.constant 2.000000e+00 : f32
    %190 = vector.broadcast %cst_125 : f32 to vector<16x16xf32>
    %191 = arith.mulf %190, %189 : vector<16x16xf32>
    %cst_126 = arith.constant 8.99999984E-4 : f32
    %192 = vector.broadcast %cst_126 : f32 to vector<16x16xf32>
    %193 = arith.addf %191, %192 : vector<16x16xf32>
    %194 = arith.addf %183, %186 : vector<16x16xf32>
    %cst_127 = arith.constant 8.99999984E-4 : f32
    %195 = vector.broadcast %cst_127 : f32 to vector<16x16xf32>
    %196 = arith.addf %194, %195 : vector<16x16xf32>
    %197 = tpu.reciprocal %196 {approx = true} : vector<16x16xf32> -> vector<16x16xf32>
    %198 = arith.mulf %193, %197 : vector<16x16xf32>
    %199 = arith.mulf %198, %198 : vector<16x16xf32>
    %200 = arith.mulf %199, %198 : vector<16x16xf32>
    %c0_128 = arith.constant 0 : index
    %c0_129 = arith.constant 0 : index
    %201 = vector.load %arg7[%c0_128, %c0_129] : memref<16x16xf32, #tpu.memory_space<vmem>>, vector<16x16xf32>
    %202 = arith.mulf %201, %200 : vector<16x16xf32>
    %c0_130 = arith.constant 0 : index
    %c0_131 = arith.constant 0 : index
    %203 = vector.load %arg7[%c0_130, %c0_131] : memref<16x16xf32, #tpu.memory_space<vmem>>, vector<16x16xf32>
    tpu.vector_store %arg7[%c0_130, %c0_131], %202 {strides = array<i32>} : memref<16x16xf32, #tpu.memory_space<vmem>>, vector<16x16xf32>,
    %c0_132 = arith.constant 0 : index
    %c1_133 = arith.constant 1 : index
    %c0_134 = arith.constant 0 : index
    %c0_135 = arith.constant 0 : index
    %204 = vector.load %arg1[%c0_132, %c1_133, %c0_134, %c0_135] : memref<1x3x16x16xf32, #tpu.memory_space<vmem>>, vector<1x1x16x16xf32>
    %205 = vector.shape_cast %204 : vector<1x1x16x16xf32> to vector<16x16xf32>
    %c0_136 = arith.constant 0 : index
    %c1_137 = arith.constant 1 : index
    %c0_138 = arith.constant 0 : index
    %c0_139 = arith.constant 0 : index
    %206 = vector.load %arg2[%c0_136, %c1_137, %c0_138, %c0_139] : memref<1x3x16x16xf32, #tpu.memory_space<vmem>>, vector<1x1x16x16xf32>
    %207 = vector.shape_cast %206 : vector<1x1x16x16xf32> to vector<16x16xf32>
    %208 = arith.mulf %205, %205 : vector<16x16xf32>
    %209 = arith.mulf %207, %207 : vector<16x16xf32>
    %210 = arith.mulf %205, %207 : vector<16x16xf32>
    %211 = arith.truncf %205 : vector<16x16xf32> to vector<16x16xbf16>
    %c0_140 = arith.constant 0 : index
    %c0_141 = arith.constant 0 : index
    %212 = vector.load %arg6[%c0_140, %c0_141] : memref<160x16xbf16, #tpu.memory_space<vmem>>, vector<16x16xbf16>
    tpu.vector_store %arg6[%c0_140, %c0_141], %211 {strides = array<i32>} : memref<160x16xbf16, #tpu.memory_space<vmem>>, vector<16x16xbf16>,
    %213 = arith.truncf %207 : vector<16x16xf32> to vector<16x16xbf16>
    %c16_142 = arith.constant 16 : index
    %c0_143 = arith.constant 0 : index
    %214 = vector.load %arg6[%c16_142, %c0_143] : memref<160x16xbf16, #tpu.memory_space<vmem>>, vector<16x16xbf16>
    tpu.vector_store %arg6[%c16_142, %c0_143], %213 {strides = array<i32>} : memref<160x16xbf16, #tpu.memory_space<vmem>>, vector<16x16xbf16>,
    %215 = arith.truncf %208 : vector<16x16xf32> to vector<16x16xbf16>
    %c32_144 = arith.constant 32 : index
    %c0_145 = arith.constant 0 : index
    %216 = vector.load %arg6[%c32_144, %c0_145] : memref<160x16xbf16, #tpu.memory_space<vmem>>, vector<16x16xbf16>
    tpu.vector_store %arg6[%c32_144, %c0_145], %215 {strides = array<i32>} : memref<160x16xbf16, #tpu.memory_space<vmem>>, vector<16x16xbf16>,
    %217 = arith.truncf %209 : vector<16x16xf32> to vector<16x16xbf16>
    %c48_146 = arith.constant 48 : index
    %c0_147 = arith.constant 0 : index
    %218 = vector.load %arg6[%c48_146, %c0_147] : memref<160x16xbf16, #tpu.memory_space<vmem>>, vector<16x16xbf16>
    tpu.vector_store %arg6[%c48_146, %c0_147], %217 {strides = array<i32>} : memref<160x16xbf16, #tpu.memory_space<vmem>>, vector<16x16xbf16>,
    %219 = arith.truncf %210 : vector<16x16xf32> to vector<16x16xbf16>
    %c64_148 = arith.constant 64 : index
    %c0_149 = arith.constant 0 : index
    %220 = vector.load %arg6[%c64_148, %c0_149] : memref<160x16xbf16, #tpu.memory_space<vmem>>, vector<16x16xbf16>
    tpu.vector_store %arg6[%c64_148, %c0_149], %219 {strides = array<i32>} : memref<160x16xbf16, #tpu.memory_space<vmem>>, vector<16x16xbf16>,
    %c0_150 = arith.constant 0 : index
    %c2_151 = arith.constant 2 : index
    %c0_152 = arith.constant 0 : index
    %c0_153 = arith.constant 0 : index
    %221 = vector.load %arg1[%c0_150, %c2_151, %c0_152, %c0_153] : memref<1x3x16x16xf32, #tpu.memory_space<vmem>>, vector<1x1x16x16xf32>
    %222 = vector.shape_cast %221 : vector<1x1x16x16xf32> to vector<16x16xf32>
    %c0_154 = arith.constant 0 : index
    %c2_155 = arith.constant 2 : index
    %c0_156 = arith.constant 0 : index
    %c0_157 = arith.constant 0 : index
    %223 = vector.load %arg2[%c0_154, %c2_155, %c0_156, %c0_157] : memref<1x3x16x16xf32, #tpu.memory_space<vmem>>, vector<1x1x16x16xf32>
    %224 = vector.shape_cast %223 : vector<1x1x16x16xf32> to vector<16x16xf32>
    %225 = arith.mulf %222, %222 : vector<16x16xf32>
    %226 = arith.mulf %224, %224 : vector<16x16xf32>
    %227 = arith.mulf %222, %224 : vector<16x16xf32>
    %228 = arith.truncf %222 : vector<16x16xf32> to vector<16x16xbf16>
    %c80_158 = arith.constant 80 : index
    %c0_159 = arith.constant 0 : index
    %229 = vector.load %arg6[%c80_158, %c0_159] : memref<160x16xbf16, #tpu.memory_space<vmem>>, vector<16x16xbf16>
    tpu.vector_store %arg6[%c80_158, %c0_159], %228 {strides = array<i32>} : memref<160x16xbf16, #tpu.memory_space<vmem>>, vector<16x16xbf16>,
    %230 = arith.truncf %224 : vector<16x16xf32> to vector<16x16xbf16>
    %c96_160 = arith.constant 96 : index
    %c0_161 = arith.constant 0 : index
    %231 = vector.load %arg6[%c96_160, %c0_161] : memref<160x16xbf16, #tpu.memory_space<vmem>>, vector<16x16xbf16>
    tpu.vector_store %arg6[%c96_160, %c0_161], %230 {strides = array<i32>} : memref<160x16xbf16, #tpu.memory_space<vmem>>, vector<16x16xbf16>,
    %232 = arith.truncf %225 : vector<16x16xf32> to vector<16x16xbf16>
    %c112_162 = arith.constant 112 : index
    %c0_163 = arith.constant 0 : index
    %233 = vector.load %arg6[%c112_162, %c0_163] : memref<160x16xbf16, #tpu.memory_space<vmem>>, vector<16x16xbf16>
    tpu.vector_store %arg6[%c112_162, %c0_163], %232 {strides = array<i32>} : memref<160x16xbf16, #tpu.memory_space<vmem>>, vector<16x16xbf16>,
    %234 = arith.truncf %226 : vector<16x16xf32> to vector<16x16xbf16>
    %c128_164 = arith.constant 128 : index
    %c0_165 = arith.constant 0 : index
    %235 = vector.load %arg6[%c128_164, %c0_165] : memref<160x16xbf16, #tpu.memory_space<vmem>>, vector<16x16xbf16>
    tpu.vector_store %arg6[%c128_164, %c0_165], %234 {strides = array<i32>} : memref<160x16xbf16, #tpu.memory_space<vmem>>, vector<16x16xbf16>,
    %236 = arith.truncf %227 : vector<16x16xf32> to vector<16x16xbf16>
    %c144_166 = arith.constant 144 : index
    %c0_167 = arith.constant 0 : index
    %237 = vector.load %arg6[%c144_166, %c0_167] : memref<160x16xbf16, #tpu.memory_space<vmem>>, vector<16x16xbf16>
    tpu.vector_store %arg6[%c144_166, %c0_167], %236 {strides = array<i32>} : memref<160x16xbf16, #tpu.memory_space<vmem>>, vector<16x16xbf16>,
    %c3 = arith.constant 3 : index
    %c0_168 = arith.constant 0 : index
    %c0_169 = arith.constant 0 : index
    %238 = vector.load %arg3[%c3, %c0_168, %c0_169] : memref<5x16x16xbf16, #tpu.memory_space<vmem>>, vector<1x16x16xbf16>
    %239 = vector.shape_cast %238 : vector<1x16x16xbf16> to vector<16x16xbf16>
    %c0_170 = arith.constant 0 : index
    %c0_171 = arith.constant 0 : index
    %240 = vector.load %arg6[%c0_170, %c0_171] : memref<160x16xbf16, #tpu.memory_space<vmem>>, vector<160x16xbf16>
    %cst_172 = arith.constant dense<0.000000e+00> : vector<160x16xf32>
    %241 = tpu.matmul %240, %239, %cst_172 {dimension_numbers = #tpu.dot_dimension_numbers<[1], [0], [0], [1], [0, 0, 1, 1], [], []>} : vector<160x16xbf16>, vector<16x16xbf16>, vector<160x16xf32> -> vector<160x16xf32>
    %242 = arith.truncf %241 : vector<160x16xf32> to vector<160x16xbf16>
    %c3_173 = arith.constant 3 : index
    %c0_174 = arith.constant 0 : index
    %c0_175 = arith.constant 0 : index
    %243 = vector.load %arg4[%c3_173, %c0_174, %c0_175] : memref<5x16x16xbf16, #tpu.memory_space<vmem>>, vector<1x16x16xbf16>
    %244 = vector.shape_cast %243 : vector<1x16x16xbf16> to vector<16x16xbf16>
    %245 = vector.extract_strided_slice %242 {offsets = [0, 0], sizes = [16, 16], strides = [1, 1]} : vector<160x16xbf16> to vector<16x16xbf16>
    %cst_176 = arith.constant dense<0.000000e+00> : vector<16x16xf32>
    %246 = tpu.matmul %244, %245, %cst_176 {dimension_numbers = #tpu.dot_dimension_numbers<[1], [0], [0], [1], [0, 0, 1, 1], [], []>} : vector<16x16xbf16>, vector<16x16xbf16>, vector<16x16xf32> -> vector<16x16xf32>
    %247 = vector.extract_strided_slice %242 {offsets = [16, 0], sizes = [16, 16], strides = [1, 1]} : vector<160x16xbf16> to vector<16x16xbf16>
    %cst_177 = arith.constant dense<0.000000e+00> : vector<16x16xf32>
    %248 = tpu.matmul %244, %247, %cst_177 {dimension_numbers = #tpu.dot_dimension_numbers<[1], [0], [0], [1], [0, 0, 1, 1], [], []>} : vector<16x16xbf16>, vector<16x16xbf16>, vector<16x16xf32> -> vector<16x16xf32>
    %249 = arith.mulf %246, %246 : vector<16x16xf32>
    %250 = arith.mulf %248, %248 : vector<16x16xf32>
    %251 = arith.mulf %246, %248 : vector<16x16xf32>
    %252 = vector.extract_strided_slice %242 {offsets = [32, 0], sizes = [16, 16], strides = [1, 1]} : vector<160x16xbf16> to vector<16x16xbf16>
    %cst_178 = arith.constant dense<0.000000e+00> : vector<16x16xf32>
    %253 = tpu.matmul %244, %252, %cst_178 {dimension_numbers = #tpu.dot_dimension_numbers<[1], [0], [0], [1], [0, 0, 1, 1], [], []>} : vector<16x16xbf16>, vector<16x16xbf16>, vector<16x16xf32> -> vector<16x16xf32>
    %254 = arith.subf %253, %249 : vector<16x16xf32>
    %255 = vector.extract_strided_slice %242 {offsets = [48, 0], sizes = [16, 16], strides = [1, 1]} : vector<160x16xbf16> to vector<16x16xbf16>
    %cst_179 = arith.constant dense<0.000000e+00> : vector<16x16xf32>
    %256 = tpu.matmul %244, %255, %cst_179 {dimension_numbers = #tpu.dot_dimension_numbers<[1], [0], [0], [1], [0, 0, 1, 1], [], []>} : vector<16x16xbf16>, vector<16x16xbf16>, vector<16x16xf32> -> vector<16x16xf32>
    %257 = arith.subf %256, %250 : vector<16x16xf32>
    %258 = vector.extract_strided_slice %242 {offsets = [64, 0], sizes = [16, 16], strides = [1, 1]} : vector<160x16xbf16> to vector<16x16xbf16>
    %cst_180 = arith.constant dense<0.000000e+00> : vector<16x16xf32>
    %259 = tpu.matmul %244, %258, %cst_180 {dimension_numbers = #tpu.dot_dimension_numbers<[1], [0], [0], [1], [0, 0, 1, 1], [], []>} : vector<16x16xbf16>, vector<16x16xbf16>, vector<16x16xf32> -> vector<16x16xf32>
    %260 = arith.subf %259, %251 : vector<16x16xf32>
    %cst_181 = arith.constant 2.000000e+00 : f32
    %261 = vector.broadcast %cst_181 : f32 to vector<16x16xf32>
    %262 = arith.mulf %261, %260 : vector<16x16xf32>
    %cst_182 = arith.constant 8.99999984E-4 : f32
    %263 = vector.broadcast %cst_182 : f32 to vector<16x16xf32>
    %264 = arith.addf %262, %263 : vector<16x16xf32>
    %265 = arith.addf %254, %257 : vector<16x16xf32>
    %cst_183 = arith.constant 8.99999984E-4 : f32
    %266 = vector.broadcast %cst_183 : f32 to vector<16x16xf32>
    %267 = arith.addf %265, %266 : vector<16x16xf32>
    %268 = tpu.reciprocal %267 {approx = true} : vector<16x16xf32> -> vector<16x16xf32>
    %269 = arith.mulf %264, %268 : vector<16x16xf32>
    %c0_184 = arith.constant 0 : index
    %c0_185 = arith.constant 0 : index
    %270 = vector.load %arg7[%c0_184, %c0_185] : memref<16x16xf32, #tpu.memory_space<vmem>>, vector<16x16xf32>
    %271 = arith.mulf %270, %269 : vector<16x16xf32>
    %c0_186 = arith.constant 0 : index
    %c0_187 = arith.constant 0 : index
    %272 = vector.load %arg7[%c0_186, %c0_187] : memref<16x16xf32, #tpu.memory_space<vmem>>, vector<16x16xf32>
    tpu.vector_store %arg7[%c0_186, %c0_187], %271 {strides = array<i32>} : memref<16x16xf32, #tpu.memory_space<vmem>>, vector<16x16xf32>,
    %273 = vector.extract_strided_slice %242 {offsets = [80, 0], sizes = [16, 16], strides = [1, 1]} : vector<160x16xbf16> to vector<16x16xbf16>
    %cst_188 = arith.constant dense<0.000000e+00> : vector<16x16xf32>
    %274 = tpu.matmul %244, %273, %cst_188 {dimension_numbers = #tpu.dot_dimension_numbers<[1], [0], [0], [1], [0, 0, 1, 1], [], []>} : vector<16x16xbf16>, vector<16x16xbf16>, vector<16x16xf32> -> vector<16x16xf32>
    %275 = vector.extract_strided_slice %242 {offsets = [96, 0], sizes = [16, 16], strides = [1, 1]} : vector<160x16xbf16> to vector<16x16xbf16>
    %cst_189 = arith.constant dense<0.000000e+00> : vector<16x16xf32>
    %276 = tpu.matmul %244, %275, %cst_189 {dimension_numbers = #tpu.dot_dimension_numbers<[1], [0], [0], [1], [0, 0, 1, 1], [], []>} : vector<16x16xbf16>, vector<16x16xbf16>, vector<16x16xf32> -> vector<16x16xf32>
    %277 = arith.mulf %274, %274 : vector<16x16xf32>
    %278 = arith.mulf %276, %276 : vector<16x16xf32>
    %279 = arith.mulf %274, %276 : vector<16x16xf32>
    %280 = vector.extract_strided_slice %242 {offsets = [112, 0], sizes = [16, 16], strides = [1, 1]} : vector<160x16xbf16> to vector<16x16xbf16>
    %cst_190 = arith.constant dense<0.000000e+00> : vector<16x16xf32>
    %281 = tpu.matmul %244, %280, %cst_190 {dimension_numbers = #tpu.dot_dimension_numbers<[1], [0], [0], [1], [0, 0, 1, 1], [], []>} : vector<16x16xbf16>, vector<16x16xbf16>, vector<16x16xf32> -> vector<16x16xf32>
    %282 = arith.subf %281, %277 : vector<16x16xf32>
    %283 = vector.extract_strided_slice %242 {offsets = [128, 0], sizes = [16, 16], strides = [1, 1]} : vector<160x16xbf16> to vector<16x16xbf16>
    %cst_191 = arith.constant dense<0.000000e+00> : vector<16x16xf32>
    %284 = tpu.matmul %244, %283, %cst_191 {dimension_numbers = #tpu.dot_dimension_numbers<[1], [0], [0], [1], [0, 0, 1, 1], [], []>} : vector<16x16xbf16>, vector<16x16xbf16>, vector<16x16xf32> -> vector<16x16xf32>
    %285 = arith.subf %284, %278 : vector<16x16xf32>
    %286 = vector.extract_strided_slice %242 {offsets = [144, 0], sizes = [16, 16], strides = [1, 1]} : vector<160x16xbf16> to vector<16x16xbf16>
    %cst_192 = arith.constant dense<0.000000e+00> : vector<16x16xf32>
    %287 = tpu.matmul %244, %286, %cst_192 {dimension_numbers = #tpu.dot_dimension_numbers<[1], [0], [0], [1], [0, 0, 1, 1], [], []>} : vector<16x16xbf16>, vector<16x16xbf16>, vector<16x16xf32> -> vector<16x16xf32>
    %288 = arith.subf %287, %279 : vector<16x16xf32>
    %cst_193 = arith.constant 2.000000e+00 : f32
    %289 = vector.broadcast %cst_193 : f32 to vector<16x16xf32>
    %290 = arith.mulf %289, %288 : vector<16x16xf32>
    %cst_194 = arith.constant 8.99999984E-4 : f32
    %291 = vector.broadcast %cst_194 : f32 to vector<16x16xf32>
    %292 = arith.addf %290, %291 : vector<16x16xf32>
    %293 = arith.addf %282, %285 : vector<16x16xf32>
    %cst_195 = arith.constant 8.99999984E-4 : f32
    %294 = vector.broadcast %cst_195 : f32 to vector<16x16xf32>
    %295 = arith.addf %293, %294 : vector<16x16xf32>
    %296 = tpu.reciprocal %295 {approx = true} : vector<16x16xf32> -> vector<16x16xf32>
    %297 = arith.mulf %292, %296 : vector<16x16xf32>
    %298 = arith.mulf %297, %297 : vector<16x16xf32>
    %c0_196 = arith.constant 0 : index
    %c0_197 = arith.constant 0 : index
    %299 = vector.load %arg7[%c0_196, %c0_197] : memref<16x16xf32, #tpu.memory_space<vmem>>, vector<16x16xf32>
    %300 = arith.mulf %299, %298 : vector<16x16xf32>
    %c0_198 = arith.constant 0 : index
    %c0_199 = arith.constant 0 : index
    %301 = vector.load %arg7[%c0_198, %c0_199] : memref<16x16xf32, #tpu.memory_space<vmem>>, vector<16x16xf32>
    tpu.vector_store %arg7[%c0_198, %c0_199], %300 {strides = array<i32>} : memref<16x16xf32, #tpu.memory_space<vmem>>, vector<16x16xf32>,
    %c0_200 = arith.constant 0 : index
    %c2_201 = arith.constant 2 : index
    %c0_202 = arith.constant 0 : index
    %c0_203 = arith.constant 0 : index
    %302 = vector.load %arg1[%c0_200, %c2_201, %c0_202, %c0_203] : memref<1x3x16x16xf32, #tpu.memory_space<vmem>>, vector<1x1x16x16xf32>
    %303 = vector.shape_cast %302 : vector<1x1x16x16xf32> to vector<16x16xf32>
    %c0_204 = arith.constant 0 : index
    %c2_205 = arith.constant 2 : index
    %c0_206 = arith.constant 0 : index
    %c0_207 = arith.constant 0 : index
    %304 = vector.load %arg2[%c0_204, %c2_205, %c0_206, %c0_207] : memref<1x3x16x16xf32, #tpu.memory_space<vmem>>, vector<1x1x16x16xf32>
    %305 = vector.shape_cast %304 : vector<1x1x16x16xf32> to vector<16x16xf32>
    %306 = arith.mulf %303, %303 : vector<16x16xf32>
    %307 = arith.mulf %305, %305 : vector<16x16xf32>
    %308 = arith.mulf %303, %305 : vector<16x16xf32>
    %309 = arith.truncf %303 : vector<16x16xf32> to vector<16x16xbf16>
    %c0_208 = arith.constant 0 : index
    %c0_209 = arith.constant 0 : index
    %310 = vector.load %arg6[%c0_208, %c0_209] : memref<160x16xbf16, #tpu.memory_space<vmem>>, vector<16x16xbf16>
    tpu.vector_store %arg6[%c0_208, %c0_209], %309 {strides = array<i32>} : memref<160x16xbf16, #tpu.memory_space<vmem>>, vector<16x16xbf16>,
    %311 = arith.truncf %305 : vector<16x16xf32> to vector<16x16xbf16>
    %c16_210 = arith.constant 16 : index
    %c0_211 = arith.constant 0 : index
    %312 = vector.load %arg6[%c16_210, %c0_211] : memref<160x16xbf16, #tpu.memory_space<vmem>>, vector<16x16xbf16>
    tpu.vector_store %arg6[%c16_210, %c0_211], %311 {strides = array<i32>} : memref<160x16xbf16, #tpu.memory_space<vmem>>, vector<16x16xbf16>,
    %313 = arith.truncf %306 : vector<16x16xf32> to vector<16x16xbf16>
    %c32_212 = arith.constant 32 : index
    %c0_213 = arith.constant 0 : index
    %314 = vector.load %arg6[%c32_212, %c0_213] : memref<160x16xbf16, #tpu.memory_space<vmem>>, vector<16x16xbf16>
    tpu.vector_store %arg6[%c32_212, %c0_213], %313 {strides = array<i32>} : memref<160x16xbf16, #tpu.memory_space<vmem>>, vector<16x16xbf16>,
    %315 = arith.truncf %307 : vector<16x16xf32> to vector<16x16xbf16>
    %c48_214 = arith.constant 48 : index
    %c0_215 = arith.constant 0 : index
    %316 = vector.load %arg6[%c48_214, %c0_215] : memref<160x16xbf16, #tpu.memory_space<vmem>>, vector<16x16xbf16>
    tpu.vector_store %arg6[%c48_214, %c0_215], %315 {strides = array<i32>} : memref<160x16xbf16, #tpu.memory_space<vmem>>, vector<16x16xbf16>,
    %317 = arith.truncf %308 : vector<16x16xf32> to vector<16x16xbf16>
    %c64_216 = arith.constant 64 : index
    %c0_217 = arith.constant 0 : index
    %318 = vector.load %arg6[%c64_216, %c0_217] : memref<160x16xbf16, #tpu.memory_space<vmem>>, vector<16x16xbf16>
    tpu.vector_store %arg6[%c64_216, %c0_217], %317 {strides = array<i32>} : memref<160x16xbf16, #tpu.memory_space<vmem>>, vector<16x16xbf16>,
    %c0_218 = arith.constant 0 : index
    %c0_219 = arith.constant 0 : index
    %c0_220 = arith.constant 0 : index
    %c0_221 = arith.constant 0 : index
    %319 = vector.load %arg1[%c0_218, %c0_219, %c0_220, %c0_221] : memref<1x3x16x16xf32, #tpu.memory_space<vmem>>, vector<1x1x16x16xf32>
    %320 = vector.shape_cast %319 : vector<1x1x16x16xf32> to vector<16x16xf32>
    %c0_222 = arith.constant 0 : index
    %c0_223 = arith.constant 0 : index
    %c0_224 = arith.constant 0 : index
    %c0_225 = arith.constant 0 : index
    %321 = vector.load %arg2[%c0_222, %c0_223, %c0_224, %c0_225] : memref<1x3x16x16xf32, #tpu.memory_space<vmem>>, vector<1x1x16x16xf32>
    %322 = vector.shape_cast %321 : vector<1x1x16x16xf32> to vector<16x16xf32>
    %323 = arith.subf %320, %322 : vector<16x16xf32>
    %324 = math.absf %323 : vector<16x16xf32>
    %325 = arith.truncf %324 : vector<16x16xf32> to vector<16x16xbf16>
    %c80_226 = arith.constant 80 : index
    %c0_227 = arith.constant 0 : index
    %326 = vector.load %arg6[%c80_226, %c0_227] : memref<160x16xbf16, #tpu.memory_space<vmem>>, vector<16x16xbf16>
    tpu.vector_store %arg6[%c80_226, %c0_227], %325 {strides = array<i32>} : memref<160x16xbf16, #tpu.memory_space<vmem>>, vector<16x16xbf16>,
    %c0_228 = arith.constant 0 : index
    %c1_229 = arith.constant 1 : index
    %c0_230 = arith.constant 0 : index
    %c0_231 = arith.constant 0 : index
    %327 = vector.load %arg1[%c0_228, %c1_229, %c0_230, %c0_231] : memref<1x3x16x16xf32, #tpu.memory_space<vmem>>, vector<1x1x16x16xf32>
    %328 = vector.shape_cast %327 : vector<1x1x16x16xf32> to vector<16x16xf32>
    %c0_232 = arith.constant 0 : index
    %c1_233 = arith.constant 1 : index
    %c0_234 = arith.constant 0 : index
    %c0_235 = arith.constant 0 : index
    %329 = vector.load %arg2[%c0_232, %c1_233, %c0_234, %c0_235] : memref<1x3x16x16xf32, #tpu.memory_space<vmem>>, vector<1x1x16x16xf32>
    %330 = vector.shape_cast %329 : vector<1x1x16x16xf32> to vector<16x16xf32>
    %331 = arith.subf %328, %330 : vector<16x16xf32>
    %332 = math.absf %331 : vector<16x16xf32>
    %333 = arith.truncf %332 : vector<16x16xf32> to vector<16x16xbf16>
    %c96_236 = arith.constant 96 : index
    %c0_237 = arith.constant 0 : index
    %334 = vector.load %arg6[%c96_236, %c0_237] : memref<160x16xbf16, #tpu.memory_space<vmem>>, vector<16x16xbf16>
    tpu.vector_store %arg6[%c96_236, %c0_237], %333 {strides = array<i32>} : memref<160x16xbf16, #tpu.memory_space<vmem>>, vector<16x16xbf16>,
    %c0_238 = arith.constant 0 : index
    %c2_239 = arith.constant 2 : index
    %c0_240 = arith.constant 0 : index
    %c0_241 = arith.constant 0 : index
    %335 = vector.load %arg1[%c0_238, %c2_239, %c0_240, %c0_241] : memref<1x3x16x16xf32, #tpu.memory_space<vmem>>, vector<1x1x16x16xf32>
    %336 = vector.shape_cast %335 : vector<1x1x16x16xf32> to vector<16x16xf32>
    %c0_242 = arith.constant 0 : index
    %c2_243 = arith.constant 2 : index
    %c0_244 = arith.constant 0 : index
    %c0_245 = arith.constant 0 : index
    %337 = vector.load %arg2[%c0_242, %c2_243, %c0_244, %c0_245] : memref<1x3x16x16xf32, #tpu.memory_space<vmem>>, vector<1x1x16x16xf32>
    %338 = vector.shape_cast %337 : vector<1x1x16x16xf32> to vector<16x16xf32>
    %339 = arith.subf %336, %338 : vector<16x16xf32>
    %340 = math.absf %339 : vector<16x16xf32>
    %341 = arith.truncf %340 : vector<16x16xf32> to vector<16x16xbf16>
    %c112_246 = arith.constant 112 : index
    %c0_247 = arith.constant 0 : index
    %342 = vector.load %arg6[%c112_246, %c0_247] : memref<160x16xbf16, #tpu.memory_space<vmem>>, vector<16x16xbf16>
    tpu.vector_store %arg6[%c112_246, %c0_247], %341 {strides = array<i32>} : memref<160x16xbf16, #tpu.memory_space<vmem>>, vector<16x16xbf16>,
    %c4 = arith.constant 4 : index
    %c0_248 = arith.constant 0 : index
    %c0_249 = arith.constant 0 : index
    %343 = vector.load %arg3[%c4, %c0_248, %c0_249] : memref<5x16x16xbf16, #tpu.memory_space<vmem>>, vector<1x16x16xbf16>
    %344 = vector.shape_cast %343 : vector<1x16x16xbf16> to vector<16x16xbf16>
    %c0_250 = arith.constant 0 : index
    %c0_251 = arith.constant 0 : index
    %345 = vector.load %arg6[%c0_250, %c0_251] : memref<160x16xbf16, #tpu.memory_space<vmem>>, vector<128x16xbf16>
    %cst_252 = arith.constant dense<0.000000e+00> : vector<128x16xf32>
    %346 = tpu.matmul %345, %344, %cst_252 {dimension_numbers = #tpu.dot_dimension_numbers<[1], [0], [0], [1], [0, 0, 1, 1], [], []>} : vector<128x16xbf16>, vector<16x16xbf16>, vector<128x16xf32> -> vector<128x16xf32>
    %347 = arith.truncf %346 : vector<128x16xf32> to vector<128x16xbf16>
    %c4_253 = arith.constant 4 : index
    %c0_254 = arith.constant 0 : index
    %c0_255 = arith.constant 0 : index
    %348 = vector.load %arg4[%c4_253, %c0_254, %c0_255] : memref<5x16x16xbf16, #tpu.memory_space<vmem>>, vector<1x16x16xbf16>
    %349 = vector.shape_cast %348 : vector<1x16x16xbf16> to vector<16x16xbf16>
    %350 = vector.extract_strided_slice %347 {offsets = [0, 0], sizes = [16, 16], strides = [1, 1]} : vector<128x16xbf16> to vector<16x16xbf16>
    %cst_256 = arith.constant dense<0.000000e+00> : vector<16x16xf32>
    %351 = tpu.matmul %349, %350, %cst_256 {dimension_numbers = #tpu.dot_dimension_numbers<[1], [0], [0], [1], [0, 0, 1, 1], [], []>} : vector<16x16xbf16>, vector<16x16xbf16>, vector<16x16xf32> -> vector<16x16xf32>
    %352 = vector.extract_strided_slice %347 {offsets = [16, 0], sizes = [16, 16], strides = [1, 1]} : vector<128x16xbf16> to vector<16x16xbf16>
    %cst_257 = arith.constant dense<0.000000e+00> : vector<16x16xf32>
    %353 = tpu.matmul %349, %352, %cst_257 {dimension_numbers = #tpu.dot_dimension_numbers<[1], [0], [0], [1], [0, 0, 1, 1], [], []>} : vector<16x16xbf16>, vector<16x16xbf16>, vector<16x16xf32> -> vector<16x16xf32>
    %354 = arith.mulf %351, %351 : vector<16x16xf32>
    %355 = arith.mulf %353, %353 : vector<16x16xf32>
    %356 = arith.mulf %351, %353 : vector<16x16xf32>
    %357 = vector.extract_strided_slice %347 {offsets = [32, 0], sizes = [16, 16], strides = [1, 1]} : vector<128x16xbf16> to vector<16x16xbf16>
    %cst_258 = arith.constant dense<0.000000e+00> : vector<16x16xf32>
    %358 = tpu.matmul %349, %357, %cst_258 {dimension_numbers = #tpu.dot_dimension_numbers<[1], [0], [0], [1], [0, 0, 1, 1], [], []>} : vector<16x16xbf16>, vector<16x16xbf16>, vector<16x16xf32> -> vector<16x16xf32>
    %359 = arith.subf %358, %354 : vector<16x16xf32>
    %360 = vector.extract_strided_slice %347 {offsets = [48, 0], sizes = [16, 16], strides = [1, 1]} : vector<128x16xbf16> to vector<16x16xbf16>
    %cst_259 = arith.constant dense<0.000000e+00> : vector<16x16xf32>
    %361 = tpu.matmul %349, %360, %cst_259 {dimension_numbers = #tpu.dot_dimension_numbers<[1], [0], [0], [1], [0, 0, 1, 1], [], []>} : vector<16x16xbf16>, vector<16x16xbf16>, vector<16x16xf32> -> vector<16x16xf32>
    %362 = arith.subf %361, %355 : vector<16x16xf32>
    %363 = vector.extract_strided_slice %347 {offsets = [64, 0], sizes = [16, 16], strides = [1, 1]} : vector<128x16xbf16> to vector<16x16xbf16>
    %cst_260 = arith.constant dense<0.000000e+00> : vector<16x16xf32>
    %364 = tpu.matmul %349, %363, %cst_260 {dimension_numbers = #tpu.dot_dimension_numbers<[1], [0], [0], [1], [0, 0, 1, 1], [], []>} : vector<16x16xbf16>, vector<16x16xbf16>, vector<16x16xf32> -> vector<16x16xf32>
    %365 = arith.subf %364, %356 : vector<16x16xf32>
    %cst_261 = arith.constant 2.000000e+00 : f32
    %366 = vector.broadcast %cst_261 : f32 to vector<16x16xf32>
    %367 = arith.mulf %366, %365 : vector<16x16xf32>
    %cst_262 = arith.constant 8.99999984E-4 : f32
    %368 = vector.broadcast %cst_262 : f32 to vector<16x16xf32>
    %369 = arith.addf %367, %368 : vector<16x16xf32>
    %370 = arith.addf %359, %362 : vector<16x16xf32>
    %cst_263 = arith.constant 8.99999984E-4 : f32
    %371 = vector.broadcast %cst_263 : f32 to vector<16x16xf32>
    %372 = arith.addf %370, %371 : vector<16x16xf32>
    %373 = tpu.reciprocal %372 {approx = true} : vector<16x16xf32> -> vector<16x16xf32>
    %374 = arith.mulf %369, %373 : vector<16x16xf32>
    %375 = arith.mulf %374, %374 : vector<16x16xf32>
    %376 = arith.mulf %375, %374 : vector<16x16xf32>
    %c0_264 = arith.constant 0 : index
    %c0_265 = arith.constant 0 : index
    %377 = vector.load %arg7[%c0_264, %c0_265] : memref<16x16xf32, #tpu.memory_space<vmem>>, vector<16x16xf32>
    %378 = arith.mulf %377, %376 : vector<16x16xf32>
    %cst_266 = arith.constant 2.000000e+00 : f32
    %379 = vector.broadcast %cst_266 : f32 to vector<16x16xf32>
    %380 = arith.mulf %379, %356 : vector<16x16xf32>
    %cst_267 = arith.constant 9.99999974E-5 : f32
    %381 = vector.broadcast %cst_267 : f32 to vector<16x16xf32>
    %382 = arith.addf %380, %381 : vector<16x16xf32>
    %383 = arith.addf %354, %355 : vector<16x16xf32>
    %cst_268 = arith.constant 9.99999974E-5 : f32
    %384 = vector.broadcast %cst_268 : f32 to vector<16x16xf32>
    %385 = arith.addf %383, %384 : vector<16x16xf32>
    %386 = tpu.reciprocal %385 {approx = true} : vector<16x16xf32> -> vector<16x16xf32>
    %387 = arith.mulf %382, %386 : vector<16x16xf32>
    %388 = arith.mulf %387, %387 : vector<16x16xf32>
    %389 = arith.mulf %388, %387 : vector<16x16xf32>
    %390 = vector.extract_strided_slice %347 {offsets = [80, 0], sizes = [16, 16], strides = [1, 1]} : vector<128x16xbf16> to vector<16x16xbf16>
    %cst_269 = arith.constant dense<0.000000e+00> : vector<16x16xf32>
    %391 = tpu.matmul %349, %390, %cst_269 {dimension_numbers = #tpu.dot_dimension_numbers<[1], [0], [0], [1], [0, 0, 1, 1], [], []>} : vector<16x16xbf16>, vector<16x16xbf16>, vector<16x16xf32> -> vector<16x16xf32>
    %392 = vector.extract_strided_slice %347 {offsets = [96, 0], sizes = [16, 16], strides = [1, 1]} : vector<128x16xbf16> to vector<16x16xbf16>
    %cst_270 = arith.constant dense<0.000000e+00> : vector<16x16xf32>
    %393 = tpu.matmul %349, %392, %cst_270 {dimension_numbers = #tpu.dot_dimension_numbers<[1], [0], [0], [1], [0, 0, 1, 1], [], []>} : vector<16x16xbf16>, vector<16x16xbf16>, vector<16x16xf32> -> vector<16x16xf32>
    %394 = arith.addf %391, %393 : vector<16x16xf32>
    %395 = vector.extract_strided_slice %347 {offsets = [112, 0], sizes = [16, 16], strides = [1, 1]} : vector<128x16xbf16> to vector<16x16xbf16>
    %cst_271 = arith.constant dense<0.000000e+00> : vector<16x16xf32>
    %396 = tpu.matmul %349, %395, %cst_271 {dimension_numbers = #tpu.dot_dimension_numbers<[1], [0], [0], [1], [0, 0, 1, 1], [], []>} : vector<16x16xbf16>, vector<16x16xbf16>, vector<16x16xf32> -> vector<16x16xf32>
    %397 = arith.addf %394, %396 : vector<16x16xf32>
    %cst_272 = arith.constant 0.333333343 : f32
    %398 = vector.broadcast %cst_272 : f32 to vector<16x16xf32>
    %399 = arith.mulf %397, %398 : vector<16x16xf32>
    %400 = arith.mulf %389, %378 : vector<16x16xf32>
    %cst_273 = arith.constant 1.000000e+00 : f32
    %401 = vector.broadcast %cst_273 : f32 to vector<16x16xf32>
    %402 = arith.subf %401, %400 : vector<16x16xf32>
    %cst_274 = arith.constant 1.000000e-01 : f32
    %403 = vector.broadcast %cst_274 : f32 to vector<16x16xf32>
    %404 = arith.mulf %403, %402 : vector<16x16xf32>
    %cst_275 = arith.constant 0.899999976 : f32
    %405 = vector.broadcast %cst_275 : f32 to vector<16x16xf32>
    %406 = arith.mulf %405, %399 : vector<16x16xf32>
    %407 = arith.addf %404, %406 : vector<16x16xf32>
    %c0_276 = arith.constant 0 : index
    %c0_277 = arith.constant 0 : index
    %c0_278 = arith.constant 0 : index
    %408 = vector.load %arg5[%c0_276, %c0_277, %c0_278] : memref<1x16x16xf32, #tpu.memory_space<vmem>>, vector<1x16x16xf32>
    %409 = vector.shape_cast %408 : vector<1x16x16xf32> to vector<16x16xf32>
    %410 = vector.shape_cast %407 : vector<16x16xf32> to vector<1x16x16xf32>
    tpu.vector_store %arg5[%c0_276, %c0_277, %c0_278], %410 {strides = array<i32>} : memref<1x16x16xf32, #tpu.memory_space<vmem>>, vector<1x16x16xf32>,
    return
  }
  func.func @transform_0(%arg0: i32) -> (i32, i32, i32, i32) {
    %c0_i32 = arith.constant 0 : i32
    %c0_i32_0 = arith.constant 0 : i32
    %c0_i32_1 = arith.constant 0 : i32
    %c0_i32_2 = arith.constant 0 : i32
    return %arg0, %c0_i32, %c0_i32_0, %c0_i32_1 : i32, i32, i32, i32
  }
  func.func @transform_1(%arg0: i32) -> (i32, i32, i32, i32) {
    %c0_i32 = arith.constant 0 : i32
    %c0_i32_0 = arith.constant 0 : i32
    %c0_i32_1 = arith.constant 0 : i32
    %c0_i32_2 = arith.constant 0 : i32
    return %arg0, %c0_i32, %c0_i32_0, %c0_i32_1 : i32, i32, i32, i32
  }
  func.func @transform_2(%arg0: i32) -> (i32, i32, i32) {
    %c0_i32 = arith.constant 0 : i32
    %c0_i32_0 = arith.constant 0 : i32
    %c0_i32_1 = arith.constant 0 : i32
    %c0_i32_2 = arith.constant 0 : i32
    return %c0_i32, %c0_i32_0, %c0_i32_1 : i32, i32, i32
  }
  func.func @transform_3(%arg0: i32) -> (i32, i32, i32) {
    %c0_i32 = arith.constant 0 : i32
    %c0_i32_0 = arith.constant 0 : i32
    %c0_i32_1 = arith.constant 0 : i32
    %c0_i32_2 = arith.constant 0 : i32
    return %c0_i32, %c0_i32_0, %c0_i32_1 : i32, i32, i32
  }
  func.func @transform_4(%arg0: i32) -> (i32, i32, i32) {
    %c0_i32 = arith.constant 0 : i32
    %c0_i32_0 = arith.constant 0 : i32
    %c0_i32_1 = arith.constant 0 : i32
    return %arg0, %c0_i32, %c0_i32_0 : i32, i32, i32
  }
}

module attributes {stable_mosaic.version = 11 : i64} {
  func.func @kernel(%arg0: i32, %arg1: memref<1x3x16x16xf32, #tpu.memory_space<vmem>>, %arg2: memref<1x3x16x16xf32, #tpu.memory_space<vmem>>, %arg3: memref<5x16x16xbf16, #tpu.memory_space<vmem>>, %arg4: memref<5x16x16xbf16, #tpu.memory_space<vmem>>, %arg5: memref<1x16x16xf32, #tpu.memory_space<vmem>>, %arg6: memref<160x16xbf16, #tpu.memory_space<vmem>>, %arg7: memref<16x16xf32, #tpu.memory_space<vmem>>) attributes {dimension_semantics = [#tpu.dimension_semantics<parallel>], iteration_bounds = array<i64: 2>, scalar_prefetch = 0 : i64, scratch_operands = 2 : i64, tpu.core_type = #tpu.core_type<tc>, window_params = [{transform_indices = @transform_0, window_bounds = array<i64: 1, 3, 16, 16>}, {transform_indices = @transform_1, window_bounds = array<i64: 1, 3, 16, 16>}, {pipeline_mode = #tpu.pipeline_mode<synchronous>, transform_indices = @transform_2, window_bounds = array<i64: 5, 16, 16>}, {pipeline_mode = #tpu.pipeline_mode<synchronous>, transform_indices = @transform_3, window_bounds = array<i64: 5, 16, 16>}, {transform_indices = @transform_4, window_bounds = array<i64: 1, 16, 16>}]} {
    %c0 = arith.constant 0 : index
    %c0_0 = arith.constant 0 : index
    %c0_1 = arith.constant 0 : index
    %c0_2 = arith.constant 0 : index
    %0 = vector.load %arg1[%c0, %c0_0, %c0_1, %c0_2] : memref<1x3x16x16xf32, #tpu.memory_space<vmem>>, vector<1x1x16x16xf32>
    %1 = vector.shape_cast %0 : vector<1x1x16x16xf32> to vector<16x16xf32>
    %c0_3 = arith.constant 0 : index
    %c0_4 = arith.constant 0 : index
    %c0_5 = arith.constant 0 : index
    %c0_6 = arith.constant 0 : index
    %2 = vector.load %arg2[%c0_3, %c0_4, %c0_5, %c0_6] : memref<1x3x16x16xf32, #tpu.memory_space<vmem>>, vector<1x1x16x16xf32>
    %3 = vector.shape_cast %2 : vector<1x1x16x16xf32> to vector<16x16xf32>
    %4 = arith.mulf %1, %1 : vector<16x16xf32>
    %5 = arith.mulf %3, %3 : vector<16x16xf32>
    %6 = arith.mulf %1, %3 : vector<16x16xf32>
    %7 = arith.truncf %1 : vector<16x16xf32> to vector<16x16xbf16>
    %c0_7 = arith.constant 0 : index
    %c0_8 = arith.constant 0 : index
    %8 = vector.load %arg6[%c0_7, %c0_8] : memref<160x16xbf16, #tpu.memory_space<vmem>>, vector<16x16xbf16>
    tpu.vector_store %arg6[%c0_7, %c0_8], %7 {strides = array<i32>} : memref<160x16xbf16, #tpu.memory_space<vmem>>, vector<16x16xbf16>,
    %9 = arith.truncf %3 : vector<16x16xf32> to vector<16x16xbf16>
    %c16 = arith.constant 16 : index
    %c0_9 = arith.constant 0 : index
    %10 = vector.load %arg6[%c16, %c0_9] : memref<160x16xbf16, #tpu.memory_space<vmem>>, vector<16x16xbf16>
    tpu.vector_store %arg6[%c16, %c0_9], %9 {strides = array<i32>} : memref<160x16xbf16, #tpu.memory_space<vmem>>, vector<16x16xbf16>,
    %11 = arith.truncf %4 : vector<16x16xf32> to vector<16x16xbf16>
    %c32 = arith.constant 32 : index
    %c0_10 = arith.constant 0 : index
    %12 = vector.load %arg6[%c32, %c0_10] : memref<160x16xbf16, #tpu.memory_space<vmem>>, vector<16x16xbf16>
    tpu.vector_store %arg6[%c32, %c0_10], %11 {strides = array<i32>} : memref<160x16xbf16, #tpu.memory_space<vmem>>, vector<16x16xbf16>,
    %13 = arith.truncf %5 : vector<16x16xf32> to vector<16x16xbf16>
    %c48 = arith.constant 48 : index
    %c0_11 = arith.constant 0 : index
    %14 = vector.load %arg6[%c48, %c0_11] : memref<160x16xbf16, #tpu.memory_space<vmem>>, vector<16x16xbf16>
    tpu.vector_store %arg6[%c48, %c0_11], %13 {strides = array<i32>} : memref<160x16xbf16, #tpu.memory_space<vmem>>, vector<16x16xbf16>,
    %15 = arith.truncf %6 : vector<16x16xf32> to vector<16x16xbf16>
    %c64 = arith.constant 64 : index
    %c0_12 = arith.constant 0 : index
    %16 = vector.load %arg6[%c64, %c0_12] : memref<160x16xbf16, #tpu.memory_space<vmem>>, vector<16x16xbf16>
    tpu.vector_store %arg6[%c64, %c0_12], %15 {strides = array<i32>} : memref<160x16xbf16, #tpu.memory_space<vmem>>, vector<16x16xbf16>,
    %c0_13 = arith.constant 0 : index
    %c0_14 = arith.constant 0 : index
    %c0_15 = arith.constant 0 : index
    %17 = vector.load %arg3[%c0_13, %c0_14, %c0_15] : memref<5x16x16xbf16, #tpu.memory_space<vmem>>, vector<1x16x16xbf16>
    %18 = vector.shape_cast %17 : vector<1x16x16xbf16> to vector<16x16xbf16>
    %c0_16 = arith.constant 0 : index
    %c0_17 = arith.constant 0 : index
    %19 = vector.load %arg6[%c0_16, %c0_17] : memref<160x16xbf16, #tpu.memory_space<vmem>>, vector<80x16xbf16>
    %cst = arith.constant dense<0.000000e+00> : vector<80x16xf32>
    %20 = tpu.matmul %19, %18, %cst {dimension_numbers = #tpu.dot_dimension_numbers<[1], [0], [0], [1], [0, 0, 1, 1], [], []>} : vector<80x16xbf16>, vector<16x16xbf16>, vector<80x16xf32> -> vector<80x16xf32>
    %21 = arith.truncf %20 : vector<80x16xf32> to vector<80x16xbf16>
    %c0_18 = arith.constant 0 : index
    %c0_19 = arith.constant 0 : index
    %c0_20 = arith.constant 0 : index
    %22 = vector.load %arg4[%c0_18, %c0_19, %c0_20] : memref<5x16x16xbf16, #tpu.memory_space<vmem>>, vector<1x16x16xbf16>
    %23 = vector.shape_cast %22 : vector<1x16x16xbf16> to vector<16x16xbf16>
    %24 = vector.extract_strided_slice %21 {offsets = [0, 0], sizes = [16, 16], strides = [1, 1]} : vector<80x16xbf16> to vector<16x16xbf16>
    %cst_21 = arith.constant dense<0.000000e+00> : vector<16x16xf32>
    %25 = tpu.matmul %23, %24, %cst_21 {dimension_numbers = #tpu.dot_dimension_numbers<[1], [0], [0], [1], [0, 0, 1, 1], [], []>} : vector<16x16xbf16>, vector<16x16xbf16>, vector<16x16xf32> -> vector<16x16xf32>
    %26 = vector.extract_strided_slice %21 {offsets = [16, 0], sizes = [16, 16], strides = [1, 1]} : vector<80x16xbf16> to vector<16x16xbf16>
    %cst_22 = arith.constant dense<0.000000e+00> : vector<16x16xf32>
    %27 = tpu.matmul %23, %26, %cst_22 {dimension_numbers = #tpu.dot_dimension_numbers<[1], [0], [0], [1], [0, 0, 1, 1], [], []>} : vector<16x16xbf16>, vector<16x16xbf16>, vector<16x16xf32> -> vector<16x16xf32>
    %28 = arith.mulf %25, %25 : vector<16x16xf32>
    %29 = arith.mulf %27, %27 : vector<16x16xf32>
    %30 = arith.mulf %25, %27 : vector<16x16xf32>
    %31 = vector.extract_strided_slice %21 {offsets = [32, 0], sizes = [16, 16], strides = [1, 1]} : vector<80x16xbf16> to vector<16x16xbf16>
    %cst_23 = arith.constant dense<0.000000e+00> : vector<16x16xf32>
    %32 = tpu.matmul %23, %31, %cst_23 {dimension_numbers = #tpu.dot_dimension_numbers<[1], [0], [0], [1], [0, 0, 1, 1], [], []>} : vector<16x16xbf16>, vector<16x16xbf16>, vector<16x16xf32> -> vector<16x16xf32>
    %33 = arith.subf %32, %28 : vector<16x16xf32>
    %34 = vector.extract_strided_slice %21 {offsets = [48, 0], sizes = [16, 16], strides = [1, 1]} : vector<80x16xbf16> to vector<16x16xbf16>
    %cst_24 = arith.constant dense<0.000000e+00> : vector<16x16xf32>
    %35 = tpu.matmul %23, %34, %cst_24 {dimension_numbers = #tpu.dot_dimension_numbers<[1], [0], [0], [1], [0, 0, 1, 1], [], []>} : vector<16x16xbf16>, vector<16x16xbf16>, vector<16x16xf32> -> vector<16x16xf32>
    %36 = arith.subf %35, %29 : vector<16x16xf32>
    %37 = vector.extract_strided_slice %21 {offsets = [64, 0], sizes = [16, 16], strides = [1, 1]} : vector<80x16xbf16> to vector<16x16xbf16>
    %cst_25 = arith.constant dense<0.000000e+00> : vector<16x16xf32>
    %38 = tpu.matmul %23, %37, %cst_25 {dimension_numbers = #tpu.dot_dimension_numbers<[1], [0], [0], [1], [0, 0, 1, 1], [], []>} : vector<16x16xbf16>, vector<16x16xbf16>, vector<16x16xf32> -> vector<16x16xf32>
    %39 = arith.subf %38, %30 : vector<16x16xf32>
    %cst_26 = arith.constant 2.000000e+00 : f32
    %40 = vector.broadcast %cst_26 : f32 to vector<16x16xf32>
    %41 = arith.mulf %40, %39 : vector<16x16xf32>
    %cst_27 = arith.constant 8.99999984E-4 : f32
    %42 = vector.broadcast %cst_27 : f32 to vector<16x16xf32>
    %43 = arith.addf %41, %42 : vector<16x16xf32>
    %44 = arith.addf %33, %36 : vector<16x16xf32>
    %cst_28 = arith.constant 8.99999984E-4 : f32
    %45 = vector.broadcast %cst_28 : f32 to vector<16x16xf32>
    %46 = arith.addf %44, %45 : vector<16x16xf32>
    %47 = tpu.reciprocal %46 {approx = true} : vector<16x16xf32> -> vector<16x16xf32>
    %48 = arith.mulf %43, %47 : vector<16x16xf32>
    %49 = arith.mulf %48, %48 : vector<16x16xf32>
    %50 = arith.mulf %49, %48 : vector<16x16xf32>
    %c0_29 = arith.constant 0 : index
    %c0_30 = arith.constant 0 : index
    %51 = vector.load %arg7[%c0_29, %c0_30] : memref<16x16xf32, #tpu.memory_space<vmem>>, vector<16x16xf32>
    tpu.vector_store %arg7[%c0_29, %c0_30], %50 {strides = array<i32>} : memref<16x16xf32, #tpu.memory_space<vmem>>, vector<16x16xf32>,
    %c0_31 = arith.constant 0 : index
    %c0_32 = arith.constant 0 : index
    %c0_33 = arith.constant 0 : index
    %c0_34 = arith.constant 0 : index
    %52 = vector.load %arg1[%c0_31, %c0_32, %c0_33, %c0_34] : memref<1x3x16x16xf32, #tpu.memory_space<vmem>>, vector<1x1x16x16xf32>
    %53 = vector.shape_cast %52 : vector<1x1x16x16xf32> to vector<16x16xf32>
    %c0_35 = arith.constant 0 : index
    %c0_36 = arith.constant 0 : index
    %c0_37 = arith.constant 0 : index
    %c0_38 = arith.constant 0 : index
    %54 = vector.load %arg2[%c0_35, %c0_36, %c0_37, %c0_38] : memref<1x3x16x16xf32, #tpu.memory_space<vmem>>, vector<1x1x16x16xf32>
    %55 = vector.shape_cast %54 : vector<1x1x16x16xf32> to vector<16x16xf32>
    %56 = arith.mulf %53, %53 : vector<16x16xf32>
    %57 = arith.mulf %55, %55 : vector<16x16xf32>
    %58 = arith.mulf %53, %55 : vector<16x16xf32>
    %59 = arith.truncf %53 : vector<16x16xf32> to vector<16x16xbf16>
    %c0_39 = arith.constant 0 : index
    %c0_40 = arith.constant 0 : index
    %60 = vector.load %arg6[%c0_39, %c0_40] : memref<160x16xbf16, #tpu.memory_space<vmem>>, vector<16x16xbf16>
    tpu.vector_store %arg6[%c0_39, %c0_40], %59 {strides = array<i32>} : memref<160x16xbf16, #tpu.memory_space<vmem>>, vector<16x16xbf16>,
    %61 = arith.truncf %55 : vector<16x16xf32> to vector<16x16xbf16>
    %c16_41 = arith.constant 16 : index
    %c0_42 = arith.constant 0 : index
    %62 = vector.load %arg6[%c16_41, %c0_42] : memref<160x16xbf16, #tpu.memory_space<vmem>>, vector<16x16xbf16>
    tpu.vector_store %arg6[%c16_41, %c0_42], %61 {strides = array<i32>} : memref<160x16xbf16, #tpu.memory_space<vmem>>, vector<16x16xbf16>,
    %63 = arith.truncf %56 : vector<16x16xf32> to vector<16x16xbf16>
    %c32_43 = arith.constant 32 : index
    %c0_44 = arith.constant 0 : index
    %64 = vector.load %arg6[%c32_43, %c0_44] : memref<160x16xbf16, #tpu.memory_space<vmem>>, vector<16x16xbf16>
    tpu.vector_store %arg6[%c32_43, %c0_44], %63 {strides = array<i32>} : memref<160x16xbf16, #tpu.memory_space<vmem>>, vector<16x16xbf16>,
    %65 = arith.truncf %57 : vector<16x16xf32> to vector<16x16xbf16>
    %c48_45 = arith.constant 48 : index
    %c0_46 = arith.constant 0 : index
    %66 = vector.load %arg6[%c48_45, %c0_46] : memref<160x16xbf16, #tpu.memory_space<vmem>>, vector<16x16xbf16>
    tpu.vector_store %arg6[%c48_45, %c0_46], %65 {strides = array<i32>} : memref<160x16xbf16, #tpu.memory_space<vmem>>, vector<16x16xbf16>,
    %67 = arith.truncf %58 : vector<16x16xf32> to vector<16x16xbf16>
    %c64_47 = arith.constant 64 : index
    %c0_48 = arith.constant 0 : index
    %68 = vector.load %arg6[%c64_47, %c0_48] : memref<160x16xbf16, #tpu.memory_space<vmem>>, vector<16x16xbf16>
    tpu.vector_store %arg6[%c64_47, %c0_48], %67 {strides = array<i32>} : memref<160x16xbf16, #tpu.memory_space<vmem>>, vector<16x16xbf16>,
    %c0_49 = arith.constant 0 : index
    %c1 = arith.constant 1 : index
    %c0_50 = arith.constant 0 : index
    %c0_51 = arith.constant 0 : index
    %69 = vector.load %arg1[%c0_49, %c1, %c0_50, %c0_51] : memref<1x3x16x16xf32, #tpu.memory_space<vmem>>, vector<1x1x16x16xf32>
    %70 = vector.shape_cast %69 : vector<1x1x16x16xf32> to vector<16x16xf32>
    %c0_52 = arith.constant 0 : index
    %c1_53 = arith.constant 1 : index
    %c0_54 = arith.constant 0 : index
    %c0_55 = arith.constant 0 : index
    %71 = vector.load %arg2[%c0_52, %c1_53, %c0_54, %c0_55] : memref<1x3x16x16xf32, #tpu.memory_space<vmem>>, vector<1x1x16x16xf32>
    %72 = vector.shape_cast %71 : vector<1x1x16x16xf32> to vector<16x16xf32>
    %73 = arith.mulf %70, %70 : vector<16x16xf32>
    %74 = arith.mulf %72, %72 : vector<16x16xf32>
    %75 = arith.mulf %70, %72 : vector<16x16xf32>
    %76 = arith.truncf %70 : vector<16x16xf32> to vector<16x16xbf16>
    %c80 = arith.constant 80 : index
    %c0_56 = arith.constant 0 : index
    %77 = vector.load %arg6[%c80, %c0_56] : memref<160x16xbf16, #tpu.memory_space<vmem>>, vector<16x16xbf16>
    tpu.vector_store %arg6[%c80, %c0_56], %76 {strides = array<i32>} : memref<160x16xbf16, #tpu.memory_space<vmem>>, vector<16x16xbf16>,
    %78 = arith.truncf %72 : vector<16x16xf32> to vector<16x16xbf16>
    %c96 = arith.constant 96 : index
    %c0_57 = arith.constant 0 : index
    %79 = vector.load %arg6[%c96, %c0_57] : memref<160x16xbf16, #tpu.memory_space<vmem>>, vector<16x16xbf16>
    tpu.vector_store %arg6[%c96, %c0_57], %78 {strides = array<i32>} : memref<160x16xbf16, #tpu.memory_space<vmem>>, vector<16x16xbf16>,
    %80 = arith.truncf %73 : vector<16x16xf32> to vector<16x16xbf16>
    %c112 = arith.constant 112 : index
    %c0_58 = arith.constant 0 : index
    %81 = vector.load %arg6[%c112, %c0_58] : memref<160x16xbf16, #tpu.memory_space<vmem>>, vector<16x16xbf16>
    tpu.vector_store %arg6[%c112, %c0_58], %80 {strides = array<i32>} : memref<160x16xbf16, #tpu.memory_space<vmem>>, vector<16x16xbf16>,
    %82 = arith.truncf %74 : vector<16x16xf32> to vector<16x16xbf16>
    %c128 = arith.constant 128 : index
    %c0_59 = arith.constant 0 : index
    %83 = vector.load %arg6[%c128, %c0_59] : memref<160x16xbf16, #tpu.memory_space<vmem>>, vector<16x16xbf16>
    tpu.vector_store %arg6[%c128, %c0_59], %82 {strides = array<i32>} : memref<160x16xbf16, #tpu.memory_space<vmem>>, vector<16x16xbf16>,
    %84 = arith.truncf %75 : vector<16x16xf32> to vector<16x16xbf16>
    %c144 = arith.constant 144 : index
    %c0_60 = arith.constant 0 : index
    %85 = vector.load %arg6[%c144, %c0_60] : memref<160x16xbf16, #tpu.memory_space<vmem>>, vector<16x16xbf16>
    tpu.vector_store %arg6[%c144, %c0_60], %84 {strides = array<i32>} : memref<160x16xbf16, #tpu.memory_space<vmem>>, vector<16x16xbf16>,
    %c1_61 = arith.constant 1 : index
    %c0_62 = arith.constant 0 : index
    %c0_63 = arith.constant 0 : index
    %86 = vector.load %arg3[%c1_61, %c0_62, %c0_63] : memref<5x16x16xbf16, #tpu.memory_space<vmem>>, vector<1x16x16xbf16>
    %87 = vector.shape_cast %86 : vector<1x16x16xbf16> to vector<16x16xbf16>
    %c0_64 = arith.constant 0 : index
    %c0_65 = arith.constant 0 : index
    %88 = vector.load %arg6[%c0_64, %c0_65] : memref<160x16xbf16, #tpu.memory_space<vmem>>, vector<160x16xbf16>
    %cst_66 = arith.constant dense<0.000000e+00> : vector<160x16xf32>
    %89 = tpu.matmul %88, %87, %cst_66 {dimension_numbers = #tpu.dot_dimension_numbers<[1], [0], [0], [1], [0, 0, 1, 1], [], []>} : vector<160x16xbf16>, vector<16x16xbf16>, vector<160x16xf32> -> vector<160x16xf32>
    %90 = arith.truncf %89 : vector<160x16xf32> to vector<160x16xbf16>
    %c1_67 = arith.constant 1 : index
    %c0_68 = arith.constant 0 : index
    %c0_69 = arith.constant 0 : index
    %91 = vector.load %arg4[%c1_67, %c0_68, %c0_69] : memref<5x16x16xbf16, #tpu.memory_space<vmem>>, vector<1x16x16xbf16>
    %92 = vector.shape_cast %91 : vector<1x16x16xbf16> to vector<16x16xbf16>
    %93 = vector.extract_strided_slice %90 {offsets = [0, 0], sizes = [16, 16], strides = [1, 1]} : vector<160x16xbf16> to vector<16x16xbf16>
    %cst_70 = arith.constant dense<0.000000e+00> : vector<16x16xf32>
    %94 = tpu.matmul %92, %93, %cst_70 {dimension_numbers = #tpu.dot_dimension_numbers<[1], [0], [0], [1], [0, 0, 1, 1], [], []>} : vector<16x16xbf16>, vector<16x16xbf16>, vector<16x16xf32> -> vector<16x16xf32>
    %95 = vector.extract_strided_slice %90 {offsets = [16, 0], sizes = [16, 16], strides = [1, 1]} : vector<160x16xbf16> to vector<16x16xbf16>
    %cst_71 = arith.constant dense<0.000000e+00> : vector<16x16xf32>
    %96 = tpu.matmul %92, %95, %cst_71 {dimension_numbers = #tpu.dot_dimension_numbers<[1], [0], [0], [1], [0, 0, 1, 1], [], []>} : vector<16x16xbf16>, vector<16x16xbf16>, vector<16x16xf32> -> vector<16x16xf32>
    %97 = arith.mulf %94, %94 : vector<16x16xf32>
    %98 = arith.mulf %96, %96 : vector<16x16xf32>
    %99 = arith.mulf %94, %96 : vector<16x16xf32>
    %100 = vector.extract_strided_slice %90 {offsets = [32, 0], sizes = [16, 16], strides = [1, 1]} : vector<160x16xbf16> to vector<16x16xbf16>
    %cst_72 = arith.constant dense<0.000000e+00> : vector<16x16xf32>
    %101 = tpu.matmul %92, %100, %cst_72 {dimension_numbers = #tpu.dot_dimension_numbers<[1], [0], [0], [1], [0, 0, 1, 1], [], []>} : vector<16x16xbf16>, vector<16x16xbf16>, vector<16x16xf32> -> vector<16x16xf32>
    %102 = arith.subf %101, %97 : vector<16x16xf32>
    %103 = vector.extract_strided_slice %90 {offsets = [48, 0], sizes = [16, 16], strides = [1, 1]} : vector<160x16xbf16> to vector<16x16xbf16>
    %cst_73 = arith.constant dense<0.000000e+00> : vector<16x16xf32>
    %104 = tpu.matmul %92, %103, %cst_73 {dimension_numbers = #tpu.dot_dimension_numbers<[1], [0], [0], [1], [0, 0, 1, 1], [], []>} : vector<16x16xbf16>, vector<16x16xbf16>, vector<16x16xf32> -> vector<16x16xf32>
    %105 = arith.subf %104, %98 : vector<16x16xf32>
    %106 = vector.extract_strided_slice %90 {offsets = [64, 0], sizes = [16, 16], strides = [1, 1]} : vector<160x16xbf16> to vector<16x16xbf16>
    %cst_74 = arith.constant dense<0.000000e+00> : vector<16x16xf32>
    %107 = tpu.matmul %92, %106, %cst_74 {dimension_numbers = #tpu.dot_dimension_numbers<[1], [0], [0], [1], [0, 0, 1, 1], [], []>} : vector<16x16xbf16>, vector<16x16xbf16>, vector<16x16xf32> -> vector<16x16xf32>
    %108 = arith.subf %107, %99 : vector<16x16xf32>
    %cst_75 = arith.constant 2.000000e+00 : f32
    %109 = vector.broadcast %cst_75 : f32 to vector<16x16xf32>
    %110 = arith.mulf %109, %108 : vector<16x16xf32>
    %cst_76 = arith.constant 8.99999984E-4 : f32
    %111 = vector.broadcast %cst_76 : f32 to vector<16x16xf32>
    %112 = arith.addf %110, %111 : vector<16x16xf32>
    %113 = arith.addf %102, %105 : vector<16x16xf32>
    %cst_77 = arith.constant 8.99999984E-4 : f32
    %114 = vector.broadcast %cst_77 : f32 to vector<16x16xf32>
    %115 = arith.addf %113, %114 : vector<16x16xf32>
    %116 = tpu.reciprocal %115 {approx = true} : vector<16x16xf32> -> vector<16x16xf32>
    %117 = arith.mulf %112, %116 : vector<16x16xf32>
    %118 = arith.mulf %117, %117 : vector<16x16xf32>
    %c0_78 = arith.constant 0 : index
    %c0_79 = arith.constant 0 : index
    %119 = vector.load %arg7[%c0_78, %c0_79] : memref<16x16xf32, #tpu.memory_space<vmem>>, vector<16x16xf32>
    %120 = arith.mulf %119, %118 : vector<16x16xf32>
    %c0_80 = arith.constant 0 : index
    %c0_81 = arith.constant 0 : index
    %121 = vector.load %arg7[%c0_80, %c0_81] : memref<16x16xf32, #tpu.memory_space<vmem>>, vector<16x16xf32>
    tpu.vector_store %arg7[%c0_80, %c0_81], %120 {strides = array<i32>} : memref<16x16xf32, #tpu.memory_space<vmem>>, vector<16x16xf32>,
    %122 = vector.extract_strided_slice %90 {offsets = [80, 0], sizes = [16, 16], strides = [1, 1]} : vector<160x16xbf16> to vector<16x16xbf16>
    %cst_82 = arith.constant dense<0.000000e+00> : vector<16x16xf32>
    %123 = tpu.matmul %92, %122, %cst_82 {dimension_numbers = #tpu.dot_dimension_numbers<[1], [0], [0], [1], [0, 0, 1, 1], [], []>} : vector<16x16xbf16>, vector<16x16xbf16>, vector<16x16xf32> -> vector<16x16xf32>
    %124 = vector.extract_strided_slice %90 {offsets = [96, 0], sizes = [16, 16], strides = [1, 1]} : vector<160x16xbf16> to vector<16x16xbf16>
    %cst_83 = arith.constant dense<0.000000e+00> : vector<16x16xf32>
    %125 = tpu.matmul %92, %124, %cst_83 {dimension_numbers = #tpu.dot_dimension_numbers<[1], [0], [0], [1], [0, 0, 1, 1], [], []>} : vector<16x16xbf16>, vector<16x16xbf16>, vector<16x16xf32> -> vector<16x16xf32>
    %126 = arith.mulf %123, %123 : vector<16x16xf32>
    %127 = arith.mulf %125, %125 : vector<16x16xf32>
    %128 = arith.mulf %123, %125 : vector<16x16xf32>
    %129 = vector.extract_strided_slice %90 {offsets = [112, 0], sizes = [16, 16], strides = [1, 1]} : vector<160x16xbf16> to vector<16x16xbf16>
    %cst_84 = arith.constant dense<0.000000e+00> : vector<16x16xf32>
    %130 = tpu.matmul %92, %129, %cst_84 {dimension_numbers = #tpu.dot_dimension_numbers<[1], [0], [0], [1], [0, 0, 1, 1], [], []>} : vector<16x16xbf16>, vector<16x16xbf16>, vector<16x16xf32> -> vector<16x16xf32>
    %131 = arith.subf %130, %126 : vector<16x16xf32>
    %132 = vector.extract_strided_slice %90 {offsets = [128, 0], sizes = [16, 16], strides = [1, 1]} : vector<160x16xbf16> to vector<16x16xbf16>
    %cst_85 = arith.constant dense<0.000000e+00> : vector<16x16xf32>
    %133 = tpu.matmul %92, %132, %cst_85 {dimension_numbers = #tpu.dot_dimension_numbers<[1], [0], [0], [1], [0, 0, 1, 1], [], []>} : vector<16x16xbf16>, vector<16x16xbf16>, vector<16x16xf32> -> vector<16x16xf32>
    %134 = arith.subf %133, %127 : vector<16x16xf32>
    %135 = vector.extract_strided_slice %90 {offsets = [144, 0], sizes = [16, 16], strides = [1, 1]} : vector<160x16xbf16> to vector<16x16xbf16>
    %cst_86 = arith.constant dense<0.000000e+00> : vector<16x16xf32>
    %136 = tpu.matmul %92, %135, %cst_86 {dimension_numbers = #tpu.dot_dimension_numbers<[1], [0], [0], [1], [0, 0, 1, 1], [], []>} : vector<16x16xbf16>, vector<16x16xbf16>, vector<16x16xf32> -> vector<16x16xf32>
    %137 = arith.subf %136, %128 : vector<16x16xf32>
    %cst_87 = arith.constant 2.000000e+00 : f32
    %138 = vector.broadcast %cst_87 : f32 to vector<16x16xf32>
    %139 = arith.mulf %138, %137 : vector<16x16xf32>
    %cst_88 = arith.constant 8.99999984E-4 : f32
    %140 = vector.broadcast %cst_88 : f32 to vector<16x16xf32>
    %141 = arith.addf %139, %140 : vector<16x16xf32>
    %142 = arith.addf %131, %134 : vector<16x16xf32>
    %cst_89 = arith.constant 8.99999984E-4 : f32
    %143 = vector.broadcast %cst_89 : f32 to vector<16x16xf32>
    %144 = arith.addf %142, %143 : vector<16x16xf32>
    %145 = tpu.reciprocal %144 {approx = true} : vector<16x16xf32> -> vector<16x16xf32>
    %146 = arith.mulf %141, %145 : vector<16x16xf32>
    %c0_90 = arith.constant 0 : index
    %c0_91 = arith.constant 0 : index
    %147 = vector.load %arg7[%c0_90, %c0_91] : memref<16x16xf32, #tpu.memory_space<vmem>>, vector<16x16xf32>
    %148 = arith.mulf %147, %146 : vector<16x16xf32>
    %c0_92 = arith.constant 0 : index
    %c0_93 = arith.constant 0 : index
    %149 = vector.load %arg7[%c0_92, %c0_93] : memref<16x16xf32, #tpu.memory_space<vmem>>, vector<16x16xf32>
    tpu.vector_store %arg7[%c0_92, %c0_93], %148 {strides = array<i32>} : memref<16x16xf32, #tpu.memory_space<vmem>>, vector<16x16xf32>,
    %c0_94 = arith.constant 0 : index
    %c1_95 = arith.constant 1 : index
    %c0_96 = arith.constant 0 : index
    %c0_97 = arith.constant 0 : index
    %150 = vector.load %arg1[%c0_94, %c1_95, %c0_96, %c0_97] : memref<1x3x16x16xf32, #tpu.memory_space<vmem>>, vector<1x1x16x16xf32>
    %151 = vector.shape_cast %150 : vector<1x1x16x16xf32> to vector<16x16xf32>
    %c0_98 = arith.constant 0 : index
    %c1_99 = arith.constant 1 : index
    %c0_100 = arith.constant 0 : index
    %c0_101 = arith.constant 0 : index
    %152 = vector.load %arg2[%c0_98, %c1_99, %c0_100, %c0_101] : memref<1x3x16x16xf32, #tpu.memory_space<vmem>>, vector<1x1x16x16xf32>
    %153 = vector.shape_cast %152 : vector<1x1x16x16xf32> to vector<16x16xf32>
    %154 = arith.mulf %151, %151 : vector<16x16xf32>
    %155 = arith.mulf %153, %153 : vector<16x16xf32>
    %156 = arith.mulf %151, %153 : vector<16x16xf32>
    %157 = arith.truncf %151 : vector<16x16xf32> to vector<16x16xbf16>
    %c0_102 = arith.constant 0 : index
    %c0_103 = arith.constant 0 : index
    %158 = vector.load %arg6[%c0_102, %c0_103] : memref<160x16xbf16, #tpu.memory_space<vmem>>, vector<16x16xbf16>
    tpu.vector_store %arg6[%c0_102, %c0_103], %157 {strides = array<i32>} : memref<160x16xbf16, #tpu.memory_space<vmem>>, vector<16x16xbf16>,
    %159 = arith.truncf %153 : vector<16x16xf32> to vector<16x16xbf16>
    %c16_104 = arith.constant 16 : index
    %c0_105 = arith.constant 0 : index
    %160 = vector.load %arg6[%c16_104, %c0_105] : memref<160x16xbf16, #tpu.memory_space<vmem>>, vector<16x16xbf16>
    tpu.vector_store %arg6[%c16_104, %c0_105], %159 {strides = array<i32>} : memref<160x16xbf16, #tpu.memory_space<vmem>>, vector<16x16xbf16>,
    %161 = arith.truncf %154 : vector<16x16xf32> to vector<16x16xbf16>
    %c32_106 = arith.constant 32 : index
    %c0_107 = arith.constant 0 : index
    %162 = vector.load %arg6[%c32_106, %c0_107] : memref<160x16xbf16, #tpu.memory_space<vmem>>, vector<16x16xbf16>
    tpu.vector_store %arg6[%c32_106, %c0_107], %161 {strides = array<i32>} : memref<160x16xbf16, #tpu.memory_space<vmem>>, vector<16x16xbf16>,
    %163 = arith.truncf %155 : vector<16x16xf32> to vector<16x16xbf16>
    %c48_108 = arith.constant 48 : index
    %c0_109 = arith.constant 0 : index
    %164 = vector.load %arg6[%c48_108, %c0_109] : memref<160x16xbf16, #tpu.memory_space<vmem>>, vector<16x16xbf16>
    tpu.vector_store %arg6[%c48_108, %c0_109], %163 {strides = array<i32>} : memref<160x16xbf16, #tpu.memory_space<vmem>>, vector<16x16xbf16>,
    %165 = arith.truncf %156 : vector<16x16xf32> to vector<16x16xbf16>
    %c64_110 = arith.constant 64 : index
    %c0_111 = arith.constant 0 : index
    %166 = vector.load %arg6[%c64_110, %c0_111] : memref<160x16xbf16, #tpu.memory_space<vmem>>, vector<16x16xbf16>
    tpu.vector_store %arg6[%c64_110, %c0_111], %165 {strides = array<i32>} : memref<160x16xbf16, #tpu.memory_space<vmem>>, vector<16x16xbf16>,
    %c2 = arith.constant 2 : index
    %c0_112 = arith.constant 0 : index
    %c0_113 = arith.constant 0 : index
    %167 = vector.load %arg3[%c2, %c0_112, %c0_113] : memref<5x16x16xbf16, #tpu.memory_space<vmem>>, vector<1x16x16xbf16>
    %168 = vector.shape_cast %167 : vector<1x16x16xbf16> to vector<16x16xbf16>
    %c0_114 = arith.constant 0 : index
    %c0_115 = arith.constant 0 : index
    %169 = vector.load %arg6[%c0_114, %c0_115] : memref<160x16xbf16, #tpu.memory_space<vmem>>, vector<80x16xbf16>
    %cst_116 = arith.constant dense<0.000000e+00> : vector<80x16xf32>
    %170 = tpu.matmul %169, %168, %cst_116 {dimension_numbers = #tpu.dot_dimension_numbers<[1], [0], [0], [1], [0, 0, 1, 1], [], []>} : vector<80x16xbf16>, vector<16x16xbf16>, vector<80x16xf32> -> vector<80x16xf32>
    %171 = arith.truncf %170 : vector<80x16xf32> to vector<80x16xbf16>
    %c2_117 = arith.constant 2 : index
    %c0_118 = arith.constant 0 : index
    %c0_119 = arith.constant 0 : index
    %172 = vector.load %arg4[%c2_117, %c0_118, %c0_119] : memref<5x16x16xbf16, #tpu.memory_space<vmem>>, vector<1x16x16xbf16>
    %173 = vector.shape_cast %172 : vector<1x16x16xbf16> to vector<16x16xbf16>
    %174 = vector.extract_strided_slice %171 {offsets = [0, 0], sizes = [16, 16], strides = [1, 1]} : vector<80x16xbf16> to vector<16x16xbf16>
    %cst_120 = arith.constant dense<0.000000e+00> : vector<16x16xf32>
    %175 = tpu.matmul %173, %174, %cst_120 {dimension_numbers = #tpu.dot_dimension_numbers<[1], [0], [0], [1], [0, 0, 1, 1], [], []>} : vector<16x16xbf16>, vector<16x16xbf16>, vector<16x16xf32> -> vector<16x16xf32>
    %176 = vector.extract_strided_slice %171 {offsets = [16, 0], sizes = [16, 16], strides = [1, 1]} : vector<80x16xbf16> to vector<16x16xbf16>
    %cst_121 = arith.constant dense<0.000000e+00> : vector<16x16xf32>
    %177 = tpu.matmul %173, %176, %cst_121 {dimension_numbers = #tpu.dot_dimension_numbers<[1], [0], [0], [1], [0, 0, 1, 1], [], []>} : vector<16x16xbf16>, vector<16x16xbf16>, vector<16x16xf32> -> vector<16x16xf32>
    %178 = arith.mulf %175, %175 : vector<16x16xf32>
    %179 = arith.mulf %177, %177 : vector<16x16xf32>
    %180 = arith.mulf %175, %177 : vector<16x16xf32>
    %181 = vector.extract_strided_slice %171 {offsets = [32, 0], sizes = [16, 16], strides = [1, 1]} : vector<80x16xbf16> to vector<16x16xbf16>
    %cst_122 = arith.constant dense<0.000000e+00> : vector<16x16xf32>
    %182 = tpu.matmul %173, %181, %cst_122 {dimension_numbers = #tpu.dot_dimension_numbers<[1], [0], [0], [1], [0, 0, 1, 1], [], []>} : vector<16x16xbf16>, vector<16x16xbf16>, vector<16x16xf32> -> vector<16x16xf32>
    %183 = arith.subf %182, %178 : vector<16x16xf32>
    %184 = vector.extract_strided_slice %171 {offsets = [48, 0], sizes = [16, 16], strides = [1, 1]} : vector<80x16xbf16> to vector<16x16xbf16>
    %cst_123 = arith.constant dense<0.000000e+00> : vector<16x16xf32>
    %185 = tpu.matmul %173, %184, %cst_123 {dimension_numbers = #tpu.dot_dimension_numbers<[1], [0], [0], [1], [0, 0, 1, 1], [], []>} : vector<16x16xbf16>, vector<16x16xbf16>, vector<16x16xf32> -> vector<16x16xf32>
    %186 = arith.subf %185, %179 : vector<16x16xf32>
    %187 = vector.extract_strided_slice %171 {offsets = [64, 0], sizes = [16, 16], strides = [1, 1]} : vector<80x16xbf16> to vector<16x16xbf16>
    %cst_124 = arith.constant dense<0.000000e+00> : vector<16x16xf32>
    %188 = tpu.matmul %173, %187, %cst_124 {dimension_numbers = #tpu.dot_dimension_numbers<[1], [0], [0], [1], [0, 0, 1, 1], [], []>} : vector<16x16xbf16>, vector<16x16xbf16>, vector<16x16xf32> -> vector<16x16xf32>
    %189 = arith.subf %188, %180 : vector<16x16xf32>
    %cst_125 = arith.constant 2.000000e+00 : f32
    %190 = vector.broadcast %cst_125 : f32 to vector<16x16xf32>
    %191 = arith.mulf %190, %189 : vector<16x16xf32>
    %cst_126 = arith.constant 8.99999984E-4 : f32
    %192 = vector.broadcast %cst_126 : f32 to vector<16x16xf32>
    %193 = arith.addf %191, %192 : vector<16x16xf32>
    %194 = arith.addf %183, %186 : vector<16x16xf32>
    %cst_127 = arith.constant 8.99999984E-4 : f32
    %195 = vector.broadcast %cst_127 : f32 to vector<16x16xf32>
    %196 = arith.addf %194, %195 : vector<16x16xf32>
    %197 = tpu.reciprocal %196 {approx = true} : vector<16x16xf32> -> vector<16x16xf32>
    %198 = arith.mulf %193, %197 : vector<16x16xf32>
    %199 = arith.mulf %198, %198 : vector<16x16xf32>
    %200 = arith.mulf %199, %198 : vector<16x16xf32>
    %c0_128 = arith.constant 0 : index
    %c0_129 = arith.constant 0 : index
    %201 = vector.load %arg7[%c0_128, %c0_129] : memref<16x16xf32, #tpu.memory_space<vmem>>, vector<16x16xf32>
    %202 = arith.mulf %201, %200 : vector<16x16xf32>
    %c0_130 = arith.constant 0 : index
    %c0_131 = arith.constant 0 : index
    %203 = vector.load %arg7[%c0_130, %c0_131] : memref<16x16xf32, #tpu.memory_space<vmem>>, vector<16x16xf32>
    tpu.vector_store %arg7[%c0_130, %c0_131], %202 {strides = array<i32>} : memref<16x16xf32, #tpu.memory_space<vmem>>, vector<16x16xf32>,
    %c0_132 = arith.constant 0 : index
    %c1_133 = arith.constant 1 : index
    %c0_134 = arith.constant 0 : index
    %c0_135 = arith.constant 0 : index
    %204 = vector.load %arg1[%c0_132, %c1_133, %c0_134, %c0_135] : memref<1x3x16x16xf32, #tpu.memory_space<vmem>>, vector<1x1x16x16xf32>
    %205 = vector.shape_cast %204 : vector<1x1x16x16xf32> to vector<16x16xf32>
    %c0_136 = arith.constant 0 : index
    %c1_137 = arith.constant 1 : index
    %c0_138 = arith.constant 0 : index
    %c0_139 = arith.constant 0 : index
    %206 = vector.load %arg2[%c0_136, %c1_137, %c0_138, %c0_139] : memref<1x3x16x16xf32, #tpu.memory_space<vmem>>, vector<1x1x16x16xf32>
    %207 = vector.shape_cast %206 : vector<1x1x16x16xf32> to vector<16x16xf32>
    %208 = arith.mulf %205, %205 : vector<16x16xf32>
    %209 = arith.mulf %207, %207 : vector<16x16xf32>
    %210 = arith.mulf %205, %207 : vector<16x16xf32>
    %211 = arith.truncf %205 : vector<16x16xf32> to vector<16x16xbf16>
    %c0_140 = arith.constant 0 : index
    %c0_141 = arith.constant 0 : index
    %212 = vector.load %arg6[%c0_140, %c0_141] : memref<160x16xbf16, #tpu.memory_space<vmem>>, vector<16x16xbf16>
    tpu.vector_store %arg6[%c0_140, %c0_141], %211 {strides = array<i32>} : memref<160x16xbf16, #tpu.memory_space<vmem>>, vector<16x16xbf16>,
    %213 = arith.truncf %207 : vector<16x16xf32> to vector<16x16xbf16>
    %c16_142 = arith.constant 16 : index
    %c0_143 = arith.constant 0 : index
    %214 = vector.load %arg6[%c16_142, %c0_143] : memref<160x16xbf16, #tpu.memory_space<vmem>>, vector<16x16xbf16>
    tpu.vector_store %arg6[%c16_142, %c0_143], %213 {strides = array<i32>} : memref<160x16xbf16, #tpu.memory_space<vmem>>, vector<16x16xbf16>,
    %215 = arith.truncf %208 : vector<16x16xf32> to vector<16x16xbf16>
    %c32_144 = arith.constant 32 : index
    %c0_145 = arith.constant 0 : index
    %216 = vector.load %arg6[%c32_144, %c0_145] : memref<160x16xbf16, #tpu.memory_space<vmem>>, vector<16x16xbf16>
    tpu.vector_store %arg6[%c32_144, %c0_145], %215 {strides = array<i32>} : memref<160x16xbf16, #tpu.memory_space<vmem>>, vector<16x16xbf16>,
    %217 = arith.truncf %209 : vector<16x16xf32> to vector<16x16xbf16>
    %c48_146 = arith.constant 48 : index
    %c0_147 = arith.constant 0 : index
    %218 = vector.load %arg6[%c48_146, %c0_147] : memref<160x16xbf16, #tpu.memory_space<vmem>>, vector<16x16xbf16>
    tpu.vector_store %arg6[%c48_146, %c0_147], %217 {strides = array<i32>} : memref<160x16xbf16, #tpu.memory_space<vmem>>, vector<16x16xbf16>,
    %219 = arith.truncf %210 : vector<16x16xf32> to vector<16x16xbf16>
    %c64_148 = arith.constant 64 : index
    %c0_149 = arith.constant 0 : index
    %220 = vector.load %arg6[%c64_148, %c0_149] : memref<160x16xbf16, #tpu.memory_space<vmem>>, vector<16x16xbf16>
    tpu.vector_store %arg6[%c64_148, %c0_149], %219 {strides = array<i32>} : memref<160x16xbf16, #tpu.memory_space<vmem>>, vector<16x16xbf16>,
    %c0_150 = arith.constant 0 : index
    %c2_151 = arith.constant 2 : index
    %c0_152 = arith.constant 0 : index
    %c0_153 = arith.constant 0 : index
    %221 = vector.load %arg1[%c0_150, %c2_151, %c0_152, %c0_153] : memref<1x3x16x16xf32, #tpu.memory_space<vmem>>, vector<1x1x16x16xf32>
    %222 = vector.shape_cast %221 : vector<1x1x16x16xf32> to vector<16x16xf32>
    %c0_154 = arith.constant 0 : index
    %c2_155 = arith.constant 2 : index
    %c0_156 = arith.constant 0 : index
    %c0_157 = arith.constant 0 : index
    %223 = vector.load %arg2[%c0_154, %c2_155, %c0_156, %c0_157] : memref<1x3x16x16xf32, #tpu.memory_space<vmem>>, vector<1x1x16x16xf32>
    %224 = vector.shape_cast %223 : vector<1x1x16x16xf32> to vector<16x16xf32>
    %225 = arith.mulf %222, %222 : vector<16x16xf32>
    %226 = arith.mulf %224, %224 : vector<16x16xf32>
    %227 = arith.mulf %222, %224 : vector<16x16xf32>
    %228 = arith.truncf %222 : vector<16x16xf32> to vector<16x16xbf16>
    %c80_158 = arith.constant 80 : index
    %c0_159 = arith.constant 0 : index
    %229 = vector.load %arg6[%c80_158, %c0_159] : memref<160x16xbf16, #tpu.memory_space<vmem>>, vector<16x16xbf16>
    tpu.vector_store %arg6[%c80_158, %c0_159], %228 {strides = array<i32>} : memref<160x16xbf16, #tpu.memory_space<vmem>>, vector<16x16xbf16>,
    %230 = arith.truncf %224 : vector<16x16xf32> to vector<16x16xbf16>
    %c96_160 = arith.constant 96 : index
    %c0_161 = arith.constant 0 : index
    %231 = vector.load %arg6[%c96_160, %c0_161] : memref<160x16xbf16, #tpu.memory_space<vmem>>, vector<16x16xbf16>
    tpu.vector_store %arg6[%c96_160, %c0_161], %230 {strides = array<i32>} : memref<160x16xbf16, #tpu.memory_space<vmem>>, vector<16x16xbf16>,
    %232 = arith.truncf %225 : vector<16x16xf32> to vector<16x16xbf16>
    %c112_162 = arith.constant 112 : index
    %c0_163 = arith.constant 0 : index
    %233 = vector.load %arg6[%c112_162, %c0_163] : memref<160x16xbf16, #tpu.memory_space<vmem>>, vector<16x16xbf16>
    tpu.vector_store %arg6[%c112_162, %c0_163], %232 {strides = array<i32>} : memref<160x16xbf16, #tpu.memory_space<vmem>>, vector<16x16xbf16>,
    %234 = arith.truncf %226 : vector<16x16xf32> to vector<16x16xbf16>
    %c128_164 = arith.constant 128 : index
    %c0_165 = arith.constant 0 : index
    %235 = vector.load %arg6[%c128_164, %c0_165] : memref<160x16xbf16, #tpu.memory_space<vmem>>, vector<16x16xbf16>
    tpu.vector_store %arg6[%c128_164, %c0_165], %234 {strides = array<i32>} : memref<160x16xbf16, #tpu.memory_space<vmem>>, vector<16x16xbf16>,
    %236 = arith.truncf %227 : vector<16x16xf32> to vector<16x16xbf16>
    %c144_166 = arith.constant 144 : index
    %c0_167 = arith.constant 0 : index
    %237 = vector.load %arg6[%c144_166, %c0_167] : memref<160x16xbf16, #tpu.memory_space<vmem>>, vector<16x16xbf16>
    tpu.vector_store %arg6[%c144_166, %c0_167], %236 {strides = array<i32>} : memref<160x16xbf16, #tpu.memory_space<vmem>>, vector<16x16xbf16>,
    %c3 = arith.constant 3 : index
    %c0_168 = arith.constant 0 : index
    %c0_169 = arith.constant 0 : index
    %238 = vector.load %arg3[%c3, %c0_168, %c0_169] : memref<5x16x16xbf16, #tpu.memory_space<vmem>>, vector<1x16x16xbf16>
    %239 = vector.shape_cast %238 : vector<1x16x16xbf16> to vector<16x16xbf16>
    %c0_170 = arith.constant 0 : index
    %c0_171 = arith.constant 0 : index
    %240 = vector.load %arg6[%c0_170, %c0_171] : memref<160x16xbf16, #tpu.memory_space<vmem>>, vector<160x16xbf16>
    %cst_172 = arith.constant dense<0.000000e+00> : vector<160x16xf32>
    %241 = tpu.matmul %240, %239, %cst_172 {dimension_numbers = #tpu.dot_dimension_numbers<[1], [0], [0], [1], [0, 0, 1, 1], [], []>} : vector<160x16xbf16>, vector<16x16xbf16>, vector<160x16xf32> -> vector<160x16xf32>
    %242 = arith.truncf %241 : vector<160x16xf32> to vector<160x16xbf16>
    %c3_173 = arith.constant 3 : index
    %c0_174 = arith.constant 0 : index
    %c0_175 = arith.constant 0 : index
    %243 = vector.load %arg4[%c3_173, %c0_174, %c0_175] : memref<5x16x16xbf16, #tpu.memory_space<vmem>>, vector<1x16x16xbf16>
    %244 = vector.shape_cast %243 : vector<1x16x16xbf16> to vector<16x16xbf16>
    %245 = vector.extract_strided_slice %242 {offsets = [0, 0], sizes = [16, 16], strides = [1, 1]} : vector<160x16xbf16> to vector<16x16xbf16>
    %cst_176 = arith.constant dense<0.000000e+00> : vector<16x16xf32>
    %246 = tpu.matmul %244, %245, %cst_176 {dimension_numbers = #tpu.dot_dimension_numbers<[1], [0], [0], [1], [0, 0, 1, 1], [], []>} : vector<16x16xbf16>, vector<16x16xbf16>, vector<16x16xf32> -> vector<16x16xf32>
    %247 = vector.extract_strided_slice %242 {offsets = [16, 0], sizes = [16, 16], strides = [1, 1]} : vector<160x16xbf16> to vector<16x16xbf16>
    %cst_177 = arith.constant dense<0.000000e+00> : vector<16x16xf32>
    %248 = tpu.matmul %244, %247, %cst_177 {dimension_numbers = #tpu.dot_dimension_numbers<[1], [0], [0], [1], [0, 0, 1, 1], [], []>} : vector<16x16xbf16>, vector<16x16xbf16>, vector<16x16xf32> -> vector<16x16xf32>
    %249 = arith.mulf %246, %246 : vector<16x16xf32>
    %250 = arith.mulf %248, %248 : vector<16x16xf32>
    %251 = arith.mulf %246, %248 : vector<16x16xf32>
    %252 = vector.extract_strided_slice %242 {offsets = [32, 0], sizes = [16, 16], strides = [1, 1]} : vector<160x16xbf16> to vector<16x16xbf16>
    %cst_178 = arith.constant dense<0.000000e+00> : vector<16x16xf32>
    %253 = tpu.matmul %244, %252, %cst_178 {dimension_numbers = #tpu.dot_dimension_numbers<[1], [0], [0], [1], [0, 0, 1, 1], [], []>} : vector<16x16xbf16>, vector<16x16xbf16>, vector<16x16xf32> -> vector<16x16xf32>
    %254 = arith.subf %253, %249 : vector<16x16xf32>
    %255 = vector.extract_strided_slice %242 {offsets = [48, 0], sizes = [16, 16], strides = [1, 1]} : vector<160x16xbf16> to vector<16x16xbf16>
    %cst_179 = arith.constant dense<0.000000e+00> : vector<16x16xf32>
    %256 = tpu.matmul %244, %255, %cst_179 {dimension_numbers = #tpu.dot_dimension_numbers<[1], [0], [0], [1], [0, 0, 1, 1], [], []>} : vector<16x16xbf16>, vector<16x16xbf16>, vector<16x16xf32> -> vector<16x16xf32>
    %257 = arith.subf %256, %250 : vector<16x16xf32>
    %258 = vector.extract_strided_slice %242 {offsets = [64, 0], sizes = [16, 16], strides = [1, 1]} : vector<160x16xbf16> to vector<16x16xbf16>
    %cst_180 = arith.constant dense<0.000000e+00> : vector<16x16xf32>
    %259 = tpu.matmul %244, %258, %cst_180 {dimension_numbers = #tpu.dot_dimension_numbers<[1], [0], [0], [1], [0, 0, 1, 1], [], []>} : vector<16x16xbf16>, vector<16x16xbf16>, vector<16x16xf32> -> vector<16x16xf32>
    %260 = arith.subf %259, %251 : vector<16x16xf32>
    %cst_181 = arith.constant 2.000000e+00 : f32
    %261 = vector.broadcast %cst_181 : f32 to vector<16x16xf32>
    %262 = arith.mulf %261, %260 : vector<16x16xf32>
    %cst_182 = arith.constant 8.99999984E-4 : f32
    %263 = vector.broadcast %cst_182 : f32 to vector<16x16xf32>
    %264 = arith.addf %262, %263 : vector<16x16xf32>
    %265 = arith.addf %254, %257 : vector<16x16xf32>
    %cst_183 = arith.constant 8.99999984E-4 : f32
    %266 = vector.broadcast %cst_183 : f32 to vector<16x16xf32>
    %267 = arith.addf %265, %266 : vector<16x16xf32>
    %268 = tpu.reciprocal %267 {approx = true} : vector<16x16xf32> -> vector<16x16xf32>
    %269 = arith.mulf %264, %268 : vector<16x16xf32>
    %c0_184 = arith.constant 0 : index
    %c0_185 = arith.constant 0 : index
    %270 = vector.load %arg7[%c0_184, %c0_185] : memref<16x16xf32, #tpu.memory_space<vmem>>, vector<16x16xf32>
    %271 = arith.mulf %270, %269 : vector<16x16xf32>
    %c0_186 = arith.constant 0 : index
    %c0_187 = arith.constant 0 : index
    %272 = vector.load %arg7[%c0_186, %c0_187] : memref<16x16xf32, #tpu.memory_space<vmem>>, vector<16x16xf32>
    tpu.vector_store %arg7[%c0_186, %c0_187], %271 {strides = array<i32>} : memref<16x16xf32, #tpu.memory_space<vmem>>, vector<16x16xf32>,
    %273 = vector.extract_strided_slice %242 {offsets = [80, 0], sizes = [16, 16], strides = [1, 1]} : vector<160x16xbf16> to vector<16x16xbf16>
    %cst_188 = arith.constant dense<0.000000e+00> : vector<16x16xf32>
    %274 = tpu.matmul %244, %273, %cst_188 {dimension_numbers = #tpu.dot_dimension_numbers<[1], [0], [0], [1], [0, 0, 1, 1], [], []>} : vector<16x16xbf16>, vector<16x16xbf16>, vector<16x16xf32> -> vector<16x16xf32>
    %275 = vector.extract_strided_slice %242 {offsets = [96, 0], sizes = [16, 16], strides = [1, 1]} : vector<160x16xbf16> to vector<16x16xbf16>
    %cst_189 = arith.constant dense<0.000000e+00> : vector<16x16xf32>
    %276 = tpu.matmul %244, %275, %cst_189 {dimension_numbers = #tpu.dot_dimension_numbers<[1], [0], [0], [1], [0, 0, 1, 1], [], []>} : vector<16x16xbf16>, vector<16x16xbf16>, vector<16x16xf32> -> vector<16x16xf32>
    %277 = arith.mulf %274, %274 : vector<16x16xf32>
    %278 = arith.mulf %276, %276 : vector<16x16xf32>
    %279 = arith.mulf %274, %276 : vector<16x16xf32>
    %280 = vector.extract_strided_slice %242 {offsets = [112, 0], sizes = [16, 16], strides = [1, 1]} : vector<160x16xbf16> to vector<16x16xbf16>
    %cst_190 = arith.constant dense<0.000000e+00> : vector<16x16xf32>
    %281 = tpu.matmul %244, %280, %cst_190 {dimension_numbers = #tpu.dot_dimension_numbers<[1], [0], [0], [1], [0, 0, 1, 1], [], []>} : vector<16x16xbf16>, vector<16x16xbf16>, vector<16x16xf32> -> vector<16x16xf32>
    %282 = arith.subf %281, %277 : vector<16x16xf32>
    %283 = vector.extract_strided_slice %242 {offsets = [128, 0], sizes = [16, 16], strides = [1, 1]} : vector<160x16xbf16> to vector<16x16xbf16>
    %cst_191 = arith.constant dense<0.000000e+00> : vector<16x16xf32>
    %284 = tpu.matmul %244, %283, %cst_191 {dimension_numbers = #tpu.dot_dimension_numbers<[1], [0], [0], [1], [0, 0, 1, 1], [], []>} : vector<16x16xbf16>, vector<16x16xbf16>, vector<16x16xf32> -> vector<16x16xf32>
    %285 = arith.subf %284, %278 : vector<16x16xf32>
    %286 = vector.extract_strided_slice %242 {offsets = [144, 0], sizes = [16, 16], strides = [1, 1]} : vector<160x16xbf16> to vector<16x16xbf16>
    %cst_192 = arith.constant dense<0.000000e+00> : vector<16x16xf32>
    %287 = tpu.matmul %244, %286, %cst_192 {dimension_numbers = #tpu.dot_dimension_numbers<[1], [0], [0], [1], [0, 0, 1, 1], [], []>} : vector<16x16xbf16>, vector<16x16xbf16>, vector<16x16xf32> -> vector<16x16xf32>
    %288 = arith.subf %287, %279 : vector<16x16xf32>
    %cst_193 = arith.constant 2.000000e+00 : f32
    %289 = vector.broadcast %cst_193 : f32 to vector<16x16xf32>
    %290 = arith.mulf %289, %288 : vector<16x16xf32>
    %cst_194 = arith.constant 8.99999984E-4 : f32
    %291 = vector.broadcast %cst_194 : f32 to vector<16x16xf32>
    %292 = arith.addf %290, %291 : vector<16x16xf32>
    %293 = arith.addf %282, %285 : vector<16x16xf32>
    %cst_195 = arith.constant 8.99999984E-4 : f32
    %294 = vector.broadcast %cst_195 : f32 to vector<16x16xf32>
    %295 = arith.addf %293, %294 : vector<16x16xf32>
    %296 = tpu.reciprocal %295 {approx = true} : vector<16x16xf32> -> vector<16x16xf32>
    %297 = arith.mulf %292, %296 : vector<16x16xf32>
    %298 = arith.mulf %297, %297 : vector<16x16xf32>
    %c0_196 = arith.constant 0 : index
    %c0_197 = arith.constant 0 : index
    %299 = vector.load %arg7[%c0_196, %c0_197] : memref<16x16xf32, #tpu.memory_space<vmem>>, vector<16x16xf32>
    %300 = arith.mulf %299, %298 : vector<16x16xf32>
    %c0_198 = arith.constant 0 : index
    %c0_199 = arith.constant 0 : index
    %301 = vector.load %arg7[%c0_198, %c0_199] : memref<16x16xf32, #tpu.memory_space<vmem>>, vector<16x16xf32>
    tpu.vector_store %arg7[%c0_198, %c0_199], %300 {strides = array<i32>} : memref<16x16xf32, #tpu.memory_space<vmem>>, vector<16x16xf32>,
    %c0_200 = arith.constant 0 : index
    %c2_201 = arith.constant 2 : index
    %c0_202 = arith.constant 0 : index
    %c0_203 = arith.constant 0 : index
    %302 = vector.load %arg1[%c0_200, %c2_201, %c0_202, %c0_203] : memref<1x3x16x16xf32, #tpu.memory_space<vmem>>, vector<1x1x16x16xf32>
    %303 = vector.shape_cast %302 : vector<1x1x16x16xf32> to vector<16x16xf32>
    %c0_204 = arith.constant 0 : index
    %c2_205 = arith.constant 2 : index
    %c0_206 = arith.constant 0 : index
    %c0_207 = arith.constant 0 : index
    %304 = vector.load %arg2[%c0_204, %c2_205, %c0_206, %c0_207] : memref<1x3x16x16xf32, #tpu.memory_space<vmem>>, vector<1x1x16x16xf32>
    %305 = vector.shape_cast %304 : vector<1x1x16x16xf32> to vector<16x16xf32>
    %306 = arith.mulf %303, %303 : vector<16x16xf32>
    %307 = arith.mulf %305, %305 : vector<16x16xf32>
    %308 = arith.mulf %303, %305 : vector<16x16xf32>
    %309 = arith.truncf %303 : vector<16x16xf32> to vector<16x16xbf16>
    %c0_208 = arith.constant 0 : index
    %c0_209 = arith.constant 0 : index
    %310 = vector.load %arg6[%c0_208, %c0_209] : memref<160x16xbf16, #tpu.memory_space<vmem>>, vector<16x16xbf16>
    tpu.vector_store %arg6[%c0_208, %c0_209], %309 {strides = array<i32>} : memref<160x16xbf16, #tpu.memory_space<vmem>>, vector<16x16xbf16>,
    %311 = arith.truncf %305 : vector<16x16xf32> to vector<16x16xbf16>
    %c16_210 = arith.constant 16 : index
    %c0_211 = arith.constant 0 : index
    %312 = vector.load %arg6[%c16_210, %c0_211] : memref<160x16xbf16, #tpu.memory_space<vmem>>, vector<16x16xbf16>
    tpu.vector_store %arg6[%c16_210, %c0_211], %311 {strides = array<i32>} : memref<160x16xbf16, #tpu.memory_space<vmem>>, vector<16x16xbf16>,
    %313 = arith.truncf %306 : vector<16x16xf32> to vector<16x16xbf16>
    %c32_212 = arith.constant 32 : index
    %c0_213 = arith.constant 0 : index
    %314 = vector.load %arg6[%c32_212, %c0_213] : memref<160x16xbf16, #tpu.memory_space<vmem>>, vector<16x16xbf16>
    tpu.vector_store %arg6[%c32_212, %c0_213], %313 {strides = array<i32>} : memref<160x16xbf16, #tpu.memory_space<vmem>>, vector<16x16xbf16>,
    %315 = arith.truncf %307 : vector<16x16xf32> to vector<16x16xbf16>
    %c48_214 = arith.constant 48 : index
    %c0_215 = arith.constant 0 : index
    %316 = vector.load %arg6[%c48_214, %c0_215] : memref<160x16xbf16, #tpu.memory_space<vmem>>, vector<16x16xbf16>
    tpu.vector_store %arg6[%c48_214, %c0_215], %315 {strides = array<i32>} : memref<160x16xbf16, #tpu.memory_space<vmem>>, vector<16x16xbf16>,
    %317 = arith.truncf %308 : vector<16x16xf32> to vector<16x16xbf16>
    %c64_216 = arith.constant 64 : index
    %c0_217 = arith.constant 0 : index
    %318 = vector.load %arg6[%c64_216, %c0_217] : memref<160x16xbf16, #tpu.memory_space<vmem>>, vector<16x16xbf16>
    tpu.vector_store %arg6[%c64_216, %c0_217], %317 {strides = array<i32>} : memref<160x16xbf16, #tpu.memory_space<vmem>>, vector<16x16xbf16>,
    %c0_218 = arith.constant 0 : index
    %c0_219 = arith.constant 0 : index
    %c0_220 = arith.constant 0 : index
    %c0_221 = arith.constant 0 : index
    %319 = vector.load %arg1[%c0_218, %c0_219, %c0_220, %c0_221] : memref<1x3x16x16xf32, #tpu.memory_space<vmem>>, vector<1x1x16x16xf32>
    %320 = vector.shape_cast %319 : vector<1x1x16x16xf32> to vector<16x16xf32>
    %c0_222 = arith.constant 0 : index
    %c0_223 = arith.constant 0 : index
    %c0_224 = arith.constant 0 : index
    %c0_225 = arith.constant 0 : index
    %321 = vector.load %arg2[%c0_222, %c0_223, %c0_224, %c0_225] : memref<1x3x16x16xf32, #tpu.memory_space<vmem>>, vector<1x1x16x16xf32>
    %322 = vector.shape_cast %321 : vector<1x1x16x16xf32> to vector<16x16xf32>
    %323 = arith.subf %320, %322 : vector<16x16xf32>
    %324 = math.absf %323 : vector<16x16xf32>
    %325 = arith.truncf %324 : vector<16x16xf32> to vector<16x16xbf16>
    %c80_226 = arith.constant 80 : index
    %c0_227 = arith.constant 0 : index
    %326 = vector.load %arg6[%c80_226, %c0_227] : memref<160x16xbf16, #tpu.memory_space<vmem>>, vector<16x16xbf16>
    tpu.vector_store %arg6[%c80_226, %c0_227], %325 {strides = array<i32>} : memref<160x16xbf16, #tpu.memory_space<vmem>>, vector<16x16xbf16>,
    %c0_228 = arith.constant 0 : index
    %c1_229 = arith.constant 1 : index
    %c0_230 = arith.constant 0 : index
    %c0_231 = arith.constant 0 : index
    %327 = vector.load %arg1[%c0_228, %c1_229, %c0_230, %c0_231] : memref<1x3x16x16xf32, #tpu.memory_space<vmem>>, vector<1x1x16x16xf32>
    %328 = vector.shape_cast %327 : vector<1x1x16x16xf32> to vector<16x16xf32>
    %c0_232 = arith.constant 0 : index
    %c1_233 = arith.constant 1 : index
    %c0_234 = arith.constant 0 : index
    %c0_235 = arith.constant 0 : index
    %329 = vector.load %arg2[%c0_232, %c1_233, %c0_234, %c0_235] : memref<1x3x16x16xf32, #tpu.memory_space<vmem>>, vector<1x1x16x16xf32>
    %330 = vector.shape_cast %329 : vector<1x1x16x16xf32> to vector<16x16xf32>
    %331 = arith.subf %328, %330 : vector<16x16xf32>
    %332 = math.absf %331 : vector<16x16xf32>
    %333 = arith.truncf %332 : vector<16x16xf32> to vector<16x16xbf16>
    %c96_236 = arith.constant 96 : index
    %c0_237 = arith.constant 0 : index
    %334 = vector.load %arg6[%c96_236, %c0_237] : memref<160x16xbf16, #tpu.memory_space<vmem>>, vector<16x16xbf16>
    tpu.vector_store %arg6[%c96_236, %c0_237], %333 {strides = array<i32>} : memref<160x16xbf16, #tpu.memory_space<vmem>>, vector<16x16xbf16>,
    %c0_238 = arith.constant 0 : index
    %c2_239 = arith.constant 2 : index
    %c0_240 = arith.constant 0 : index
    %c0_241 = arith.constant 0 : index
    %335 = vector.load %arg1[%c0_238, %c2_239, %c0_240, %c0_241] : memref<1x3x16x16xf32, #tpu.memory_space<vmem>>, vector<1x1x16x16xf32>
    %336 = vector.shape_cast %335 : vector<1x1x16x16xf32> to vector<16x16xf32>
    %c0_242 = arith.constant 0 : index
    %c2_243 = arith.constant 2 : index
    %c0_244 = arith.constant 0 : index
    %c0_245 = arith.constant 0 : index
    %337 = vector.load %arg2[%c0_242, %c2_243, %c0_244, %c0_245] : memref<1x3x16x16xf32, #tpu.memory_space<vmem>>, vector<1x1x16x16xf32>
    %338 = vector.shape_cast %337 : vector<1x1x16x16xf32> to vector<16x16xf32>
    %339 = arith.subf %336, %338 : vector<16x16xf32>
    %340 = math.absf %339 : vector<16x16xf32>
    %341 = arith.truncf %340 : vector<16x16xf32> to vector<16x16xbf16>
    %c112_246 = arith.constant 112 : index
    %c0_247 = arith.constant 0 : index
    %342 = vector.load %arg6[%c112_246, %c0_247] : memref<160x16xbf16, #tpu.memory_space<vmem>>, vector<16x16xbf16>
    tpu.vector_store %arg6[%c112_246, %c0_247], %341 {strides = array<i32>} : memref<160x16xbf16, #tpu.memory_space<vmem>>, vector<16x16xbf16>,
    %c4 = arith.constant 4 : index
    %c0_248 = arith.constant 0 : index
    %c0_249 = arith.constant 0 : index
    %343 = vector.load %arg3[%c4, %c0_248, %c0_249] : memref<5x16x16xbf16, #tpu.memory_space<vmem>>, vector<1x16x16xbf16>
    %344 = vector.shape_cast %343 : vector<1x16x16xbf16> to vector<16x16xbf16>
    %c0_250 = arith.constant 0 : index
    %c0_251 = arith.constant 0 : index
    %345 = vector.load %arg6[%c0_250, %c0_251] : memref<160x16xbf16, #tpu.memory_space<vmem>>, vector<128x16xbf16>
    %cst_252 = arith.constant dense<0.000000e+00> : vector<128x16xf32>
    %346 = tpu.matmul %345, %344, %cst_252 {dimension_numbers = #tpu.dot_dimension_numbers<[1], [0], [0], [1], [0, 0, 1, 1], [], []>} : vector<128x16xbf16>, vector<16x16xbf16>, vector<128x16xf32> -> vector<128x16xf32>
    %347 = arith.truncf %346 : vector<128x16xf32> to vector<128x16xbf16>
    %c4_253 = arith.constant 4 : index
    %c0_254 = arith.constant 0 : index
    %c0_255 = arith.constant 0 : index
    %348 = vector.load %arg4[%c4_253, %c0_254, %c0_255] : memref<5x16x16xbf16, #tpu.memory_space<vmem>>, vector<1x16x16xbf16>
    %349 = vector.shape_cast %348 : vector<1x16x16xbf16> to vector<16x16xbf16>
    %350 = vector.extract_strided_slice %347 {offsets = [0, 0], sizes = [16, 16], strides = [1, 1]} : vector<128x16xbf16> to vector<16x16xbf16>
    %cst_256 = arith.constant dense<0.000000e+00> : vector<16x16xf32>
    %351 = tpu.matmul %349, %350, %cst_256 {dimension_numbers = #tpu.dot_dimension_numbers<[1], [0], [0], [1], [0, 0, 1, 1], [], []>} : vector<16x16xbf16>, vector<16x16xbf16>, vector<16x16xf32> -> vector<16x16xf32>
    %352 = vector.extract_strided_slice %347 {offsets = [16, 0], sizes = [16, 16], strides = [1, 1]} : vector<128x16xbf16> to vector<16x16xbf16>
    %cst_257 = arith.constant dense<0.000000e+00> : vector<16x16xf32>
    %353 = tpu.matmul %349, %352, %cst_257 {dimension_numbers = #tpu.dot_dimension_numbers<[1], [0], [0], [1], [0, 0, 1, 1], [], []>} : vector<16x16xbf16>, vector<16x16xbf16>, vector<16x16xf32> -> vector<16x16xf32>
    %354 = arith.mulf %351, %351 : vector<16x16xf32>
    %355 = arith.mulf %353, %353 : vector<16x16xf32>
    %356 = arith.mulf %351, %353 : vector<16x16xf32>
    %357 = vector.extract_strided_slice %347 {offsets = [32, 0], sizes = [16, 16], strides = [1, 1]} : vector<128x16xbf16> to vector<16x16xbf16>
    %cst_258 = arith.constant dense<0.000000e+00> : vector<16x16xf32>
    %358 = tpu.matmul %349, %357, %cst_258 {dimension_numbers = #tpu.dot_dimension_numbers<[1], [0], [0], [1], [0, 0, 1, 1], [], []>} : vector<16x16xbf16>, vector<16x16xbf16>, vector<16x16xf32> -> vector<16x16xf32>
    %359 = arith.subf %358, %354 : vector<16x16xf32>
    %360 = vector.extract_strided_slice %347 {offsets = [48, 0], sizes = [16, 16], strides = [1, 1]} : vector<128x16xbf16> to vector<16x16xbf16>
    %cst_259 = arith.constant dense<0.000000e+00> : vector<16x16xf32>
    %361 = tpu.matmul %349, %360, %cst_259 {dimension_numbers = #tpu.dot_dimension_numbers<[1], [0], [0], [1], [0, 0, 1, 1], [], []>} : vector<16x16xbf16>, vector<16x16xbf16>, vector<16x16xf32> -> vector<16x16xf32>
    %362 = arith.subf %361, %355 : vector<16x16xf32>
    %363 = vector.extract_strided_slice %347 {offsets = [64, 0], sizes = [16, 16], strides = [1, 1]} : vector<128x16xbf16> to vector<16x16xbf16>
    %cst_260 = arith.constant dense<0.000000e+00> : vector<16x16xf32>
    %364 = tpu.matmul %349, %363, %cst_260 {dimension_numbers = #tpu.dot_dimension_numbers<[1], [0], [0], [1], [0, 0, 1, 1], [], []>} : vector<16x16xbf16>, vector<16x16xbf16>, vector<16x16xf32> -> vector<16x16xf32>
    %365 = arith.subf %364, %356 : vector<16x16xf32>
    %cst_261 = arith.constant 2.000000e+00 : f32
    %366 = vector.broadcast %cst_261 : f32 to vector<16x16xf32>
    %367 = arith.mulf %366, %365 : vector<16x16xf32>
    %cst_262 = arith.constant 8.99999984E-4 : f32
    %368 = vector.broadcast %cst_262 : f32 to vector<16x16xf32>
    %369 = arith.addf %367, %368 : vector<16x16xf32>
    %370 = arith.addf %359, %362 : vector<16x16xf32>
    %cst_263 = arith.constant 8.99999984E-4 : f32
    %371 = vector.broadcast %cst_263 : f32 to vector<16x16xf32>
    %372 = arith.addf %370, %371 : vector<16x16xf32>
    %373 = tpu.reciprocal %372 {approx = true} : vector<16x16xf32> -> vector<16x16xf32>
    %374 = arith.mulf %369, %373 : vector<16x16xf32>
    %375 = arith.mulf %374, %374 : vector<16x16xf32>
    %376 = arith.mulf %375, %374 : vector<16x16xf32>
    %c0_264 = arith.constant 0 : index
    %c0_265 = arith.constant 0 : index
    %377 = vector.load %arg7[%c0_264, %c0_265] : memref<16x16xf32, #tpu.memory_space<vmem>>, vector<16x16xf32>
    %378 = arith.mulf %377, %376 : vector<16x16xf32>
    %cst_266 = arith.constant 2.000000e+00 : f32
    %379 = vector.broadcast %cst_266 : f32 to vector<16x16xf32>
    %380 = arith.mulf %379, %356 : vector<16x16xf32>
    %cst_267 = arith.constant 9.99999974E-5 : f32
    %381 = vector.broadcast %cst_267 : f32 to vector<16x16xf32>
    %382 = arith.addf %380, %381 : vector<16x16xf32>
    %383 = arith.addf %354, %355 : vector<16x16xf32>
    %cst_268 = arith.constant 9.99999974E-5 : f32
    %384 = vector.broadcast %cst_268 : f32 to vector<16x16xf32>
    %385 = arith.addf %383, %384 : vector<16x16xf32>
    %386 = tpu.reciprocal %385 {approx = true} : vector<16x16xf32> -> vector<16x16xf32>
    %387 = arith.mulf %382, %386 : vector<16x16xf32>
    %388 = arith.mulf %387, %387 : vector<16x16xf32>
    %389 = arith.mulf %388, %387 : vector<16x16xf32>
    %390 = vector.extract_strided_slice %347 {offsets = [80, 0], sizes = [16, 16], strides = [1, 1]} : vector<128x16xbf16> to vector<16x16xbf16>
    %cst_269 = arith.constant dense<0.000000e+00> : vector<16x16xf32>
    %391 = tpu.matmul %349, %390, %cst_269 {dimension_numbers = #tpu.dot_dimension_numbers<[1], [0], [0], [1], [0, 0, 1, 1], [], []>} : vector<16x16xbf16>, vector<16x16xbf16>, vector<16x16xf32> -> vector<16x16xf32>
    %392 = vector.extract_strided_slice %347 {offsets = [96, 0], sizes = [16, 16], strides = [1, 1]} : vector<128x16xbf16> to vector<16x16xbf16>
    %cst_270 = arith.constant dense<0.000000e+00> : vector<16x16xf32>
    %393 = tpu.matmul %349, %392, %cst_270 {dimension_numbers = #tpu.dot_dimension_numbers<[1], [0], [0], [1], [0, 0, 1, 1], [], []>} : vector<16x16xbf16>, vector<16x16xbf16>, vector<16x16xf32> -> vector<16x16xf32>
    %394 = arith.addf %391, %393 : vector<16x16xf32>
    %395 = vector.extract_strided_slice %347 {offsets = [112, 0], sizes = [16, 16], strides = [1, 1]} : vector<128x16xbf16> to vector<16x16xbf16>
    %cst_271 = arith.constant dense<0.000000e+00> : vector<16x16xf32>
    %396 = tpu.matmul %349, %395, %cst_271 {dimension_numbers = #tpu.dot_dimension_numbers<[1], [0], [0], [1], [0, 0, 1, 1], [], []>} : vector<16x16xbf16>, vector<16x16xbf16>, vector<16x16xf32> -> vector<16x16xf32>
    %397 = arith.addf %394, %396 : vector<16x16xf32>
    %cst_272 = arith.constant 0.333333343 : f32
    %398 = vector.broadcast %cst_272 : f32 to vector<16x16xf32>
    %399 = arith.mulf %397, %398 : vector<16x16xf32>
    %400 = arith.mulf %389, %378 : vector<16x16xf32>
    %cst_273 = arith.constant 1.000000e+00 : f32
    %401 = vector.broadcast %cst_273 : f32 to vector<16x16xf32>
    %402 = arith.subf %401, %400 : vector<16x16xf32>
    %cst_274 = arith.constant 1.000000e-01 : f32
    %403 = vector.broadcast %cst_274 : f32 to vector<16x16xf32>
    %404 = arith.mulf %403, %402 : vector<16x16xf32>
    %cst_275 = arith.constant 0.899999976 : f32
    %405 = vector.broadcast %cst_275 : f32 to vector<16x16xf32>
    %406 = arith.mulf %405, %399 : vector<16x16xf32>
    %407 = arith.addf %404, %406 : vector<16x16xf32>
    %c0_276 = arith.constant 0 : index
    %c0_277 = arith.constant 0 : index
    %c0_278 = arith.constant 0 : index
    %408 = vector.load %arg5[%c0_276, %c0_277, %c0_278] : memref<1x16x16xf32, #tpu.memory_space<vmem>>, vector<1x16x16xf32>
    %409 = vector.shape_cast %408 : vector<1x16x16xf32> to vector<16x16xf32>
    %410 = vector.shape_cast %407 : vector<16x16xf32> to vector<1x16x16xf32>
    tpu.vector_store %arg5[%c0_276, %c0_277, %c0_278], %410 {strides = array<i32>} : memref<1x16x16xf32, #tpu.memory_space<vmem>>, vector<1x16x16xf32>,
    return
  }
  func.func @transform_0(%arg0: i32) -> (i32, i32, i32, i32) {
    %c0_i32 = arith.constant 0 : i32
    %c0_i32_0 = arith.constant 0 : i32
    %c0_i32_1 = arith.constant 0 : i32
    %c0_i32_2 = arith.constant 0 : i32
    return %arg0, %c0_i32, %c0_i32_0, %c0_i32_1 : i32, i32, i32, i32
  }
  func.func @transform_1(%arg0: i32) -> (i32, i32, i32, i32) {
    %c0_i32 = arith.constant 0 : i32
    %c0_i32_0 = arith.constant 0 : i32
    %c0_i32_1 = arith.constant 0 : i32
    %c0_i32_2 = arith.constant 0 : i32
    return %arg0, %c0_i32, %c0_i32_0, %c0_i32_1 : i32, i32, i32, i32
  }
  func.func @transform_2(%arg0: i32) -> (i32, i32, i32) {
    %c0_i32 = arith.constant 0 : i32
    %c0_i32_0 = arith.constant 0 : i32
    %c0_i32_1 = arith.constant 0 : i32
    %c0_i32_2 = arith.constant 0 : i32
    return %c0_i32, %c0_i32_0, %c0_i32_1 : i32, i32, i32
  }
  func.func @transform_3(%arg0: i32) -> (i32, i32, i32) {
    %c0_i32 = arith.constant 0 : i32
    %c0_i32_0 = arith.constant 0 : i32
    %c0_i32_1 = arith.constant 0 : i32
    %c0_i32_2 = arith.constant 0 : i32
    return %c0_i32, %c0_i32_0, %c0_i32_1 : i32, i32, i32
  }
  func.func @transform_4(%arg0: i32) -> (i32, i32, i32) {
    %c0_i32 = arith.constant 0 : i32
    %c0_i32_0 = arith.constant 0 : i32
    %c0_i32_1 = arith.constant 0 : i32
    return %arg0, %c0_i32, %c0_i32_0 : i32, i32, i32
  }
}

</mosaic_0001>

<llo_original>
// kernel: tpu_custom_call.1
$region0: #{tpu_custom_call.1}
  #allocation0 [shape = 'u32[]', space=smem, size = 0x4, offset = 0x4, fixed_abs, tag = 'smem constant byte address 0x4 - core index']
  #allocation1 [shape = 'u32[144,128]{1,0:T(1,128)}', space=vmem, size = 0x12000, scoped, tag = 'internal scratch']
  #allocation2 [shape = 'bf16[160,16]{1,0:T(16,128)(2,1)}', space=vmem, size = 0xa000, scoped, tag = 'scratch operand']
  #allocation3 [shape = 'f32[16,16]{1,0:T(8,128)}', space=vmem, size = 0x2000, scoped, tag = 'scratch operand']
  %s0 = inlined_call_operand.hbm [shape: f32[2,3,16,16], index: 0, kind: input, shape index: {}]
  %s1 = inlined_call_operand.hbm [shape: f32[2,3,16,16], index: 1, kind: input, shape index: {}]
  %s2 = inlined_call_operand.hbm [shape: bf16[5,16,16], index: 2, kind: input, shape index: {}]
  %s3 = inlined_call_operand.hbm [shape: bf16[5,16,16], index: 3, kind: input, shape index: {}]
  %s4 = inlined_call_operand.hbm [shape: f32[2,16,16], index: 4, kind: output, shape index: {}]
  %s5 = sld [smem:[#allocation0]]
  $region65: #{tpu_custom_call.1} parent=0
    _
  %s7 = ssub.s32 1, %s5
  %s8 = scalar_select 0, %s7, %s5
  $region1: #{tpu_custom_call.1} parent=0
    #allocation4 [shape = 'u8[49152]{0}', space=vmem, size = 0xc000, scoped, tag = 'input window, operand 0']
    #allocation5 [shape = 's32[2]{0}', space=sflag, size = 0x8, scoped, tag = 'scoped memory for tpu_custom_call.1']
    #allocation6 [shape = 's32[2]{0}', space=sflag, size = 0x8, scoped, tag = 'scoped memory for tpu_custom_call.1']
    #allocation7 [shape = 'u8[49152]{0}', space=vmem, size = 0xc000, scoped, tag = 'input window, operand 1']
    #allocation8 [shape = 's32[2]{0}', space=sflag, size = 0x8, scoped, tag = 'scoped memory for tpu_custom_call.1']
    #allocation9 [shape = 'u8[20480]{0}', space=vmem, size = 0x5000, scoped, tag = 'input window, operand 2, single buffered']
    #allocation10 [shape = 'u8[20480]{0}', space=vmem, size = 0x5000, scoped, tag = 'input window, operand 3, single buffered']
    #allocation11 [shape = 's32[1]{0}', space=sflag, size = 0x4, scoped, tag = 'scoped memory for tpu_custom_call.1']
    #allocation12 [shape = 'u8[16384]{0}', space=vmem, size = 0x4000, scoped, tag = 'output window, operand 0']
    %9 = vsyncpa [#allocation5], 0
    %s10 = scalar_lea.sflag [#allocation5], 1
    %11 = vsyncpa %s10, 0
    %12 = vsyncpa [#allocation8], 0
    %s13 = scalar_lea.sflag [#allocation8], 1
    %14 = vsyncpa %s13, 0
    %15 = vsyncpa [#allocation11], 0
    %16 = vsyncpa [#allocation6], 0
    %s17 = scalar_lea.sflag [#allocation6], 1
    %18 = vsyncpa %s17, 0
    loop: start=0, step=1, limit=4
    $region2: #{tpu_custom_call.1} parent=1 // loop_pre_header
      _
    $region3: #{tpu_custom_call.1} parent=1 // loop_header
      %s20 = sphi 0, %s24
      %p21 = scmp.ge.s32.totalorder %s20, 4
      %s30 = sphi 0, %s32
      %s33 = sphi 0, %s30
      %s34 = sphi 0, %s33
      %s50 = sphi 0, %s34
      %s56 = sphi 0, %s58
      %s59 = sphi 0, %s56
      %s60 = sphi 0, %s59
      %s76 = sphi 0, %s60
      %s80 = sphi 0, %s80
      %s82 = sphi 0, %s80
      %s83 = sphi 0, %s82
      %s97 = sphi 0, %s83
      %s101 = sphi 0, %s101
      %s103 = sphi 0, %s101
      %s104 = sphi 0, %s103
      %s118 = sphi 0, %s104
      %s124 = sphi 0, %s126
      %s127 = sphi 0, %s124
      %s128 = sphi 0, %s127
      %s144 = sphi 0, %s128
    $region4: #{tpu_custom_call.1} parent=1 // loop_header_branch
      %23 = sbr.rel (%p21) target = $region8
    $region5: #{tpu_custom_call.1} parent=1 // loop_body
      %s25 = ssub.s32 %s20, 1
      %s26 = ssub.s32 %s20, 2
      %s27 = sadd.s32 %s20, 1
      %s28 = ssub.s32 %s20, %s27
      %p29 = scmp.eq.s32.totalorder %s28, 0
      %s31 = sadd.s32 %s30, 1
      %s32 = scalar_select %p29, %s30, %s31
      %p35 = pneg %p29
      %p36 = scmp.eq.s32.totalorder %s20, 1
      %p37 = por %p35, %p36
      %p38 = scmp.ne.s32.totalorder %s30, %s33
      %p39 = scmp.eq.s32.totalorder %s20, 0
      %p40 = por %p38, %p39
      %p41 = scmp.ne.s32.totalorder %s30, %s33
      %p42 = scmp.eq.s32.totalorder %s25, 1
      %p43 = por %p41, %p42
      %p44 = scmp.ne.s32.totalorder %s33, %s34
      %p45 = scmp.eq.s32.totalorder %s25, 0
      %p46 = por %p44, %p45
      %p47 = scmp.ne.s32.totalorder %s33, %s34
      %p48 = scmp.eq.s32.totalorder %s26, 1
      %p49 = por %p47, %p48
      %p51 = scmp.ne.s32.totalorder %s34, %s50
      %p52 = scmp.eq.s32.totalorder %s26, 0
      %p53 = por %p51, %p52
      %s54 = ssub.s32 %s20, %s27
      %p55 = scmp.eq.s32.totalorder %s54, 0
      %s57 = sadd.s32 %s56, 1
      %s58 = scalar_select %p55, %s56, %s57
      %p61 = pneg %p55
      %p62 = scmp.eq.s32.totalorder %s20, 1
      %p63 = por %p61, %p62
      %p64 = scmp.ne.s32.totalorder %s56, %s59
      %p65 = scmp.eq.s32.totalorder %s20, 0
      %p66 = por %p64, %p65
      %p67 = scmp.ne.s32.totalorder %s56, %s59
      %p68 = scmp.eq.s32.totalorder %s25, 1
      %p69 = por %p67, %p68
      %p70 = scmp.ne.s32.totalorder %s59, %s60
      %p71 = scmp.eq.s32.totalorder %s25, 0
      %p72 = por %p70, %p71
      %p73 = scmp.ne.s32.totalorder %s59, %s60
      %p74 = scmp.eq.s32.totalorder %s26, 1
      %p75 = por %p73, %p74
      %p77 = scmp.ne.s32.totalorder %s60, %s76
      %p78 = scmp.eq.s32.totalorder %s26, 0
      %p79 = por %p77, %p78
      %s81 = sadd.s32 %s80, 1
      %p84 = scmp.eq.s32.totalorder %s20, 1
      %p85 = scmp.ne.s32.totalorder %s80, %s82
      %p86 = scmp.eq.s32.totalorder %s20, 0
      %p87 = por %p85, %p86
      %p88 = scmp.ne.s32.totalorder %s80, %s82
      %p89 = scmp.eq.s32.totalorder %s25, 1
      %p90 = por %p88, %p89
      %p91 = scmp.ne.s32.totalorder %s82, %s83
      %p92 = scmp.eq.s32.totalorder %s25, 0
      %p93 = por %p91, %p92
      %p94 = scmp.ne.s32.totalorder %s82, %s83
      %p95 = scmp.eq.s32.totalorder %s26, 1
      %p96 = por %p94, %p95
      %p98 = scmp.ne.s32.totalorder %s83, %s97
      %p99 = scmp.eq.s32.totalorder %s26, 0
      %p100 = por %p98, %p99
      %s102 = sadd.s32 %s101, 1
      %p105 = scmp.eq.s32.totalorder %s20, 1
      %p106 = scmp.ne.s32.totalorder %s101, %s103
      %p107 = scmp.eq.s32.totalorder %s20, 0
      %p108 = por %p106, %p107
      %p109 = scmp.ne.s32.totalorder %s101, %s103
      %p110 = scmp.eq.s32.totalorder %s25, 1
      %p111 = por %p109, %p110
      %p112 = scmp.ne.s32.totalorder %s103, %s104
      %p113 = scmp.eq.s32.totalorder %s25, 0
      %p114 = por %p112, %p113
      %p115 = scmp.ne.s32.totalorder %s103, %s104
      %p116 = scmp.eq.s32.totalorder %s26, 1
      %p117 = por %p115, %p116
      %p119 = scmp.ne.s32.totalorder %s104, %s118
      %p120 = scmp.eq.s32.totalorder %s26, 0
      %p121 = por %p119, %p120
      %s122 = ssub.s32 %s20, %s27
      %p123 = scmp.eq.s32.totalorder %s122, 0
      %s125 = sadd.s32 %s124, 1
      %s126 = scalar_select %p123, %s124, %s125
      %p129 = pneg %p123
      %p130 = scmp.eq.s32.totalorder %s20, 1
      %p131 = por %p129, %p130
      %p132 = scmp.ne.s32.totalorder %s124, %s127
      %p133 = scmp.eq.s32.totalorder %s20, 0
      %p134 = por %p132, %p133
      %p135 = scmp.ne.s32.totalorder %s124, %s127
      %p136 = scmp.eq.s32.totalorder %s25, 1
      %p137 = por %p135, %p136
      %p138 = scmp.ne.s32.totalorder %s127, %s128
      %p139 = scmp.eq.s32.totalorder %s25, 0
      %p140 = por %p138, %p139
      %p141 = scmp.ne.s32.totalorder %s127, %s128
      %p142 = scmp.eq.s32.totalorder %s26, 1
      %p143 = por %p141, %p142
      %p145 = scmp.ne.s32.totalorder %s128, %s144
      %p146 = scmp.eq.s32.totalorder %s26, 0
      %p147 = por %p145, %p146
      %p148 = scmp.le.s32.totalorder 1, %s20
      %p149 = scmp.lt.s32.totalorder %s20, 3
      %p150 = pnand %p148, %p149
      %p151 = pneg %p150
      // Predicated region
      $region9: #{tpu_custom_call.1} parent=5 // pred_check
        _
      $region10: #{tpu_custom_call.1} parent=5 // pred_check_branch
        %153 = sbr.rel (%p150) target = $region12
      $region11: #{tpu_custom_call.1} parent=5 // pred_region
        %s154 = ssub.s32 %s20, 1
        // Predicated region
        $region13: #{tpu_custom_call.1} parent=11 // pred_check
          %p155 = pneg %p93
        $region14: #{tpu_custom_call.1} parent=11 // pred_check_branch
          %157 = sbr.rel (%p155) target = $region16
        $region15: #{tpu_custom_call.1} parent=11 // pred_region
          %s159 = ssub.s32 640, 640
          %160 = vsyncadd [#allocation8], %s159
          %s161 = sshll.u32 [#allocation9], 4
          %s162 = int_to_ptr.vmem [resolvable:$true] %s161
          %167 = dma.hbm_to_vmem [thread:$0]  %s2, 640, %s162, [#allocation8], 64, 64, 4
        $region16: #{tpu_custom_call.1} parent=11 // pred_fallthru
          _
        // Predicated region
        $region17: #{tpu_custom_call.1} parent=11 // pred_check
          %p168 = pneg %p114
        $region18: #{tpu_custom_call.1} parent=11 // pred_check_branch
          %170 = sbr.rel (%p168) target = $region20
        $region19: #{tpu_custom_call.1} parent=11 // pred_region
          %s172 = ssub.s32 640, 640
          %173 = vsyncadd [#allocation11], %s172
          %s174 = sshll.u32 [#allocation10], 4
          %s175 = int_to_ptr.vmem [resolvable:$true] %s174
          %180 = dma.hbm_to_vmem [thread:$0]  %s3, 640, %s175, [#allocation11], 64, 64, 4
        $region20: #{tpu_custom_call.1} parent=11 // pred_fallthru
          _
      $region12: #{tpu_custom_call.1} parent=5 // pred_fallthru
        _
      %p181 = scmp.lt.s32.totalorder %s20, 2
      // Predicated region
      $region21: #{tpu_custom_call.1} parent=5 // pred_check
        %p182 = pneg %p181
      $region22: #{tpu_custom_call.1} parent=5 // pred_check_branch
        %184 = sbr.rel (%p182) target = $region24
      $region23: #{tpu_custom_call.1} parent=5 // pred_region
        // Predicated region
        $region25: #{tpu_custom_call.1} parent=23 // pred_check
          %p185 = pneg %p40
        $region26: #{tpu_custom_call.1} parent=23 // pred_check_branch
          %187 = sbr.rel (%p185) target = $region28
        $region27: #{tpu_custom_call.1} parent=23 // pred_region
          %s188 = sand.u32 %s30, 1
          %s189 = scalar_lea.sflag [#allocation5], %s188
          %s190 = sand.u32 %s30, 1
          %s191 = smul.addr %s190, 48
          %s192 = scalar_lea.vmem [#allocation4], %s191
          %s194 = ssub.s32 768, 768
          %195 = vsyncadd %s189, %s194
          %s196 = smul.addr %s20, 6
          %s197 = smul.addr %s196, 128
          %s198 = scalar_lea.hbm %s0, %s197
          %s199 = sshll.u32 %s192, 4
          %s200 = int_to_ptr.vmem [resolvable:$true] %s199
          %205 = dma.hbm_to_vmem [thread:$0]  %s198, 768, %s200, %s189, 128, 128, 8
        $region28: #{tpu_custom_call.1} parent=23 // pred_fallthru
          _
        // Predicated region
        $region29: #{tpu_custom_call.1} parent=23 // pred_check
          %p206 = pneg %p66
        $region30: #{tpu_custom_call.1} parent=23 // pred_check_branch
          %208 = sbr.rel (%p206) target = $region32
        $region31: #{tpu_custom_call.1} parent=23 // pred_region
          %s209 = sand.u32 %s20, 1
          %s210 = scalar_lea.sflag [#allocation8], %s209
          %s211 = sand.u32 %s56, 1
          %s212 = smul.addr %s211, 48
          %s213 = scalar_lea.vmem [#allocation7], %s212
          %s215 = ssub.s32 768, 768
          %216 = vsyncadd %s210, %s215
          %s217 = smul.addr %s20, 6
          %s218 = smul.addr %s217, 128
          %s219 = scalar_lea.hbm %s1, %s218
          %s220 = sshll.u32 %s213, 4
          %s221 = int_to_ptr.vmem [resolvable:$true] %s220
          %226 = dma.hbm_to_vmem [thread:$0]  %s219, 768, %s221, %s210, 128, 128, 8
        $region32: #{tpu_custom_call.1} parent=23 // pred_fallthru
          _
      $region24: #{tpu_custom_call.1} parent=5 // pred_fallthru
        _
      %p227 = scmp.le.s32.totalorder 1, %s20
      %p228 = scmp.lt.s32.totalorder %s20, 3
      %p229 = pnand %p227, %p228
      %p230 = pneg %p229
      // Predicated region
      $region33: #{tpu_custom_call.1} parent=5 // pred_check
        _
      $region34: #{tpu_custom_call.1} parent=5 // pred_check_branch
        %232 = sbr.rel (%p229) target = $region36
      $region35: #{tpu_custom_call.1} parent=5 // pred_region
        %s233 = ssub.s32 %s20, 1
        %s234 = sand.u32 %s33, 1
        %s235 = scalar_lea.sflag [#allocation5], %s234
        %s236 = sand.u32 %s33, 1
        %s237 = smul.addr %s236, 48
        %s238 = scalar_lea.vmem [#allocation4], %s237
        // Predicated region
        $region37: #{tpu_custom_call.1} parent=35 // pred_check
          %p239 = pneg %p46
        $region38: #{tpu_custom_call.1} parent=35 // pred_check_branch
          %241 = sbr.rel (%p239) target = $region40
        $region39: #{tpu_custom_call.1} parent=35 // pred_region
          %242 = dma.done %s235, 768
        $region40: #{tpu_custom_call.1} parent=35 // pred_fallthru
          _
        %s243 = sand.u32 %s25, 1
        %s244 = scalar_lea.sflag [#allocation8], %s243
        %s245 = sand.u32 %s59, 1
        %s246 = smul.addr %s245, 48
        %s247 = scalar_lea.vmem [#allocation7], %s246
        // Predicated region
        $region41: #{tpu_custom_call.1} parent=35 // pred_check
          %p248 = pneg %p72
        $region42: #{tpu_custom_call.1} parent=35 // pred_check_branch
          %250 = sbr.rel (%p248) target = $region44
        $region43: #{tpu_custom_call.1} parent=35 // pred_region
          %251 = dma.done %s244, 768
        $region44: #{tpu_custom_call.1} parent=35 // pred_fallthru
          _
        // Predicated region
        $region45: #{tpu_custom_call.1} parent=35 // pred_check
          %p252 = pneg %p93
        $region46: #{tpu_custom_call.1} parent=35 // pred_check_branch
          %254 = sbr.rel (%p252) target = $region48
        $region47: #{tpu_custom_call.1} parent=35 // pred_region
          %255 = dma.done [#allocation8], 640
        $region48: #{tpu_custom_call.1} parent=35 // pred_fallthru
          _
        // Predicated region
        $region49: #{tpu_custom_call.1} parent=35 // pred_check
          %p256 = pneg %p114
        $region50: #{tpu_custom_call.1} parent=35 // pred_check_branch
          %258 = sbr.rel (%p256) target = $region52
        $region51: #{tpu_custom_call.1} parent=35 // pred_region
          %259 = dma.done [#allocation11], 640
        $region52: #{tpu_custom_call.1} parent=35 // pred_fallthru
          _
        %s260 = sand.u32 %s33, 1
        %s261 = scalar_lea.sflag [#allocation5], %s260
        %s262 = sand.u32 %s33, 1
        %s263 = smul.addr %s262, 48
        %s264 = scalar_lea.vmem [#allocation4], %s263
        %p265 = pneg %p46
        %p266 = pneg %p43
        %s267 = sand.u32 %s25, 1
        %s268 = scalar_lea.sflag [#allocation8], %s267
        %s269 = sand.u32 %s59, 1
        %s270 = smul.addr %s269, 48
        %s271 = scalar_lea.vmem [#allocation7], %s270
        %p272 = pneg %p72
        %p273 = pneg %p69
        %p274 = pneg %p93
        %p275 = pneg %p90
        %p276 = pneg %p114
        %p277 = pneg %p111
        %p278 = pneg %p140
        %p279 = pneg %p137
        %s280 = sand.u32 %s127, 1
        %s281 = scalar_lea.sflag [#allocation6], %s280
        %s282 = sand.u32 %s127, 1
        %s283 = smul.addr %s282, 16
        %s284 = scalar_lea.vmem [#allocation12], %s283
        %v286 = vld [vmem:[%s238] sm:$0xff]
        %v287 = vld [vmem:[%s238 + $0x8] sm:$0xff]
        %v288 = vld [vmem:[%s247] sm:$0xff]
        %v289 = vld [vmem:[%s247 + $0x8] sm:$0xff]
        %v290 = vmul.f32 %v286, %v286
        %v291 = vmul.f32 %v287, %v287
        %v292 = vmul.f32 %v288, %v288
        %v293 = vmul.f32 %v289, %v289
        %v294 = vmul.f32 %v286, %v288
        %v295 = vmul.f32 %v287, %v289
        %v296 = vpack.c.bf16 %v287, %v286
        %vm297 = vcmask 130048
        %298 = vst.msk [vmem:[#allocation2] sm:$0xff] %vm297, %v296
        %v299 = vpack.c.bf16 %v289, %v288
        %300 = vst.msk [vmem:[#allocation2 + $0x8] sm:$0xff] %vm297, %v299
        %v301 = vpack.c.bf16 %v291, %v290
        %302 = vst.msk [vmem:[#allocation2 + $0x10] sm:$0xff] %vm297, %v301
        %v303 = vpack.c.bf16 %v293, %v292
        %304 = vst.msk [vmem:[#allocation2 + $0x18] sm:$0xff] %vm297, %v303
        %v305 = vpack.c.bf16 %v295, %v294
        %306 = vst.msk [vmem:[#allocation2 + $0x20] sm:$0xff] %vm297, %v305
        %v307 = vld [vmem:[#allocation9] sm:$0xf]
        %v308 = vld [vmem:[#allocation9 + $0x4] sm:$0xf]
        %v309 = vld [vmem:[#allocation2] sm:$0xff]
        %v310 = vld [vmem:[#allocation2 + $0x8] sm:$0xff]
        %v311 = vld [vmem:[#allocation2 + $0x10] sm:$0xff]
        %v312 = vld [vmem:[#allocation2 + $0x18] sm:$0xff]
        %v313 = vld [vmem:[#allocation2 + $0x20] sm:$0xff]
        %v316 = vunpack.c.l.b16 %v307
        %v317 = vunpack.c.l.b16 %v308
        %v318 = vpack.c.b16 %v317, %v316
        %v321 = vsel %vm297, %v309, 0
        %v324 = vsel %vm297, %v310, 0
        %v327 = vsel %vm297, %v311, 0
        %v330 = vsel %vm297, %v312, 0
        %v333 = vsel %vm297, %v313, 0
        %335 = vmatprep.subr.bf16.mxu0 0
        %336 = vmatpush1.bf16.msra.mxu0 %v318
        %337 = vmatprep.subr.bf16.mxu0 0
        %338 = vmatpush1.bf16.msra.mxu0 0
        %339 = vmatprep.subr.bf16.mxu0 0
        %340 = vmatpush1.bf16.msra.mxu0 0
        %341 = vmatprep.subr.bf16.mxu0 0
        %342 = vmatpush1.bf16.msra.mxu0 0
        %343 = vmatprep.subr.bf16.mxu0 0
        %344 = vmatpush1.bf16.msra.mxu0 0
        %345 = vmatprep.subr.bf16.mxu0 0
        %346 = vmatpush1.bf16.msra.mxu0 0
        %347 = vmatprep.subr.bf16.mxu0 0
        %348 = vmatpush1.bf16.msra.mxu0 0
        %349 = vmatprep.subr.bf16.mxu0 0
        %350 = vmatpush1.bf16.msra.mxu0 0
        %351 = vmatprep.subr.bf16.mxu0 0
        %352 = vmatpush1.bf16.msra.mxu0 0
        %353 = vmatprep.subr.bf16.mxu0 0
        %354 = vmatpush1.bf16.msra.mxu0 0
        %355 = vmatprep.subr.bf16.mxu0 0
        %356 = vmatpush1.bf16.msra.mxu0 0
        %357 = vmatprep.subr.bf16.mxu0 0
        %358 = vmatpush1.bf16.msra.mxu0 0
        %359 = vmatprep.subr.bf16.mxu0 0
        %360 = vmatpush1.bf16.msra.mxu0 0
        %361 = vmatprep.subr.bf16.mxu0 0
        %362 = vmatpush1.bf16.msra.mxu0 0
        %363 = vmatprep.subr.bf16.mxu0 0
        %364 = vmatpush1.bf16.msra.mxu0 0
        %365 = vmatprep.subr.bf16.mxu0 0
        %366 = vmatpush1.bf16.msra.mxu0 0
        %367 = vmatprep.mubr.bf16.mxu0 0
        %368 = vmatmul.mubr.bf16.gmra.mrb[0].mxu0 %v321
        %v369 = vpop.f32.mrb[0].mxu0
        %v370 = vadd.f32 0.0, %v369
        %v371 = vpop.f32.mrb[0].mxu0
        %v372 = vpop.f32.mrb[0].mxu0
        %v373 = vadd.f32 0.0, %v372
        %v374 = vpop.f32.mrb[0].mxu0
        %375 = vmatprep.mubr.bf16.mxu0 0
        %376 = vmatmul.mubr.bf16.gmra.mrb[0].mxu0 %v324
        %v377 = vpop.f32.mrb[0].mxu0
        %v378 = vadd.f32 0.0, %v377
        %v379 = vpop.f32.mrb[0].mxu0
        %v380 = vpop.f32.mrb[0].mxu0
        %v381 = vadd.f32 0.0, %v380
        %v382 = vpop.f32.mrb[0].mxu0
        %383 = vmatprep.mubr.bf16.mxu0 0
        %384 = vmatmul.mubr.bf16.gmra.mrb[0].mxu0 %v327
        %v385 = vpop.f32.mrb[0].mxu0
        %v386 = vadd.f32 0.0, %v385
        %v387 = vpop.f32.mrb[0].mxu0
        %v388 = vpop.f32.mrb[0].mxu0
        %v389 = vadd.f32 0.0, %v388
        %v390 = vpop.f32.mrb[0].mxu0
        %391 = vmatprep.mubr.bf16.mxu0 0
        %392 = vmatmul.mubr.bf16.gmra.mrb[0].mxu0 %v330
        %v393 = vpop.f32.mrb[0].mxu0
        %v394 = vadd.f32 0.0, %v393
        %v395 = vpop.f32.mrb[0].mxu0
        %v396 = vpop.f32.mrb[0].mxu0
        %v397 = vadd.f32 0.0, %v396
        %v398 = vpop.f32.mrb[0].mxu0
        %399 = vmatprep.mubr.bf16.mxu0 0
        %400 = vmatmul.mubr.bf16.gmra.mrb[0].mxu0 %v333
        %v401 = vpop.f32.mrb[0].mxu0
        %v402 = vadd.f32 0.0, %v401
        %v403 = vpop.f32.mrb[0].mxu0
        %v404 = vpop.f32.mrb[0].mxu0
        %v405 = vadd.f32 0.0, %v404
        %v406 = vpop.f32.mrb[0].mxu0
        %407 = vdwg.mxu0
        %v408 = vpack.c.bf16 %v373, %v370
        %v409 = vpack.c.bf16 %v381, %v378
        %v410 = vpack.c.bf16 %v389, %v386
        %v411 = vpack.c.bf16 %v397, %v394
        %v412 = vpack.c.bf16 %v405, %v402
        %v413 = vld [vmem:[#allocation10] sm:$0xf]
        %v414 = vld [vmem:[#allocation10 + $0x4] sm:$0xf]
        %v417 = vunpack.c.l.b16 %v413
        %v418 = vunpack.c.l.b16 %v414
        %v419 = vpack.c.b16 %v418, %v417
        %v421 = vsel %vm297, %v419, 0
        %423 = vmatprep.subr.bf16.mxu0 0
        %424 = vmatpush1.bf16.msra.mxu0 %v408
        %425 = vmatprep.subr.bf16.mxu0 0
        %426 = vmatpush1.bf16.msra.mxu0 0
        %427 = vmatprep.subr.bf16.mxu0 0
        %428 = vmatpush1.bf16.msra.mxu0 0
        %429 = vmatprep.subr.bf16.mxu0 0
        %430 = vmatpush1.bf16.msra.mxu0 0
        %431 = vmatprep.subr.bf16.mxu0 0
        %432 = vmatpush1.bf16.msra.mxu0 0
        %433 = vmatprep.subr.bf16.mxu0 0
        %434 = vmatpush1.bf16.msra.mxu0 0
        %435 = vmatprep.subr.bf16.mxu0 0
        %436 = vmatpush1.bf16.msra.mxu0 0
        %437 = vmatprep.subr.bf16.mxu0 0
        %438 = vmatpush1.bf16.msra.mxu0 0
        %439 = vmatprep.subr.bf16.mxu0 0
        %440 = vmatpush1.bf16.msra.mxu0 0
        %441 = vmatprep.subr.bf16.mxu0 0
        %442 = vmatpush1.bf16.msra.mxu0 0
        %443 = vmatprep.subr.bf16.mxu0 0
        %444 = vmatpush1.bf16.msra.mxu0 0
        %445 = vmatprep.subr.bf16.mxu0 0
        %446 = vmatpush1.bf16.msra.mxu0 0
        %447 = vmatprep.subr.bf16.mxu0 0
        %448 = vmatpush1.bf16.msra.mxu0 0
        %449 = vmatprep.subr.bf16.mxu0 0
        %450 = vmatpush1.bf16.msra.mxu0 0
        %451 = vmatprep.subr.bf16.mxu0 0
        %452 = vmatpush1.bf16.msra.mxu0 0
        %453 = vmatprep.subr.bf16.mxu0 0
        %454 = vmatpush1.bf16.msra.mxu0 0
        %455 = vmatprep.mubr.bf16.mxu0 0
        %456 = vmatmul.mubr.bf16.gmra.mrb[0].mxu0 %v421
        %v457 = vpop.f32.mrb[0].mxu0
        %v458 = vadd.f32 0.0, %v457
        %v459 = vpop.f32.mrb[0].mxu0
        %v460 = vpop.f32.mrb[0].mxu0
        %v461 = vadd.f32 0.0, %v460
        %v462 = vpop.f32.mrb[0].mxu0
        %463 = vdwg.mxu0
        %464 = vmatprep.subr.bf16.mxu0 0
        %465 = vmatpush1.bf16.msra.mxu0 %v409
        %466 = vmatprep.subr.bf16.mxu0 0
        %467 = vmatpush1.bf16.msra.mxu0 0
        %468 = vmatprep.subr.bf16.mxu0 0
        %469 = vmatpush1.bf16.msra.mxu0 0
        %470 = vmatprep.subr.bf16.mxu0 0
        %471 = vmatpush1.bf16.msra.mxu0 0
        %472 = vmatprep.subr.bf16.mxu0 0
        %473 = vmatpush1.bf16.msra.mxu0 0
        %474 = vmatprep.subr.bf16.mxu0 0
        %475 = vmatpush1.bf16.msra.mxu0 0
        %476 = vmatprep.subr.bf16.mxu0 0
        %477 = vmatpush1.bf16.msra.mxu0 0
        %478 = vmatprep.subr.bf16.mxu0 0
        %479 = vmatpush1.bf16.msra.mxu0 0
        %480 = vmatprep.subr.bf16.mxu0 0
        %481 = vmatpush1.bf16.msra.mxu0 0
        %482 = vmatprep.subr.bf16.mxu0 0
        %483 = vmatpush1.bf16.msra.mxu0 0
        %484 = vmatprep.subr.bf16.mxu0 0
        %485 = vmatpush1.bf16.msra.mxu0 0
        %486 = vmatprep.subr.bf16.mxu0 0
        %487 = vmatpush1.bf16.msra.mxu0 0
        %488 = vmatprep.subr.bf16.mxu0 0
        %489 = vmatpush1.bf16.msra.mxu0 0
        %490 = vmatprep.subr.bf16.mxu0 0
        %491 = vmatpush1.bf16.msra.mxu0 0
        %492 = vmatprep.subr.bf16.mxu0 0
        %493 = vmatpush1.bf16.msra.mxu0 0
        %494 = vmatprep.subr.bf16.mxu0 0
        %495 = vmatpush1.bf16.msra.mxu0 0
        %496 = vmatprep.mubr.bf16.mxu0 0
        %497 = vmatmul.mubr.bf16.gmra.mrb[0].mxu0 %v421
        %v498 = vpop.f32.mrb[0].mxu0
        %v499 = vadd.f32 0.0, %v498
        %v500 = vpop.f32.mrb[0].mxu0
        %v501 = vpop.f32.mrb[0].mxu0
        %v502 = vadd.f32 0.0, %v501
        %v503 = vpop.f32.mrb[0].mxu0
        %504 = vdwg.mxu0
        %v505 = vmul.f32 %v458, %v458
        %v506 = vmul.f32 %v461, %v461
        %v507 = vmul.f32 %v499, %v499
        %v508 = vmul.f32 %v502, %v502
        %v509 = vmul.f32 %v458, %v499
        %v510 = vmul.f32 %v461, %v502
        %511 = vmatprep.subr.bf16.mxu0 0
        %512 = vmatpush1.bf16.msra.mxu0 %v410
        %513 = vmatprep.subr.bf16.mxu0 0
        %514 = vmatpush1.bf16.msra.mxu0 0
        %515 = vmatprep.subr.bf16.mxu0 0
        %516 = vmatpush1.bf16.msra.mxu0 0
        %517 = vmatprep.subr.bf16.mxu0 0
        %518 = vmatpush1.bf16.msra.mxu0 0
        %519 = vmatprep.subr.bf16.mxu0 0
        %520 = vmatpush1.bf16.msra.mxu0 0
        %521 = vmatprep.subr.bf16.mxu0 0
        %522 = vmatpush1.bf16.msra.mxu0 0
        %523 = vmatprep.subr.bf16.mxu0 0
        %524 = vmatpush1.bf16.msra.mxu0 0
        %525 = vmatprep.subr.bf16.mxu0 0
        %526 = vmatpush1.bf16.msra.mxu0 0
        %527 = vmatprep.subr.bf16.mxu0 0
        %528 = vmatpush1.bf16.msra.mxu0 0
        %529 = vmatprep.subr.bf16.mxu0 0
        %530 = vmatpush1.bf16.msra.mxu0 0
        %531 = vmatprep.subr.bf16.mxu0 0
        %532 = vmatpush1.bf16.msra.mxu0 0
        %533 = vmatprep.subr.bf16.mxu0 0
        %534 = vmatpush1.bf16.msra.mxu0 0
        %535 = vmatprep.subr.bf16.mxu0 0
        %536 = vmatpush1.bf16.msra.mxu0 0
        %537 = vmatprep.subr.bf16.mxu0 0
        %538 = vmatpush1.bf16.msra.mxu0 0
        %539 = vmatprep.subr.bf16.mxu0 0
        %540 = vmatpush1.bf16.msra.mxu0 0
        %541 = vmatprep.subr.bf16.mxu0 0
        %542 = vmatpush1.bf16.msra.mxu0 0
        %543 = vmatprep.mubr.bf16.mxu0 0
        %544 = vmatmul.mubr.bf16.gmra.mrb[0].mxu0 %v421
        %v545 = vpop.f32.mrb[0].mxu0
        %v546 = vadd.f32 0.0, %v545
        %v547 = vpop.f32.mrb[0].mxu0
        %v548 = vpop.f32.mrb[0].mxu0
        %v549 = vadd.f32 0.0, %v548
        %v550 = vpop.f32.mrb[0].mxu0
        %551 = vdwg.mxu0
        %v552 = vsub.f32 %v546, %v505
        %v553 = vsub.f32 %v549, %v506
        %554 = vmatprep.subr.bf16.mxu0 0
        %555 = vmatpush1.bf16.msra.mxu0 %v411
        %556 = vmatprep.subr.bf16.mxu0 0
        %557 = vmatpush1.bf16.msra.mxu0 0
        %558 = vmatprep.subr.bf16.mxu0 0
        %559 = vmatpush1.bf16.msra.mxu0 0
        %560 = vmatprep.subr.bf16.mxu0 0
        %561 = vmatpush1.bf16.msra.mxu0 0
        %562 = vmatprep.subr.bf16.mxu0 0
        %563 = vmatpush1.bf16.msra.mxu0 0
        %564 = vmatprep.subr.bf16.mxu0 0
        %565 = vmatpush1.bf16.msra.mxu0 0
        %566 = vmatprep.subr.bf16.mxu0 0
        %567 = vmatpush1.bf16.msra.mxu0 0
        %568 = vmatprep.subr.bf16.mxu0 0
        %569 = vmatpush1.bf16.msra.mxu0 0
        %570 = vmatprep.subr.bf16.mxu0 0
        %571 = vmatpush1.bf16.msra.mxu0 0
        %572 = vmatprep.subr.bf16.mxu0 0
        %573 = vmatpush1.bf16.msra.mxu0 0
        %574 = vmatprep.subr.bf16.mxu0 0
        %575 = vmatpush1.bf16.msra.mxu0 0
        %576 = vmatprep.subr.bf16.mxu0 0
        %577 = vmatpush1.bf16.msra.mxu0 0
        %578 = vmatprep.subr.bf16.mxu0 0
        %579 = vmatpush1.bf16.msra.mxu0 0
        %580 = vmatprep.subr.bf16.mxu0 0
        %581 = vmatpush1.bf16.msra.mxu0 0
        %582 = vmatprep.subr.bf16.mxu0 0
        %583 = vmatpush1.bf16.msra.mxu0 0
        %584 = vmatprep.subr.bf16.mxu0 0
        %585 = vmatpush1.bf16.msra.mxu0 0
        %586 = vmatprep.mubr.bf16.mxu0 0
        %587 = vmatmul.mubr.bf16.gmra.mrb[0].mxu0 %v421
        %v588 = vpop.f32.mrb[0].mxu0
        %v589 = vadd.f32 0.0, %v588
        %v590 = vpop.f32.mrb[0].mxu0
        %v591 = vpop.f32.mrb[0].mxu0
        %v592 = vadd.f32 0.0, %v591
        %v593 = vpop.f32.mrb[0].mxu0
        %594 = vdwg.mxu0
        %v595 = vsub.f32 %v589, %v507
        %v596 = vsub.f32 %v592, %v508
        %597 = vmatprep.subr.bf16.mxu0 0
        %598 = vmatpush1.bf16.msra.mxu0 %v412
        %599 = vmatprep.subr.bf16.mxu0 0
        %600 = vmatpush1.bf16.msra.mxu0 0
        %601 = vmatprep.subr.bf16.mxu0 0
        %602 = vmatpush1.bf16.msra.mxu0 0
        %603 = vmatprep.subr.bf16.mxu0 0
        %604 = vmatpush1.bf16.msra.mxu0 0
        %605 = vmatprep.subr.bf16.mxu0 0
        %606 = vmatpush1.bf16.msra.mxu0 0
        %607 = vmatprep.subr.bf16.mxu0 0
        %608 = vmatpush1.bf16.msra.mxu0 0
        %609 = vmatprep.subr.bf16.mxu0 0
        %610 = vmatpush1.bf16.msra.mxu0 0
        %611 = vmatprep.subr.bf16.mxu0 0
        %612 = vmatpush1.bf16.msra.mxu0 0
        %613 = vmatprep.subr.bf16.mxu0 0
        %614 = vmatpush1.bf16.msra.mxu0 0
        %615 = vmatprep.subr.bf16.mxu0 0
        %616 = vmatpush1.bf16.msra.mxu0 0
        %617 = vmatprep.subr.bf16.mxu0 0
        %618 = vmatpush1.bf16.msra.mxu0 0
        %619 = vmatprep.subr.bf16.mxu0 0
        %620 = vmatpush1.bf16.msra.mxu0 0
        %621 = vmatprep.subr.bf16.mxu0 0
        %622 = vmatpush1.bf16.msra.mxu0 0
        %623 = vmatprep.subr.bf16.mxu0 0
        %624 = vmatpush1.bf16.msra.mxu0 0
        %625 = vmatprep.subr.bf16.mxu0 0
        %626 = vmatpush1.bf16.msra.mxu0 0
        %627 = vmatprep.subr.bf16.mxu0 0
        %628 = vmatpush1.bf16.msra.mxu0 0
        %629 = vmatprep.mubr.bf16.mxu0 0
        %630 = vmatmul.mubr.bf16.gmra.mrb[0].mxu0 %v421
        %v631 = vpop.f32.mrb[0].mxu0
        %v632 = vadd.f32 0.0, %v631
        %v633 = vpop.f32.mrb[0].mxu0
        %v634 = vpop.f32.mrb[0].mxu0
        %v635 = vadd.f32 0.0, %v634
        %v636 = vpop.f32.mrb[0].mxu0
        %637 = vdwg.mxu0
        %v638 = vsub.f32 %v632, %v509
        %v639 = vsub.f32 %v635, %v510
        %v640 = vmul.f32 %v638, 2.0
        %v641 = vmul.f32 %v639, 2.0
        %v642 = vadd.f32 %v640, 0.0009
        %v643 = vadd.f32 %v641, 0.0009
        %v644 = vadd.f32 %v552, %v595
        %v645 = vadd.f32 %v553, %v596
        %v646 = vadd.f32 %v644, 0.0009
        %v647 = vadd.f32 %v645, 0.0009
        %v648 = vrcp.pop %v646
        %v649 = vrcp.pop %v647
        %v650 = vmul.f32 %v642, %v648
        %v651 = vmul.f32 %v643, %v649
        %v652 = vmul.f32 %v650, %v650
        %v653 = vmul.f32 %v651, %v651
        %v654 = vmul.f32 %v652, %v650
        %v655 = vmul.f32 %v653, %v651
        %656 = vst.msk [vmem:[#allocation3] sm:$0xff] %vm297, %v654
        %657 = vst.msk [vmem:[#allocation3 + $0x8] sm:$0xff] %vm297, %v655
        %v658 = vld [vmem:[%s238] sm:$0xff]
        %v659 = vld [vmem:[%s238 + $0x8] sm:$0xff]
        %v660 = vld [vmem:[%s247] sm:$0xff]
        %v661 = vld [vmem:[%s247 + $0x8] sm:$0xff]
        %v662 = vmul.f32 %v658, %v658
        %v663 = vmul.f32 %v659, %v659
        %v664 = vmul.f32 %v660, %v660
        %v665 = vmul.f32 %v661, %v661
        %v666 = vmul.f32 %v658, %v660
        %v667 = vmul.f32 %v659, %v661
        %v668 = vpack.c.bf16 %v659, %v658
        %669 = vst.msk [vmem:[#allocation2] sm:$0xff] %vm297, %v668
        %v670 = vpack.c.bf16 %v661, %v660
        %671 = vst.msk [vmem:[#allocation2 + $0x8] sm:$0xff] %vm297, %v670
        %v672 = vpack.c.bf16 %v663, %v662
        %673 = vst.msk [vmem:[#allocation2 + $0x10] sm:$0xff] %vm297, %v672
        %v674 = vpack.c.bf16 %v665, %v664
        %675 = vst.msk [vmem:[#allocation2 + $0x18] sm:$0xff] %vm297, %v674
        %v676 = vpack.c.bf16 %v667, %v666
        %677 = vst.msk [vmem:[#allocation2 + $0x20] sm:$0xff] %vm297, %v676
        %s678 = scalar_lea.vmem %s238, 16 [#allocation4]
        %v679 = vld [vmem:[%s678] sm:$0xff]
        %v680 = vld [vmem:[%s678 + $0x8] sm:$0xff]
        %s681 = scalar_lea.vmem %s247, 16 [#allocation7]
        %v682 = vld [vmem:[%s681] sm:$0xff]
        %v683 = vld [vmem:[%s681 + $0x8] sm:$0xff]
        %v684 = vmul.f32 %v679, %v679
        %v685 = vmul.f32 %v680, %v680
        %v686 = vmul.f32 %v682, %v682
        %v687 = vmul.f32 %v683, %v683
        %v688 = vmul.f32 %v679, %v682
        %v689 = vmul.f32 %v680, %v683
        %v690 = vpack.c.bf16 %v680, %v679
        %691 = vst.msk [vmem:[#allocation2 + $0x28] sm:$0xff] %vm297, %v690
        %v692 = vpack.c.bf16 %v683, %v682
        %693 = vst.msk [vmem:[#allocation2 + $0x30] sm:$0xff] %vm297, %v692
        %v694 = vpack.c.bf16 %v685, %v684
        %695 = vst.msk [vmem:[#allocation2 + $0x38] sm:$0xff] %vm297, %v694
        %v696 = vpack.c.bf16 %v687, %v686
        %697 = vst.msk [vmem:[#allocation2 + $0x40] sm:$0xff] %vm297, %v696
        %v698 = vpack.c.bf16 %v689, %v688
        %699 = vst.msk [vmem:[#allocation2 + $0x48] sm:$0xff] %vm297, %v698
        %s700 = scalar_lea.vmem [#allocation9], 8
        %v701 = vld [vmem:[%s700] sm:$0xf]
        %v702 = vld [vmem:[%s700 + $0x4] sm:$0xf]
        %v703 = vld [vmem:[#allocation2] sm:$0xff]
        %v704 = vld [vmem:[#allocation2 + $0x8] sm:$0xff]
        %v705 = vld [vmem:[#allocation2 + $0x10] sm:$0xff]
        %v706 = vld [vmem:[#allocation2 + $0x18] sm:$0xff]
        %v707 = vld [vmem:[#allocation2 + $0x20] sm:$0xff]
        %v708 = vld [vmem:[#allocation2 + $0x28] sm:$0xff]
        %v709 = vld [vmem:[#allocation2 + $0x30] sm:$0xff]
        %v710 = vld [vmem:[#allocation2 + $0x38] sm:$0xff]
        %v711 = vld [vmem:[#allocation2 + $0x40] sm:$0xff]
        %v712 = vld [vmem:[#allocation2 + $0x48] sm:$0xff]
        %v715 = vunpack.c.l.b16 %v701
        %v716 = vunpack.c.l.b16 %v702
        %v717 = vpack.c.b16 %v716, %v715
        %v720 = vsel %vm297, %v703, 0
        %v723 = vsel %vm297, %v704, 0
        %v726 = vsel %vm297, %v705, 0
        %v729 = vsel %vm297, %v706, 0
        %v732 = vsel %vm297, %v707, 0
        %v735 = vsel %vm297, %v708, 0
        %v738 = vsel %vm297, %v709, 0
        %v741 = vsel %vm297, %v710, 0
        %v744 = vsel %vm297, %v711, 0
        %v747 = vsel %vm297, %v712, 0
        %749 = vmatprep.subr.bf16.mxu0 0
        %750 = vmatpush1.bf16.msra.mxu0 %v717
        %751 = vmatprep.subr.bf16.mxu0 0
        %752 = vmatpush1.bf16.msra.mxu0 0
        %753 = vmatprep.subr.bf16.mxu0 0
        %754 = vmatpush1.bf16.msra.mxu0 0
        %755 = vmatprep.subr.bf16.mxu0 0
        %756 = vmatpush1.bf16.msra.mxu0 0
        %757 = vmatprep.subr.bf16.mxu0 0
        %758 = vmatpush1.bf16.msra.mxu0 0
        %759 = vmatprep.subr.bf16.mxu0 0
        %760 = vmatpush1.bf16.msra.mxu0 0
        %761 = vmatprep.subr.bf16.mxu0 0
        %762 = vmatpush1.bf16.msra.mxu0 0
        %763 = vmatprep.subr.bf16.mxu0 0
        %764 = vmatpush1.bf16.msra.mxu0 0
        %765 = vmatprep.subr.bf16.mxu0 0
        %766 = vmatpush1.bf16.msra.mxu0 0
        %767 = vmatprep.subr.bf16.mxu0 0
        %768 = vmatpush1.bf16.msra.mxu0 0
        %769 = vmatprep.subr.bf16.mxu0 0
        %770 = vmatpush1.bf16.msra.mxu0 0
        %771 = vmatprep.subr.bf16.mxu0 0
        %772 = vmatpush1.bf16.msra.mxu0 0
        %773 = vmatprep.subr.bf16.mxu0 0
        %774 = vmatpush1.bf16.msra.mxu0 0
        %775 = vmatprep.subr.bf16.mxu0 0
        %776 = vmatpush1.bf16.msra.mxu0 0
        %777 = vmatprep.subr.bf16.mxu0 0
        %778 = vmatpush1.bf16.msra.mxu0 0
        %779 = vmatprep.subr.bf16.mxu0 0
        %780 = vmatpush1.bf16.msra.mxu0 0
        %781 = vmatprep.mubr.bf16.mxu0 0
        %782 = vmatmul.mubr.bf16.gmra.mrb[0].mxu0 %v720
        %v783 = vpop.f32.mrb[0].mxu0
        %v784 = vadd.f32 0.0, %v783
        %v785 = vpop.f32.mrb[0].mxu0
        %v786 = vpop.f32.mrb[0].mxu0
        %v787 = vadd.f32 0.0, %v786
        %v788 = vpop.f32.mrb[0].mxu0
        %789 = vmatprep.mubr.bf16.mxu0 0
        %790 = vmatmul.mubr.bf16.gmra.mrb[0].mxu0 %v723
        %v791 = vpop.f32.mrb[0].mxu0
        %v792 = vadd.f32 0.0, %v791
        %v793 = vpop.f32.mrb[0].mxu0
        %v794 = vpop.f32.mrb[0].mxu0
        %v795 = vadd.f32 0.0, %v794
        %v796 = vpop.f32.mrb[0].mxu0
        %797 = vmatprep.mubr.bf16.mxu0 0
        %798 = vmatmul.mubr.bf16.gmra.mrb[0].mxu0 %v726
        %v799 = vpop.f32.mrb[0].mxu0
        %v800 = vadd.f32 0.0, %v799
        %v801 = vpop.f32.mrb[0].mxu0
        %v802 = vpop.f32.mrb[0].mxu0
        %v803 = vadd.f32 0.0, %v802
        %v804 = vpop.f32.mrb[0].mxu0
        %805 = vmatprep.mubr.bf16.mxu0 0
        %806 = vmatmul.mubr.bf16.gmra.mrb[0].mxu0 %v729
        %v807 = vpop.f32.mrb[0].mxu0
        %v808 = vadd.f32 0.0, %v807
        %v809 = vpop.f32.mrb[0].mxu0
        %v810 = vpop.f32.mrb[0].mxu0
        %v811 = vadd.f32 0.0, %v810
        %v812 = vpop.f32.mrb[0].mxu0
        %813 = vmatprep.mubr.bf16.mxu0 0
        %814 = vmatmul.mubr.bf16.gmra.mrb[0].mxu0 %v732
        %v815 = vpop.f32.mrb[0].mxu0
        %v816 = vadd.f32 0.0, %v815
        %v817 = vpop.f32.mrb[0].mxu0
        %v818 = vpop.f32.mrb[0].mxu0
        %v819 = vadd.f32 0.0, %v818
        %v820 = vpop.f32.mrb[0].mxu0
        %821 = vmatprep.mubr.bf16.mxu0 0
        %822 = vmatmul.mubr.bf16.gmra.mrb[0].mxu0 %v735
        %v823 = vpop.f32.mrb[0].mxu0
        %v824 = vadd.f32 0.0, %v823
        %v825 = vpop.f32.mrb[0].mxu0
        %v826 = vpop.f32.mrb[0].mxu0
        %v827 = vadd.f32 0.0, %v826
        %v828 = vpop.f32.mrb[0].mxu0
        %829 = vmatprep.mubr.bf16.mxu0 0
        %830 = vmatmul.mubr.bf16.gmra.mrb[0].mxu0 %v738
        %v831 = vpop.f32.mrb[0].mxu0
        %v832 = vadd.f32 0.0, %v831
        %v833 = vpop.f32.mrb[0].mxu0
        %v834 = vpop.f32.mrb[0].mxu0
        %v835 = vadd.f32 0.0, %v834
        %v836 = vpop.f32.mrb[0].mxu0
        %837 = vmatprep.mubr.bf16.mxu0 0
        %838 = vmatmul.mubr.bf16.gmra.mrb[0].mxu0 %v741
        %v839 = vpop.f32.mrb[0].mxu0
        %v840 = vadd.f32 0.0, %v839
        %v841 = vpop.f32.mrb[0].mxu0
        %v842 = vpop.f32.mrb[0].mxu0
        %v843 = vadd.f32 0.0, %v842
        %v844 = vpop.f32.mrb[0].mxu0
        %845 = vmatprep.mubr.bf16.mxu0 0
        %846 = vmatmul.mubr.bf16.gmra.mrb[0].mxu0 %v744
        %v847 = vpop.f32.mrb[0].mxu0
        %v848 = vadd.f32 0.0, %v847
        %v849 = vpop.f32.mrb[0].mxu0
        %v850 = vpop.f32.mrb[0].mxu0
        %v851 = vadd.f32 0.0, %v850
        %v852 = vpop.f32.mrb[0].mxu0
        %853 = vmatprep.mubr.bf16.mxu0 0
        %854 = vmatmul.mubr.bf16.gmra.mrb[0].mxu0 %v747
        %v855 = vpop.f32.mrb[0].mxu0
        %v856 = vadd.f32 0.0, %v855
        %v857 = vpop.f32.mrb[0].mxu0
        %v858 = vpop.f32.mrb[0].mxu0
        %v859 = vadd.f32 0.0, %v858
        %v860 = vpop.f32.mrb[0].mxu0
        %861 = vdwg.mxu0
        %v862 = vpack.c.bf16 %v787, %v784
        %v863 = vpack.c.bf16 %v795, %v792
        %v864 = vpack.c.bf16 %v803, %v800
        %v865 = vpack.c.bf16 %v811, %v808
        %v866 = vpack.c.bf16 %v819, %v816
        %v867 = vpack.c.bf16 %v827, %v824
        %v868 = vpack.c.bf16 %v835, %v832
        %v869 = vpack.c.bf16 %v843, %v840
        %v870 = vpack.c.bf16 %v851, %v848
        %v871 = vpack.c.bf16 %v859, %v856
        %s872 = scalar_lea.vmem [#allocation10], 8
        %v873 = vld [vmem:[%s872] sm:$0xf]
        %v874 = vld [vmem:[%s872 + $0x4] sm:$0xf]
        %v877 = vunpack.c.l.b16 %v873
        %v878 = vunpack.c.l.b16 %v874
        %v879 = vpack.c.b16 %v878, %v877
        %v881 = vsel %vm297, %v879, 0
        %883 = vmatprep.subr.bf16.mxu0 0
        %884 = vmatpush1.bf16.msra.mxu0 %v862
        %885 = vmatprep.subr.bf16.mxu0 0
        %886 = vmatpush1.bf16.msra.mxu0 0
        %887 = vmatprep.subr.bf16.mxu0 0
        %888 = vmatpush1.bf16.msra.mxu0 0
        %889 = vmatprep.subr.bf16.mxu0 0
        %890 = vmatpush1.bf16.msra.mxu0 0
        %891 = vmatprep.subr.bf16.mxu0 0
        %892 = vmatpush1.bf16.msra.mxu0 0
        %893 = vmatprep.subr.bf16.mxu0 0
        %894 = vmatpush1.bf16.msra.mxu0 0
        %895 = vmatprep.subr.bf16.mxu0 0
        %896 = vmatpush1.bf16.msra.mxu0 0
        %897 = vmatprep.subr.bf16.mxu0 0
        %898 = vmatpush1.bf16.msra.mxu0 0
        %899 = vmatprep.subr.bf16.mxu0 0
        %900 = vmatpush1.bf16.msra.mxu0 0
        %901 = vmatprep.subr.bf16.mxu0 0
        %902 = vmatpush1.bf16.msra.mxu0 0
        %903 = vmatprep.subr.bf16.mxu0 0
        %904 = vmatpush1.bf16.msra.mxu0 0
        %905 = vmatprep.subr.bf16.mxu0 0
        %906 = vmatpush1.bf16.msra.mxu0 0
        %907 = vmatprep.subr.bf16.mxu0 0
        %908 = vmatpush1.bf16.msra.mxu0 0
        %909 = vmatprep.subr.bf16.mxu0 0
        %910 = vmatpush1.bf16.msra.mxu0 0
        %911 = vmatprep.subr.bf16.mxu0 0
        %912 = vmatpush1.bf16.msra.mxu0 0
        %913 = vmatprep.subr.bf16.mxu0 0
        %914 = vmatpush1.bf16.msra.mxu0 0
        %915 = vmatprep.mubr.bf16.mxu0 0
        %916 = vmatmul.mubr.bf16.gmra.mrb[0].mxu0 %v881
        %v917 = vpop.f32.mrb[0].mxu0
        %v918 = vadd.f32 0.0, %v917
        %v919 = vpop.f32.mrb[0].mxu0
        %v920 = vpop.f32.mrb[0].mxu0
        %v921 = vadd.f32 0.0, %v920
        %v922 = vpop.f32.mrb[0].mxu0
        %923 = vdwg.mxu0
        %924 = vmatprep.subr.bf16.mxu0 0
        %925 = vmatpush1.bf16.msra.mxu0 %v863
        %926 = vmatprep.subr.bf16.mxu0 0
        %927 = vmatpush1.bf16.msra.mxu0 0
        %928 = vmatprep.subr.bf16.mxu0 0
        %929 = vmatpush1.bf16.msra.mxu0 0
        %930 = vmatprep.subr.bf16.mxu0 0
        %931 = vmatpush1.bf16.msra.mxu0 0
        %932 = vmatprep.subr.bf16.mxu0 0
        %933 = vmatpush1.bf16.msra.mxu0 0
        %934 = vmatprep.subr.bf16.mxu0 0
        %935 = vmatpush1.bf16.msra.mxu0 0
        %936 = vmatprep.subr.bf16.mxu0 0
        %937 = vmatpush1.bf16.msra.mxu0 0
        %938 = vmatprep.subr.bf16.mxu0 0
        %939 = vmatpush1.bf16.msra.mxu0 0
        %940 = vmatprep.subr.bf16.mxu0 0
        %941 = vmatpush1.bf16.msra.mxu0 0
        %942 = vmatprep.subr.bf16.mxu0 0
        %943 = vmatpush1.bf16.msra.mxu0 0
        %944 = vmatprep.subr.bf16.mxu0 0
        %945 = vmatpush1.bf16.msra.mxu0 0
        %946 = vmatprep.subr.bf16.mxu0 0
        %947 = vmatpush1.bf16.msra.mxu0 0
        %948 = vmatprep.subr.bf16.mxu0 0
        %949 = vmatpush1.bf16.msra.mxu0 0
        %950 = vmatprep.subr.bf16.mxu0 0
        %951 = vmatpush1.bf16.msra.mxu0 0
        %952 = vmatprep.subr.bf16.mxu0 0
        %953 = vmatpush1.bf16.msra.mxu0 0
        %954 = vmatprep.subr.bf16.mxu0 0
        %955 = vmatpush1.bf16.msra.mxu0 0
        %956 = vmatprep.mubr.bf16.mxu0 0
        %957 = vmatmul.mubr.bf16.gmra.mrb[0].mxu0 %v881
        %v958 = vpop.f32.mrb[0].mxu0
        %v959 = vadd.f32 0.0, %v958
        %v960 = vpop.f32.mrb[0].mxu0
        %v961 = vpop.f32.mrb[0].mxu0
        %v962 = vadd.f32 0.0, %v961
        %v963 = vpop.f32.mrb[0].mxu0
        %964 = vdwg.mxu0
        %v965 = vmul.f32 %v918, %v918
        %v966 = vmul.f32 %v921, %v921
        %v967 = vmul.f32 %v959, %v959
        %v968 = vmul.f32 %v962, %v962
        %v969 = vmul.f32 %v918, %v959
        %v970 = vmul.f32 %v921, %v962
        %971 = vmatprep.subr.bf16.mxu0 0
        %972 = vmatpush1.bf16.msra.mxu0 %v864
        %973 = vmatprep.subr.bf16.mxu0 0
        %974 = vmatpush1.bf16.msra.mxu0 0
        %975 = vmatprep.subr.bf16.mxu0 0
        %976 = vmatpush1.bf16.msra.mxu0 0
        %977 = vmatprep.subr.bf16.mxu0 0
        %978 = vmatpush1.bf16.msra.mxu0 0
        %979 = vmatprep.subr.bf16.mxu0 0
        %980 = vmatpush1.bf16.msra.mxu0 0
        %981 = vmatprep.subr.bf16.mxu0 0
        %982 = vmatpush1.bf16.msra.mxu0 0
        %983 = vmatprep.subr.bf16.mxu0 0
        %984 = vmatpush1.bf16.msra.mxu0 0
        %985 = vmatprep.subr.bf16.mxu0 0
        %986 = vmatpush1.bf16.msra.mxu0 0
        %987 = vmatprep.subr.bf16.mxu0 0
        %988 = vmatpush1.bf16.msra.mxu0 0
        %989 = vmatprep.subr.bf16.mxu0 0
        %990 = vmatpush1.bf16.msra.mxu0 0
        %991 = vmatprep.subr.bf16.mxu0 0
        %992 = vmatpush1.bf16.msra.mxu0 0
        %993 = vmatprep.subr.bf16.mxu0 0
        %994 = vmatpush1.bf16.msra.mxu0 0
        %995 = vmatprep.subr.bf16.mxu0 0
        %996 = vmatpush1.bf16.msra.mxu0 0
        %997 = vmatprep.subr.bf16.mxu0 0
        %998 = vmatpush1.bf16.msra.mxu0 0
        %999 = vmatprep.subr.bf16.mxu0 0
        %1000 = vmatpush1.bf16.msra.mxu0 0
        %1001 = vmatprep.subr.bf16.mxu0 0
        %1002 = vmatpush1.bf16.msra.mxu0 0
        %1003 = vmatprep.mubr.bf16.mxu0 0
        %1004 = vmatmul.mubr.bf16.gmra.mrb[0].mxu0 %v881
        %v1005 = vpop.f32.mrb[0].mxu0
        %v1006 = vadd.f32 0.0, %v1005
        %v1007 = vpop.f32.mrb[0].mxu0
        %v1008 = vpop.f32.mrb[0].mxu0
        %v1009 = vadd.f32 0.0, %v1008
        %v1010 = vpop.f32.mrb[0].mxu0
        %1011 = vdwg.mxu0
        %v1012 = vsub.f32 %v1006, %v965
        %v1013 = vsub.f32 %v1009, %v966
        %1014 = vmatprep.subr.bf16.mxu0 0
        %1015 = vmatpush1.bf16.msra.mxu0 %v865
        %1016 = vmatprep.subr.bf16.mxu0 0
        %1017 = vmatpush1.bf16.msra.mxu0 0
        %1018 = vmatprep.subr.bf16.mxu0 0
        %1019 = vmatpush1.bf16.msra.mxu0 0
        %1020 = vmatprep.subr.bf16.mxu0 0
        %1021 = vmatpush1.bf16.msra.mxu0 0
        %1022 = vmatprep.subr.bf16.mxu0 0
        %1023 = vmatpush1.bf16.msra.mxu0 0
        %1024 = vmatprep.subr.bf16.mxu0 0
        %1025 = vmatpush1.bf16.msra.mxu0 0
        %1026 = vmatprep.subr.bf16.mxu0 0
        %1027 = vmatpush1.bf16.msra.mxu0 0
        %1028 = vmatprep.subr.bf16.mxu0 0
        %1029 = vmatpush1.bf16.msra.mxu0 0
        %1030 = vmatprep.subr.bf16.mxu0 0
        %1031 = vmatpush1.bf16.msra.mxu0 0
        %1032 = vmatprep.subr.bf16.mxu0 0
        %1033 = vmatpush1.bf16.msra.mxu0 0
        %1034 = vmatprep.subr.bf16.mxu0 0
        %1035 = vmatpush1.bf16.msra.mxu0 0
        %1036 = vmatprep.subr.bf16.mxu0 0
        %1037 = vmatpush1.bf16.msra.mxu0 0
        %1038 = vmatprep.subr.bf16.mxu0 0
        %1039 = vmatpush1.bf16.msra.mxu0 0
        %1040 = vmatprep.subr.bf16.mxu0 0
        %1041 = vmatpush1.bf16.msra.mxu0 0
        %1042 = vmatprep.subr.bf16.mxu0 0
        %1043 = vmatpush1.bf16.msra.mxu0 0
        %1044 = vmatprep.subr.bf16.mxu0 0
        %1045 = vmatpush1.bf16.msra.mxu0 0
        %1046 = vmatprep.mubr.bf16.mxu0 0
        %1047 = vmatmul.mubr.bf16.gmra.mrb[0].mxu0 %v881
        %v1048 = vpop.f32.mrb[0].mxu0
        %v1049 = vadd.f32 0.0, %v1048
        %v1050 = vpop.f32.mrb[0].mxu0
        %v1051 = vpop.f32.mrb[0].mxu0
        %v1052 = vadd.f32 0.0, %v1051
        %v1053 = vpop.f32.mrb[0].mxu0
        %1054 = vdwg.mxu0
        %v1055 = vsub.f32 %v1049, %v967
        %v1056 = vsub.f32 %v1052, %v968
        %1057 = vmatprep.subr.bf16.mxu0 0
        %1058 = vmatpush1.bf16.msra.mxu0 %v866
        %1059 = vmatprep.subr.bf16.mxu0 0
        %1060 = vmatpush1.bf16.msra.mxu0 0
        %1061 = vmatprep.subr.bf16.mxu0 0
        %1062 = vmatpush1.bf16.msra.mxu0 0
        %1063 = vmatprep.subr.bf16.mxu0 0
        %1064 = vmatpush1.bf16.msra.mxu0 0
        %1065 = vmatprep.subr.bf16.mxu0 0
        %1066 = vmatpush1.bf16.msra.mxu0 0
        %1067 = vmatprep.subr.bf16.mxu0 0
        %1068 = vmatpush1.bf16.msra.mxu0 0
        %1069 = vmatprep.subr.bf16.mxu0 0
        %1070 = vmatpush1.bf16.msra.mxu0 0
        %1071 = vmatprep.subr.bf16.mxu0 0
        %1072 = vmatpush1.bf16.msra.mxu0 0
        %1073 = vmatprep.subr.bf16.mxu0 0
        %1074 = vmatpush1.bf16.msra.mxu0 0
        %1075 = vmatprep.subr.bf16.mxu0 0
        %1076 = vmatpush1.bf16.msra.mxu0 0
        %1077 = vmatprep.subr.bf16.mxu0 0
        %1078 = vmatpush1.bf16.msra.mxu0 0
        %1079 = vmatprep.subr.bf16.mxu0 0
        %1080 = vmatpush1.bf16.msra.mxu0 0
        %1081 = vmatprep.subr.bf16.mxu0 0
        %1082 = vmatpush1.bf16.msra.mxu0 0
        %1083 = vmatprep.subr.bf16.mxu0 0
        %1084 = vmatpush1.bf16.msra.mxu0 0
        %1085 = vmatprep.subr.bf16.mxu0 0
        %1086 = vmatpush1.bf16.msra.mxu0 0
        %1087 = vmatprep.subr.bf16.mxu0 0
        %1088 = vmatpush1.bf16.msra.mxu0 0
        %1089 = vmatprep.mubr.bf16.mxu0 0
        %1090 = vmatmul.mubr.bf16.gmra.mrb[0].mxu0 %v881
        %v1091 = vpop.f32.mrb[0].mxu0
        %v1092 = vadd.f32 0.0, %v1091
        %v1093 = vpop.f32.mrb[0].mxu0
        %v1094 = vpop.f32.mrb[0].mxu0
        %v1095 = vadd.f32 0.0, %v1094
        %v1096 = vpop.f32.mrb[0].mxu0
        %1097 = vdwg.mxu0
        %v1098 = vsub.f32 %v1092, %v969
        %v1099 = vsub.f32 %v1095, %v970
        %v1100 = vmul.f32 %v1098, 2.0
        %v1101 = vmul.f32 %v1099, 2.0
        %v1102 = vadd.f32 %v1100, 0.0009
        %v1103 = vadd.f32 %v1101, 0.0009
        %v1104 = vadd.f32 %v1012, %v1055
        %v1105 = vadd.f32 %v1013, %v1056
        %v1106 = vadd.f32 %v1104, 0.0009
        %v1107 = vadd.f32 %v1105, 0.0009
        %v1108 = vrcp.pop %v1106
        %v1109 = vrcp.pop %v1107
        %v1110 = vmul.f32 %v1102, %v1108
        %v1111 = vmul.f32 %v1103, %v1109
        %v1112 = vmul.f32 %v1110, %v1110
        %v1113 = vmul.f32 %v1111, %v1111
        %v1114 = vld [vmem:[#allocation3] sm:$0xff]
        %v1115 = vld [vmem:[#allocation3 + $0x8] sm:$0xff]
        %v1116 = vmul.f32 %v1114, %v1112
        %v1117 = vmul.f32 %v1115, %v1113
        %1118 = vst.msk [vmem:[#allocation3] sm:$0xff] %vm297, %v1116
        %1119 = vst.msk [vmem:[#allocation3 + $0x8] sm:$0xff] %vm297, %v1117
        %1120 = vmatprep.subr.bf16.mxu0 0
        %1121 = vmatpush1.bf16.msra.mxu0 %v867
        %1122 = vmatprep.subr.bf16.mxu0 0
        %1123 = vmatpush1.bf16.msra.mxu0 0
        %1124 = vmatprep.subr.bf16.mxu0 0
        %1125 = vmatpush1.bf16.msra.mxu0 0
        %1126 = vmatprep.subr.bf16.mxu0 0
        %1127 = vmatpush1.bf16.msra.mxu0 0
        %1128 = vmatprep.subr.bf16.mxu0 0
        %1129 = vmatpush1.bf16.msra.mxu0 0
        %1130 = vmatprep.subr.bf16.mxu0 0
        %1131 = vmatpush1.bf16.msra.mxu0 0
        %1132 = vmatprep.subr.bf16.mxu0 0
        %1133 = vmatpush1.bf16.msra.mxu0 0
        %1134 = vmatprep.subr.bf16.mxu0 0
        %1135 = vmatpush1.bf16.msra.mxu0 0
        %1136 = vmatprep.subr.bf16.mxu0 0
        %1137 = vmatpush1.bf16.msra.mxu0 0
        %1138 = vmatprep.subr.bf16.mxu0 0
        %1139 = vmatpush1.bf16.msra.mxu0 0
        %1140 = vmatprep.subr.bf16.mxu0 0
        %1141 = vmatpush1.bf16.msra.mxu0 0
        %1142 = vmatprep.subr.bf16.mxu0 0
        %1143 = vmatpush1.bf16.msra.mxu0 0
        %1144 = vmatprep.subr.bf16.mxu0 0
        %1145 = vmatpush1.bf16.msra.mxu0 0
        %1146 = vmatprep.subr.bf16.mxu0 0
        %1147 = vmatpush1.bf16.msra.mxu0 0
        %1148 = vmatprep.subr.bf16.mxu0 0
        %1149 = vmatpush1.bf16.msra.mxu0 0
        %1150 = vmatprep.subr.bf16.mxu0 0
        %1151 = vmatpush1.bf16.msra.mxu0 0
        %1152 = vmatprep.mubr.bf16.mxu0 0
        %1153 = vmatmul.mubr.bf16.gmra.mrb[0].mxu0 %v881
        %v1154 = vpop.f32.mrb[0].mxu0
        %v1155 = vadd.f32 0.0, %v1154
        %v1156 = vpop.f32.mrb[0].mxu0
        %v1157 = vpop.f32.mrb[0].mxu0
        %v1158 = vadd.f32 0.0, %v1157
        %v1159 = vpop.f32.mrb[0].mxu0
        %1160 = vdwg.mxu0
        %1161 = vmatprep.subr.bf16.mxu0 0
        %1162 = vmatpush1.bf16.msra.mxu0 %v868
        %1163 = vmatprep.subr.bf16.mxu0 0
        %1164 = vmatpush1.bf16.msra.mxu0 0
        %1165 = vmatprep.subr.bf16.mxu0 0
        %1166 = vmatpush1.bf16.msra.mxu0 0
        %1167 = vmatprep.subr.bf16.mxu0 0
        %1168 = vmatpush1.bf16.msra.mxu0 0
        %1169 = vmatprep.subr.bf16.mxu0 0
        %1170 = vmatpush1.bf16.msra.mxu0 0
        %1171 = vmatprep.subr.bf16.mxu0 0
        %1172 = vmatpush1.bf16.msra.mxu0 0
        %1173 = vmatprep.subr.bf16.mxu0 0
        %1174 = vmatpush1.bf16.msra.mxu0 0
        %1175 = vmatprep.subr.bf16.mxu0 0
        %1176 = vmatpush1.bf16.msra.mxu0 0
        %1177 = vmatprep.subr.bf16.mxu0 0
        %1178 = vmatpush1.bf16.msra.mxu0 0
        %1179 = vmatprep.subr.bf16.mxu0 0
        %1180 = vmatpush1.bf16.msra.mxu0 0
        %1181 = vmatprep.subr.bf16.mxu0 0
        %1182 = vmatpush1.bf16.msra.mxu0 0
        %1183 = vmatprep.subr.bf16.mxu0 0
        %1184 = vmatpush1.bf16.msra.mxu0 0
        %1185 = vmatprep.subr.bf16.mxu0 0
        %1186 = vmatpush1.bf16.msra.mxu0 0
        %1187 = vmatprep.subr.bf16.mxu0 0
        %1188 = vmatpush1.bf16.msra.mxu0 0
        %1189 = vmatprep.subr.bf16.mxu0 0
        %1190 = vmatpush1.bf16.msra.mxu0 0
        %1191 = vmatprep.subr.bf16.mxu0 0
        %1192 = vmatpush1.bf16.msra.mxu0 0
        %1193 = vmatprep.mubr.bf16.mxu0 0
        %1194 = vmatmul.mubr.bf16.gmra.mrb[0].mxu0 %v881
        %v1195 = vpop.f32.mrb[0].mxu0
        %v1196 = vadd.f32 0.0, %v1195
        %v1197 = vpop.f32.mrb[0].mxu0
        %v1198 = vpop.f32.mrb[0].mxu0
        %v1199 = vadd.f32 0.0, %v1198
        %v1200 = vpop.f32.mrb[0].mxu0
        %1201 = vdwg.mxu0
        %v1202 = vmul.f32 %v1155, %v1155
        %v1203 = vmul.f32 %v1158, %v1158
        %v1204 = vmul.f32 %v1196, %v1196
        %v1205 = vmul.f32 %v1199, %v1199
        %v1206 = vmul.f32 %v1155, %v1196
        %v1207 = vmul.f32 %v1158, %v1199
        %1208 = vmatprep.subr.bf16.mxu0 0
        %1209 = vmatpush1.bf16.msra.mxu0 %v869
        %1210 = vmatprep.subr.bf16.mxu0 0
        %1211 = vmatpush1.bf16.msra.mxu0 0
        %1212 = vmatprep.subr.bf16.mxu0 0
        %1213 = vmatpush1.bf16.msra.mxu0 0
        %1214 = vmatprep.subr.bf16.mxu0 0
        %1215 = vmatpush1.bf16.msra.mxu0 0
        %1216 = vmatprep.subr.bf16.mxu0 0
        %1217 = vmatpush1.bf16.msra.mxu0 0
        %1218 = vmatprep.subr.bf16.mxu0 0
        %1219 = vmatpush1.bf16.msra.mxu0 0
        %1220 = vmatprep.subr.bf16.mxu0 0
        %1221 = vmatpush1.bf16.msra.mxu0 0
        %1222 = vmatprep.subr.bf16.mxu0 0
        %1223 = vmatpush1.bf16.msra.mxu0 0
        %1224 = vmatprep.subr.bf16.mxu0 0
        %1225 = vmatpush1.bf16.msra.mxu0 0
        %1226 = vmatprep.subr.bf16.mxu0 0
        %1227 = vmatpush1.bf16.msra.mxu0 0
        %1228 = vmatprep.subr.bf16.mxu0 0
        %1229 = vmatpush1.bf16.msra.mxu0 0
        %1230 = vmatprep.subr.bf16.mxu0 0
        %1231 = vmatpush1.bf16.msra.mxu0 0
        %1232 = vmatprep.subr.bf16.mxu0 0
        %1233 = vmatpush1.bf16.msra.mxu0 0
        %1234 = vmatprep.subr.bf16.mxu0 0
        %1235 = vmatpush1.bf16.msra.mxu0 0
        %1236 = vmatprep.subr.bf16.mxu0 0
        %1237 = vmatpush1.bf16.msra.mxu0 0
        %1238 = vmatprep.subr.bf16.mxu0 0
        %1239 = vmatpush1.bf16.msra.mxu0 0
        %1240 = vmatprep.mubr.bf16.mxu0 0
        %1241 = vmatmul.mubr.bf16.gmra.mrb[0].mxu0 %v881
        %v1242 = vpop.f32.mrb[0].mxu0
        %v1243 = vadd.f32 0.0, %v1242
        %v1244 = vpop.f32.mrb[0].mxu0
        %v1245 = vpop.f32.mrb[0].mxu0
        %v1246 = vadd.f32 0.0, %v1245
        %v1247 = vpop.f32.mrb[0].mxu0
        %1248 = vdwg.mxu0
        %v1249 = vsub.f32 %v1243, %v1202
        %v1250 = vsub.f32 %v1246, %v1203
        %1251 = vmatprep.subr.bf16.mxu0 0
        %1252 = vmatpush1.bf16.msra.mxu0 %v870
        %1253 = vmatprep.subr.bf16.mxu0 0
        %1254 = vmatpush1.bf16.msra.mxu0 0
        %1255 = vmatprep.subr.bf16.mxu0 0
        %1256 = vmatpush1.bf16.msra.mxu0 0
        %1257 = vmatprep.subr.bf16.mxu0 0
        %1258 = vmatpush1.bf16.msra.mxu0 0
        %1259 = vmatprep.subr.bf16.mxu0 0
        %1260 = vmatpush1.bf16.msra.mxu0 0
        %1261 = vmatprep.subr.bf16.mxu0 0
        %1262 = vmatpush1.bf16.msra.mxu0 0
        %1263 = vmatprep.subr.bf16.mxu0 0
        %1264 = vmatpush1.bf16.msra.mxu0 0
        %1265 = vmatprep.subr.bf16.mxu0 0
        %1266 = vmatpush1.bf16.msra.mxu0 0
        %1267 = vmatprep.subr.bf16.mxu0 0
        %1268 = vmatpush1.bf16.msra.mxu0 0
        %1269 = vmatprep.subr.bf16.mxu0 0
        %1270 = vmatpush1.bf16.msra.mxu0 0
        %1271 = vmatprep.subr.bf16.mxu0 0
        %1272 = vmatpush1.bf16.msra.mxu0 0
        %1273 = vmatprep.subr.bf16.mxu0 0
        %1274 = vmatpush1.bf16.msra.mxu0 0
        %1275 = vmatprep.subr.bf16.mxu0 0
        %1276 = vmatpush1.bf16.msra.mxu0 0
        %1277 = vmatprep.subr.bf16.mxu0 0
        %1278 = vmatpush1.bf16.msra.mxu0 0
        %1279 = vmatprep.subr.bf16.mxu0 0
        %1280 = vmatpush1.bf16.msra.mxu0 0
        %1281 = vmatprep.subr.bf16.mxu0 0
        %1282 = vmatpush1.bf16.msra.mxu0 0
        %1283 = vmatprep.mubr.bf16.mxu0 0
        %1284 = vmatmul.mubr.bf16.gmra.mrb[0].mxu0 %v881
        %v1285 = vpop.f32.mrb[0].mxu0
        %v1286 = vadd.f32 0.0, %v1285
        %v1287 = vpop.f32.mrb[0].mxu0
        %v1288 = vpop.f32.mrb[0].mxu0
        %v1289 = vadd.f32 0.0, %v1288
        %v1290 = vpop.f32.mrb[0].mxu0
        %1291 = vdwg.mxu0
        %v1292 = vsub.f32 %v1286, %v1204
        %v1293 = vsub.f32 %v1289, %v1205
        %1294 = vmatprep.subr.bf16.mxu0 0
        %1295 = vmatpush1.bf16.msra.mxu0 %v871
        %1296 = vmatprep.subr.bf16.mxu0 0
        %1297 = vmatpush1.bf16.msra.mxu0 0
        %1298 = vmatprep.subr.bf16.mxu0 0
        %1299 = vmatpush1.bf16.msra.mxu0 0
        %1300 = vmatprep.subr.bf16.mxu0 0
        %1301 = vmatpush1.bf16.msra.mxu0 0
        %1302 = vmatprep.subr.bf16.mxu0 0
        %1303 = vmatpush1.bf16.msra.mxu0 0
        %1304 = vmatprep.subr.bf16.mxu0 0
        %1305 = vmatpush1.bf16.msra.mxu0 0
        %1306 = vmatprep.subr.bf16.mxu0 0
        %1307 = vmatpush1.bf16.msra.mxu0 0
        %1308 = vmatprep.subr.bf16.mxu0 0
        %1309 = vmatpush1.bf16.msra.mxu0 0
        %1310 = vmatprep.subr.bf16.mxu0 0
        %1311 = vmatpush1.bf16.msra.mxu0 0
        %1312 = vmatprep.subr.bf16.mxu0 0
        %1313 = vmatpush1.bf16.msra.mxu0 0
        %1314 = vmatprep.subr.bf16.mxu0 0
        %1315 = vmatpush1.bf16.msra.mxu0 0
        %1316 = vmatprep.subr.bf16.mxu0 0
        %1317 = vmatpush1.bf16.msra.mxu0 0
        %1318 = vmatprep.subr.bf16.mxu0 0
        %1319 = vmatpush1.bf16.msra.mxu0 0
        %1320 = vmatprep.subr.bf16.mxu0 0
        %1321 = vmatpush1.bf16.msra.mxu0 0
        %1322 = vmatprep.subr.bf16.mxu0 0
        %1323 = vmatpush1.bf16.msra.mxu0 0
        %1324 = vmatprep.subr.bf16.mxu0 0
        %1325 = vmatpush1.bf16.msra.mxu0 0
        %1326 = vmatprep.mubr.bf16.mxu0 0
        %1327 = vmatmul.mubr.bf16.gmra.mrb[0].mxu0 %v881
        %v1328 = vpop.f32.mrb[0].mxu0
        %v1329 = vadd.f32 0.0, %v1328
        %v1330 = vpop.f32.mrb[0].mxu0
        %v1331 = vpop.f32.mrb[0].mxu0
        %v1332 = vadd.f32 0.0, %v1331
        %v1333 = vpop.f32.mrb[0].mxu0
        %1334 = vdwg.mxu0
        %v1335 = vsub.f32 %v1329, %v1206
        %v1336 = vsub.f32 %v1332, %v1207
        %v1337 = vmul.f32 %v1335, 2.0
        %v1338 = vmul.f32 %v1336, 2.0
        %v1339 = vadd.f32 %v1337, 0.0009
        %v1340 = vadd.f32 %v1338, 0.0009
        %v1341 = vadd.f32 %v1249, %v1292
        %v1342 = vadd.f32 %v1250, %v1293
        %v1343 = vadd.f32 %v1341, 0.0009
        %v1344 = vadd.f32 %v1342, 0.0009
        %v1345 = vrcp.pop %v1343
        %v1346 = vrcp.pop %v1344
        %v1347 = vmul.f32 %v1339, %v1345
        %v1348 = vmul.f32 %v1340, %v1346
        %v1349 = vld [vmem:[#allocation3] sm:$0xff]
        %v1350 = vld [vmem:[#allocation3 + $0x8] sm:$0xff]
        %v1351 = vmul.f32 %v1349, %v1347
        %v1352 = vmul.f32 %v1350, %v1348
        %1353 = vst.msk [vmem:[#allocation3] sm:$0xff] %vm297, %v1351
        %1354 = vst.msk [vmem:[#allocation3 + $0x8] sm:$0xff] %vm297, %v1352
        %v1355 = vld [vmem:[%s678] sm:$0xff]
        %v1356 = vld [vmem:[%s678 + $0x8] sm:$0xff]
        %v1357 = vld [vmem:[%s681] sm:$0xff]
        %v1358 = vld [vmem:[%s681 + $0x8] sm:$0xff]
        %v1359 = vmul.f32 %v1355, %v1355
        %v1360 = vmul.f32 %v1356, %v1356
        %v1361 = vmul.f32 %v1357, %v1357
        %v1362 = vmul.f32 %v1358, %v1358
        %v1363 = vmul.f32 %v1355, %v1357
        %v1364 = vmul.f32 %v1356, %v1358
        %v1365 = vpack.c.bf16 %v1356, %v1355
        %1366 = vst.msk [vmem:[#allocation2] sm:$0xff] %vm297, %v1365
        %v1367 = vpack.c.bf16 %v1358, %v1357
        %1368 = vst.msk [vmem:[#allocation2 + $0x8] sm:$0xff] %vm297, %v1367
        %v1369 = vpack.c.bf16 %v1360, %v1359
        %1370 = vst.msk [vmem:[#allocation2 + $0x10] sm:$0xff] %vm297, %v1369
        %v1371 = vpack.c.bf16 %v1362, %v1361
        %1372 = vst.msk [vmem:[#allocation2 + $0x18] sm:$0xff] %vm297, %v1371
        %v1373 = vpack.c.bf16 %v1364, %v1363
        %1374 = vst.msk [vmem:[#allocation2 + $0x20] sm:$0xff] %vm297, %v1373
        %s1375 = scalar_lea.vmem [#allocation9], 16
        %v1376 = vld [vmem:[%s1375] sm:$0xf]
        %v1377 = vld [vmem:[%s1375 + $0x4] sm:$0xf]
        %v1378 = vld [vmem:[#allocation2] sm:$0xff]
        %v1379 = vld [vmem:[#allocation2 + $0x8] sm:$0xff]
        %v1380 = vld [vmem:[#allocation2 + $0x10] sm:$0xff]
        %v1381 = vld [vmem:[#allocation2 + $0x18] sm:$0xff]
        %v1382 = vld [vmem:[#allocation2 + $0x20] sm:$0xff]
        %v1385 = vunpack.c.l.b16 %v1376
        %v1386 = vunpack.c.l.b16 %v1377
        %v1387 = vpack.c.b16 %v1386, %v1385
        %v1390 = vsel %vm297, %v1378, 0
        %v1393 = vsel %vm297, %v1379, 0
        %v1396 = vsel %vm297, %v1380, 0
        %v1399 = vsel %vm297, %v1381, 0
        %v1402 = vsel %vm297, %v1382, 0
        %1404 = vmatprep.subr.bf16.mxu0 0
        %1405 = vmatpush1.bf16.msra.mxu0 %v1387
        %1406 = vmatprep.subr.bf16.mxu0 0
        %1407 = vmatpush1.bf16.msra.mxu0 0
        %1408 = vmatprep.subr.bf16.mxu0 0
        %1409 = vmatpush1.bf16.msra.mxu0 0
        %1410 = vmatprep.subr.bf16.mxu0 0
        %1411 = vmatpush1.bf16.msra.mxu0 0
        %1412 = vmatprep.subr.bf16.mxu0 0
        %1413 = vmatpush1.bf16.msra.mxu0 0
        %1414 = vmatprep.subr.bf16.mxu0 0
        %1415 = vmatpush1.bf16.msra.mxu0 0
        %1416 = vmatprep.subr.bf16.mxu0 0
        %1417 = vmatpush1.bf16.msra.mxu0 0
        %1418 = vmatprep.subr.bf16.mxu0 0
        %1419 = vmatpush1.bf16.msra.mxu0 0
        %1420 = vmatprep.subr.bf16.mxu0 0
        %1421 = vmatpush1.bf16.msra.mxu0 0
        %1422 = vmatprep.subr.bf16.mxu0 0
        %1423 = vmatpush1.bf16.msra.mxu0 0
        %1424 = vmatprep.subr.bf16.mxu0 0
        %1425 = vmatpush1.bf16.msra.mxu0 0
        %1426 = vmatprep.subr.bf16.mxu0 0
        %1427 = vmatpush1.bf16.msra.mxu0 0
        %1428 = vmatprep.subr.bf16.mxu0 0
        %1429 = vmatpush1.bf16.msra.mxu0 0
        %1430 = vmatprep.subr.bf16.mxu0 0
        %1431 = vmatpush1.bf16.msra.mxu0 0
        %1432 = vmatprep.subr.bf16.mxu0 0
        %1433 = vmatpush1.bf16.msra.mxu0 0
        %1434 = vmatprep.subr.bf16.mxu0 0
        %1435 = vmatpush1.bf16.msra.mxu0 0
        %1436 = vmatprep.mubr.bf16.mxu0 0
        %1437 = vmatmul.mubr.bf16.gmra.mrb[0].mxu0 %v1390
        %v1438 = vpop.f32.mrb[0].mxu0
        %v1439 = vadd.f32 0.0, %v1438
        %v1440 = vpop.f32.mrb[0].mxu0
        %v1441 = vpop.f32.mrb[0].mxu0
        %v1442 = vadd.f32 0.0, %v1441
        %v1443 = vpop.f32.mrb[0].mxu0
        %1444 = vmatprep.mubr.bf16.mxu0 0
        %1445 = vmatmul.mubr.bf16.gmra.mrb[0].mxu0 %v1393
        %v1446 = vpop.f32.mrb[0].mxu0
        %v1447 = vadd.f32 0.0, %v1446
        %v1448 = vpop.f32.mrb[0].mxu0
        %v1449 = vpop.f32.mrb[0].mxu0
        %v1450 = vadd.f32 0.0, %v1449
        %v1451 = vpop.f32.mrb[0].mxu0
        %1452 = vmatprep.mubr.bf16.mxu0 0
        %1453 = vmatmul.mubr.bf16.gmra.mrb[0].mxu0 %v1396
        %v1454 = vpop.f32.mrb[0].mxu0
        %v1455 = vadd.f32 0.0, %v1454
        %v1456 = vpop.f32.mrb[0].mxu0
        %v1457 = vpop.f32.mrb[0].mxu0
        %v1458 = vadd.f32 0.0, %v1457
        %v1459 = vpop.f32.mrb[0].mxu0
        %1460 = vmatprep.mubr.bf16.mxu0 0
        %1461 = vmatmul.mubr.bf16.gmra.mrb[0].mxu0 %v1399
        %v1462 = vpop.f32.mrb[0].mxu0
        %v1463 = vadd.f32 0.0, %v1462
        %v1464 = vpop.f32.mrb[0].mxu0
        %v1465 = vpop.f32.mrb[0].mxu0
        %v1466 = vadd.f32 0.0, %v1465
        %v1467 = vpop.f32.mrb[0].mxu0
        %1468 = vmatprep.mubr.bf16.mxu0 0
        %1469 = vmatmul.mubr.bf16.gmra.mrb[0].mxu0 %v1402
        %v1470 = vpop.f32.mrb[0].mxu0
        %v1471 = vadd.f32 0.0, %v1470
        %v1472 = vpop.f32.mrb[0].mxu0
        %v1473 = vpop.f32.mrb[0].mxu0
        %v1474 = vadd.f32 0.0, %v1473
        %v1475 = vpop.f32.mrb[0].mxu0
        %1476 = vdwg.mxu0
        %v1477 = vpack.c.bf16 %v1442, %v1439
        %v1478 = vpack.c.bf16 %v1450, %v1447
        %v1479 = vpack.c.bf16 %v1458, %v1455
        %v1480 = vpack.c.bf16 %v1466, %v1463
        %v1481 = vpack.c.bf16 %v1474, %v1471
        %s1482 = scalar_lea.vmem [#allocation10], 16
        %v1483 = vld [vmem:[%s1482] sm:$0xf]
        %v1484 = vld [vmem:[%s1482 + $0x4] sm:$0xf]
        %v1487 = vunpack.c.l.b16 %v1483
        %v1488 = vunpack.c.l.b16 %v1484
        %v1489 = vpack.c.b16 %v1488, %v1487
        %v1491 = vsel %vm297, %v1489, 0
        %1493 = vmatprep.subr.bf16.mxu0 0
        %1494 = vmatpush1.bf16.msra.mxu0 %v1477
        %1495 = vmatprep.subr.bf16.mxu0 0
        %1496 = vmatpush1.bf16.msra.mxu0 0
        %1497 = vmatprep.subr.bf16.mxu0 0
        %1498 = vmatpush1.bf16.msra.mxu0 0
        %1499 = vmatprep.subr.bf16.mxu0 0
        %1500 = vmatpush1.bf16.msra.mxu0 0
        %1501 = vmatprep.subr.bf16.mxu0 0
        %1502 = vmatpush1.bf16.msra.mxu0 0
        %1503 = vmatprep.subr.bf16.mxu0 0
        %1504 = vmatpush1.bf16.msra.mxu0 0
        %1505 = vmatprep.subr.bf16.mxu0 0
        %1506 = vmatpush1.bf16.msra.mxu0 0
        %1507 = vmatprep.subr.bf16.mxu0 0
        %1508 = vmatpush1.bf16.msra.mxu0 0
        %1509 = vmatprep.subr.bf16.mxu0 0
        %1510 = vmatpush1.bf16.msra.mxu0 0
        %1511 = vmatprep.subr.bf16.mxu0 0
        %1512 = vmatpush1.bf16.msra.mxu0 0
        %1513 = vmatprep.subr.bf16.mxu0 0
        %1514 = vmatpush1.bf16.msra.mxu0 0
        %1515 = vmatprep.subr.bf16.mxu0 0
        %1516 = vmatpush1.bf16.msra.mxu0 0
        %1517 = vmatprep.subr.bf16.mxu0 0
        %1518 = vmatpush1.bf16.msra.mxu0 0
        %1519 = vmatprep.subr.bf16.mxu0 0
        %1520 = vmatpush1.bf16.msra.mxu0 0
        %1521 = vmatprep.subr.bf16.mxu0 0
        %1522 = vmatpush1.bf16.msra.mxu0 0
        %1523 = vmatprep.subr.bf16.mxu0 0
        %1524 = vmatpush1.bf16.msra.mxu0 0
        %1525 = vmatprep.mubr.bf16.mxu0 0
        %1526 = vmatmul.mubr.bf16.gmra.mrb[0].mxu0 %v1491
        %v1527 = vpop.f32.mrb[0].mxu0
        %v1528 = vadd.f32 0.0, %v1527
        %v1529 = vpop.f32.mrb[0].mxu0
        %v1530 = vpop.f32.mrb[0].mxu0
        %v1531 = vadd.f32 0.0, %v1530
        %v1532 = vpop.f32.mrb[0].mxu0
        %1533 = vdwg.mxu0
        %1534 = vmatprep.subr.bf16.mxu0 0
        %1535 = vmatpush1.bf16.msra.mxu0 %v1478
        %1536 = vmatprep.subr.bf16.mxu0 0
        %1537 = vmatpush1.bf16.msra.mxu0 0
        %1538 = vmatprep.subr.bf16.mxu0 0
        %1539 = vmatpush1.bf16.msra.mxu0 0
        %1540 = vmatprep.subr.bf16.mxu0 0
        %1541 = vmatpush1.bf16.msra.mxu0 0
        %1542 = vmatprep.subr.bf16.mxu0 0
        %1543 = vmatpush1.bf16.msra.mxu0 0
        %1544 = vmatprep.subr.bf16.mxu0 0
        %1545 = vmatpush1.bf16.msra.mxu0 0
        %1546 = vmatprep.subr.bf16.mxu0 0
        %1547 = vmatpush1.bf16.msra.mxu0 0
        %1548 = vmatprep.subr.bf16.mxu0 0
        %1549 = vmatpush1.bf16.msra.mxu0 0
        %1550 = vmatprep.subr.bf16.mxu0 0
        %1551 = vmatpush1.bf16.msra.mxu0 0
        %1552 = vmatprep.subr.bf16.mxu0 0
        %1553 = vmatpush1.bf16.msra.mxu0 0
        %1554 = vmatprep.subr.bf16.mxu0 0
        %1555 = vmatpush1.bf16.msra.mxu0 0
        %1556 = vmatprep.subr.bf16.mxu0 0
        %1557 = vmatpush1.bf16.msra.mxu0 0
        %1558 = vmatprep.subr.bf16.mxu0 0
        %1559 = vmatpush1.bf16.msra.mxu0 0
        %1560 = vmatprep.subr.bf16.mxu0 0
        %1561 = vmatpush1.bf16.msra.mxu0 0
        %1562 = vmatprep.subr.bf16.mxu0 0
        %1563 = vmatpush1.bf16.msra.mxu0 0
        %1564 = vmatprep.subr.bf16.mxu0 0
        %1565 = vmatpush1.bf16.msra.mxu0 0
        %1566 = vmatprep.mubr.bf16.mxu0 0
        %1567 = vmatmul.mubr.bf16.gmra.mrb[0].mxu0 %v1491
        %v1568 = vpop.f32.mrb[0].mxu0
        %v1569 = vadd.f32 0.0, %v1568
        %v1570 = vpop.f32.mrb[0].mxu0
        %v1571 = vpop.f32.mrb[0].mxu0
        %v1572 = vadd.f32 0.0, %v1571
        %v1573 = vpop.f32.mrb[0].mxu0
        %1574 = vdwg.mxu0
        %v1575 = vmul.f32 %v1528, %v1528
        %v1576 = vmul.f32 %v1531, %v1531
        %v1577 = vmul.f32 %v1569, %v1569
        %v1578 = vmul.f32 %v1572, %v1572
        %v1579 = vmul.f32 %v1528, %v1569
        %v1580 = vmul.f32 %v1531, %v1572
        %1581 = vmatprep.subr.bf16.mxu0 0
        %1582 = vmatpush1.bf16.msra.mxu0 %v1479
        %1583 = vmatprep.subr.bf16.mxu0 0
        %1584 = vmatpush1.bf16.msra.mxu0 0
        %1585 = vmatprep.subr.bf16.mxu0 0
        %1586 = vmatpush1.bf16.msra.mxu0 0
        %1587 = vmatprep.subr.bf16.mxu0 0
        %1588 = vmatpush1.bf16.msra.mxu0 0
        %1589 = vmatprep.subr.bf16.mxu0 0
        %1590 = vmatpush1.bf16.msra.mxu0 0
        %1591 = vmatprep.subr.bf16.mxu0 0
        %1592 = vmatpush1.bf16.msra.mxu0 0
        %1593 = vmatprep.subr.bf16.mxu0 0
        %1594 = vmatpush1.bf16.msra.mxu0 0
        %1595 = vmatprep.subr.bf16.mxu0 0
        %1596 = vmatpush1.bf16.msra.mxu0 0
        %1597 = vmatprep.subr.bf16.mxu0 0
        %1598 = vmatpush1.bf16.msra.mxu0 0
        %1599 = vmatprep.subr.bf16.mxu0 0
        %1600 = vmatpush1.bf16.msra.mxu0 0
        %1601 = vmatprep.subr.bf16.mxu0 0
        %1602 = vmatpush1.bf16.msra.mxu0 0
        %1603 = vmatprep.subr.bf16.mxu0 0
        %1604 = vmatpush1.bf16.msra.mxu0 0
        %1605 = vmatprep.subr.bf16.mxu0 0
        %1606 = vmatpush1.bf16.msra.mxu0 0
        %1607 = vmatprep.subr.bf16.mxu0 0
        %1608 = vmatpush1.bf16.msra.mxu0 0
        %1609 = vmatprep.subr.bf16.mxu0 0
        %1610 = vmatpush1.bf16.msra.mxu0 0
        %1611 = vmatprep.subr.bf16.mxu0 0
        %1612 = vmatpush1.bf16.msra.mxu0 0
        %1613 = vmatprep.mubr.bf16.mxu0 0
        %1614 = vmatmul.mubr.bf16.gmra.mrb[0].mxu0 %v1491
        %v1615 = vpop.f32.mrb[0].mxu0
        %v1616 = vadd.f32 0.0, %v1615
        %v1617 = vpop.f32.mrb[0].mxu0
        %v1618 = vpop.f32.mrb[0].mxu0
        %v1619 = vadd.f32 0.0, %v1618
        %v1620 = vpop.f32.mrb[0].mxu0
        %1621 = vdwg.mxu0
        %v1622 = vsub.f32 %v1616, %v1575
        %v1623 = vsub.f32 %v1619, %v1576
        %1624 = vmatprep.subr.bf16.mxu0 0
        %1625 = vmatpush1.bf16.msra.mxu0 %v1480
        %1626 = vmatprep.subr.bf16.mxu0 0
        %1627 = vmatpush1.bf16.msra.mxu0 0
        %1628 = vmatprep.subr.bf16.mxu0 0
        %1629 = vmatpush1.bf16.msra.mxu0 0
        %1630 = vmatprep.subr.bf16.mxu0 0
        %1631 = vmatpush1.bf16.msra.mxu0 0
        %1632 = vmatprep.subr.bf16.mxu0 0
        %1633 = vmatpush1.bf16.msra.mxu0 0
        %1634 = vmatprep.subr.bf16.mxu0 0
        %1635 = vmatpush1.bf16.msra.mxu0 0
        %1636 = vmatprep.subr.bf16.mxu0 0
        %1637 = vmatpush1.bf16.msra.mxu0 0
        %1638 = vmatprep.subr.bf16.mxu0 0
        %1639 = vmatpush1.bf16.msra.mxu0 0
        %1640 = vmatprep.subr.bf16.mxu0 0
        %1641 = vmatpush1.bf16.msra.mxu0 0
        %1642 = vmatprep.subr.bf16.mxu0 0
        %1643 = vmatpush1.bf16.msra.mxu0 0
        %1644 = vmatprep.subr.bf16.mxu0 0
        %1645 = vmatpush1.bf16.msra.mxu0 0
        %1646 = vmatprep.subr.bf16.mxu0 0
        %1647 = vmatpush1.bf16.msra.mxu0 0
        %1648 = vmatprep.subr.bf16.mxu0 0
        %1649 = vmatpush1.bf16.msra.mxu0 0
        %1650 = vmatprep.subr.bf16.mxu0 0
        %1651 = vmatpush1.bf16.msra.mxu0 0
        %1652 = vmatprep.subr.bf16.mxu0 0
        %1653 = vmatpush1.bf16.msra.mxu0 0
        %1654 = vmatprep.subr.bf16.mxu0 0
        %1655 = vmatpush1.bf16.msra.mxu0 0
        %1656 = vmatprep.mubr.bf16.mxu0 0
        %1657 = vmatmul.mubr.bf16.gmra.mrb[0].mxu0 %v1491
        %v1658 = vpop.f32.mrb[0].mxu0
        %v1659 = vadd.f32 0.0, %v1658
        %v1660 = vpop.f32.mrb[0].mxu0
        %v1661 = vpop.f32.mrb[0].mxu0
        %v1662 = vadd.f32 0.0, %v1661
        %v1663 = vpop.f32.mrb[0].mxu0
        %1664 = vdwg.mxu0
        %v1665 = vsub.f32 %v1659, %v1577
        %v1666 = vsub.f32 %v1662, %v1578
        %1667 = vmatprep.subr.bf16.mxu0 0
        %1668 = vmatpush1.bf16.msra.mxu0 %v1481
        %1669 = vmatprep.subr.bf16.mxu0 0
        %1670 = vmatpush1.bf16.msra.mxu0 0
        %1671 = vmatprep.subr.bf16.mxu0 0
        %1672 = vmatpush1.bf16.msra.mxu0 0
        %1673 = vmatprep.subr.bf16.mxu0 0
        %1674 = vmatpush1.bf16.msra.mxu0 0
        %1675 = vmatprep.subr.bf16.mxu0 0
        %1676 = vmatpush1.bf16.msra.mxu0 0
        %1677 = vmatprep.subr.bf16.mxu0 0
        %1678 = vmatpush1.bf16.msra.mxu0 0
        %1679 = vmatprep.subr.bf16.mxu0 0
        %1680 = vmatpush1.bf16.msra.mxu0 0
        %1681 = vmatprep.subr.bf16.mxu0 0
        %1682 = vmatpush1.bf16.msra.mxu0 0
        %1683 = vmatprep.subr.bf16.mxu0 0
        %1684 = vmatpush1.bf16.msra.mxu0 0
        %1685 = vmatprep.subr.bf16.mxu0 0
        %1686 = vmatpush1.bf16.msra.mxu0 0
        %1687 = vmatprep.subr.bf16.mxu0 0
        %1688 = vmatpush1.bf16.msra.mxu0 0
        %1689 = vmatprep.subr.bf16.mxu0 0
        %1690 = vmatpush1.bf16.msra.mxu0 0
        %1691 = vmatprep.subr.bf16.mxu0 0
        %1692 = vmatpush1.bf16.msra.mxu0 0
        %1693 = vmatprep.subr.bf16.mxu0 0
        %1694 = vmatpush1.bf16.msra.mxu0 0
        %1695 = vmatprep.subr.bf16.mxu0 0
        %1696 = vmatpush1.bf16.msra.mxu0 0
        %1697 = vmatprep.subr.bf16.mxu0 0
        %1698 = vmatpush1.bf16.msra.mxu0 0
        %1699 = vmatprep.mubr.bf16.mxu0 0
        %1700 = vmatmul.mubr.bf16.gmra.mrb[0].mxu0 %v1491
        %v1701 = vpop.f32.mrb[0].mxu0
        %v1702 = vadd.f32 0.0, %v1701
        %v1703 = vpop.f32.mrb[0].mxu0
        %v1704 = vpop.f32.mrb[0].mxu0
        %v1705 = vadd.f32 0.0, %v1704
        %v1706 = vpop.f32.mrb[0].mxu0
        %1707 = vdwg.mxu0
        %v1708 = vsub.f32 %v1702, %v1579
        %v1709 = vsub.f32 %v1705, %v1580
        %v1710 = vmul.f32 %v1708, 2.0
        %v1711 = vmul.f32 %v1709, 2.0
        %v1712 = vadd.f32 %v1710, 0.0009
        %v1713 = vadd.f32 %v1711, 0.0009
        %v1714 = vadd.f32 %v1622, %v1665
        %v1715 = vadd.f32 %v1623, %v1666
        %v1716 = vadd.f32 %v1714, 0.0009
        %v1717 = vadd.f32 %v1715, 0.0009
        %v1718 = vrcp.pop %v1716
        %v1719 = vrcp.pop %v1717
        %v1720 = vmul.f32 %v1712, %v1718
        %v1721 = vmul.f32 %v1713, %v1719
        %v1722 = vmul.f32 %v1720, %v1720
        %v1723 = vmul.f32 %v1721, %v1721
        %v1724 = vmul.f32 %v1722, %v1720
        %v1725 = vmul.f32 %v1723, %v1721
        %v1726 = vld [vmem:[#allocation3] sm:$0xff]
        %v1727 = vld [vmem:[#allocation3 + $0x8] sm:$0xff]
        %v1728 = vmul.f32 %v1726, %v1724
        %v1729 = vmul.f32 %v1727, %v1725
        %1730 = vst.msk [vmem:[#allocation3] sm:$0xff] %vm297, %v1728
        %1731 = vst.msk [vmem:[#allocation3 + $0x8] sm:$0xff] %vm297, %v1729
        %v1732 = vld [vmem:[%s678] sm:$0xff]
        %v1733 = vld [vmem:[%s678 + $0x8] sm:$0xff]
        %v1734 = vld [vmem:[%s681] sm:$0xff]
        %v1735 = vld [vmem:[%s681 + $0x8] sm:$0xff]
        %v1736 = vmul.f32 %v1732, %v1732
        %v1737 = vmul.f32 %v1733, %v1733
        %v1738 = vmul.f32 %v1734, %v1734
        %v1739 = vmul.f32 %v1735, %v1735
        %v1740 = vmul.f32 %v1732, %v1734
        %v1741 = vmul.f32 %v1733, %v1735
        %v1742 = vpack.c.bf16 %v1733, %v1732
        %1743 = vst.msk [vmem:[#allocation2] sm:$0xff] %vm297, %v1742
        %v1744 = vpack.c.bf16 %v1735, %v1734
        %1745 = vst.msk [vmem:[#allocation2 + $0x8] sm:$0xff] %vm297, %v1744
        %v1746 = vpack.c.bf16 %v1737, %v1736
        %1747 = vst.msk [vmem:[#allocation2 + $0x10] sm:$0xff] %vm297, %v1746
        %v1748 = vpack.c.bf16 %v1739, %v1738
        %1749 = vst.msk [vmem:[#allocation2 + $0x18] sm:$0xff] %vm297, %v1748
        %v1750 = vpack.c.bf16 %v1741, %v1740
        %1751 = vst.msk [vmem:[#allocation2 + $0x20] sm:$0xff] %vm297, %v1750
        %s1752 = scalar_lea.vmem %s238, 32 [#allocation4]
        %v1753 = vld [vmem:[%s1752] sm:$0xff]
        %v1754 = vld [vmem:[%s1752 + $0x8] sm:$0xff]
        %s1755 = scalar_lea.vmem %s247, 32 [#allocation7]
        %v1756 = vld [vmem:[%s1755] sm:$0xff]
        %v1757 = vld [vmem:[%s1755 + $0x8] sm:$0xff]
        %v1758 = vmul.f32 %v1753, %v1753
        %v1759 = vmul.f32 %v1754, %v1754
        %v1760 = vmul.f32 %v1756, %v1756
        %v1761 = vmul.f32 %v1757, %v1757
        %v1762 = vmul.f32 %v1753, %v1756
        %v1763 = vmul.f32 %v1754, %v1757
        %v1764 = vpack.c.bf16 %v1754, %v1753
        %1765 = vst.msk [vmem:[#allocation2 + $0x28] sm:$0xff] %vm297, %v1764
        %v1766 = vpack.c.bf16 %v1757, %v1756
        %1767 = vst.msk [vmem:[#allocation2 + $0x30] sm:$0xff] %vm297, %v1766
        %v1768 = vpack.c.bf16 %v1759, %v1758
        %1769 = vst.msk [vmem:[#allocation2 + $0x38] sm:$0xff] %vm297, %v1768
        %v1770 = vpack.c.bf16 %v1761, %v1760
        %1771 = vst.msk [vmem:[#allocation2 + $0x40] sm:$0xff] %vm297, %v1770
        %v1772 = vpack.c.bf16 %v1763, %v1762
        %1773 = vst.msk [vmem:[#allocation2 + $0x48] sm:$0xff] %vm297, %v1772
        %s1774 = scalar_lea.vmem [#allocation9], 24
        %v1775 = vld [vmem:[%s1774] sm:$0xf]
        %v1776 = vld [vmem:[%s1774 + $0x4] sm:$0xf]
        %v1777 = vld [vmem:[#allocation2] sm:$0xff]
        %v1778 = vld [vmem:[#allocation2 + $0x8] sm:$0xff]
        %v1779 = vld [vmem:[#allocation2 + $0x10] sm:$0xff]
        %v1780 = vld [vmem:[#allocation2 + $0x18] sm:$0xff]
        %v1781 = vld [vmem:[#allocation2 + $0x20] sm:$0xff]
        %v1782 = vld [vmem:[#allocation2 + $0x28] sm:$0xff]
        %v1783 = vld [vmem:[#allocation2 + $0x30] sm:$0xff]
        %v1784 = vld [vmem:[#allocation2 + $0x38] sm:$0xff]
        %v1785 = vld [vmem:[#allocation2 + $0x40] sm:$0xff]
        %v1786 = vld [vmem:[#allocation2 + $0x48] sm:$0xff]
        %v1789 = vunpack.c.l.b16 %v1775
        %v1790 = vunpack.c.l.b16 %v1776
        %v1791 = vpack.c.b16 %v1790, %v1789
        %v1794 = vsel %vm297, %v1777, 0
        %v1797 = vsel %vm297, %v1778, 0
        %v1800 = vsel %vm297, %v1779, 0
        %v1803 = vsel %vm297, %v1780, 0
        %v1806 = vsel %vm297, %v1781, 0
        %v1809 = vsel %vm297, %v1782, 0
        %v1812 = vsel %vm297, %v1783, 0
        %v1815 = vsel %vm297, %v1784, 0
        %v1818 = vsel %vm297, %v1785, 0
        %v1821 = vsel %vm297, %v1786, 0
        %1823 = vmatprep.subr.bf16.mxu0 0
        %1824 = vmatpush1.bf16.msra.mxu0 %v1791
        %1825 = vmatprep.subr.bf16.mxu0 0
        %1826 = vmatpush1.bf16.msra.mxu0 0
        %1827 = vmatprep.subr.bf16.mxu0 0
        %1828 = vmatpush1.bf16.msra.mxu0 0
        %1829 = vmatprep.subr.bf16.mxu0 0
        %1830 = vmatpush1.bf16.msra.mxu0 0
        %1831 = vmatprep.subr.bf16.mxu0 0
        %1832 = vmatpush1.bf16.msra.mxu0 0
        %1833 = vmatprep.subr.bf16.mxu0 0
        %1834 = vmatpush1.bf16.msra.mxu0 0
        %1835 = vmatprep.subr.bf16.mxu0 0
        %1836 = vmatpush1.bf16.msra.mxu0 0
        %1837 = vmatprep.subr.bf16.mxu0 0
        %1838 = vmatpush1.bf16.msra.mxu0 0
        %1839 = vmatprep.subr.bf16.mxu0 0
        %1840 = vmatpush1.bf16.msra.mxu0 0
        %1841 = vmatprep.subr.bf16.mxu0 0
        %1842 = vmatpush1.bf16.msra.mxu0 0
        %1843 = vmatprep.subr.bf16.mxu0 0
        %1844 = vmatpush1.bf16.msra.mxu0 0
        %1845 = vmatprep.subr.bf16.mxu0 0
        %1846 = vmatpush1.bf16.msra.mxu0 0
        %1847 = vmatprep.subr.bf16.mxu0 0
        %1848 = vmatpush1.bf16.msra.mxu0 0
        %1849 = vmatprep.subr.bf16.mxu0 0
        %1850 = vmatpush1.bf16.msra.mxu0 0
        %1851 = vmatprep.subr.bf16.mxu0 0
        %1852 = vmatpush1.bf16.msra.mxu0 0
        %1853 = vmatprep.subr.bf16.mxu0 0
        %1854 = vmatpush1.bf16.msra.mxu0 0
        %1855 = vmatprep.mubr.bf16.mxu0 0
        %1856 = vmatmul.mubr.bf16.gmra.mrb[0].mxu0 %v1794
        %v1857 = vpop.f32.mrb[0].mxu0
        %v1858 = vadd.f32 0.0, %v1857
        %v1859 = vpop.f32.mrb[0].mxu0
        %v1860 = vpop.f32.mrb[0].mxu0
        %v1861 = vadd.f32 0.0, %v1860
        %v1862 = vpop.f32.mrb[0].mxu0
        %1863 = vmatprep.mubr.bf16.mxu0 0
        %1864 = vmatmul.mubr.bf16.gmra.mrb[0].mxu0 %v1797
        %v1865 = vpop.f32.mrb[0].mxu0
        %v1866 = vadd.f32 0.0, %v1865
        %v1867 = vpop.f32.mrb[0].mxu0
        %v1868 = vpop.f32.mrb[0].mxu0
        %v1869 = vadd.f32 0.0, %v1868
        %v1870 = vpop.f32.mrb[0].mxu0
        %1871 = vmatprep.mubr.bf16.mxu0 0
        %1872 = vmatmul.mubr.bf16.gmra.mrb[0].mxu0 %v1800
        %v1873 = vpop.f32.mrb[0].mxu0
        %v1874 = vadd.f32 0.0, %v1873
        %v1875 = vpop.f32.mrb[0].mxu0
        %v1876 = vpop.f32.mrb[0].mxu0
        %v1877 = vadd.f32 0.0, %v1876
        %v1878 = vpop.f32.mrb[0].mxu0
        %1879 = vmatprep.mubr.bf16.mxu0 0
        %1880 = vmatmul.mubr.bf16.gmra.mrb[0].mxu0 %v1803
        %v1881 = vpop.f32.mrb[0].mxu0
        %v1882 = vadd.f32 0.0, %v1881
        %v1883 = vpop.f32.mrb[0].mxu0
        %v1884 = vpop.f32.mrb[0].mxu0
        %v1885 = vadd.f32 0.0, %v1884
        %v1886 = vpop.f32.mrb[0].mxu0
        %1887 = vmatprep.mubr.bf16.mxu0 0
        %1888 = vmatmul.mubr.bf16.gmra.mrb[0].mxu0 %v1806
        %v1889 = vpop.f32.mrb[0].mxu0
        %v1890 = vadd.f32 0.0, %v1889
        %v1891 = vpop.f32.mrb[0].mxu0
        %v1892 = vpop.f32.mrb[0].mxu0
        %v1893 = vadd.f32 0.0, %v1892
        %v1894 = vpop.f32.mrb[0].mxu0
        %1895 = vmatprep.mubr.bf16.mxu0 0
        %1896 = vmatmul.mubr.bf16.gmra.mrb[0].mxu0 %v1809
        %v1897 = vpop.f32.mrb[0].mxu0
        %v1898 = vadd.f32 0.0, %v1897
        %v1899 = vpop.f32.mrb[0].mxu0
        %v1900 = vpop.f32.mrb[0].mxu0
        %v1901 = vadd.f32 0.0, %v1900
        %v1902 = vpop.f32.mrb[0].mxu0
        %1903 = vmatprep.mubr.bf16.mxu0 0
        %1904 = vmatmul.mubr.bf16.gmra.mrb[0].mxu0 %v1812
        %v1905 = vpop.f32.mrb[0].mxu0
        %v1906 = vadd.f32 0.0, %v1905
        %v1907 = vpop.f32.mrb[0].mxu0
        %v1908 = vpop.f32.mrb[0].mxu0
        %v1909 = vadd.f32 0.0, %v1908
        %v1910 = vpop.f32.mrb[0].mxu0
        %1911 = vmatprep.mubr.bf16.mxu0 0
        %1912 = vmatmul.mubr.bf16.gmra.mrb[0].mxu0 %v1815
        %v1913 = vpop.f32.mrb[0].mxu0
        %v1914 = vadd.f32 0.0, %v1913
        %v1915 = vpop.f32.mrb[0].mxu0
        %v1916 = vpop.f32.mrb[0].mxu0
        %v1917 = vadd.f32 0.0, %v1916
        %v1918 = vpop.f32.mrb[0].mxu0
        %1919 = vmatprep.mubr.bf16.mxu0 0
        %1920 = vmatmul.mubr.bf16.gmra.mrb[0].mxu0 %v1818
        %v1921 = vpop.f32.mrb[0].mxu0
        %v1922 = vadd.f32 0.0, %v1921
        %v1923 = vpop.f32.mrb[0].mxu0
        %v1924 = vpop.f32.mrb[0].mxu0
        %v1925 = vadd.f32 0.0, %v1924
        %v1926 = vpop.f32.mrb[0].mxu0
        %1927 = vmatprep.mubr.bf16.mxu0 0
        %1928 = vmatmul.mubr.bf16.gmra.mrb[0].mxu0 %v1821
        %v1929 = vpop.f32.mrb[0].mxu0
        %v1930 = vadd.f32 0.0, %v1929
        %v1931 = vpop.f32.mrb[0].mxu0
        %v1932 = vpop.f32.mrb[0].mxu0
        %v1933 = vadd.f32 0.0, %v1932
        %v1934 = vpop.f32.mrb[0].mxu0
        %1935 = vdwg.mxu0
        %v1936 = vpack.c.bf16 %v1861, %v1858
        %v1937 = vpack.c.bf16 %v1869, %v1866
        %v1938 = vpack.c.bf16 %v1877, %v1874
        %v1939 = vpack.c.bf16 %v1885, %v1882
        %v1940 = vpack.c.bf16 %v1893, %v1890
        %v1941 = vpack.c.bf16 %v1901, %v1898
        %v1942 = vpack.c.bf16 %v1909, %v1906
        %v1943 = vpack.c.bf16 %v1917, %v1914
        %v1944 = vpack.c.bf16 %v1925, %v1922
        %v1945 = vpack.c.bf16 %v1933, %v1930
        %s1946 = scalar_lea.vmem [#allocation10], 24
        %v1947 = vld [vmem:[%s1946] sm:$0xf]
        %v1948 = vld [vmem:[%s1946 + $0x4] sm:$0xf]
        %v1951 = vunpack.c.l.b16 %v1947
        %v1952 = vunpack.c.l.b16 %v1948
        %v1953 = vpack.c.b16 %v1952, %v1951
        %v1955 = vsel %vm297, %v1953, 0
        %1957 = vmatprep.subr.bf16.mxu0 0
        %1958 = vmatpush1.bf16.msra.mxu0 %v1936
        %1959 = vmatprep.subr.bf16.mxu0 0
        %1960 = vmatpush1.bf16.msra.mxu0 0
        %1961 = vmatprep.subr.bf16.mxu0 0
        %1962 = vmatpush1.bf16.msra.mxu0 0
        %1963 = vmatprep.subr.bf16.mxu0 0
        %1964 = vmatpush1.bf16.msra.mxu0 0
        %1965 = vmatprep.subr.bf16.mxu0 0
        %1966 = vmatpush1.bf16.msra.mxu0 0
        %1967 = vmatprep.subr.bf16.mxu0 0
        %1968 = vmatpush1.bf16.msra.mxu0 0
        %1969 = vmatprep.subr.bf16.mxu0 0
        %1970 = vmatpush1.bf16.msra.mxu0 0
        %1971 = vmatprep.subr.bf16.mxu0 0
        %1972 = vmatpush1.bf16.msra.mxu0 0
        %1973 = vmatprep.subr.bf16.mxu0 0
        %1974 = vmatpush1.bf16.msra.mxu0 0
        %1975 = vmatprep.subr.bf16.mxu0 0
        %1976 = vmatpush1.bf16.msra.mxu0 0
        %1977 = vmatprep.subr.bf16.mxu0 0
        %1978 = vmatpush1.bf16.msra.mxu0 0
        %1979 = vmatprep.subr.bf16.mxu0 0
        %1980 = vmatpush1.bf16.msra.mxu0 0
        %1981 = vmatprep.subr.bf16.mxu0 0
        %1982 = vmatpush1.bf16.msra.mxu0 0
        %1983 = vmatprep.subr.bf16.mxu0 0
        %1984 = vmatpush1.bf16.msra.mxu0 0
        %1985 = vmatprep.subr.bf16.mxu0 0
        %1986 = vmatpush1.bf16.msra.mxu0 0
        %1987 = vmatprep.subr.bf16.mxu0 0
        %1988 = vmatpush1.bf16.msra.mxu0 0
        %1989 = vmatprep.mubr.bf16.mxu0 0
        %1990 = vmatmul.mubr.bf16.gmra.mrb[0].mxu0 %v1955
        %v1991 = vpop.f32.mrb[0].mxu0
        %v1992 = vadd.f32 0.0, %v1991
        %v1993 = vpop.f32.mrb[0].mxu0
        %v1994 = vpop.f32.mrb[0].mxu0
        %v1995 = vadd.f32 0.0, %v1994
        %v1996 = vpop.f32.mrb[0].mxu0
        %1997 = vdwg.mxu0
        %1998 = vmatprep.subr.bf16.mxu0 0
        %1999 = vmatpush1.bf16.msra.mxu0 %v1937
        %2000 = vmatprep.subr.bf16.mxu0 0
        %2001 = vmatpush1.bf16.msra.mxu0 0
        %2002 = vmatprep.subr.bf16.mxu0 0
        %2003 = vmatpush1.bf16.msra.mxu0 0
        %2004 = vmatprep.subr.bf16.mxu0 0
        %2005 = vmatpush1.bf16.msra.mxu0 0
        %2006 = vmatprep.subr.bf16.mxu0 0
        %2007 = vmatpush1.bf16.msra.mxu0 0
        %2008 = vmatprep.subr.bf16.mxu0 0
        %2009 = vmatpush1.bf16.msra.mxu0 0
        %2010 = vmatprep.subr.bf16.mxu0 0
        %2011 = vmatpush1.bf16.msra.mxu0 0
        %2012 = vmatprep.subr.bf16.mxu0 0
        %2013 = vmatpush1.bf16.msra.mxu0 0
        %2014 = vmatprep.subr.bf16.mxu0 0
        %2015 = vmatpush1.bf16.msra.mxu0 0
        %2016 = vmatprep.subr.bf16.mxu0 0
        %2017 = vmatpush1.bf16.msra.mxu0 0
        %2018 = vmatprep.subr.bf16.mxu0 0
        %2019 = vmatpush1.bf16.msra.mxu0 0
        %2020 = vmatprep.subr.bf16.mxu0 0
        %2021 = vmatpush1.bf16.msra.mxu0 0
        %2022 = vmatprep.subr.bf16.mxu0 0
        %2023 = vmatpush1.bf16.msra.mxu0 0
        %2024 = vmatprep.subr.bf16.mxu0 0
        %2025 = vmatpush1.bf16.msra.mxu0 0
        %2026 = vmatprep.subr.bf16.mxu0 0
        %2027 = vmatpush1.bf16.msra.mxu0 0
        %2028 = vmatprep.subr.bf16.mxu0 0
        %2029 = vmatpush1.bf16.msra.mxu0 0
        %2030 = vmatprep.mubr.bf16.mxu0 0
        %2031 = vmatmul.mubr.bf16.gmra.mrb[0].mxu0 %v1955
        %v2032 = vpop.f32.mrb[0].mxu0
        %v2033 = vadd.f32 0.0, %v2032
        %v2034 = vpop.f32.mrb[0].mxu0
        %v2035 = vpop.f32.mrb[0].mxu0
        %v2036 = vadd.f32 0.0, %v2035
        %v2037 = vpop.f32.mrb[0].mxu0
        %2038 = vdwg.mxu0
        %v2039 = vmul.f32 %v1992, %v1992
        %v2040 = vmul.f32 %v1995, %v1995
        %v2041 = vmul.f32 %v2033, %v2033
        %v2042 = vmul.f32 %v2036, %v2036
        %v2043 = vmul.f32 %v1992, %v2033
        %v2044 = vmul.f32 %v1995, %v2036
        %2045 = vmatprep.subr.bf16.mxu0 0
        %2046 = vmatpush1.bf16.msra.mxu0 %v1938
        %2047 = vmatprep.subr.bf16.mxu0 0
        %2048 = vmatpush1.bf16.msra.mxu0 0
        %2049 = vmatprep.subr.bf16.mxu0 0
        %2050 = vmatpush1.bf16.msra.mxu0 0
        %2051 = vmatprep.subr.bf16.mxu0 0
        %2052 = vmatpush1.bf16.msra.mxu0 0
        %2053 = vmatprep.subr.bf16.mxu0 0
        %2054 = vmatpush1.bf16.msra.mxu0 0
        %2055 = vmatprep.subr.bf16.mxu0 0
        %2056 = vmatpush1.bf16.msra.mxu0 0
        %2057 = vmatprep.subr.bf16.mxu0 0
        %2058 = vmatpush1.bf16.msra.mxu0 0
        %2059 = vmatprep.subr.bf16.mxu0 0
        %2060 = vmatpush1.bf16.msra.mxu0 0
        %2061 = vmatprep.subr.bf16.mxu0 0
        %2062 = vmatpush1.bf16.msra.mxu0 0
        %2063 = vmatprep.subr.bf16.mxu0 0
        %2064 = vmatpush1.bf16.msra.mxu0 0
        %2065 = vmatprep.subr.bf16.mxu0 0
        %2066 = vmatpush1.bf16.msra.mxu0 0
        %2067 = vmatprep.subr.bf16.mxu0 0
        %2068 = vmatpush1.bf16.msra.mxu0 0
        %2069 = vmatprep.subr.bf16.mxu0 0
        %2070 = vmatpush1.bf16.msra.mxu0 0
        %2071 = vmatprep.subr.bf16.mxu0 0
        %2072 = vmatpush1.bf16.msra.mxu0 0
        %2073 = vmatprep.subr.bf16.mxu0 0
        %2074 = vmatpush1.bf16.msra.mxu0 0
        %2075 = vmatprep.subr.bf16.mxu0 0
        %2076 = vmatpush1.bf16.msra.mxu0 0
        %2077 = vmatprep.mubr.bf16.mxu0 0
        %2078 = vmatmul.mubr.bf16.gmra.mrb[0].mxu0 %v1955
        %v2079 = vpop.f32.mrb[0].mxu0
        %v2080 = vadd.f32 0.0, %v2079
        %v2081 = vpop.f32.mrb[0].mxu0
        %v2082 = vpop.f32.mrb[0].mxu0
        %v2083 = vadd.f32 0.0, %v2082
        %v2084 = vpop.f32.mrb[0].mxu0
        %2085 = vdwg.mxu0
        %v2086 = vsub.f32 %v2080, %v2039
        %v2087 = vsub.f32 %v2083, %v2040
        %2088 = vmatprep.subr.bf16.mxu0 0
        %2089 = vmatpush1.bf16.msra.mxu0 %v1939
        %2090 = vmatprep.subr.bf16.mxu0 0
        %2091 = vmatpush1.bf16.msra.mxu0 0
        %2092 = vmatprep.subr.bf16.mxu0 0
        %2093 = vmatpush1.bf16.msra.mxu0 0
        %2094 = vmatprep.subr.bf16.mxu0 0
        %2095 = vmatpush1.bf16.msra.mxu0 0
        %2096 = vmatprep.subr.bf16.mxu0 0
        %2097 = vmatpush1.bf16.msra.mxu0 0
        %2098 = vmatprep.subr.bf16.mxu0 0
        %2099 = vmatpush1.bf16.msra.mxu0 0
        %2100 = vmatprep.subr.bf16.mxu0 0
        %2101 = vmatpush1.bf16.msra.mxu0 0
        %2102 = vmatprep.subr.bf16.mxu0 0
        %2103 = vmatpush1.bf16.msra.mxu0 0
        %2104 = vmatprep.subr.bf16.mxu0 0
        %2105 = vmatpush1.bf16.msra.mxu0 0
        %2106 = vmatprep.subr.bf16.mxu0 0
        %2107 = vmatpush1.bf16.msra.mxu0 0
        %2108 = vmatprep.subr.bf16.mxu0 0
        %2109 = vmatpush1.bf16.msra.mxu0 0
        %2110 = vmatprep.subr.bf16.mxu0 0
        %2111 = vmatpush1.bf16.msra.mxu0 0
        %2112 = vmatprep.subr.bf16.mxu0 0
        %2113 = vmatpush1.bf16.msra.mxu0 0
        %2114 = vmatprep.subr.bf16.mxu0 0
        %2115 = vmatpush1.bf16.msra.mxu0 0
        %2116 = vmatprep.subr.bf16.mxu0 0
        %2117 = vmatpush1.bf16.msra.mxu0 0
        %2118 = vmatprep.subr.bf16.mxu0 0
        %2119 = vmatpush1.bf16.msra.mxu0 0
        %2120 = vmatprep.mubr.bf16.mxu0 0
        %2121 = vmatmul.mubr.bf16.gmra.mrb[0].mxu0 %v1955
        %v2122 = vpop.f32.mrb[0].mxu0
        %v2123 = vadd.f32 0.0, %v2122
        %v2124 = vpop.f32.mrb[0].mxu0
        %v2125 = vpop.f32.mrb[0].mxu0
        %v2126 = vadd.f32 0.0, %v2125
        %v2127 = vpop.f32.mrb[0].mxu0
        %2128 = vdwg.mxu0
        %v2129 = vsub.f32 %v2123, %v2041
        %v2130 = vsub.f32 %v2126, %v2042
        %2131 = vmatprep.subr.bf16.mxu0 0
        %2132 = vmatpush1.bf16.msra.mxu0 %v1940
        %2133 = vmatprep.subr.bf16.mxu0 0
        %2134 = vmatpush1.bf16.msra.mxu0 0
        %2135 = vmatprep.subr.bf16.mxu0 0
        %2136 = vmatpush1.bf16.msra.mxu0 0
        %2137 = vmatprep.subr.bf16.mxu0 0
        %2138 = vmatpush1.bf16.msra.mxu0 0
        %2139 = vmatprep.subr.bf16.mxu0 0
        %2140 = vmatpush1.bf16.msra.mxu0 0
        %2141 = vmatprep.subr.bf16.mxu0 0
        %2142 = vmatpush1.bf16.msra.mxu0 0
        %2143 = vmatprep.subr.bf16.mxu0 0
        %2144 = vmatpush1.bf16.msra.mxu0 0
        %2145 = vmatprep.subr.bf16.mxu0 0
        %2146 = vmatpush1.bf16.msra.mxu0 0
        %2147 = vmatprep.subr.bf16.mxu0 0
        %2148 = vmatpush1.bf16.msra.mxu0 0
        %2149 = vmatprep.subr.bf16.mxu0 0
        %2150 = vmatpush1.bf16.msra.mxu0 0
        %2151 = vmatprep.subr.bf16.mxu0 0
        %2152 = vmatpush1.bf16.msra.mxu0 0
        %2153 = vmatprep.subr.bf16.mxu0 0
        %2154 = vmatpush1.bf16.msra.mxu0 0
        %2155 = vmatprep.subr.bf16.mxu0 0
        %2156 = vmatpush1.bf16.msra.mxu0 0
        %2157 = vmatprep.subr.bf16.mxu0 0
        %2158 = vmatpush1.bf16.msra.mxu0 0
        %2159 = vmatprep.subr.bf16.mxu0 0
        %2160 = vmatpush1.bf16.msra.mxu0 0
        %2161 = vmatprep.subr.bf16.mxu0 0
        %2162 = vmatpush1.bf16.msra.mxu0 0
        %2163 = vmatprep.mubr.bf16.mxu0 0
        %2164 = vmatmul.mubr.bf16.gmra.mrb[0].mxu0 %v1955
        %v2165 = vpop.f32.mrb[0].mxu0
        %v2166 = vadd.f32 0.0, %v2165
        %v2167 = vpop.f32.mrb[0].mxu0
        %v2168 = vpop.f32.mrb[0].mxu0
        %v2169 = vadd.f32 0.0, %v2168
        %v2170 = vpop.f32.mrb[0].mxu0
        %2171 = vdwg.mxu0
        %v2172 = vsub.f32 %v2166, %v2043
        %v2173 = vsub.f32 %v2169, %v2044
        %v2174 = vmul.f32 %v2172, 2.0
        %v2175 = vmul.f32 %v2173, 2.0
        %v2176 = vadd.f32 %v2174, 0.0009
        %v2177 = vadd.f32 %v2175, 0.0009
        %v2178 = vadd.f32 %v2086, %v2129
        %v2179 = vadd.f32 %v2087, %v2130
        %v2180 = vadd.f32 %v2178, 0.0009
        %v2181 = vadd.f32 %v2179, 0.0009
        %v2182 = vrcp.pop %v2180
        %v2183 = vrcp.pop %v2181
        %v2184 = vmul.f32 %v2176, %v2182
        %v2185 = vmul.f32 %v2177, %v2183
        %v2186 = vld [vmem:[#allocation3] sm:$0xff]
        %v2187 = vld [vmem:[#allocation3 + $0x8] sm:$0xff]
        %v2188 = vmul.f32 %v2186, %v2184
        %v2189 = vmul.f32 %v2187, %v2185
        %2190 = vst.msk [vmem:[#allocation3] sm:$0xff] %vm297, %v2188
        %2191 = vst.msk [vmem:[#allocation3 + $0x8] sm:$0xff] %vm297, %v2189
        %2192 = vmatprep.subr.bf16.mxu0 0
        %2193 = vmatpush1.bf16.msra.mxu0 %v1941
        %2194 = vmatprep.subr.bf16.mxu0 0
        %2195 = vmatpush1.bf16.msra.mxu0 0
        %2196 = vmatprep.subr.bf16.mxu0 0
        %2197 = vmatpush1.bf16.msra.mxu0 0
        %2198 = vmatprep.subr.bf16.mxu0 0
        %2199 = vmatpush1.bf16.msra.mxu0 0
        %2200 = vmatprep.subr.bf16.mxu0 0
        %2201 = vmatpush1.bf16.msra.mxu0 0
        %2202 = vmatprep.subr.bf16.mxu0 0
        %2203 = vmatpush1.bf16.msra.mxu0 0
        %2204 = vmatprep.subr.bf16.mxu0 0
        %2205 = vmatpush1.bf16.msra.mxu0 0
        %2206 = vmatprep.subr.bf16.mxu0 0
        %2207 = vmatpush1.bf16.msra.mxu0 0
        %2208 = vmatprep.subr.bf16.mxu0 0
        %2209 = vmatpush1.bf16.msra.mxu0 0
        %2210 = vmatprep.subr.bf16.mxu0 0
        %2211 = vmatpush1.bf16.msra.mxu0 0
        %2212 = vmatprep.subr.bf16.mxu0 0
        %2213 = vmatpush1.bf16.msra.mxu0 0
        %2214 = vmatprep.subr.bf16.mxu0 0
        %2215 = vmatpush1.bf16.msra.mxu0 0
        %2216 = vmatprep.subr.bf16.mxu0 0
        %2217 = vmatpush1.bf16.msra.mxu0 0
        %2218 = vmatprep.subr.bf16.mxu0 0
        %2219 = vmatpush1.bf16.msra.mxu0 0
        %2220 = vmatprep.subr.bf16.mxu0 0
        %2221 = vmatpush1.bf16.msra.mxu0 0
        %2222 = vmatprep.subr.bf16.mxu0 0
        %2223 = vmatpush1.bf16.msra.mxu0 0
        %2224 = vmatprep.mubr.bf16.mxu0 0
        %2225 = vmatmul.mubr.bf16.gmra.mrb[0].mxu0 %v1955
        %v2226 = vpop.f32.mrb[0].mxu0
        %v2227 = vadd.f32 0.0, %v2226
        %v2228 = vpop.f32.mrb[0].mxu0
        %v2229 = vpop.f32.mrb[0].mxu0
        %v2230 = vadd.f32 0.0, %v2229
        %v2231 = vpop.f32.mrb[0].mxu0
        %2232 = vdwg.mxu0
        %2233 = vmatprep.subr.bf16.mxu0 0
        %2234 = vmatpush1.bf16.msra.mxu0 %v1942
        %2235 = vmatprep.subr.bf16.mxu0 0
        %2236 = vmatpush1.bf16.msra.mxu0 0
        %2237 = vmatprep.subr.bf16.mxu0 0
        %2238 = vmatpush1.bf16.msra.mxu0 0
        %2239 = vmatprep.subr.bf16.mxu0 0
        %2240 = vmatpush1.bf16.msra.mxu0 0
        %2241 = vmatprep.subr.bf16.mxu0 0
        %2242 = vmatpush1.bf16.msra.mxu0 0
        %2243 = vmatprep.subr.bf16.mxu0 0
        %2244 = vmatpush1.bf16.msra.mxu0 0
        %2245 = vmatprep.subr.bf16.mxu0 0
        %2246 = vmatpush1.bf16.msra.mxu0 0
        %2247 = vmatprep.subr.bf16.mxu0 0
        %2248 = vmatpush1.bf16.msra.mxu0 0
        %2249 = vmatprep.subr.bf16.mxu0 0
        %2250 = vmatpush1.bf16.msra.mxu0 0
        %2251 = vmatprep.subr.bf16.mxu0 0
        %2252 = vmatpush1.bf16.msra.mxu0 0
        %2253 = vmatprep.subr.bf16.mxu0 0
        %2254 = vmatpush1.bf16.msra.mxu0 0
        %2255 = vmatprep.subr.bf16.mxu0 0
        %2256 = vmatpush1.bf16.msra.mxu0 0
        %2257 = vmatprep.subr.bf16.mxu0 0
        %2258 = vmatpush1.bf16.msra.mxu0 0
        %2259 = vmatprep.subr.bf16.mxu0 0
        %2260 = vmatpush1.bf16.msra.mxu0 0
        %2261 = vmatprep.subr.bf16.mxu0 0
        %2262 = vmatpush1.bf16.msra.mxu0 0
        %2263 = vmatprep.subr.bf16.mxu0 0
        %2264 = vmatpush1.bf16.msra.mxu0 0
        %2265 = vmatprep.mubr.bf16.mxu0 0
        %2266 = vmatmul.mubr.bf16.gmra.mrb[0].mxu0 %v1955
        %v2267 = vpop.f32.mrb[0].mxu0
        %v2268 = vadd.f32 0.0, %v2267
        %v2269 = vpop.f32.mrb[0].mxu0
        %v2270 = vpop.f32.mrb[0].mxu0
        %v2271 = vadd.f32 0.0, %v2270
        %v2272 = vpop.f32.mrb[0].mxu0
        %2273 = vdwg.mxu0
        %v2274 = vmul.f32 %v2227, %v2227
        %v2275 = vmul.f32 %v2230, %v2230
        %v2276 = vmul.f32 %v2268, %v2268
        %v2277 = vmul.f32 %v2271, %v2271
        %v2278 = vmul.f32 %v2227, %v2268
        %v2279 = vmul.f32 %v2230, %v2271
        %2280 = vmatprep.subr.bf16.mxu0 0
        %2281 = vmatpush1.bf16.msra.mxu0 %v1943
        %2282 = vmatprep.subr.bf16.mxu0 0
        %2283 = vmatpush1.bf16.msra.mxu0 0
        %2284 = vmatprep.subr.bf16.mxu0 0
        %2285 = vmatpush1.bf16.msra.mxu0 0
        %2286 = vmatprep.subr.bf16.mxu0 0
        %2287 = vmatpush1.bf16.msra.mxu0 0
        %2288 = vmatprep.subr.bf16.mxu0 0
        %2289 = vmatpush1.bf16.msra.mxu0 0
        %2290 = vmatprep.subr.bf16.mxu0 0
        %2291 = vmatpush1.bf16.msra.mxu0 0
        %2292 = vmatprep.subr.bf16.mxu0 0
        %2293 = vmatpush1.bf16.msra.mxu0 0
        %2294 = vmatprep.subr.bf16.mxu0 0
        %2295 = vmatpush1.bf16.msra.mxu0 0
        %2296 = vmatprep.subr.bf16.mxu0 0
        %2297 = vmatpush1.bf16.msra.mxu0 0
        %2298 = vmatprep.subr.bf16.mxu0 0
        %2299 = vmatpush1.bf16.msra.mxu0 0
        %2300 = vmatprep.subr.bf16.mxu0 0
        %2301 = vmatpush1.bf16.msra.mxu0 0
        %2302 = vmatprep.subr.bf16.mxu0 0
        %2303 = vmatpush1.bf16.msra.mxu0 0
        %2304 = vmatprep.subr.bf16.mxu0 0
        %2305 = vmatpush1.bf16.msra.mxu0 0
        %2306 = vmatprep.subr.bf16.mxu0 0
        %2307 = vmatpush1.bf16.msra.mxu0 0
        %2308 = vmatprep.subr.bf16.mxu0 0
        %2309 = vmatpush1.bf16.msra.mxu0 0
        %2310 = vmatprep.subr.bf16.mxu0 0
        %2311 = vmatpush1.bf16.msra.mxu0 0
        %2312 = vmatprep.mubr.bf16.mxu0 0
        %2313 = vmatmul.mubr.bf16.gmra.mrb[0].mxu0 %v1955
        %v2314 = vpop.f32.mrb[0].mxu0
        %v2315 = vadd.f32 0.0, %v2314
        %v2316 = vpop.f32.mrb[0].mxu0
        %v2317 = vpop.f32.mrb[0].mxu0
        %v2318 = vadd.f32 0.0, %v2317
        %v2319 = vpop.f32.mrb[0].mxu0
        %2320 = vdwg.mxu0
        %v2321 = vsub.f32 %v2315, %v2274
        %v2322 = vsub.f32 %v2318, %v2275
        %2323 = vmatprep.subr.bf16.mxu0 0
        %2324 = vmatpush1.bf16.msra.mxu0 %v1944
        %2325 = vmatprep.subr.bf16.mxu0 0
        %2326 = vmatpush1.bf16.msra.mxu0 0
        %2327 = vmatprep.subr.bf16.mxu0 0
        %2328 = vmatpush1.bf16.msra.mxu0 0
        %2329 = vmatprep.subr.bf16.mxu0 0
        %2330 = vmatpush1.bf16.msra.mxu0 0
        %2331 = vmatprep.subr.bf16.mxu0 0
        %2332 = vmatpush1.bf16.msra.mxu0 0
        %2333 = vmatprep.subr.bf16.mxu0 0
        %2334 = vmatpush1.bf16.msra.mxu0 0
        %2335 = vmatprep.subr.bf16.mxu0 0
        %2336 = vmatpush1.bf16.msra.mxu0 0
        %2337 = vmatprep.subr.bf16.mxu0 0
        %2338 = vmatpush1.bf16.msra.mxu0 0
        %2339 = vmatprep.subr.bf16.mxu0 0
        %2340 = vmatpush1.bf16.msra.mxu0 0
        %2341 = vmatprep.subr.bf16.mxu0 0
        %2342 = vmatpush1.bf16.msra.mxu0 0
        %2343 = vmatprep.subr.bf16.mxu0 0
        %2344 = vmatpush1.bf16.msra.mxu0 0
        %2345 = vmatprep.subr.bf16.mxu0 0
        %2346 = vmatpush1.bf16.msra.mxu0 0
        %2347 = vmatprep.subr.bf16.mxu0 0
        %2348 = vmatpush1.bf16.msra.mxu0 0
        %2349 = vmatprep.subr.bf16.mxu0 0
        %2350 = vmatpush1.bf16.msra.mxu0 0
        %2351 = vmatprep.subr.bf16.mxu0 0
        %2352 = vmatpush1.bf16.msra.mxu0 0
        %2353 = vmatprep.subr.bf16.mxu0 0
        %2354 = vmatpush1.bf16.msra.mxu0 0
        %2355 = vmatprep.mubr.bf16.mxu0 0
        %2356 = vmatmul.mubr.bf16.gmra.mrb[0].mxu0 %v1955
        %v2357 = vpop.f32.mrb[0].mxu0
        %v2358 = vadd.f32 0.0, %v2357
        %v2359 = vpop.f32.mrb[0].mxu0
        %v2360 = vpop.f32.mrb[0].mxu0
        %v2361 = vadd.f32 0.0, %v2360
        %v2362 = vpop.f32.mrb[0].mxu0
        %2363 = vdwg.mxu0
        %v2364 = vsub.f32 %v2358, %v2276
        %v2365 = vsub.f32 %v2361, %v2277
        %2366 = vmatprep.subr.bf16.mxu0 0
        %2367 = vmatpush1.bf16.msra.mxu0 %v1945
        %2368 = vmatprep.subr.bf16.mxu0 0
        %2369 = vmatpush1.bf16.msra.mxu0 0
        %2370 = vmatprep.subr.bf16.mxu0 0
        %2371 = vmatpush1.bf16.msra.mxu0 0
        %2372 = vmatprep.subr.bf16.mxu0 0
        %2373 = vmatpush1.bf16.msra.mxu0 0
        %2374 = vmatprep.subr.bf16.mxu0 0
        %2375 = vmatpush1.bf16.msra.mxu0 0
        %2376 = vmatprep.subr.bf16.mxu0 0
        %2377 = vmatpush1.bf16.msra.mxu0 0
        %2378 = vmatprep.subr.bf16.mxu0 0
        %2379 = vmatpush1.bf16.msra.mxu0 0
        %2380 = vmatprep.subr.bf16.mxu0 0
        %2381 = vmatpush1.bf16.msra.mxu0 0
        %2382 = vmatprep.subr.bf16.mxu0 0
        %2383 = vmatpush1.bf16.msra.mxu0 0
        %2384 = vmatprep.subr.bf16.mxu0 0
        %2385 = vmatpush1.bf16.msra.mxu0 0
        %2386 = vmatprep.subr.bf16.mxu0 0
        %2387 = vmatpush1.bf16.msra.mxu0 0
        %2388 = vmatprep.subr.bf16.mxu0 0
        %2389 = vmatpush1.bf16.msra.mxu0 0
        %2390 = vmatprep.subr.bf16.mxu0 0
        %2391 = vmatpush1.bf16.msra.mxu0 0
        %2392 = vmatprep.subr.bf16.mxu0 0
        %2393 = vmatpush1.bf16.msra.mxu0 0
        %2394 = vmatprep.subr.bf16.mxu0 0
        %2395 = vmatpush1.bf16.msra.mxu0 0
        %2396 = vmatprep.subr.bf16.mxu0 0
        %2397 = vmatpush1.bf16.msra.mxu0 0
        %2398 = vmatprep.mubr.bf16.mxu0 0
        %2399 = vmatmul.mubr.bf16.gmra.mrb[0].mxu0 %v1955
        %v2400 = vpop.f32.mrb[0].mxu0
        %v2401 = vadd.f32 0.0, %v2400
        %v2402 = vpop.f32.mrb[0].mxu0
        %v2403 = vpop.f32.mrb[0].mxu0
        %v2404 = vadd.f32 0.0, %v2403
        %v2405 = vpop.f32.mrb[0].mxu0
        %2406 = vdwg.mxu0
        %v2407 = vsub.f32 %v2401, %v2278
        %v2408 = vsub.f32 %v2404, %v2279
        %v2409 = vmul.f32 %v2407, 2.0
        %v2410 = vmul.f32 %v2408, 2.0
        %v2411 = vadd.f32 %v2409, 0.0009
        %v2412 = vadd.f32 %v2410, 0.0009
        %v2413 = vadd.f32 %v2321, %v2364
        %v2414 = vadd.f32 %v2322, %v2365
        %v2415 = vadd.f32 %v2413, 0.0009
        %v2416 = vadd.f32 %v2414, 0.0009
        %v2417 = vrcp.pop %v2415
        %v2418 = vrcp.pop %v2416
        %v2419 = vmul.f32 %v2411, %v2417
        %v2420 = vmul.f32 %v2412, %v2418
        %v2421 = vmul.f32 %v2419, %v2419
        %v2422 = vmul.f32 %v2420, %v2420
        %v2423 = vld [vmem:[#allocation3] sm:$0xff]
        %v2424 = vld [vmem:[#allocation3 + $0x8] sm:$0xff]
        %v2425 = vmul.f32 %v2423, %v2421
        %v2426 = vmul.f32 %v2424, %v2422
        %2427 = vst.msk [vmem:[#allocation3] sm:$0xff] %vm297, %v2425
        %2428 = vst.msk [vmem:[#allocation3 + $0x8] sm:$0xff] %vm297, %v2426
        %v2429 = vld [vmem:[%s1752] sm:$0xff]
        %v2430 = vld [vmem:[%s1752 + $0x8] sm:$0xff]
        %v2431 = vld [vmem:[%s1755] sm:$0xff]
        %v2432 = vld [vmem:[%s1755 + $0x8] sm:$0xff]
        %v2433 = vmul.f32 %v2429, %v2429
        %v2434 = vmul.f32 %v2430, %v2430
        %v2435 = vmul.f32 %v2431, %v2431
        %v2436 = vmul.f32 %v2432, %v2432
        %v2437 = vmul.f32 %v2429, %v2431
        %v2438 = vmul.f32 %v2430, %v2432
        %v2439 = vpack.c.bf16 %v2430, %v2429
        %2440 = vst.msk [vmem:[#allocation2] sm:$0xff] %vm297, %v2439
        %v2441 = vpack.c.bf16 %v2432, %v2431
        %2442 = vst.msk [vmem:[#allocation2 + $0x8] sm:$0xff] %vm297, %v2441
        %v2443 = vpack.c.bf16 %v2434, %v2433
        %2444 = vst.msk [vmem:[#allocation2 + $0x10] sm:$0xff] %vm297, %v2443
        %v2445 = vpack.c.bf16 %v2436, %v2435
        %2446 = vst.msk [vmem:[#allocation2 + $0x18] sm:$0xff] %vm297, %v2445
        %v2447 = vpack.c.bf16 %v2438, %v2437
        %2448 = vst.msk [vmem:[#allocation2 + $0x20] sm:$0xff] %vm297, %v2447
        %v2449 = vld [vmem:[%s238] sm:$0xff]
        %v2450 = vld [vmem:[%s238 + $0x8] sm:$0xff]
        %v2451 = vld [vmem:[%s247] sm:$0xff]
        %v2452 = vld [vmem:[%s247 + $0x8] sm:$0xff]
        %v2453 = vsub.f32 %v2449, %v2451
        %v2454 = vsub.f32 %v2450, %v2452
        %v2455 = vand.u32 2147483647, %v2453
        %v2456 = vand.u32 2147483647, %v2454
        %v2457 = vpack.c.bf16 %v2456, %v2455
        %2458 = vst.msk [vmem:[#allocation2 + $0x28] sm:$0xff] %vm297, %v2457
        %v2459 = vld [vmem:[%s678] sm:$0xff]
        %v2460 = vld [vmem:[%s678 + $0x8] sm:$0xff]
        %v2461 = vld [vmem:[%s681] sm:$0xff]
        %v2462 = vld [vmem:[%s681 + $0x8] sm:$0xff]
        %v2463 = vsub.f32 %v2459, %v2461
        %v2464 = vsub.f32 %v2460, %v2462
        %v2465 = vand.u32 2147483647, %v2463
        %v2466 = vand.u32 2147483647, %v2464
        %v2467 = vpack.c.bf16 %v2466, %v2465
        %2468 = vst.msk [vmem:[#allocation2 + $0x30] sm:$0xff] %vm297, %v2467
        %v2469 = vld [vmem:[%s1752] sm:$0xff]
        %v2470 = vld [vmem:[%s1752 + $0x8] sm:$0xff]
        %v2471 = vld [vmem:[%s1755] sm:$0xff]
        %v2472 = vld [vmem:[%s1755 + $0x8] sm:$0xff]
        %v2473 = vsub.f32 %v2469, %v2471
        %v2474 = vsub.f32 %v2470, %v2472
        %v2475 = vand.u32 2147483647, %v2473
        %v2476 = vand.u32 2147483647, %v2474
        %v2477 = vpack.c.bf16 %v2476, %v2475
        %2478 = vst.msk [vmem:[#allocation2 + $0x38] sm:$0xff] %vm297, %v2477
        %s2479 = scalar_lea.vmem [#allocation9], 32
        %v2480 = vld [vmem:[%s2479] sm:$0xf]
        %v2481 = vld [vmem:[%s2479 + $0x4] sm:$0xf]
        %v2482 = vld [vmem:[#allocation2] sm:$0xff]
        %v2483 = vld [vmem:[#allocation2 + $0x8] sm:$0xff]
        %v2484 = vld [vmem:[#allocation2 + $0x10] sm:$0xff]
        %v2485 = vld [vmem:[#allocation2 + $0x18] sm:$0xff]
        %v2486 = vld [vmem:[#allocation2 + $0x20] sm:$0xff]
        %v2487 = vld [vmem:[#allocation2 + $0x28] sm:$0xff]
        %v2488 = vld [vmem:[#allocation2 + $0x30] sm:$0xff]
        %v2489 = vld [vmem:[#allocation2 + $0x38] sm:$0xff]
        %v2492 = vunpack.c.l.b16 %v2480
        %v2493 = vunpack.c.l.b16 %v2481
        %v2494 = vpack.c.b16 %v2493, %v2492
        %v2497 = vsel %vm297, %v2482, 0
        %v2500 = vsel %vm297, %v2483, 0
        %v2503 = vsel %vm297, %v2484, 0
        %v2506 = vsel %vm297, %v2485, 0
        %v2509 = vsel %vm297, %v2486, 0
        %v2512 = vsel %vm297, %v2487, 0
        %v2515 = vsel %vm297, %v2488, 0
        %v2518 = vsel %vm297, %v2489, 0
        %2520 = vmatprep.subr.bf16.mxu0 0
        %2521 = vmatpush1.bf16.msra.mxu0 %v2494
        %2522 = vmatprep.subr.bf16.mxu0 0
        %2523 = vmatpush1.bf16.msra.mxu0 0
        %2524 = vmatprep.subr.bf16.mxu0 0
        %2525 = vmatpush1.bf16.msra.mxu0 0
        %2526 = vmatprep.subr.bf16.mxu0 0
        %2527 = vmatpush1.bf16.msra.mxu0 0
        %2528 = vmatprep.subr.bf16.mxu0 0
        %2529 = vmatpush1.bf16.msra.mxu0 0
        %2530 = vmatprep.subr.bf16.mxu0 0
        %2531 = vmatpush1.bf16.msra.mxu0 0
        %2532 = vmatprep.subr.bf16.mxu0 0
        %2533 = vmatpush1.bf16.msra.mxu0 0
        %2534 = vmatprep.subr.bf16.mxu0 0
        %2535 = vmatpush1.bf16.msra.mxu0 0
        %2536 = vmatprep.subr.bf16.mxu0 0
        %2537 = vmatpush1.bf16.msra.mxu0 0
        %2538 = vmatprep.subr.bf16.mxu0 0
        %2539 = vmatpush1.bf16.msra.mxu0 0
        %2540 = vmatprep.subr.bf16.mxu0 0
        %2541 = vmatpush1.bf16.msra.mxu0 0
        %2542 = vmatprep.subr.bf16.mxu0 0
        %2543 = vmatpush1.bf16.msra.mxu0 0
        %2544 = vmatprep.subr.bf16.mxu0 0
        %2545 = vmatpush1.bf16.msra.mxu0 0
        %2546 = vmatprep.subr.bf16.mxu0 0
        %2547 = vmatpush1.bf16.msra.mxu0 0
        %2548 = vmatprep.subr.bf16.mxu0 0
        %2549 = vmatpush1.bf16.msra.mxu0 0
        %2550 = vmatprep.subr.bf16.mxu0 0
        %2551 = vmatpush1.bf16.msra.mxu0 0
        %2552 = vmatprep.mubr.bf16.mxu0 0
        %2553 = vmatmul.mubr.bf16.gmra.mrb[0].mxu0 %v2497
        %v2554 = vpop.f32.mrb[0].mxu0
        %v2555 = vadd.f32 0.0, %v2554
        %v2556 = vpop.f32.mrb[0].mxu0
        %v2557 = vpop.f32.mrb[0].mxu0
        %v2558 = vadd.f32 0.0, %v2557
        %v2559 = vpop.f32.mrb[0].mxu0
        %2560 = vmatprep.mubr.bf16.mxu0 0
        %2561 = vmatmul.mubr.bf16.gmra.mrb[0].mxu0 %v2500
        %v2562 = vpop.f32.mrb[0].mxu0
        %v2563 = vadd.f32 0.0, %v2562
        %v2564 = vpop.f32.mrb[0].mxu0
        %v2565 = vpop.f32.mrb[0].mxu0
        %v2566 = vadd.f32 0.0, %v2565
        %v2567 = vpop.f32.mrb[0].mxu0
        %2568 = vmatprep.mubr.bf16.mxu0 0
        %2569 = vmatmul.mubr.bf16.gmra.mrb[0].mxu0 %v2503
        %v2570 = vpop.f32.mrb[0].mxu0
        %v2571 = vadd.f32 0.0, %v2570
        %v2572 = vpop.f32.mrb[0].mxu0
        %v2573 = vpop.f32.mrb[0].mxu0
        %v2574 = vadd.f32 0.0, %v2573
        %v2575 = vpop.f32.mrb[0].mxu0
        %2576 = vmatprep.mubr.bf16.mxu0 0
        %2577 = vmatmul.mubr.bf16.gmra.mrb[0].mxu0 %v2506
        %v2578 = vpop.f32.mrb[0].mxu0
        %v2579 = vadd.f32 0.0, %v2578
        %v2580 = vpop.f32.mrb[0].mxu0
        %v2581 = vpop.f32.mrb[0].mxu0
        %v2582 = vadd.f32 0.0, %v2581
        %v2583 = vpop.f32.mrb[0].mxu0
        %2584 = vmatprep.mubr.bf16.mxu0 0
        %2585 = vmatmul.mubr.bf16.gmra.mrb[0].mxu0 %v2509
        %v2586 = vpop.f32.mrb[0].mxu0
        %v2587 = vadd.f32 0.0, %v2586
        %v2588 = vpop.f32.mrb[0].mxu0
        %v2589 = vpop.f32.mrb[0].mxu0
        %v2590 = vadd.f32 0.0, %v2589
        %v2591 = vpop.f32.mrb[0].mxu0
        %2592 = vmatprep.mubr.bf16.mxu0 0
        %2593 = vmatmul.mubr.bf16.gmra.mrb[0].mxu0 %v2512
        %v2594 = vpop.f32.mrb[0].mxu0
        %v2595 = vadd.f32 0.0, %v2594
        %v2596 = vpop.f32.mrb[0].mxu0
        %v2597 = vpop.f32.mrb[0].mxu0
        %v2598 = vadd.f32 0.0, %v2597
        %v2599 = vpop.f32.mrb[0].mxu0
        %2600 = vmatprep.mubr.bf16.mxu0 0
        %2601 = vmatmul.mubr.bf16.gmra.mrb[0].mxu0 %v2515
        %v2602 = vpop.f32.mrb[0].mxu0
        %v2603 = vadd.f32 0.0, %v2602
        %v2604 = vpop.f32.mrb[0].mxu0
        %v2605 = vpop.f32.mrb[0].mxu0
        %v2606 = vadd.f32 0.0, %v2605
        %v2607 = vpop.f32.mrb[0].mxu0
        %2608 = vmatprep.mubr.bf16.mxu0 0
        %2609 = vmatmul.mubr.bf16.gmra.mrb[0].mxu0 %v2518
        %v2610 = vpop.f32.mrb[0].mxu0
        %v2611 = vadd.f32 0.0, %v2610
        %v2612 = vpop.f32.mrb[0].mxu0
        %v2613 = vpop.f32.mrb[0].mxu0
        %v2614 = vadd.f32 0.0, %v2613
        %v2615 = vpop.f32.mrb[0].mxu0
        %2616 = vdwg.mxu0
        %v2617 = vpack.c.bf16 %v2558, %v2555
        %v2618 = vpack.c.bf16 %v2566, %v2563
        %v2619 = vpack.c.bf16 %v2574, %v2571
        %v2620 = vpack.c.bf16 %v2582, %v2579
        %v2621 = vpack.c.bf16 %v2590, %v2587
        %v2622 = vpack.c.bf16 %v2598, %v2595
        %v2623 = vpack.c.bf16 %v2606, %v2603
        %v2624 = vpack.c.bf16 %v2614, %v2611
        %s2625 = scalar_lea.vmem [#allocation10], 32
        %v2626 = vld [vmem:[%s2625] sm:$0xf]
        %v2627 = vld [vmem:[%s2625 + $0x4] sm:$0xf]
        %v2630 = vunpack.c.l.b16 %v2626
        %v2631 = vunpack.c.l.b16 %v2627
        %v2632 = vpack.c.b16 %v2631, %v2630
        %v2634 = vsel %vm297, %v2632, 0
        %2636 = vmatprep.subr.bf16.mxu0 0
        %2637 = vmatpush1.bf16.msra.mxu0 %v2617
        %2638 = vmatprep.subr.bf16.mxu0 0
        %2639 = vmatpush1.bf16.msra.mxu0 0
        %2640 = vmatprep.subr.bf16.mxu0 0
        %2641 = vmatpush1.bf16.msra.mxu0 0
        %2642 = vmatprep.subr.bf16.mxu0 0
        %2643 = vmatpush1.bf16.msra.mxu0 0
        %2644 = vmatprep.subr.bf16.mxu0 0
        %2645 = vmatpush1.bf16.msra.mxu0 0
        %2646 = vmatprep.subr.bf16.mxu0 0
        %2647 = vmatpush1.bf16.msra.mxu0 0
        %2648 = vmatprep.subr.bf16.mxu0 0
        %2649 = vmatpush1.bf16.msra.mxu0 0
        %2650 = vmatprep.subr.bf16.mxu0 0
        %2651 = vmatpush1.bf16.msra.mxu0 0
        %2652 = vmatprep.subr.bf16.mxu0 0
        %2653 = vmatpush1.bf16.msra.mxu0 0
        %2654 = vmatprep.subr.bf16.mxu0 0
        %2655 = vmatpush1.bf16.msra.mxu0 0
        %2656 = vmatprep.subr.bf16.mxu0 0
        %2657 = vmatpush1.bf16.msra.mxu0 0
        %2658 = vmatprep.subr.bf16.mxu0 0
        %2659 = vmatpush1.bf16.msra.mxu0 0
        %2660 = vmatprep.subr.bf16.mxu0 0
        %2661 = vmatpush1.bf16.msra.mxu0 0
        %2662 = vmatprep.subr.bf16.mxu0 0
        %2663 = vmatpush1.bf16.msra.mxu0 0
        %2664 = vmatprep.subr.bf16.mxu0 0
        %2665 = vmatpush1.bf16.msra.mxu0 0
        %2666 = vmatprep.subr.bf16.mxu0 0
        %2667 = vmatpush1.bf16.msra.mxu0 0
        %2668 = vmatprep.mubr.bf16.mxu0 0
        %2669 = vmatmul.mubr.bf16.gmra.mrb[0].mxu0 %v2634
        %v2670 = vpop.f32.mrb[0].mxu0
        %v2671 = vadd.f32 0.0, %v2670
        %v2672 = vpop.f32.mrb[0].mxu0
        %v2673 = vpop.f32.mrb[0].mxu0
        %v2674 = vadd.f32 0.0, %v2673
        %v2675 = vpop.f32.mrb[0].mxu0
        %2676 = vdwg.mxu0
        %2677 = vmatprep.subr.bf16.mxu0 0
        %2678 = vmatpush1.bf16.msra.mxu0 %v2618
        %2679 = vmatprep.subr.bf16.mxu0 0
        %2680 = vmatpush1.bf16.msra.mxu0 0
        %2681 = vmatprep.subr.bf16.mxu0 0
        %2682 = vmatpush1.bf16.msra.mxu0 0
        %2683 = vmatprep.subr.bf16.mxu0 0
        %2684 = vmatpush1.bf16.msra.mxu0 0
        %2685 = vmatprep.subr.bf16.mxu0 0
        %2686 = vmatpush1.bf16.msra.mxu0 0
        %2687 = vmatprep.subr.bf16.mxu0 0
        %2688 = vmatpush1.bf16.msra.mxu0 0
        %2689 = vmatprep.subr.bf16.mxu0 0
        %2690 = vmatpush1.bf16.msra.mxu0 0
        %2691 = vmatprep.subr.bf16.mxu0 0
        %2692 = vmatpush1.bf16.msra.mxu0 0
        %2693 = vmatprep.subr.bf16.mxu0 0
        %2694 = vmatpush1.bf16.msra.mxu0 0
        %2695 = vmatprep.subr.bf16.mxu0 0
        %2696 = vmatpush1.bf16.msra.mxu0 0
        %2697 = vmatprep.subr.bf16.mxu0 0
        %2698 = vmatpush1.bf16.msra.mxu0 0
        %2699 = vmatprep.subr.bf16.mxu0 0
        %2700 = vmatpush1.bf16.msra.mxu0 0
        %2701 = vmatprep.subr.bf16.mxu0 0
        %2702 = vmatpush1.bf16.msra.mxu0 0
        %2703 = vmatprep.subr.bf16.mxu0 0
        %2704 = vmatpush1.bf16.msra.mxu0 0
        %2705 = vmatprep.subr.bf16.mxu0 0
        %2706 = vmatpush1.bf16.msra.mxu0 0
        %2707 = vmatprep.subr.bf16.mxu0 0
        %2708 = vmatpush1.bf16.msra.mxu0 0
        %2709 = vmatprep.mubr.bf16.mxu0 0
        %2710 = vmatmul.mubr.bf16.gmra.mrb[0].mxu0 %v2634
        %v2711 = vpop.f32.mrb[0].mxu0
        %v2712 = vadd.f32 0.0, %v2711
        %v2713 = vpop.f32.mrb[0].mxu0
        %v2714 = vpop.f32.mrb[0].mxu0
        %v2715 = vadd.f32 0.0, %v2714
        %v2716 = vpop.f32.mrb[0].mxu0
        %2717 = vdwg.mxu0
        %v2718 = vmul.f32 %v2671, %v2671
        %v2719 = vmul.f32 %v2674, %v2674
        %v2720 = vmul.f32 %v2712, %v2712
        %v2721 = vmul.f32 %v2715, %v2715
        %v2722 = vmul.f32 %v2671, %v2712
        %v2723 = vmul.f32 %v2674, %v2715
        %2724 = vmatprep.subr.bf16.mxu0 0
        %2725 = vmatpush1.bf16.msra.mxu0 %v2619
        %2726 = vmatprep.subr.bf16.mxu0 0
        %2727 = vmatpush1.bf16.msra.mxu0 0
        %2728 = vmatprep.subr.bf16.mxu0 0
        %2729 = vmatpush1.bf16.msra.mxu0 0
        %2730 = vmatprep.subr.bf16.mxu0 0
        %2731 = vmatpush1.bf16.msra.mxu0 0
        %2732 = vmatprep.subr.bf16.mxu0 0
        %2733 = vmatpush1.bf16.msra.mxu0 0
        %2734 = vmatprep.subr.bf16.mxu0 0
        %2735 = vmatpush1.bf16.msra.mxu0 0
        %2736 = vmatprep.subr.bf16.mxu0 0
        %2737 = vmatpush1.bf16.msra.mxu0 0
        %2738 = vmatprep.subr.bf16.mxu0 0
        %2739 = vmatpush1.bf16.msra.mxu0 0
        %2740 = vmatprep.subr.bf16.mxu0 0
        %2741 = vmatpush1.bf16.msra.mxu0 0
        %2742 = vmatprep.subr.bf16.mxu0 0
        %2743 = vmatpush1.bf16.msra.mxu0 0
        %2744 = vmatprep.subr.bf16.mxu0 0
        %2745 = vmatpush1.bf16.msra.mxu0 0
        %2746 = vmatprep.subr.bf16.mxu0 0
        %2747 = vmatpush1.bf16.msra.mxu0 0
        %2748 = vmatprep.subr.bf16.mxu0 0
        %2749 = vmatpush1.bf16.msra.mxu0 0
        %2750 = vmatprep.subr.bf16.mxu0 0
        %2751 = vmatpush1.bf16.msra.mxu0 0
        %2752 = vmatprep.subr.bf16.mxu0 0
        %2753 = vmatpush1.bf16.msra.mxu0 0
        %2754 = vmatprep.subr.bf16.mxu0 0
        %2755 = vmatpush1.bf16.msra.mxu0 0
        %2756 = vmatprep.mubr.bf16.mxu0 0
        %2757 = vmatmul.mubr.bf16.gmra.mrb[0].mxu0 %v2634
        %v2758 = vpop.f32.mrb[0].mxu0
        %v2759 = vadd.f32 0.0, %v2758
        %v2760 = vpop.f32.mrb[0].mxu0
        %v2761 = vpop.f32.mrb[0].mxu0
        %v2762 = vadd.f32 0.0, %v2761
        %v2763 = vpop.f32.mrb[0].mxu0
        %2764 = vdwg.mxu0
        %v2765 = vsub.f32 %v2759, %v2718
        %v2766 = vsub.f32 %v2762, %v2719
        %2767 = vmatprep.subr.bf16.mxu0 0
        %2768 = vmatpush1.bf16.msra.mxu0 %v2620
        %2769 = vmatprep.subr.bf16.mxu0 0
        %2770 = vmatpush1.bf16.msra.mxu0 0
        %2771 = vmatprep.subr.bf16.mxu0 0
        %2772 = vmatpush1.bf16.msra.mxu0 0
        %2773 = vmatprep.subr.bf16.mxu0 0
        %2774 = vmatpush1.bf16.msra.mxu0 0
        %2775 = vmatprep.subr.bf16.mxu0 0
        %2776 = vmatpush1.bf16.msra.mxu0 0
        %2777 = vmatprep.subr.bf16.mxu0 0
        %2778 = vmatpush1.bf16.msra.mxu0 0
        %2779 = vmatprep.subr.bf16.mxu0 0
        %2780 = vmatpush1.bf16.msra.mxu0 0
        %2781 = vmatprep.subr.bf16.mxu0 0
        %2782 = vmatpush1.bf16.msra.mxu0 0
        %2783 = vmatprep.subr.bf16.mxu0 0
        %2784 = vmatpush1.bf16.msra.mxu0 0
        %2785 = vmatprep.subr.bf16.mxu0 0
        %2786 = vmatpush1.bf16.msra.mxu0 0
        %2787 = vmatprep.subr.bf16.mxu0 0
        %2788 = vmatpush1.bf16.msra.mxu0 0
        %2789 = vmatprep.subr.bf16.mxu0 0
        %2790 = vmatpush1.bf16.msra.mxu0 0
        %2791 = vmatprep.subr.bf16.mxu0 0
        %2792 = vmatpush1.bf16.msra.mxu0 0
        %2793 = vmatprep.subr.bf16.mxu0 0
        %2794 = vmatpush1.bf16.msra.mxu0 0
        %2795 = vmatprep.subr.bf16.mxu0 0
        %2796 = vmatpush1.bf16.msra.mxu0 0
        %2797 = vmatprep.subr.bf16.mxu0 0
        %2798 = vmatpush1.bf16.msra.mxu0 0
        %2799 = vmatprep.mubr.bf16.mxu0 0
        %2800 = vmatmul.mubr.bf16.gmra.mrb[0].mxu0 %v2634
        %v2801 = vpop.f32.mrb[0].mxu0
        %v2802 = vadd.f32 0.0, %v2801
        %v2803 = vpop.f32.mrb[0].mxu0
        %v2804 = vpop.f32.mrb[0].mxu0
        %v2805 = vadd.f32 0.0, %v2804
        %v2806 = vpop.f32.mrb[0].mxu0
        %2807 = vdwg.mxu0
        %v2808 = vsub.f32 %v2802, %v2720
        %v2809 = vsub.f32 %v2805, %v2721
        %2810 = vmatprep.subr.bf16.mxu0 0
        %2811 = vmatpush1.bf16.msra.mxu0 %v2621
        %2812 = vmatprep.subr.bf16.mxu0 0
        %2813 = vmatpush1.bf16.msra.mxu0 0
        %2814 = vmatprep.subr.bf16.mxu0 0
        %2815 = vmatpush1.bf16.msra.mxu0 0
        %2816 = vmatprep.subr.bf16.mxu0 0
        %2817 = vmatpush1.bf16.msra.mxu0 0
        %2818 = vmatprep.subr.bf16.mxu0 0
        %2819 = vmatpush1.bf16.msra.mxu0 0
        %2820 = vmatprep.subr.bf16.mxu0 0
        %2821 = vmatpush1.bf16.msra.mxu0 0
        %2822 = vmatprep.subr.bf16.mxu0 0
        %2823 = vmatpush1.bf16.msra.mxu0 0
        %2824 = vmatprep.subr.bf16.mxu0 0
        %2825 = vmatpush1.bf16.msra.mxu0 0
        %2826 = vmatprep.subr.bf16.mxu0 0
        %2827 = vmatpush1.bf16.msra.mxu0 0
        %2828 = vmatprep.subr.bf16.mxu0 0
        %2829 = vmatpush1.bf16.msra.mxu0 0
        %2830 = vmatprep.subr.bf16.mxu0 0
        %2831 = vmatpush1.bf16.msra.mxu0 0
        %2832 = vmatprep.subr.bf16.mxu0 0
        %2833 = vmatpush1.bf16.msra.mxu0 0
        %2834 = vmatprep.subr.bf16.mxu0 0
        %2835 = vmatpush1.bf16.msra.mxu0 0
        %2836 = vmatprep.subr.bf16.mxu0 0
        %2837 = vmatpush1.bf16.msra.mxu0 0
        %2838 = vmatprep.subr.bf16.mxu0 0
        %2839 = vmatpush1.bf16.msra.mxu0 0
        %2840 = vmatprep.subr.bf16.mxu0 0
        %2841 = vmatpush1.bf16.msra.mxu0 0
        %2842 = vmatprep.mubr.bf16.mxu0 0
        %2843 = vmatmul.mubr.bf16.gmra.mrb[0].mxu0 %v2634
        %v2844 = vpop.f32.mrb[0].mxu0
        %v2845 = vadd.f32 0.0, %v2844
        %v2846 = vpop.f32.mrb[0].mxu0
        %v2847 = vpop.f32.mrb[0].mxu0
        %v2848 = vadd.f32 0.0, %v2847
        %v2849 = vpop.f32.mrb[0].mxu0
        %2850 = vdwg.mxu0
        %v2851 = vsub.f32 %v2845, %v2722
        %v2852 = vsub.f32 %v2848, %v2723
        %v2853 = vmul.f32 %v2851, 2.0
        %v2854 = vmul.f32 %v2852, 2.0
        %v2855 = vadd.f32 %v2853, 0.0009
        %v2856 = vadd.f32 %v2854, 0.0009
        %v2857 = vadd.f32 %v2765, %v2808
        %v2858 = vadd.f32 %v2766, %v2809
        %v2859 = vadd.f32 %v2857, 0.0009
        %v2860 = vadd.f32 %v2858, 0.0009
        %v2861 = vrcp.pop %v2859
        %v2862 = vrcp.pop %v2860
        %v2863 = vmul.f32 %v2855, %v2861
        %v2864 = vmul.f32 %v2856, %v2862
        %v2865 = vmul.f32 %v2863, %v2863
        %v2866 = vmul.f32 %v2864, %v2864
        %v2867 = vmul.f32 %v2865, %v2863
        %v2868 = vmul.f32 %v2866, %v2864
        %v2869 = vld [vmem:[#allocation3] sm:$0xff]
        %v2870 = vld [vmem:[#allocation3 + $0x8] sm:$0xff]
        %v2871 = vmul.f32 %v2869, %v2867
        %v2872 = vmul.f32 %v2870, %v2868
        %v2873 = vmul.f32 %v2722, 2.0
        %v2874 = vmul.f32 %v2723, 2.0
        %v2875 = vadd.f32 %v2873, 0.0001
        %v2876 = vadd.f32 %v2874, 0.0001
        %v2877 = vadd.f32 %v2718, %v2720
        %v2878 = vadd.f32 %v2719, %v2721
        %v2879 = vadd.f32 %v2877, 0.0001
        %v2880 = vadd.f32 %v2878, 0.0001
        %v2881 = vrcp.pop %v2879
        %v2882 = vrcp.pop %v2880
        %v2883 = vmul.f32 %v2875, %v2881
        %v2884 = vmul.f32 %v2876, %v2882
        %v2885 = vmul.f32 %v2883, %v2883
        %v2886 = vmul.f32 %v2884, %v2884
        %v2887 = vmul.f32 %v2885, %v2883
        %v2888 = vmul.f32 %v2886, %v2884
        %2889 = vmatprep.subr.bf16.mxu0 0
        %2890 = vmatpush1.bf16.msra.mxu0 %v2623
        %2891 = vmatprep.subr.bf16.mxu0 0
        %2892 = vmatpush1.bf16.msra.mxu0 0
        %2893 = vmatprep.subr.bf16.mxu0 0
        %2894 = vmatpush1.bf16.msra.mxu0 0
        %2895 = vmatprep.subr.bf16.mxu0 0
        %2896 = vmatpush1.bf16.msra.mxu0 0
        %2897 = vmatprep.subr.bf16.mxu0 0
        %2898 = vmatpush1.bf16.msra.mxu0 0
        %2899 = vmatprep.subr.bf16.mxu0 0
        %2900 = vmatpush1.bf16.msra.mxu0 0
        %2901 = vmatprep.subr.bf16.mxu0 0
        %2902 = vmatpush1.bf16.msra.mxu0 0
        %2903 = vmatprep.subr.bf16.mxu0 0
        %2904 = vmatpush1.bf16.msra.mxu0 0
        %2905 = vmatprep.subr.bf16.mxu0 0
        %2906 = vmatpush1.bf16.msra.mxu0 0
        %2907 = vmatprep.subr.bf16.mxu0 0
        %2908 = vmatpush1.bf16.msra.mxu0 0
        %2909 = vmatprep.subr.bf16.mxu0 0
        %2910 = vmatpush1.bf16.msra.mxu0 0
        %2911 = vmatprep.subr.bf16.mxu0 0
        %2912 = vmatpush1.bf16.msra.mxu0 0
        %2913 = vmatprep.subr.bf16.mxu0 0
        %2914 = vmatpush1.bf16.msra.mxu0 0
        %2915 = vmatprep.subr.bf16.mxu0 0
        %2916 = vmatpush1.bf16.msra.mxu0 0
        %2917 = vmatprep.subr.bf16.mxu0 0
        %2918 = vmatpush1.bf16.msra.mxu0 0
        %2919 = vmatprep.subr.bf16.mxu0 0
        %2920 = vmatpush1.bf16.msra.mxu0 0
        %2921 = vmatprep.mubr.bf16.mxu0 0
        %2922 = vmatmul.mubr.bf16.gmra.mrb[0].mxu0 %v2634
        %v2923 = vpop.f32.mrb[0].mxu0
        %v2924 = vadd.f32 0.0, %v2923
        %v2925 = vpop.f32.mrb[0].mxu0
        %v2926 = vpop.f32.mrb[0].mxu0
        %v2927 = vadd.f32 0.0, %v2926
        %v2928 = vpop.f32.mrb[0].mxu0
        %2929 = vdwg.mxu0
        %2930 = vmatprep.subr.bf16.mxu0 0
        %2931 = vmatpush1.bf16.msra.mxu0 %v2622
        %2932 = vmatprep.subr.bf16.mxu0 0
        %2933 = vmatpush1.bf16.msra.mxu0 0
        %2934 = vmatprep.subr.bf16.mxu0 0
        %2935 = vmatpush1.bf16.msra.mxu0 0
        %2936 = vmatprep.subr.bf16.mxu0 0
        %2937 = vmatpush1.bf16.msra.mxu0 0
        %2938 = vmatprep.subr.bf16.mxu0 0
        %2939 = vmatpush1.bf16.msra.mxu0 0
        %2940 = vmatprep.subr.bf16.mxu0 0
        %2941 = vmatpush1.bf16.msra.mxu0 0
        %2942 = vmatprep.subr.bf16.mxu0 0
        %2943 = vmatpush1.bf16.msra.mxu0 0
        %2944 = vmatprep.subr.bf16.mxu0 0
        %2945 = vmatpush1.bf16.msra.mxu0 0
        %2946 = vmatprep.subr.bf16.mxu0 0
        %2947 = vmatpush1.bf16.msra.mxu0 0
        %2948 = vmatprep.subr.bf16.mxu0 0
        %2949 = vmatpush1.bf16.msra.mxu0 0
        %2950 = vmatprep.subr.bf16.mxu0 0
        %2951 = vmatpush1.bf16.msra.mxu0 0
        %2952 = vmatprep.subr.bf16.mxu0 0
        %2953 = vmatpush1.bf16.msra.mxu0 0
        %2954 = vmatprep.subr.bf16.mxu0 0
        %2955 = vmatpush1.bf16.msra.mxu0 0
        %2956 = vmatprep.subr.bf16.mxu0 0
        %2957 = vmatpush1.bf16.msra.mxu0 0
        %2958 = vmatprep.subr.bf16.mxu0 0
        %2959 = vmatpush1.bf16.msra.mxu0 0
        %2960 = vmatprep.subr.bf16.mxu0 0
        %2961 = vmatpush1.bf16.msra.mxu0 0
        %2962 = vmatprep.mubr.bf16.mxu0 0
        %2963 = vmatmul.mubr.bf16.gmra.mrb[0].mxu0 %v2634
        %v2964 = vpop.f32.mrb[0].mxu0
        %v2965 = vadd.f32 %v2924, %v2964
        %v2966 = vpop.f32.mrb[0].mxu0
        %v2967 = vpop.f32.mrb[0].mxu0
        %v2968 = vadd.f32 %v2927, %v2967
        %v2969 = vpop.f32.mrb[0].mxu0
        %2970 = vdwg.mxu0
        %2971 = vmatprep.subr.bf16.mxu0 0
        %2972 = vmatpush1.bf16.msra.mxu0 %v2624
        %2973 = vmatprep.subr.bf16.mxu0 0
        %2974 = vmatpush1.bf16.msra.mxu0 0
        %2975 = vmatprep.subr.bf16.mxu0 0
        %2976 = vmatpush1.bf16.msra.mxu0 0
        %2977 = vmatprep.subr.bf16.mxu0 0
        %2978 = vmatpush1.bf16.msra.mxu0 0
        %2979 = vmatprep.subr.bf16.mxu0 0
        %2980 = vmatpush1.bf16.msra.mxu0 0
        %2981 = vmatprep.subr.bf16.mxu0 0
        %2982 = vmatpush1.bf16.msra.mxu0 0
        %2983 = vmatprep.subr.bf16.mxu0 0
        %2984 = vmatpush1.bf16.msra.mxu0 0
        %2985 = vmatprep.subr.bf16.mxu0 0
        %2986 = vmatpush1.bf16.msra.mxu0 0
        %2987 = vmatprep.subr.bf16.mxu0 0
        %2988 = vmatpush1.bf16.msra.mxu0 0
        %2989 = vmatprep.subr.bf16.mxu0 0
        %2990 = vmatpush1.bf16.msra.mxu0 0
        %2991 = vmatprep.subr.bf16.mxu0 0
        %2992 = vmatpush1.bf16.msra.mxu0 0
        %2993 = vmatprep.subr.bf16.mxu0 0
        %2994 = vmatpush1.bf16.msra.mxu0 0
        %2995 = vmatprep.subr.bf16.mxu0 0
        %2996 = vmatpush1.bf16.msra.mxu0 0
        %2997 = vmatprep.subr.bf16.mxu0 0
        %2998 = vmatpush1.bf16.msra.mxu0 0
        %2999 = vmatprep.subr.bf16.mxu0 0
        %3000 = vmatpush1.bf16.msra.mxu0 0
        %3001 = vmatprep.subr.bf16.mxu0 0
        %3002 = vmatpush1.bf16.msra.mxu0 0
        %3003 = vmatprep.mubr.bf16.mxu0 0
        %3004 = vmatmul.mubr.bf16.gmra.mrb[0].mxu0 %v2634
        %v3005 = vpop.f32.mrb[0].mxu0
        %v3006 = vadd.f32 0.0, %v3005
        %v3007 = vpop.f32.mrb[0].mxu0
        %v3008 = vpop.f32.mrb[0].mxu0
        %v3009 = vadd.f32 0.0, %v3008
        %v3010 = vpop.f32.mrb[0].mxu0
        %3011 = vdwg.mxu0
        %v3012 = vadd.f32 %v2965, %v3006
        %v3013 = vadd.f32 %v2968, %v3009
        %v3014 = vmul.f32 %v3012, 0.33333334
        %v3015 = vmul.f32 %v3013, 0.33333334
        %v3016 = vmul.f32 %v2887, %v2871
        %v3017 = vmul.f32 %v2888, %v2872
        %v3018 = vsub.f32 1.0, %v3016
        %v3019 = vsub.f32 1.0, %v3017
        %v3020 = vmul.f32 %v3018, 0.1
        %v3021 = vmul.f32 %v3019, 0.1
        %v3022 = vmul.f32 %v3014, 0.9
        %v3023 = vmul.f32 %v3015, 0.9
        %v3024 = vadd.f32 %v3020, %v3022
        %v3025 = vadd.f32 %v3021, %v3023
        %3026 = vst.msk [vmem:[%s284] sm:$0xff] %vm297, %v3024
        %3027 = vst.msk [vmem:[%s284 + $0x8] sm:$0xff] %vm297, %v3025
        %s3028 = sand.u32 %s127, 1
        %s3029 = scalar_lea.sflag [#allocation6], %s3028
        %s3030 = sand.u32 %s127, 1
        %s3031 = smul.addr %s3030, 16
        %s3032 = scalar_lea.vmem [#allocation12], %s3031
        // Predicated region
        $region53: #{tpu_custom_call.1} parent=35 // pred_check
          %p3033 = pneg %p137
        $region54: #{tpu_custom_call.1} parent=35 // pred_check_branch
          %3035 = sbr.rel (%p3033) target = $region56
        $region55: #{tpu_custom_call.1} parent=35 // pred_region
          %s3037 = ssub.s32 256, 256
          %3038 = vsyncadd %s3029, %s3037
          %s3039 = smul.addr %s25, 2
          %s3040 = smul.addr %s3039, 128
          %s3041 = scalar_lea.hbm %s4, %s3040
          %s3042 = sshll.u32 %s3032, 4
          %s3043 = int_to_ptr.vmem [resolvable:$true] %s3042
          %3048 = dma.vmem_to_hbm [thread:$0]  %s3043, 256, %s3041, %s3029, 128, 128, 8
        $region56: #{tpu_custom_call.1} parent=35 // pred_fallthru
          _
      $region36: #{tpu_custom_call.1} parent=5 // pred_fallthru
        _
      %p3049 = scmp.le.s32.totalorder 2, %s20
      // Predicated region
      $region57: #{tpu_custom_call.1} parent=5 // pred_check
        %p3050 = pneg %p3049
      $region58: #{tpu_custom_call.1} parent=5 // pred_check_branch
        %3052 = sbr.rel (%p3050) target = $region60
      $region59: #{tpu_custom_call.1} parent=5 // pred_region
        %s3053 = ssub.s32 %s20, 2
        // Predicated region
        $region61: #{tpu_custom_call.1} parent=59 // pred_check
          %p3054 = pneg %p143
        $region62: #{tpu_custom_call.1} parent=59 // pred_check_branch
          %3056 = sbr.rel (%p3054) target = $region64
        $region63: #{tpu_custom_call.1} parent=59 // pred_region
          %s3057 = sand.u32 %s128, 1
          %s3058 = scalar_lea.sflag [#allocation6], %s3057
          %s3059 = sand.u32 %s128, 1
          %s3060 = smul.addr %s3059, 16
          %s3061 = scalar_lea.vmem [#allocation12], %s3060
          %3062 = dma.done %s3058, 256
        $region64: #{tpu_custom_call.1} parent=59 // pred_fallthru
          _
      $region60: #{tpu_custom_call.1} parent=5 // pred_fallthru
        _
    $region6: #{tpu_custom_call.1} parent=1 // loop_footer
      %s24 = sadd.s32 1, %s20
    $region7: #{tpu_custom_call.1} parent=1 // loop_footer_branch
      %19 = sbr.rel target = $region3
    $region8: #{tpu_custom_call.1} parent=1 // loop_exit
      _
    %3063 = vsyncpa [#allocation5], 1
    %s3064 = scalar_lea.sflag [#allocation5], 1
    %3065 = vsyncpa %s3064, 1
    %3066 = vsyncpa [#allocation8], 1
    %s3067 = scalar_lea.sflag [#allocation8], 1
    %3068 = vsyncpa %s3067, 1
    %3069 = vsyncpa [#allocation11], 1
    %3070 = vsyncpa [#allocation6], 1
    %s3071 = scalar_lea.sflag [#allocation6], 1
    %3072 = vsyncpa %s3071, 1

// kernel: tpu_custom_call.1
$region0: #{tpu_custom_call.1}
  #allocation0 [shape = 'u32[]', space=smem, size = 0x4, offset = 0x4, fixed_abs, tag = 'smem constant byte address 0x4 - core index']
  #allocation1 [shape = 'u32[144,128]{1,0:T(1,128)}', space=vmem, size = 0x12000, scoped, tag = 'internal scratch']
  #allocation2 [shape = 'bf16[160,16]{1,0:T(16,128)(2,1)}', space=vmem, size = 0xa000, scoped, tag = 'scratch operand']
  #allocation3 [shape = 'f32[16,16]{1,0:T(8,128)}', space=vmem, size = 0x2000, scoped, tag = 'scratch operand']
  %s0 = inlined_call_operand.hbm [shape: f32[2,3,16,16], index: 0, kind: input, shape index: {}]
  %s1 = inlined_call_operand.hbm [shape: f32[2,3,16,16], index: 1, kind: input, shape index: {}]
  %s2 = inlined_call_operand.hbm [shape: bf16[5,16,16], index: 2, kind: input, shape index: {}]
  %s3 = inlined_call_operand.hbm [shape: bf16[5,16,16], index: 3, kind: input, shape index: {}]
  %s4 = inlined_call_operand.hbm [shape: f32[2,16,16], index: 4, kind: output, shape index: {}]
  %s5 = sld [smem:[#allocation0]]
  $region65: #{tpu_custom_call.1} parent=0
    _
  %s7 = ssub.s32 1, %s5
  %s8 = scalar_select 0, %s7, %s5
  $region1: #{tpu_custom_call.1} parent=0
    #allocation4 [shape = 'u8[49152]{0}', space=vmem, size = 0xc000, scoped, tag = 'input window, operand 0']
    #allocation5 [shape = 's32[2]{0}', space=sflag, size = 0x8, scoped, tag = 'scoped memory for tpu_custom_call.1']
    #allocation6 [shape = 's32[2]{0}', space=sflag, size = 0x8, scoped, tag = 'scoped memory for tpu_custom_call.1']
    #allocation7 [shape = 'u8[49152]{0}', space=vmem, size = 0xc000, scoped, tag = 'input window, operand 1']
    #allocation8 [shape = 's32[2]{0}', space=sflag, size = 0x8, scoped, tag = 'scoped memory for tpu_custom_call.1']
    #allocation9 [shape = 'u8[20480]{0}', space=vmem, size = 0x5000, scoped, tag = 'input window, operand 2, single buffered']
    #allocation10 [shape = 'u8[20480]{0}', space=vmem, size = 0x5000, scoped, tag = 'input window, operand 3, single buffered']
    #allocation11 [shape = 's32[1]{0}', space=sflag, size = 0x4, scoped, tag = 'scoped memory for tpu_custom_call.1']
    #allocation12 [shape = 'u8[16384]{0}', space=vmem, size = 0x4000, scoped, tag = 'output window, operand 0']
    %9 = vsyncpa [#allocation5], 0
    %s10 = scalar_lea.sflag [#allocation5], 1
    %11 = vsyncpa %s10, 0
    %12 = vsyncpa [#allocation8], 0
    %s13 = scalar_lea.sflag [#allocation8], 1
    %14 = vsyncpa %s13, 0
    %15 = vsyncpa [#allocation11], 0
    %16 = vsyncpa [#allocation6], 0
    %s17 = scalar_lea.sflag [#allocation6], 1
    %18 = vsyncpa %s17, 0
    loop: start=0, step=1, limit=4
    $region2: #{tpu_custom_call.1} parent=1 // loop_pre_header
      _
    $region3: #{tpu_custom_call.1} parent=1 // loop_header
      %s20 = sphi 0, %s24
      %p21 = scmp.ge.s32.totalorder %s20, 4
      %s30 = sphi 0, %s32
      %s33 = sphi 0, %s30
      %s34 = sphi 0, %s33
      %s50 = sphi 0, %s34
      %s56 = sphi 0, %s58
      %s59 = sphi 0, %s56
      %s60 = sphi 0, %s59
      %s76 = sphi 0, %s60
      %s80 = sphi 0, %s80
      %s82 = sphi 0, %s80
      %s83 = sphi 0, %s82
      %s97 = sphi 0, %s83
      %s101 = sphi 0, %s101
      %s103 = sphi 0, %s101
      %s104 = sphi 0, %s103
      %s118 = sphi 0, %s104
      %s124 = sphi 0, %s126
      %s127 = sphi 0, %s124
      %s128 = sphi 0, %s127
      %s144 = sphi 0, %s128
    $region4: #{tpu_custom_call.1} parent=1 // loop_header_branch
      %23 = sbr.rel (%p21) target = $region8
    $region5: #{tpu_custom_call.1} parent=1 // loop_body
      %s25 = ssub.s32 %s20, 1
      %s26 = ssub.s32 %s20, 2
      %s27 = sadd.s32 %s20, 1
      %s28 = ssub.s32 %s20, %s27
      %p29 = scmp.eq.s32.totalorder %s28, 0
      %s31 = sadd.s32 %s30, 1
      %s32 = scalar_select %p29, %s30, %s31
      %p35 = pneg %p29
      %p36 = scmp.eq.s32.totalorder %s20, 1
      %p37 = por %p35, %p36
      %p38 = scmp.ne.s32.totalorder %s30, %s33
      %p39 = scmp.eq.s32.totalorder %s20, 0
      %p40 = por %p38, %p39
      %p41 = scmp.ne.s32.totalorder %s30, %s33
      %p42 = scmp.eq.s32.totalorder %s25, 1
      %p43 = por %p41, %p42
      %p44 = scmp.ne.s32.totalorder %s33, %s34
      %p45 = scmp.eq.s32.totalorder %s25, 0
      %p46 = por %p44, %p45
      %p47 = scmp.ne.s32.totalorder %s33, %s34
      %p48 = scmp.eq.s32.totalorder %s26, 1
      %p49 = por %p47, %p48
      %p51 = scmp.ne.s32.totalorder %s34, %s50
      %p52 = scmp.eq.s32.totalorder %s26, 0
      %p53 = por %p51, %p52
      %s54 = ssub.s32 %s20, %s27
      %p55 = scmp.eq.s32.totalorder %s54, 0
      %s57 = sadd.s32 %s56, 1
      %s58 = scalar_select %p55, %s56, %s57
      %p61 = pneg %p55
      %p62 = scmp.eq.s32.totalorder %s20, 1
      %p63 = por %p61, %p62
      %p64 = scmp.ne.s32.totalorder %s56, %s59
      %p65 = scmp.eq.s32.totalorder %s20, 0
      %p66 = por %p64, %p65
      %p67 = scmp.ne.s32.totalorder %s56, %s59
      %p68 = scmp.eq.s32.totalorder %s25, 1
      %p69 = por %p67, %p68
      %p70 = scmp.ne.s32.totalorder %s59, %s60
      %p71 = scmp.eq.s32.totalorder %s25, 0
      %p72 = por %p70, %p71
      %p73 = scmp.ne.s32.totalorder %s59, %s60
      %p74 = scmp.eq.s32.totalorder %s26, 1
      %p75 = por %p73, %p74
      %p77 = scmp.ne.s32.totalorder %s60, %s76
      %p78 = scmp.eq.s32.totalorder %s26, 0
      %p79 = por %p77, %p78
      %s81 = sadd.s32 %s80, 1
      %p84 = scmp.eq.s32.totalorder %s20, 1
      %p85 = scmp.ne.s32.totalorder %s80, %s82
      %p86 = scmp.eq.s32.totalorder %s20, 0
      %p87 = por %p85, %p86
      %p88 = scmp.ne.s32.totalorder %s80, %s82
      %p89 = scmp.eq.s32.totalorder %s25, 1
      %p90 = por %p88, %p89
      %p91 = scmp.ne.s32.totalorder %s82, %s83
      %p92 = scmp.eq.s32.totalorder %s25, 0
      %p93 = por %p91, %p92
      %p94 = scmp.ne.s32.totalorder %s82, %s83
      %p95 = scmp.eq.s32.totalorder %s26, 1
      %p96 = por %p94, %p95
      %p98 = scmp.ne.s32.totalorder %s83, %s97
      %p99 = scmp.eq.s32.totalorder %s26, 0
      %p100 = por %p98, %p99
      %s102 = sadd.s32 %s101, 1
      %p105 = scmp.eq.s32.totalorder %s20, 1
      %p106 = scmp.ne.s32.totalorder %s101, %s103
      %p107 = scmp.eq.s32.totalorder %s20, 0
      %p108 = por %p106, %p107
      %p109 = scmp.ne.s32.totalorder %s101, %s103
      %p110 = scmp.eq.s32.totalorder %s25, 1
      %p111 = por %p109, %p110
      %p112 = scmp.ne.s32.totalorder %s103, %s104
      %p113 = scmp.eq.s32.totalorder %s25, 0
      %p114 = por %p112, %p113
      %p115 = scmp.ne.s32.totalorder %s103, %s104
      %p116 = scmp.eq.s32.totalorder %s26, 1
      %p117 = por %p115, %p116
      %p119 = scmp.ne.s32.totalorder %s104, %s118
      %p120 = scmp.eq.s32.totalorder %s26, 0
      %p121 = por %p119, %p120
      %s122 = ssub.s32 %s20, %s27
      %p123 = scmp.eq.s32.totalorder %s122, 0
      %s125 = sadd.s32 %s124, 1
      %s126 = scalar_select %p123, %s124, %s125
      %p129 = pneg %p123
      %p130 = scmp.eq.s32.totalorder %s20, 1
      %p131 = por %p129, %p130
      %p132 = scmp.ne.s32.totalorder %s124, %s127
      %p133 = scmp.eq.s32.totalorder %s20, 0
      %p134 = por %p132, %p133
      %p135 = scmp.ne.s32.totalorder %s124, %s127
      %p136 = scmp.eq.s32.totalorder %s25, 1
      %p137 = por %p135, %p136
      %p138 = scmp.ne.s32.totalorder %s127, %s128
      %p139 = scmp.eq.s32.totalorder %s25, 0
      %p140 = por %p138, %p139
      %p141 = scmp.ne.s32.totalorder %s127, %s128
      %p142 = scmp.eq.s32.totalorder %s26, 1
      %p143 = por %p141, %p142
      %p145 = scmp.ne.s32.totalorder %s128, %s144
      %p146 = scmp.eq.s32.totalorder %s26, 0
      %p147 = por %p145, %p146
      %p148 = scmp.le.s32.totalorder 1, %s20
      %p149 = scmp.lt.s32.totalorder %s20, 3
      %p150 = pnand %p148, %p149
      %p151 = pneg %p150
      // Predicated region
      $region9: #{tpu_custom_call.1} parent=5 // pred_check
        _
      $region10: #{tpu_custom_call.1} parent=5 // pred_check_branch
        %153 = sbr.rel (%p150) target = $region12
      $region11: #{tpu_custom_call.1} parent=5 // pred_region
        %s154 = ssub.s32 %s20, 1
        // Predicated region
        $region13: #{tpu_custom_call.1} parent=11 // pred_check
          %p155 = pneg %p93
        $region14: #{tpu_custom_call.1} parent=11 // pred_check_branch
          %157 = sbr.rel (%p155) target = $region16
        $region15: #{tpu_custom_call.1} parent=11 // pred_region
          %s159 = ssub.s32 640, 640
          %160 = vsyncadd [#allocation8], %s159
          %s161 = sshll.u32 [#allocation9], 4
          %s162 = int_to_ptr.vmem [resolvable:$true] %s161
          %167 = dma.hbm_to_vmem [thread:$0]  %s2, 640, %s162, [#allocation8], 64, 64, 4
        $region16: #{tpu_custom_call.1} parent=11 // pred_fallthru
          _
        // Predicated region
        $region17: #{tpu_custom_call.1} parent=11 // pred_check
          %p168 = pneg %p114
        $region18: #{tpu_custom_call.1} parent=11 // pred_check_branch
          %170 = sbr.rel (%p168) target = $region20
        $region19: #{tpu_custom_call.1} parent=11 // pred_region
          %s172 = ssub.s32 640, 640
          %173 = vsyncadd [#allocation11], %s172
          %s174 = sshll.u32 [#allocation10], 4
          %s175 = int_to_ptr.vmem [resolvable:$true] %s174
          %180 = dma.hbm_to_vmem [thread:$0]  %s3, 640, %s175, [#allocation11], 64, 64, 4
        $region20: #{tpu_custom_call.1} parent=11 // pred_fallthru
          _
      $region12: #{tpu_custom_call.1} parent=5 // pred_fallthru
        _
      %p181 = scmp.lt.s32.totalorder %s20, 2
      // Predicated region
      $region21: #{tpu_custom_call.1} parent=5 // pred_check
        %p182 = pneg %p181
      $region22: #{tpu_custom_call.1} parent=5 // pred_check_branch
        %184 = sbr.rel (%p182) target = $region24
      $region23: #{tpu_custom_call.1} parent=5 // pred_region
        // Predicated region
        $region25: #{tpu_custom_call.1} parent=23 // pred_check
          %p185 = pneg %p40
        $region26: #{tpu_custom_call.1} parent=23 // pred_check_branch
          %187 = sbr.rel (%p185) target = $region28
        $region27: #{tpu_custom_call.1} parent=23 // pred_region
          %s188 = sand.u32 %s30, 1
          %s189 = scalar_lea.sflag [#allocation5], %s188
          %s190 = sand.u32 %s30, 1
          %s191 = smul.addr %s190, 48
          %s192 = scalar_lea.vmem [#allocation4], %s191
          %s194 = ssub.s32 768, 768
          %195 = vsyncadd %s189, %s194
          %s196 = smul.addr %s20, 6
          %s197 = smul.addr %s196, 128
          %s198 = scalar_lea.hbm %s0, %s197
          %s199 = sshll.u32 %s192, 4
          %s200 = int_to_ptr.vmem [resolvable:$true] %s199
          %205 = dma.hbm_to_vmem [thread:$0]  %s198, 768, %s200, %s189, 128, 128, 8
        $region28: #{tpu_custom_call.1} parent=23 // pred_fallthru
          _
        // Predicated region
        $region29: #{tpu_custom_call.1} parent=23 // pred_check
          %p206 = pneg %p66
        $region30: #{tpu_custom_call.1} parent=23 // pred_check_branch
          %208 = sbr.rel (%p206) target = $region32
        $region31: #{tpu_custom_call.1} parent=23 // pred_region
          %s209 = sand.u32 %s20, 1
          %s210 = scalar_lea.sflag [#allocation8], %s209
          %s211 = sand.u32 %s56, 1
          %s212 = smul.addr %s211, 48
          %s213 = scalar_lea.vmem [#allocation7], %s212
          %s215 = ssub.s32 768, 768
          %216 = vsyncadd %s210, %s215
          %s217 = smul.addr %s20, 6
          %s218 = smul.addr %s217, 128
          %s219 = scalar_lea.hbm %s1, %s218
          %s220 = sshll.u32 %s213, 4
          %s221 = int_to_ptr.vmem [resolvable:$true] %s220
          %226 = dma.hbm_to_vmem [thread:$0]  %s219, 768, %s221, %s210, 128, 128, 8
        $region32: #{tpu_custom_call.1} parent=23 // pred_fallthru
          _
      $region24: #{tpu_custom_call.1} parent=5 // pred_fallthru
        _
      %p227 = scmp.le.s32.totalorder 1, %s20
      %p228 = scmp.lt.s32.totalorder %s20, 3
      %p229 = pnand %p227, %p228
      %p230 = pneg %p229
      // Predicated region
      $region33: #{tpu_custom_call.1} parent=5 // pred_check
        _
      $region34: #{tpu_custom_call.1} parent=5 // pred_check_branch
        %232 = sbr.rel (%p229) target = $region36
      $region35: #{tpu_custom_call.1} parent=5 // pred_region
        %s233 = ssub.s32 %s20, 1
        %s234 = sand.u32 %s33, 1
        %s235 = scalar_lea.sflag [#allocation5], %s234
        %s236 = sand.u32 %s33, 1
        %s237 = smul.addr %s236, 48
        %s238 = scalar_lea.vmem [#allocation4], %s237
        // Predicated region
        $region37: #{tpu_custom_call.1} parent=35 // pred_check
          %p239 = pneg %p46
        $region38: #{tpu_custom_call.1} parent=35 // pred_check_branch
          %241 = sbr.rel (%p239) target = $region40
        $region39: #{tpu_custom_call.1} parent=35 // pred_region
          %242 = dma.done %s235, 768
        $region40: #{tpu_custom_call.1} parent=35 // pred_fallthru
          _
        %s243 = sand.u32 %s25, 1
        %s244 = scalar_lea.sflag [#allocation8], %s243
        %s245 = sand.u32 %s59, 1
        %s246 = smul.addr %s245, 48
        %s247 = scalar_lea.vmem [#allocation7], %s246
        // Predicated region
        $region41: #{tpu_custom_call.1} parent=35 // pred_check
          %p248 = pneg %p72
        $region42: #{tpu_custom_call.1} parent=35 // pred_check_branch
          %250 = sbr.rel (%p248) target = $region44
        $region43: #{tpu_custom_call.1} parent=35 // pred_region
          %251 = dma.done %s244, 768
        $region44: #{tpu_custom_call.1} parent=35 // pred_fallthru
          _
        // Predicated region
        $region45: #{tpu_custom_call.1} parent=35 // pred_check
          %p252 = pneg %p93
        $region46: #{tpu_custom_call.1} parent=35 // pred_check_branch
          %254 = sbr.rel (%p252) target = $region48
        $region47: #{tpu_custom_call.1} parent=35 // pred_region
          %255 = dma.done [#allocation8], 640
        $region48: #{tpu_custom_call.1} parent=35 // pred_fallthru
          _
        // Predicated region
        $region49: #{tpu_custom_call.1} parent=35 // pred_check
          %p256 = pneg %p114
        $region50: #{tpu_custom_call.1} parent=35 // pred_check_branch
          %258 = sbr.rel (%p256) target = $region52
        $region51: #{tpu_custom_call.1} parent=35 // pred_region
          %259 = dma.done [#allocation11], 640
        $region52: #{tpu_custom_call.1} parent=35 // pred_fallthru
          _
        %s260 = sand.u32 %s33, 1
        %s261 = scalar_lea.sflag [#allocation5], %s260
        %s262 = sand.u32 %s33, 1
        %s263 = smul.addr %s262, 48
        %s264 = scalar_lea.vmem [#allocation4], %s263
        %p265 = pneg %p46
        %p266 = pneg %p43
        %s267 = sand.u32 %s25, 1
        %s268 = scalar_lea.sflag [#allocation8], %s267
        %s269 = sand.u32 %s59, 1
        %s270 = smul.addr %s269, 48
        %s271 = scalar_lea.vmem [#allocation7], %s270
        %p272 = pneg %p72
        %p273 = pneg %p69
        %p274 = pneg %p93
        %p275 = pneg %p90
        %p276 = pneg %p114
        %p277 = pneg %p111
        %p278 = pneg %p140
        %p279 = pneg %p137
        %s280 = sand.u32 %s127, 1
        %s281 = scalar_lea.sflag [#allocation6], %s280
        %s282 = sand.u32 %s127, 1
        %s283 = smul.addr %s282, 16
        %s284 = scalar_lea.vmem [#allocation12], %s283
        %v286 = vld [vmem:[%s238] sm:$0xff]
        %v287 = vld [vmem:[%s238 + $0x8] sm:$0xff]
        %v288 = vld [vmem:[%s247] sm:$0xff]
        %v289 = vld [vmem:[%s247 + $0x8] sm:$0xff]
        %v290 = vmul.f32 %v286, %v286
        %v291 = vmul.f32 %v287, %v287
        %v292 = vmul.f32 %v288, %v288
        %v293 = vmul.f32 %v289, %v289
        %v294 = vmul.f32 %v286, %v288
        %v295 = vmul.f32 %v287, %v289
        %v296 = vpack.c.bf16 %v287, %v286
        %vm297 = vcmask 130048
        %298 = vst.msk [vmem:[#allocation2] sm:$0xff] %vm297, %v296
        %v299 = vpack.c.bf16 %v289, %v288
        %300 = vst.msk [vmem:[#allocation2 + $0x8] sm:$0xff] %vm297, %v299
        %v301 = vpack.c.bf16 %v291, %v290
        %302 = vst.msk [vmem:[#allocation2 + $0x10] sm:$0xff] %vm297, %v301
        %v303 = vpack.c.bf16 %v293, %v292
        %304 = vst.msk [vmem:[#allocation2 + $0x18] sm:$0xff] %vm297, %v303
        %v305 = vpack.c.bf16 %v295, %v294
        %306 = vst.msk [vmem:[#allocation2 + $0x20] sm:$0xff] %vm297, %v305
        %v307 = vld [vmem:[#allocation9] sm:$0xf]
        %v308 = vld [vmem:[#allocation9 + $0x4] sm:$0xf]
        %v309 = vld [vmem:[#allocation2] sm:$0xff]
        %v310 = vld [vmem:[#allocation2 + $0x8] sm:$0xff]
        %v311 = vld [vmem:[#allocation2 + $0x10] sm:$0xff]
        %v312 = vld [vmem:[#allocation2 + $0x18] sm:$0xff]
        %v313 = vld [vmem:[#allocation2 + $0x20] sm:$0xff]
        %v316 = vunpack.c.l.b16 %v307
        %v317 = vunpack.c.l.b16 %v308
        %v318 = vpack.c.b16 %v317, %v316
        %v321 = vsel %vm297, %v309, 0
        %v324 = vsel %vm297, %v310, 0
        %v327 = vsel %vm297, %v311, 0
        %v330 = vsel %vm297, %v312, 0
        %v333 = vsel %vm297, %v313, 0
        %335 = vmatprep.subr.bf16.mxu0 0
        %336 = vmatpush1.bf16.msra.mxu0 %v318
        %337 = vmatprep.subr.bf16.mxu0 0
        %338 = vmatpush1.bf16.msra.mxu0 0
        %339 = vmatprep.subr.bf16.mxu0 0
        %340 = vmatpush1.bf16.msra.mxu0 0
        %341 = vmatprep.subr.bf16.mxu0 0
        %342 = vmatpush1.bf16.msra.mxu0 0
        %343 = vmatprep.subr.bf16.mxu0 0
        %344 = vmatpush1.bf16.msra.mxu0 0
        %345 = vmatprep.subr.bf16.mxu0 0
        %346 = vmatpush1.bf16.msra.mxu0 0
        %347 = vmatprep.subr.bf16.mxu0 0
        %348 = vmatpush1.bf16.msra.mxu0 0
        %349 = vmatprep.subr.bf16.mxu0 0
        %350 = vmatpush1.bf16.msra.mxu0 0
        %351 = vmatprep.subr.bf16.mxu0 0
        %352 = vmatpush1.bf16.msra.mxu0 0
        %353 = vmatprep.subr.bf16.mxu0 0
        %354 = vmatpush1.bf16.msra.mxu0 0
        %355 = vmatprep.subr.bf16.mxu0 0
        %356 = vmatpush1.bf16.msra.mxu0 0
        %357 = vmatprep.subr.bf16.mxu0 0
        %358 = vmatpush1.bf16.msra.mxu0 0
        %359 = vmatprep.subr.bf16.mxu0 0
        %360 = vmatpush1.bf16.msra.mxu0 0
        %361 = vmatprep.subr.bf16.mxu0 0
        %362 = vmatpush1.bf16.msra.mxu0 0
        %363 = vmatprep.subr.bf16.mxu0 0
        %364 = vmatpush1.bf16.msra.mxu0 0
        %365 = vmatprep.subr.bf16.mxu0 0
        %366 = vmatpush1.bf16.msra.mxu0 0
        %367 = vmatprep.mubr.bf16.mxu0 0
        %368 = vmatmul.mubr.bf16.gmra.mrb[0].mxu0 %v321
        %v369 = vpop.f32.mrb[0].mxu0
        %v370 = vadd.f32 0.0, %v369
        %v371 = vpop.f32.mrb[0].mxu0
        %v372 = vpop.f32.mrb[0].mxu0
        %v373 = vadd.f32 0.0, %v372
        %v374 = vpop.f32.mrb[0].mxu0
        %375 = vmatprep.mubr.bf16.mxu0 0
        %376 = vmatmul.mubr.bf16.gmra.mrb[0].mxu0 %v324
        %v377 = vpop.f32.mrb[0].mxu0
        %v378 = vadd.f32 0.0, %v377
        %v379 = vpop.f32.mrb[0].mxu0
        %v380 = vpop.f32.mrb[0].mxu0
        %v381 = vadd.f32 0.0, %v380
        %v382 = vpop.f32.mrb[0].mxu0
        %383 = vmatprep.mubr.bf16.mxu0 0
        %384 = vmatmul.mubr.bf16.gmra.mrb[0].mxu0 %v327
        %v385 = vpop.f32.mrb[0].mxu0
        %v386 = vadd.f32 0.0, %v385
        %v387 = vpop.f32.mrb[0].mxu0
        %v388 = vpop.f32.mrb[0].mxu0
        %v389 = vadd.f32 0.0, %v388
        %v390 = vpop.f32.mrb[0].mxu0
        %391 = vmatprep.mubr.bf16.mxu0 0
        %392 = vmatmul.mubr.bf16.gmra.mrb[0].mxu0 %v330
        %v393 = vpop.f32.mrb[0].mxu0
        %v394 = vadd.f32 0.0, %v393
        %v395 = vpop.f32.mrb[0].mxu0
        %v396 = vpop.f32.mrb[0].mxu0
        %v397 = vadd.f32 0.0, %v396
        %v398 = vpop.f32.mrb[0].mxu0
        %399 = vmatprep.mubr.bf16.mxu0 0
        %400 = vmatmul.mubr.bf16.gmra.mrb[0].mxu0 %v333
        %v401 = vpop.f32.mrb[0].mxu0
        %v402 = vadd.f32 0.0, %v401
        %v403 = vpop.f32.mrb[0].mxu0
        %v404 = vpop.f32.mrb[0].mxu0
        %v405 = vadd.f32 0.0, %v404
        %v406 = vpop.f32.mrb[0].mxu0
        %407 = vdwg.mxu0
        %v408 = vpack.c.bf16 %v373, %v370
        %v409 = vpack.c.bf16 %v381, %v378
        %v410 = vpack.c.bf16 %v389, %v386
        %v411 = vpack.c.bf16 %v397, %v394
        %v412 = vpack.c.bf16 %v405, %v402
        %v413 = vld [vmem:[#allocation10] sm:$0xf]
        %v414 = vld [vmem:[#allocation10 + $0x4] sm:$0xf]
        %v417 = vunpack.c.l.b16 %v413
        %v418 = vunpack.c.l.b16 %v414
        %v419 = vpack.c.b16 %v418, %v417
        %v421 = vsel %vm297, %v419, 0
        %423 = vmatprep.subr.bf16.mxu0 0
        %424 = vmatpush1.bf16.msra.mxu0 %v408
        %425 = vmatprep.subr.bf16.mxu0 0
        %426 = vmatpush1.bf16.msra.mxu0 0
        %427 = vmatprep.subr.bf16.mxu0 0
        %428 = vmatpush1.bf16.msra.mxu0 0
        %429 = vmatprep.subr.bf16.mxu0 0
        %430 = vmatpush1.bf16.msra.mxu0 0
        %431 = vmatprep.subr.bf16.mxu0 0
        %432 = vmatpush1.bf16.msra.mxu0 0
        %433 = vmatprep.subr.bf16.mxu0 0
        %434 = vmatpush1.bf16.msra.mxu0 0
        %435 = vmatprep.subr.bf16.mxu0 0
        %436 = vmatpush1.bf16.msra.mxu0 0
        %437 = vmatprep.subr.bf16.mxu0 0
        %438 = vmatpush1.bf16.msra.mxu0 0
        %439 = vmatprep.subr.bf16.mxu0 0
        %440 = vmatpush1.bf16.msra.mxu0 0
        %441 = vmatprep.subr.bf16.mxu0 0
        %442 = vmatpush1.bf16.msra.mxu0 0
        %443 = vmatprep.subr.bf16.mxu0 0
        %444 = vmatpush1.bf16.msra.mxu0 0
        %445 = vmatprep.subr.bf16.mxu0 0
        %446 = vmatpush1.bf16.msra.mxu0 0
        %447 = vmatprep.subr.bf16.mxu0 0
        %448 = vmatpush1.bf16.msra.mxu0 0
        %449 = vmatprep.subr.bf16.mxu0 0
        %450 = vmatpush1.bf16.msra.mxu0 0
        %451 = vmatprep.subr.bf16.mxu0 0
        %452 = vmatpush1.bf16.msra.mxu0 0
        %453 = vmatprep.subr.bf16.mxu0 0
        %454 = vmatpush1.bf16.msra.mxu0 0
        %455 = vmatprep.mubr.bf16.mxu0 0
        %456 = vmatmul.mubr.bf16.gmra.mrb[0].mxu0 %v421
        %v457 = vpop.f32.mrb[0].mxu0
        %v458 = vadd.f32 0.0, %v457
        %v459 = vpop.f32.mrb[0].mxu0
        %v460 = vpop.f32.mrb[0].mxu0
        %v461 = vadd.f32 0.0, %v460
        %v462 = vpop.f32.mrb[0].mxu0
        %463 = vdwg.mxu0
        %464 = vmatprep.subr.bf16.mxu0 0
        %465 = vmatpush1.bf16.msra.mxu0 %v409
        %466 = vmatprep.subr.bf16.mxu0 0
        %467 = vmatpush1.bf16.msra.mxu0 0
        %468 = vmatprep.subr.bf16.mxu0 0
        %469 = vmatpush1.bf16.msra.mxu0 0
        %470 = vmatprep.subr.bf16.mxu0 0
        %471 = vmatpush1.bf16.msra.mxu0 0
        %472 = vmatprep.subr.bf16.mxu0 0
        %473 = vmatpush1.bf16.msra.mxu0 0
        %474 = vmatprep.subr.bf16.mxu0 0
        %475 = vmatpush1.bf16.msra.mxu0 0
        %476 = vmatprep.subr.bf16.mxu0 0
        %477 = vmatpush1.bf16.msra.mxu0 0
        %478 = vmatprep.subr.bf16.mxu0 0
        %479 = vmatpush1.bf16.msra.mxu0 0
        %480 = vmatprep.subr.bf16.mxu0 0
        %481 = vmatpush1.bf16.msra.mxu0 0
        %482 = vmatprep.subr.bf16.mxu0 0
        %483 = vmatpush1.bf16.msra.mxu0 0
        %484 = vmatprep.subr.bf16.mxu0 0
        %485 = vmatpush1.bf16.msra.mxu0 0
        %486 = vmatprep.subr.bf16.mxu0 0
        %487 = vmatpush1.bf16.msra.mxu0 0
        %488 = vmatprep.subr.bf16.mxu0 0
        %489 = vmatpush1.bf16.msra.mxu0 0
        %490 = vmatprep.subr.bf16.mxu0 0
        %491 = vmatpush1.bf16.msra.mxu0 0
        %492 = vmatprep.subr.bf16.mxu0 0
        %493 = vmatpush1.bf16.msra.mxu0 0
        %494 = vmatprep.subr.bf16.mxu0 0
        %495 = vmatpush1.bf16.msra.mxu0 0
        %496 = vmatprep.mubr.bf16.mxu0 0
        %497 = vmatmul.mubr.bf16.gmra.mrb[0].mxu0 %v421
        %v498 = vpop.f32.mrb[0].mxu0
        %v499 = vadd.f32 0.0, %v498
        %v500 = vpop.f32.mrb[0].mxu0
        %v501 = vpop.f32.mrb[0].mxu0
        %v502 = vadd.f32 0.0, %v501
        %v503 = vpop.f32.mrb[0].mxu0
        %504 = vdwg.mxu0
        %v505 = vmul.f32 %v458, %v458
        %v506 = vmul.f32 %v461, %v461
        %v507 = vmul.f32 %v499, %v499
        %v508 = vmul.f32 %v502, %v502
        %v509 = vmul.f32 %v458, %v499
        %v510 = vmul.f32 %v461, %v502
        %511 = vmatprep.subr.bf16.mxu0 0
        %512 = vmatpush1.bf16.msra.mxu0 %v410
        %513 = vmatprep.subr.bf16.mxu0 0
        %514 = vmatpush1.bf16.msra.mxu0 0
        %515 = vmatprep.subr.bf16.mxu0 0
        %516 = vmatpush1.bf16.msra.mxu0 0
        %517 = vmatprep.subr.bf16.mxu0 0
        %518 = vmatpush1.bf16.msra.mxu0 0
        %519 = vmatprep.subr.bf16.mxu0 0
        %520 = vmatpush1.bf16.msra.mxu0 0
        %521 = vmatprep.subr.bf16.mxu0 0
        %522 = vmatpush1.bf16.msra.mxu0 0
        %523 = vmatprep.subr.bf16.mxu0 0
        %524 = vmatpush1.bf16.msra.mxu0 0
        %525 = vmatprep.subr.bf16.mxu0 0
        %526 = vmatpush1.bf16.msra.mxu0 0
        %527 = vmatprep.subr.bf16.mxu0 0
        %528 = vmatpush1.bf16.msra.mxu0 0
        %529 = vmatprep.subr.bf16.mxu0 0
        %530 = vmatpush1.bf16.msra.mxu0 0
        %531 = vmatprep.subr.bf16.mxu0 0
        %532 = vmatpush1.bf16.msra.mxu0 0
        %533 = vmatprep.subr.bf16.mxu0 0
        %534 = vmatpush1.bf16.msra.mxu0 0
        %535 = vmatprep.subr.bf16.mxu0 0
        %536 = vmatpush1.bf16.msra.mxu0 0
        %537 = vmatprep.subr.bf16.mxu0 0
        %538 = vmatpush1.bf16.msra.mxu0 0
        %539 = vmatprep.subr.bf16.mxu0 0
        %540 = vmatpush1.bf16.msra.mxu0 0
        %541 = vmatprep.subr.bf16.mxu0 0
        %542 = vmatpush1.bf16.msra.mxu0 0
        %543 = vmatprep.mubr.bf16.mxu0 0
        %544 = vmatmul.mubr.bf16.gmra.mrb[0].mxu0 %v421
        %v545 = vpop.f32.mrb[0].mxu0
        %v546 = vadd.f32 0.0, %v545
        %v547 = vpop.f32.mrb[0].mxu0
        %v548 = vpop.f32.mrb[0].mxu0
        %v549 = vadd.f32 0.0, %v548
        %v550 = vpop.f32.mrb[0].mxu0
        %551 = vdwg.mxu0
        %v552 = vsub.f32 %v546, %v505
        %v553 = vsub.f32 %v549, %v506
        %554 = vmatprep.subr.bf16.mxu0 0
        %555 = vmatpush1.bf16.msra.mxu0 %v411
        %556 = vmatprep.subr.bf16.mxu0 0
        %557 = vmatpush1.bf16.msra.mxu0 0
        %558 = vmatprep.subr.bf16.mxu0 0
        %559 = vmatpush1.bf16.msra.mxu0 0
        %560 = vmatprep.subr.bf16.mxu0 0
        %561 = vmatpush1.bf16.msra.mxu0 0
        %562 = vmatprep.subr.bf16.mxu0 0
        %563 = vmatpush1.bf16.msra.mxu0 0
        %564 = vmatprep.subr.bf16.mxu0 0
        %565 = vmatpush1.bf16.msra.mxu0 0
        %566 = vmatprep.subr.bf16.mxu0 0
        %567 = vmatpush1.bf16.msra.mxu0 0
        %568 = vmatprep.subr.bf16.mxu0 0
        %569 = vmatpush1.bf16.msra.mxu0 0
        %570 = vmatprep.subr.bf16.mxu0 0
        %571 = vmatpush1.bf16.msra.mxu0 0
        %572 = vmatprep.subr.bf16.mxu0 0
        %573 = vmatpush1.bf16.msra.mxu0 0
        %574 = vmatprep.subr.bf16.mxu0 0
        %575 = vmatpush1.bf16.msra.mxu0 0
        %576 = vmatprep.subr.bf16.mxu0 0
        %577 = vmatpush1.bf16.msra.mxu0 0
        %578 = vmatprep.subr.bf16.mxu0 0
        %579 = vmatpush1.bf16.msra.mxu0 0
        %580 = vmatprep.subr.bf16.mxu0 0
        %581 = vmatpush1.bf16.msra.mxu0 0
        %582 = vmatprep.subr.bf16.mxu0 0
        %583 = vmatpush1.bf16.msra.mxu0 0
        %584 = vmatprep.subr.bf16.mxu0 0
        %585 = vmatpush1.bf16.msra.mxu0 0
        %586 = vmatprep.mubr.bf16.mxu0 0
        %587 = vmatmul.mubr.bf16.gmra.mrb[0].mxu0 %v421
        %v588 = vpop.f32.mrb[0].mxu0
        %v589 = vadd.f32 0.0, %v588
        %v590 = vpop.f32.mrb[0].mxu0
        %v591 = vpop.f32.mrb[0].mxu0
        %v592 = vadd.f32 0.0, %v591
        %v593 = vpop.f32.mrb[0].mxu0
        %594 = vdwg.mxu0
        %v595 = vsub.f32 %v589, %v507
        %v596 = vsub.f32 %v592, %v508
        %597 = vmatprep.subr.bf16.mxu0 0
        %598 = vmatpush1.bf16.msra.mxu0 %v412
        %599 = vmatprep.subr.bf16.mxu0 0
        %600 = vmatpush1.bf16.msra.mxu0 0
        %601 = vmatprep.subr.bf16.mxu0 0
        %602 = vmatpush1.bf16.msra.mxu0 0
        %603 = vmatprep.subr.bf16.mxu0 0
        %604 = vmatpush1.bf16.msra.mxu0 0
        %605 = vmatprep.subr.bf16.mxu0 0
        %606 = vmatpush1.bf16.msra.mxu0 0
        %607 = vmatprep.subr.bf16.mxu0 0
        %608 = vmatpush1.bf16.msra.mxu0 0
        %609 = vmatprep.subr.bf16.mxu0 0
        %610 = vmatpush1.bf16.msra.mxu0 0
        %611 = vmatprep.subr.bf16.mxu0 0
        %612 = vmatpush1.bf16.msra.mxu0 0
        %613 = vmatprep.subr.bf16.mxu0 0
        %614 = vmatpush1.bf16.msra.mxu0 0
        %615 = vmatprep.subr.bf16.mxu0 0
        %616 = vmatpush1.bf16.msra.mxu0 0
        %617 = vmatprep.subr.bf16.mxu0 0
        %618 = vmatpush1.bf16.msra.mxu0 0
        %619 = vmatprep.subr.bf16.mxu0 0
        %620 = vmatpush1.bf16.msra.mxu0 0
        %621 = vmatprep.subr.bf16.mxu0 0
        %622 = vmatpush1.bf16.msra.mxu0 0
        %623 = vmatprep.subr.bf16.mxu0 0
        %624 = vmatpush1.bf16.msra.mxu0 0
        %625 = vmatprep.subr.bf16.mxu0 0
        %626 = vmatpush1.bf16.msra.mxu0 0
        %627 = vmatprep.subr.bf16.mxu0 0
        %628 = vmatpush1.bf16.msra.mxu0 0
        %629 = vmatprep.mubr.bf16.mxu0 0
        %630 = vmatmul.mubr.bf16.gmra.mrb[0].mxu0 %v421
        %v631 = vpop.f32.mrb[0].mxu0
        %v632 = vadd.f32 0.0, %v631
        %v633 = vpop.f32.mrb[0].mxu0
        %v634 = vpop.f32.mrb[0].mxu0
        %v635 = vadd.f32 0.0, %v634
        %v636 = vpop.f32.mrb[0].mxu0
        %637 = vdwg.mxu0
        %v638 = vsub.f32 %v632, %v509
        %v639 = vsub.f32 %v635, %v510
        %v640 = vmul.f32 %v638, 2.0
        %v641 = vmul.f32 %v639, 2.0
        %v642 = vadd.f32 %v640, 0.0009
        %v643 = vadd.f32 %v641, 0.0009
        %v644 = vadd.f32 %v552, %v595
        %v645 = vadd.f32 %v553, %v596
        %v646 = vadd.f32 %v644, 0.0009
        %v647 = vadd.f32 %v645, 0.0009
        %v648 = vrcp.pop %v646
        %v649 = vrcp.pop %v647
        %v650 = vmul.f32 %v642, %v648
        %v651 = vmul.f32 %v643, %v649
        %v652 = vmul.f32 %v650, %v650
        %v653 = vmul.f32 %v651, %v651
        %v654 = vmul.f32 %v652, %v650
        %v655 = vmul.f32 %v653, %v651
        %656 = vst.msk [vmem:[#allocation3] sm:$0xff] %vm297, %v654
        %657 = vst.msk [vmem:[#allocation3 + $0x8] sm:$0xff] %vm297, %v655
        %v658 = vld [vmem:[%s238] sm:$0xff]
        %v659 = vld [vmem:[%s238 + $0x8] sm:$0xff]
        %v660 = vld [vmem:[%s247] sm:$0xff]
        %v661 = vld [vmem:[%s247 + $0x8] sm:$0xff]
        %v662 = vmul.f32 %v658, %v658
        %v663 = vmul.f32 %v659, %v659
        %v664 = vmul.f32 %v660, %v660
        %v665 = vmul.f32 %v661, %v661
        %v666 = vmul.f32 %v658, %v660
        %v667 = vmul.f32 %v659, %v661
        %v668 = vpack.c.bf16 %v659, %v658
        %669 = vst.msk [vmem:[#allocation2] sm:$0xff] %vm297, %v668
        %v670 = vpack.c.bf16 %v661, %v660
        %671 = vst.msk [vmem:[#allocation2 + $0x8] sm:$0xff] %vm297, %v670
        %v672 = vpack.c.bf16 %v663, %v662
        %673 = vst.msk [vmem:[#allocation2 + $0x10] sm:$0xff] %vm297, %v672
        %v674 = vpack.c.bf16 %v665, %v664
        %675 = vst.msk [vmem:[#allocation2 + $0x18] sm:$0xff] %vm297, %v674
        %v676 = vpack.c.bf16 %v667, %v666
        %677 = vst.msk [vmem:[#allocation2 + $0x20] sm:$0xff] %vm297, %v676
        %s678 = scalar_lea.vmem %s238, 16 [#allocation4]
        %v679 = vld [vmem:[%s678] sm:$0xff]
        %v680 = vld [vmem:[%s678 + $0x8] sm:$0xff]
        %s681 = scalar_lea.vmem %s247, 16 [#allocation7]
        %v682 = vld [vmem:[%s681] sm:$0xff]
        %v683 = vld [vmem:[%s681 + $0x8] sm:$0xff]
        %v684 = vmul.f32 %v679, %v679
        %v685 = vmul.f32 %v680, %v680
        %v686 = vmul.f32 %v682, %v682
        %v687 = vmul.f32 %v683, %v683
        %v688 = vmul.f32 %v679, %v682
        %v689 = vmul.f32 %v680, %v683
        %v690 = vpack.c.bf16 %v680, %v679
        %691 = vst.msk [vmem:[#allocation2 + $0x28] sm:$0xff] %vm297, %v690
        %v692 = vpack.c.bf16 %v683, %v682
        %693 = vst.msk [vmem:[#allocation2 + $0x30] sm:$0xff] %vm297, %v692
        %v694 = vpack.c.bf16 %v685, %v684
        %695 = vst.msk [vmem:[#allocation2 + $0x38] sm:$0xff] %vm297, %v694
        %v696 = vpack.c.bf16 %v687, %v686
        %697 = vst.msk [vmem:[#allocation2 + $0x40] sm:$0xff] %vm297, %v696
        %v698 = vpack.c.bf16 %v689, %v688
        %699 = vst.msk [vmem:[#allocation2 + $0x48] sm:$0xff] %vm297, %v698
        %s700 = scalar_lea.vmem [#allocation9], 8
        %v701 = vld [vmem:[%s700] sm:$0xf]
        %v702 = vld [vmem:[%s700 + $0x4] sm:$0xf]
        %v703 = vld [vmem:[#allocation2] sm:$0xff]
        %v704 = vld [vmem:[#allocation2 + $0x8] sm:$0xff]
        %v705 = vld [vmem:[#allocation2 + $0x10] sm:$0xff]
        %v706 = vld [vmem:[#allocation2 + $0x18] sm:$0xff]
        %v707 = vld [vmem:[#allocation2 + $0x20] sm:$0xff]
        %v708 = vld [vmem:[#allocation2 + $0x28] sm:$0xff]
        %v709 = vld [vmem:[#allocation2 + $0x30] sm:$0xff]
        %v710 = vld [vmem:[#allocation2 + $0x38] sm:$0xff]
        %v711 = vld [vmem:[#allocation2 + $0x40] sm:$0xff]
        %v712 = vld [vmem:[#allocation2 + $0x48] sm:$0xff]
        %v715 = vunpack.c.l.b16 %v701
        %v716 = vunpack.c.l.b16 %v702
        %v717 = vpack.c.b16 %v716, %v715
        %v720 = vsel %vm297, %v703, 0
        %v723 = vsel %vm297, %v704, 0
        %v726 = vsel %vm297, %v705, 0
        %v729 = vsel %vm297, %v706, 0
        %v732 = vsel %vm297, %v707, 0
        %v735 = vsel %vm297, %v708, 0
        %v738 = vsel %vm297, %v709, 0
        %v741 = vsel %vm297, %v710, 0
        %v744 = vsel %vm297, %v711, 0
        %v747 = vsel %vm297, %v712, 0
        %749 = vmatprep.subr.bf16.mxu0 0
        %750 = vmatpush1.bf16.msra.mxu0 %v717
        %751 = vmatprep.subr.bf16.mxu0 0
        %752 = vmatpush1.bf16.msra.mxu0 0
        %753 = vmatprep.subr.bf16.mxu0 0
        %754 = vmatpush1.bf16.msra.mxu0 0
        %755 = vmatprep.subr.bf16.mxu0 0
        %756 = vmatpush1.bf16.msra.mxu0 0
        %757 = vmatprep.subr.bf16.mxu0 0
        %758 = vmatpush1.bf16.msra.mxu0 0
        %759 = vmatprep.subr.bf16.mxu0 0
        %760 = vmatpush1.bf16.msra.mxu0 0
        %761 = vmatprep.subr.bf16.mxu0 0
        %762 = vmatpush1.bf16.msra.mxu0 0
        %763 = vmatprep.subr.bf16.mxu0 0
        %764 = vmatpush1.bf16.msra.mxu0 0
        %765 = vmatprep.subr.bf16.mxu0 0
        %766 = vmatpush1.bf16.msra.mxu0 0
        %767 = vmatprep.subr.bf16.mxu0 0
        %768 = vmatpush1.bf16.msra.mxu0 0
        %769 = vmatprep.subr.bf16.mxu0 0
        %770 = vmatpush1.bf16.msra.mxu0 0
        %771 = vmatprep.subr.bf16.mxu0 0
        %772 = vmatpush1.bf16.msra.mxu0 0
        %773 = vmatprep.subr.bf16.mxu0 0
        %774 = vmatpush1.bf16.msra.mxu0 0
        %775 = vmatprep.subr.bf16.mxu0 0
        %776 = vmatpush1.bf16.msra.mxu0 0
        %777 = vmatprep.subr.bf16.mxu0 0
        %778 = vmatpush1.bf16.msra.mxu0 0
        %779 = vmatprep.subr.bf16.mxu0 0
        %780 = vmatpush1.bf16.msra.mxu0 0
        %781 = vmatprep.mubr.bf16.mxu0 0
        %782 = vmatmul.mubr.bf16.gmra.mrb[0].mxu0 %v720
        %v783 = vpop.f32.mrb[0].mxu0
        %v784 = vadd.f32 0.0, %v783
        %v785 = vpop.f32.mrb[0].mxu0
        %v786 = vpop.f32.mrb[0].mxu0
        %v787 = vadd.f32 0.0, %v786
        %v788 = vpop.f32.mrb[0].mxu0
        %789 = vmatprep.mubr.bf16.mxu0 0
        %790 = vmatmul.mubr.bf16.gmra.mrb[0].mxu0 %v723
        %v791 = vpop.f32.mrb[0].mxu0
        %v792 = vadd.f32 0.0, %v791
        %v793 = vpop.f32.mrb[0].mxu0
        %v794 = vpop.f32.mrb[0].mxu0
        %v795 = vadd.f32 0.0, %v794
        %v796 = vpop.f32.mrb[0].mxu0
        %797 = vmatprep.mubr.bf16.mxu0 0
        %798 = vmatmul.mubr.bf16.gmra.mrb[0].mxu0 %v726
        %v799 = vpop.f32.mrb[0].mxu0
        %v800 = vadd.f32 0.0, %v799
        %v801 = vpop.f32.mrb[0].mxu0
        %v802 = vpop.f32.mrb[0].mxu0
        %v803 = vadd.f32 0.0, %v802
        %v804 = vpop.f32.mrb[0].mxu0
        %805 = vmatprep.mubr.bf16.mxu0 0
        %806 = vmatmul.mubr.bf16.gmra.mrb[0].mxu0 %v729
        %v807 = vpop.f32.mrb[0].mxu0
        %v808 = vadd.f32 0.0, %v807
        %v809 = vpop.f32.mrb[0].mxu0
        %v810 = vpop.f32.mrb[0].mxu0
        %v811 = vadd.f32 0.0, %v810
        %v812 = vpop.f32.mrb[0].mxu0
        %813 = vmatprep.mubr.bf16.mxu0 0
        %814 = vmatmul.mubr.bf16.gmra.mrb[0].mxu0 %v732
        %v815 = vpop.f32.mrb[0].mxu0
        %v816 = vadd.f32 0.0, %v815
        %v817 = vpop.f32.mrb[0].mxu0
        %v818 = vpop.f32.mrb[0].mxu0
        %v819 = vadd.f32 0.0, %v818
        %v820 = vpop.f32.mrb[0].mxu0
        %821 = vmatprep.mubr.bf16.mxu0 0
        %822 = vmatmul.mubr.bf16.gmra.mrb[0].mxu0 %v735
        %v823 = vpop.f32.mrb[0].mxu0
        %v824 = vadd.f32 0.0, %v823
        %v825 = vpop.f32.mrb[0].mxu0
        %v826 = vpop.f32.mrb[0].mxu0
        %v827 = vadd.f32 0.0, %v826
        %v828 = vpop.f32.mrb[0].mxu0
        %829 = vmatprep.mubr.bf16.mxu0 0
        %830 = vmatmul.mubr.bf16.gmra.mrb[0].mxu0 %v738
        %v831 = vpop.f32.mrb[0].mxu0
        %v832 = vadd.f32 0.0, %v831
        %v833 = vpop.f32.mrb[0].mxu0
        %v834 = vpop.f32.mrb[0].mxu0
        %v835 = vadd.f32 0.0, %v834
        %v836 = vpop.f32.mrb[0].mxu0
        %837 = vmatprep.mubr.bf16.mxu0 0
        %838 = vmatmul.mubr.bf16.gmra.mrb[0].mxu0 %v741
        %v839 = vpop.f32.mrb[0].mxu0
        %v840 = vadd.f32 0.0, %v839
        %v841 = vpop.f32.mrb[0].mxu0
        %v842 = vpop.f32.mrb[0].mxu0
        %v843 = vadd.f32 0.0, %v842
        %v844 = vpop.f32.mrb[0].mxu0
        %845 = vmatprep.mubr.bf16.mxu0 0
        %846 = vmatmul.mubr.bf16.gmra.mrb[0].mxu0 %v744
        %v847 = vpop.f32.mrb[0].mxu0
        %v848 = vadd.f32 0.0, %v847
        %v849 = vpop.f32.mrb[0].mxu0
        %v850 = vpop.f32.mrb[0].mxu0
        %v851 = vadd.f32 0.0, %v850
        %v852 = vpop.f32.mrb[0].mxu0
        %853 = vmatprep.mubr.bf16.mxu0 0
        %854 = vmatmul.mubr.bf16.gmra.mrb[0].mxu0 %v747
        %v855 = vpop.f32.mrb[0].mxu0
        %v856 = vadd.f32 0.0, %v855
        %v857 = vpop.f32.mrb[0].mxu0
        %v858 = vpop.f32.mrb[0].mxu0
        %v859 = vadd.f32 0.0, %v858
        %v860 = vpop.f32.mrb[0].mxu0
        %861 = vdwg.mxu0
        %v862 = vpack.c.bf16 %v787, %v784
        %v863 = vpack.c.bf16 %v795, %v792
        %v864 = vpack.c.bf16 %v803, %v800
        %v865 = vpack.c.bf16 %v811, %v808
        %v866 = vpack.c.bf16 %v819, %v816
        %v867 = vpack.c.bf16 %v827, %v824
        %v868 = vpack.c.bf16 %v835, %v832
        %v869 = vpack.c.bf16 %v843, %v840
        %v870 = vpack.c.bf16 %v851, %v848
        %v871 = vpack.c.bf16 %v859, %v856
        %s872 = scalar_lea.vmem [#allocation10], 8
        %v873 = vld [vmem:[%s872] sm:$0xf]
        %v874 = vld [vmem:[%s872 + $0x4] sm:$0xf]
        %v877 = vunpack.c.l.b16 %v873
        %v878 = vunpack.c.l.b16 %v874
        %v879 = vpack.c.b16 %v878, %v877
        %v881 = vsel %vm297, %v879, 0
        %883 = vmatprep.subr.bf16.mxu0 0
        %884 = vmatpush1.bf16.msra.mxu0 %v862
        %885 = vmatprep.subr.bf16.mxu0 0
        %886 = vmatpush1.bf16.msra.mxu0 0
        %887 = vmatprep.subr.bf16.mxu0 0
        %888 = vmatpush1.bf16.msra.mxu0 0
        %889 = vmatprep.subr.bf16.mxu0 0
        %890 = vmatpush1.bf16.msra.mxu0 0
        %891 = vmatprep.subr.bf16.mxu0 0
        %892 = vmatpush1.bf16.msra.mxu0 0
        %893 = vmatprep.subr.bf16.mxu0 0
        %894 = vmatpush1.bf16.msra.mxu0 0
        %895 = vmatprep.subr.bf16.mxu0 0
        %896 = vmatpush1.bf16.msra.mxu0 0
        %897 = vmatprep.subr.bf16.mxu0 0
        %898 = vmatpush1.bf16.msra.mxu0 0
        %899 = vmatprep.subr.bf16.mxu0 0
        %900 = vmatpush1.bf16.msra.mxu0 0
        %901 = vmatprep.subr.bf16.mxu0 0
        %902 = vmatpush1.bf16.msra.mxu0 0
        %903 = vmatprep.subr.bf16.mxu0 0
        %904 = vmatpush1.bf16.msra.mxu0 0
        %905 = vmatprep.subr.bf16.mxu0 0
        %906 = vmatpush1.bf16.msra.mxu0 0
        %907 = vmatprep.subr.bf16.mxu0 0
        %908 = vmatpush1.bf16.msra.mxu0 0
        %909 = vmatprep.subr.bf16.mxu0 0
        %910 = vmatpush1.bf16.msra.mxu0 0
        %911 = vmatprep.subr.bf16.mxu0 0
        %912 = vmatpush1.bf16.msra.mxu0 0
        %913 = vmatprep.subr.bf16.mxu0 0
        %914 = vmatpush1.bf16.msra.mxu0 0
        %915 = vmatprep.mubr.bf16.mxu0 0
        %916 = vmatmul.mubr.bf16.gmra.mrb[0].mxu0 %v881
        %v917 = vpop.f32.mrb[0].mxu0
        %v918 = vadd.f32 0.0, %v917
        %v919 = vpop.f32.mrb[0].mxu0
        %v920 = vpop.f32.mrb[0].mxu0
        %v921 = vadd.f32 0.0, %v920
        %v922 = vpop.f32.mrb[0].mxu0
        %923 = vdwg.mxu0
        %924 = vmatprep.subr.bf16.mxu0 0
        %925 = vmatpush1.bf16.msra.mxu0 %v863
        %926 = vmatprep.subr.bf16.mxu0 0
        %927 = vmatpush1.bf16.msra.mxu0 0
        %928 = vmatprep.subr.bf16.mxu0 0
        %929 = vmatpush1.bf16.msra.mxu0 0
        %930 = vmatprep.subr.bf16.mxu0 0
        %931 = vmatpush1.bf16.msra.mxu0 0
        %932 = vmatprep.subr.bf16.mxu0 0
        %933 = vmatpush1.bf16.msra.mxu0 0
        %934 = vmatprep.subr.bf16.mxu0 0
        %935 = vmatpush1.bf16.msra.mxu0 0
        %936 = vmatprep.subr.bf16.mxu0 0
        %937 = vmatpush1.bf16.msra.mxu0 0
        %938 = vmatprep.subr.bf16.mxu0 0
        %939 = vmatpush1.bf16.msra.mxu0 0
        %940 = vmatprep.subr.bf16.mxu0 0
        %941 = vmatpush1.bf16.msra.mxu0 0
        %942 = vmatprep.subr.bf16.mxu0 0
        %943 = vmatpush1.bf16.msra.mxu0 0
        %944 = vmatprep.subr.bf16.mxu0 0
        %945 = vmatpush1.bf16.msra.mxu0 0
        %946 = vmatprep.subr.bf16.mxu0 0
        %947 = vmatpush1.bf16.msra.mxu0 0
        %948 = vmatprep.subr.bf16.mxu0 0
        %949 = vmatpush1.bf16.msra.mxu0 0
        %950 = vmatprep.subr.bf16.mxu0 0
        %951 = vmatpush1.bf16.msra.mxu0 0
        %952 = vmatprep.subr.bf16.mxu0 0
        %953 = vmatpush1.bf16.msra.mxu0 0
        %954 = vmatprep.subr.bf16.mxu0 0
        %955 = vmatpush1.bf16.msra.mxu0 0
        %956 = vmatprep.mubr.bf16.mxu0 0
        %957 = vmatmul.mubr.bf16.gmra.mrb[0].mxu0 %v881
        %v958 = vpop.f32.mrb[0].mxu0
        %v959 = vadd.f32 0.0, %v958
        %v960 = vpop.f32.mrb[0].mxu0
        %v961 = vpop.f32.mrb[0].mxu0
        %v962 = vadd.f32 0.0, %v961
        %v963 = vpop.f32.mrb[0].mxu0
        %964 = vdwg.mxu0
        %v965 = vmul.f32 %v918, %v918
        %v966 = vmul.f32 %v921, %v921
        %v967 = vmul.f32 %v959, %v959
        %v968 = vmul.f32 %v962, %v962
        %v969 = vmul.f32 %v918, %v959
        %v970 = vmul.f32 %v921, %v962
        %971 = vmatprep.subr.bf16.mxu0 0
        %972 = vmatpush1.bf16.msra.mxu0 %v864
        %973 = vmatprep.subr.bf16.mxu0 0
        %974 = vmatpush1.bf16.msra.mxu0 0
        %975 = vmatprep.subr.bf16.mxu0 0
        %976 = vmatpush1.bf16.msra.mxu0 0
        %977 = vmatprep.subr.bf16.mxu0 0
        %978 = vmatpush1.bf16.msra.mxu0 0
        %979 = vmatprep.subr.bf16.mxu0 0
        %980 = vmatpush1.bf16.msra.mxu0 0
        %981 = vmatprep.subr.bf16.mxu0 0
        %982 = vmatpush1.bf16.msra.mxu0 0
        %983 = vmatprep.subr.bf16.mxu0 0
        %984 = vmatpush1.bf16.msra.mxu0 0
        %985 = vmatprep.subr.bf16.mxu0 0
        %986 = vmatpush1.bf16.msra.mxu0 0
        %987 = vmatprep.subr.bf16.mxu0 0
        %988 = vmatpush1.bf16.msra.mxu0 0
        %989 = vmatprep.subr.bf16.mxu0 0
        %990 = vmatpush1.bf16.msra.mxu0 0
        %991 = vmatprep.subr.bf16.mxu0 0
        %992 = vmatpush1.bf16.msra.mxu0 0
        %993 = vmatprep.subr.bf16.mxu0 0
        %994 = vmatpush1.bf16.msra.mxu0 0
        %995 = vmatprep.subr.bf16.mxu0 0
        %996 = vmatpush1.bf16.msra.mxu0 0
        %997 = vmatprep.subr.bf16.mxu0 0
        %998 = vmatpush1.bf16.msra.mxu0 0
        %999 = vmatprep.subr.bf16.mxu0 0
        %1000 = vmatpush1.bf16.msra.mxu0 0
        %1001 = vmatprep.subr.bf16.mxu0 0
        %1002 = vmatpush1.bf16.msra.mxu0 0
        %1003 = vmatprep.mubr.bf16.mxu0 0
        %1004 = vmatmul.mubr.bf16.gmra.mrb[0].mxu0 %v881
        %v1005 = vpop.f32.mrb[0].mxu0
        %v1006 = vadd.f32 0.0, %v1005
        %v1007 = vpop.f32.mrb[0].mxu0
        %v1008 = vpop.f32.mrb[0].mxu0
        %v1009 = vadd.f32 0.0, %v1008
        %v1010 = vpop.f32.mrb[0].mxu0
        %1011 = vdwg.mxu0
        %v1012 = vsub.f32 %v1006, %v965
        %v1013 = vsub.f32 %v1009, %v966
        %1014 = vmatprep.subr.bf16.mxu0 0
        %1015 = vmatpush1.bf16.msra.mxu0 %v865
        %1016 = vmatprep.subr.bf16.mxu0 0
        %1017 = vmatpush1.bf16.msra.mxu0 0
        %1018 = vmatprep.subr.bf16.mxu0 0
        %1019 = vmatpush1.bf16.msra.mxu0 0
        %1020 = vmatprep.subr.bf16.mxu0 0
        %1021 = vmatpush1.bf16.msra.mxu0 0
        %1022 = vmatprep.subr.bf16.mxu0 0
        %1023 = vmatpush1.bf16.msra.mxu0 0
        %1024 = vmatprep.subr.bf16.mxu0 0
        %1025 = vmatpush1.bf16.msra.mxu0 0
        %1026 = vmatprep.subr.bf16.mxu0 0
        %1027 = vmatpush1.bf16.msra.mxu0 0
        %1028 = vmatprep.subr.bf16.mxu0 0
        %1029 = vmatpush1.bf16.msra.mxu0 0
        %1030 = vmatprep.subr.bf16.mxu0 0
        %1031 = vmatpush1.bf16.msra.mxu0 0
        %1032 = vmatprep.subr.bf16.mxu0 0
        %1033 = vmatpush1.bf16.msra.mxu0 0
        %1034 = vmatprep.subr.bf16.mxu0 0
        %1035 = vmatpush1.bf16.msra.mxu0 0
        %1036 = vmatprep.subr.bf16.mxu0 0
        %1037 = vmatpush1.bf16.msra.mxu0 0
        %1038 = vmatprep.subr.bf16.mxu0 0
        %1039 = vmatpush1.bf16.msra.mxu0 0
        %1040 = vmatprep.subr.bf16.mxu0 0
        %1041 = vmatpush1.bf16.msra.mxu0 0
        %1042 = vmatprep.subr.bf16.mxu0 0
        %1043 = vmatpush1.bf16.msra.mxu0 0
        %1044 = vmatprep.subr.bf16.mxu0 0
        %1045 = vmatpush1.bf16.msra.mxu0 0
        %1046 = vmatprep.mubr.bf16.mxu0 0
        %1047 = vmatmul.mubr.bf16.gmra.mrb[0].mxu0 %v881
        %v1048 = vpop.f32.mrb[0].mxu0
        %v1049 = vadd.f32 0.0, %v1048
        %v1050 = vpop.f32.mrb[0].mxu0
        %v1051 = vpop.f32.mrb[0].mxu0
        %v1052 = vadd.f32 0.0, %v1051
        %v1053 = vpop.f32.mrb[0].mxu0
        %1054 = vdwg.mxu0
        %v1055 = vsub.f32 %v1049, %v967
        %v1056 = vsub.f32 %v1052, %v968
        %1057 = vmatprep.subr.bf16.mxu0 0
        %1058 = vmatpush1.bf16.msra.mxu0 %v866
        %1059 = vmatprep.subr.bf16.mxu0 0
        %1060 = vmatpush1.bf16.msra.mxu0 0
        %1061 = vmatprep.subr.bf16.mxu0 0
        %1062 = vmatpush1.bf16.msra.mxu0 0
        %1063 = vmatprep.subr.bf16.mxu0 0
        %1064 = vmatpush1.bf16.msra.mxu0 0
        %1065 = vmatprep.subr.bf16.mxu0 0
        %1066 = vmatpush1.bf16.msra.mxu0 0
        %1067 = vmatprep.subr.bf16.mxu0 0
        %1068 = vmatpush1.bf16.msra.mxu0 0
        %1069 = vmatprep.subr.bf16.mxu0 0
        %1070 = vmatpush1.bf16.msra.mxu0 0
        %1071 = vmatprep.subr.bf16.mxu0 0
        %1072 = vmatpush1.bf16.msra.mxu0 0
        %1073 = vmatprep.subr.bf16.mxu0 0
        %1074 = vmatpush1.bf16.msra.mxu0 0
        %1075 = vmatprep.subr.bf16.mxu0 0
        %1076 = vmatpush1.bf16.msra.mxu0 0
        %1077 = vmatprep.subr.bf16.mxu0 0
        %1078 = vmatpush1.bf16.msra.mxu0 0
        %1079 = vmatprep.subr.bf16.mxu0 0
        %1080 = vmatpush1.bf16.msra.mxu0 0
        %1081 = vmatprep.subr.bf16.mxu0 0
        %1082 = vmatpush1.bf16.msra.mxu0 0
        %1083 = vmatprep.subr.bf16.mxu0 0
        %1084 = vmatpush1.bf16.msra.mxu0 0
        %1085 = vmatprep.subr.bf16.mxu0 0
        %1086 = vmatpush1.bf16.msra.mxu0 0
        %1087 = vmatprep.subr.bf16.mxu0 0
        %1088 = vmatpush1.bf16.msra.mxu0 0
        %1089 = vmatprep.mubr.bf16.mxu0 0
        %1090 = vmatmul.mubr.bf16.gmra.mrb[0].mxu0 %v881
        %v1091 = vpop.f32.mrb[0].mxu0
        %v1092 = vadd.f32 0.0, %v1091
        %v1093 = vpop.f32.mrb[0].mxu0
        %v1094 = vpop.f32.mrb[0].mxu0
        %v1095 = vadd.f32 0.0, %v1094
        %v1096 = vpop.f32.mrb[0].mxu0
        %1097 = vdwg.mxu0
        %v1098 = vsub.f32 %v1092, %v969
        %v1099 = vsub.f32 %v1095, %v970
        %v1100 = vmul.f32 %v1098, 2.0
        %v1101 = vmul.f32 %v1099, 2.0
        %v1102 = vadd.f32 %v1100, 0.0009
        %v1103 = vadd.f32 %v1101, 0.0009
        %v1104 = vadd.f32 %v1012, %v1055
        %v1105 = vadd.f32 %v1013, %v1056
        %v1106 = vadd.f32 %v1104, 0.0009
        %v1107 = vadd.f32 %v1105, 0.0009
        %v1108 = vrcp.pop %v1106
        %v1109 = vrcp.pop %v1107
        %v1110 = vmul.f32 %v1102, %v1108
        %v1111 = vmul.f32 %v1103, %v1109
        %v1112 = vmul.f32 %v1110, %v1110
        %v1113 = vmul.f32 %v1111, %v1111
        %v1114 = vld [vmem:[#allocation3] sm:$0xff]
        %v1115 = vld [vmem:[#allocation3 + $0x8] sm:$0xff]
        %v1116 = vmul.f32 %v1114, %v1112
        %v1117 = vmul.f32 %v1115, %v1113
        %1118 = vst.msk [vmem:[#allocation3] sm:$0xff] %vm297, %v1116
        %1119 = vst.msk [vmem:[#allocation3 + $0x8] sm:$0xff] %vm297, %v1117
        %1120 = vmatprep.subr.bf16.mxu0 0
        %1121 = vmatpush1.bf16.msra.mxu0 %v867
        %1122 = vmatprep.subr.bf16.mxu0 0
        %1123 = vmatpush1.bf16.msra.mxu0 0
        %1124 = vmatprep.subr.bf16.mxu0 0
        %1125 = vmatpush1.bf16.msra.mxu0 0
        %1126 = vmatprep.subr.bf16.mxu0 0
        %1127 = vmatpush1.bf16.msra.mxu0 0
        %1128 = vmatprep.subr.bf16.mxu0 0
        %1129 = vmatpush1.bf16.msra.mxu0 0
        %1130 = vmatprep.subr.bf16.mxu0 0
        %1131 = vmatpush1.bf16.msra.mxu0 0
        %1132 = vmatprep.subr.bf16.mxu0 0
        %1133 = vmatpush1.bf16.msra.mxu0 0
        %1134 = vmatprep.subr.bf16.mxu0 0
        %1135 = vmatpush1.bf16.msra.mxu0 0
        %1136 = vmatprep.subr.bf16.mxu0 0
        %1137 = vmatpush1.bf16.msra.mxu0 0
        %1138 = vmatprep.subr.bf16.mxu0 0
        %1139 = vmatpush1.bf16.msra.mxu0 0
        %1140 = vmatprep.subr.bf16.mxu0 0
        %1141 = vmatpush1.bf16.msra.mxu0 0
        %1142 = vmatprep.subr.bf16.mxu0 0
        %1143 = vmatpush1.bf16.msra.mxu0 0
        %1144 = vmatprep.subr.bf16.mxu0 0
        %1145 = vmatpush1.bf16.msra.mxu0 0
        %1146 = vmatprep.subr.bf16.mxu0 0
        %1147 = vmatpush1.bf16.msra.mxu0 0
        %1148 = vmatprep.subr.bf16.mxu0 0
        %1149 = vmatpush1.bf16.msra.mxu0 0
        %1150 = vmatprep.subr.bf16.mxu0 0
        %1151 = vmatpush1.bf16.msra.mxu0 0
        %1152 = vmatprep.mubr.bf16.mxu0 0
        %1153 = vmatmul.mubr.bf16.gmra.mrb[0].mxu0 %v881
        %v1154 = vpop.f32.mrb[0].mxu0
        %v1155 = vadd.f32 0.0, %v1154
        %v1156 = vpop.f32.mrb[0].mxu0
        %v1157 = vpop.f32.mrb[0].mxu0
        %v1158 = vadd.f32 0.0, %v1157
        %v1159 = vpop.f32.mrb[0].mxu0
        %1160 = vdwg.mxu0
        %1161 = vmatprep.subr.bf16.mxu0 0
        %1162 = vmatpush1.bf16.msra.mxu0 %v868
        %1163 = vmatprep.subr.bf16.mxu0 0
        %1164 = vmatpush1.bf16.msra.mxu0 0
        %1165 = vmatprep.subr.bf16.mxu0 0
        %1166 = vmatpush1.bf16.msra.mxu0 0
        %1167 = vmatprep.subr.bf16.mxu0 0
        %1168 = vmatpush1.bf16.msra.mxu0 0
        %1169 = vmatprep.subr.bf16.mxu0 0
        %1170 = vmatpush1.bf16.msra.mxu0 0
        %1171 = vmatprep.subr.bf16.mxu0 0
        %1172 = vmatpush1.bf16.msra.mxu0 0
        %1173 = vmatprep.subr.bf16.mxu0 0
        %1174 = vmatpush1.bf16.msra.mxu0 0
        %1175 = vmatprep.subr.bf16.mxu0 0
        %1176 = vmatpush1.bf16.msra.mxu0 0
        %1177 = vmatprep.subr.bf16.mxu0 0
        %1178 = vmatpush1.bf16.msra.mxu0 0
        %1179 = vmatprep.subr.bf16.mxu0 0
        %1180 = vmatpush1.bf16.msra.mxu0 0
        %1181 = vmatprep.subr.bf16.mxu0 0
        %1182 = vmatpush1.bf16.msra.mxu0 0
        %1183 = vmatprep.subr.bf16.mxu0 0
        %1184 = vmatpush1.bf16.msra.mxu0 0
        %1185 = vmatprep.subr.bf16.mxu0 0
        %1186 = vmatpush1.bf16.msra.mxu0 0
        %1187 = vmatprep.subr.bf16.mxu0 0
        %1188 = vmatpush1.bf16.msra.mxu0 0
        %1189 = vmatprep.subr.bf16.mxu0 0
        %1190 = vmatpush1.bf16.msra.mxu0 0
        %1191 = vmatprep.subr.bf16.mxu0 0
        %1192 = vmatpush1.bf16.msra.mxu0 0
        %1193 = vmatprep.mubr.bf16.mxu0 0
        %1194 = vmatmul.mubr.bf16.gmra.mrb[0].mxu0 %v881
        %v1195 = vpop.f32.mrb[0].mxu0
        %v1196 = vadd.f32 0.0, %v1195
        %v1197 = vpop.f32.mrb[0].mxu0
        %v1198 = vpop.f32.mrb[0].mxu0
        %v1199 = vadd.f32 0.0, %v1198
        %v1200 = vpop.f32.mrb[0].mxu0
        %1201 = vdwg.mxu0
        %v1202 = vmul.f32 %v1155, %v1155
        %v1203 = vmul.f32 %v1158, %v1158
        %v1204 = vmul.f32 %v1196, %v1196
        %v1205 = vmul.f32 %v1199, %v1199
        %v1206 = vmul.f32 %v1155, %v1196
        %v1207 = vmul.f32 %v1158, %v1199
        %1208 = vmatprep.subr.bf16.mxu0 0
        %1209 = vmatpush1.bf16.msra.mxu0 %v869
        %1210 = vmatprep.subr.bf16.mxu0 0
        %1211 = vmatpush1.bf16.msra.mxu0 0
        %1212 = vmatprep.subr.bf16.mxu0 0
        %1213 = vmatpush1.bf16.msra.mxu0 0
        %1214 = vmatprep.subr.bf16.mxu0 0
        %1215 = vmatpush1.bf16.msra.mxu0 0
        %1216 = vmatprep.subr.bf16.mxu0 0
        %1217 = vmatpush1.bf16.msra.mxu0 0
        %1218 = vmatprep.subr.bf16.mxu0 0
        %1219 = vmatpush1.bf16.msra.mxu0 0
        %1220 = vmatprep.subr.bf16.mxu0 0
        %1221 = vmatpush1.bf16.msra.mxu0 0
        %1222 = vmatprep.subr.bf16.mxu0 0
        %1223 = vmatpush1.bf16.msra.mxu0 0
        %1224 = vmatprep.subr.bf16.mxu0 0
        %1225 = vmatpush1.bf16.msra.mxu0 0
        %1226 = vmatprep.subr.bf16.mxu0 0
        %1227 = vmatpush1.bf16.msra.mxu0 0
        %1228 = vmatprep.subr.bf16.mxu0 0
        %1229 = vmatpush1.bf16.msra.mxu0 0
        %1230 = vmatprep.subr.bf16.mxu0 0
        %1231 = vmatpush1.bf16.msra.mxu0 0
        %1232 = vmatprep.subr.bf16.mxu0 0
        %1233 = vmatpush1.bf16.msra.mxu0 0
        %1234 = vmatprep.subr.bf16.mxu0 0
        %1235 = vmatpush1.bf16.msra.mxu0 0
        %1236 = vmatprep.subr.bf16.mxu0 0
        %1237 = vmatpush1.bf16.msra.mxu0 0
        %1238 = vmatprep.subr.bf16.mxu0 0
        %1239 = vmatpush1.bf16.msra.mxu0 0
        %1240 = vmatprep.mubr.bf16.mxu0 0
        %1241 = vmatmul.mubr.bf16.gmra.mrb[0].mxu0 %v881
        %v1242 = vpop.f32.mrb[0].mxu0
        %v1243 = vadd.f32 0.0, %v1242
        %v1244 = vpop.f32.mrb[0].mxu0
        %v1245 = vpop.f32.mrb[0].mxu0
        %v1246 = vadd.f32 0.0, %v1245
        %v1247 = vpop.f32.mrb[0].mxu0
        %1248 = vdwg.mxu0
        %v1249 = vsub.f32 %v1243, %v1202
        %v1250 = vsub.f32 %v1246, %v1203
        %1251 = vmatprep.subr.bf16.mxu0 0
        %1252 = vmatpush1.bf16.msra.mxu0 %v870
        %1253 = vmatprep.subr.bf16.mxu0 0
        %1254 = vmatpush1.bf16.msra.mxu0 0
        %1255 = vmatprep.subr.bf16.mxu0 0
        %1256 = vmatpush1.bf16.msra.mxu0 0
        %1257 = vmatprep.subr.bf16.mxu0 0
        %1258 = vmatpush1.bf16.msra.mxu0 0
        %1259 = vmatprep.subr.bf16.mxu0 0
        %1260 = vmatpush1.bf16.msra.mxu0 0
        %1261 = vmatprep.subr.bf16.mxu0 0
        %1262 = vmatpush1.bf16.msra.mxu0 0
        %1263 = vmatprep.subr.bf16.mxu0 0
        %1264 = vmatpush1.bf16.msra.mxu0 0
        %1265 = vmatprep.subr.bf16.mxu0 0
        %1266 = vmatpush1.bf16.msra.mxu0 0
        %1267 = vmatprep.subr.bf16.mxu0 0
        %1268 = vmatpush1.bf16.msra.mxu0 0
        %1269 = vmatprep.subr.bf16.mxu0 0
        %1270 = vmatpush1.bf16.msra.mxu0 0
        %1271 = vmatprep.subr.bf16.mxu0 0
        %1272 = vmatpush1.bf16.msra.mxu0 0
        %1273 = vmatprep.subr.bf16.mxu0 0
        %1274 = vmatpush1.bf16.msra.mxu0 0
        %1275 = vmatprep.subr.bf16.mxu0 0
        %1276 = vmatpush1.bf16.msra.mxu0 0
        %1277 = vmatprep.subr.bf16.mxu0 0
        %1278 = vmatpush1.bf16.msra.mxu0 0
        %1279 = vmatprep.subr.bf16.mxu0 0
        %1280 = vmatpush1.bf16.msra.mxu0 0
        %1281 = vmatprep.subr.bf16.mxu0 0
        %1282 = vmatpush1.bf16.msra.mxu0 0
        %1283 = vmatprep.mubr.bf16.mxu0 0
        %1284 = vmatmul.mubr.bf16.gmra.mrb[0].mxu0 %v881
        %v1285 = vpop.f32.mrb[0].mxu0
        %v1286 = vadd.f32 0.0, %v1285
        %v1287 = vpop.f32.mrb[0].mxu0
        %v1288 = vpop.f32.mrb[0].mxu0
        %v1289 = vadd.f32 0.0, %v1288
        %v1290 = vpop.f32.mrb[0].mxu0
        %1291 = vdwg.mxu0
        %v1292 = vsub.f32 %v1286, %v1204
        %v1293 = vsub.f32 %v1289, %v1205
        %1294 = vmatprep.subr.bf16.mxu0 0
        %1295 = vmatpush1.bf16.msra.mxu0 %v871
        %1296 = vmatprep.subr.bf16.mxu0 0
        %1297 = vmatpush1.bf16.msra.mxu0 0
        %1298 = vmatprep.subr.bf16.mxu0 0
        %1299 = vmatpush1.bf16.msra.mxu0 0
        %1300 = vmatprep.subr.bf16.mxu0 0
        %1301 = vmatpush1.bf16.msra.mxu0 0
        %1302 = vmatprep.subr.bf16.mxu0 0
        %1303 = vmatpush1.bf16.msra.mxu0 0
        %1304 = vmatprep.subr.bf16.mxu0 0
        %1305 = vmatpush1.bf16.msra.mxu0 0
        %1306 = vmatprep.subr.bf16.mxu0 0
        %1307 = vmatpush1.bf16.msra.mxu0 0
        %1308 = vmatprep.subr.bf16.mxu0 0
        %1309 = vmatpush1.bf16.msra.mxu0 0
        %1310 = vmatprep.subr.bf16.mxu0 0
        %1311 = vmatpush1.bf16.msra.mxu0 0
        %1312 = vmatprep.subr.bf16.mxu0 0
        %1313 = vmatpush1.bf16.msra.mxu0 0
        %1314 = vmatprep.subr.bf16.mxu0 0
        %1315 = vmatpush1.bf16.msra.mxu0 0
        %1316 = vmatprep.subr.bf16.mxu0 0
        %1317 = vmatpush1.bf16.msra.mxu0 0
        %1318 = vmatprep.subr.bf16.mxu0 0
        %1319 = vmatpush1.bf16.msra.mxu0 0
        %1320 = vmatprep.subr.bf16.mxu0 0
        %1321 = vmatpush1.bf16.msra.mxu0 0
        %1322 = vmatprep.subr.bf16.mxu0 0
        %1323 = vmatpush1.bf16.msra.mxu0 0
        %1324 = vmatprep.subr.bf16.mxu0 0
        %1325 = vmatpush1.bf16.msra.mxu0 0
        %1326 = vmatprep.mubr.bf16.mxu0 0
        %1327 = vmatmul.mubr.bf16.gmra.mrb[0].mxu0 %v881
        %v1328 = vpop.f32.mrb[0].mxu0
        %v1329 = vadd.f32 0.0, %v1328
        %v1330 = vpop.f32.mrb[0].mxu0
        %v1331 = vpop.f32.mrb[0].mxu0
        %v1332 = vadd.f32 0.0, %v1331
        %v1333 = vpop.f32.mrb[0].mxu0
        %1334 = vdwg.mxu0
        %v1335 = vsub.f32 %v1329, %v1206
        %v1336 = vsub.f32 %v1332, %v1207
        %v1337 = vmul.f32 %v1335, 2.0
        %v1338 = vmul.f32 %v1336, 2.0
        %v1339 = vadd.f32 %v1337, 0.0009
        %v1340 = vadd.f32 %v1338, 0.0009
        %v1341 = vadd.f32 %v1249, %v1292
        %v1342 = vadd.f32 %v1250, %v1293
        %v1343 = vadd.f32 %v1341, 0.0009
        %v1344 = vadd.f32 %v1342, 0.0009
        %v1345 = vrcp.pop %v1343
        %v1346 = vrcp.pop %v1344
        %v1347 = vmul.f32 %v1339, %v1345
        %v1348 = vmul.f32 %v1340, %v1346
        %v1349 = vld [vmem:[#allocation3] sm:$0xff]
        %v1350 = vld [vmem:[#allocation3 + $0x8] sm:$0xff]
        %v1351 = vmul.f32 %v1349, %v1347
        %v1352 = vmul.f32 %v1350, %v1348
        %1353 = vst.msk [vmem:[#allocation3] sm:$0xff] %vm297, %v1351
        %1354 = vst.msk [vmem:[#allocation3 + $0x8] sm:$0xff] %vm297, %v1352
        %v1355 = vld [vmem:[%s678] sm:$0xff]
        %v1356 = vld [vmem:[%s678 + $0x8] sm:$0xff]
        %v1357 = vld [vmem:[%s681] sm:$0xff]
        %v1358 = vld [vmem:[%s681 + $0x8] sm:$0xff]
        %v1359 = vmul.f32 %v1355, %v1355
        %v1360 = vmul.f32 %v1356, %v1356
        %v1361 = vmul.f32 %v1357, %v1357
        %v1362 = vmul.f32 %v1358, %v1358
        %v1363 = vmul.f32 %v1355, %v1357
        %v1364 = vmul.f32 %v1356, %v1358
        %v1365 = vpack.c.bf16 %v1356, %v1355
        %1366 = vst.msk [vmem:[#allocation2] sm:$0xff] %vm297, %v1365
        %v1367 = vpack.c.bf16 %v1358, %v1357
        %1368 = vst.msk [vmem:[#allocation2 + $0x8] sm:$0xff] %vm297, %v1367
        %v1369 = vpack.c.bf16 %v1360, %v1359
        %1370 = vst.msk [vmem:[#allocation2 + $0x10] sm:$0xff] %vm297, %v1369
        %v1371 = vpack.c.bf16 %v1362, %v1361
        %1372 = vst.msk [vmem:[#allocation2 + $0x18] sm:$0xff] %vm297, %v1371
        %v1373 = vpack.c.bf16 %v1364, %v1363
        %1374 = vst.msk [vmem:[#allocation2 + $0x20] sm:$0xff] %vm297, %v1373
        %s1375 = scalar_lea.vmem [#allocation9], 16
        %v1376 = vld [vmem:[%s1375] sm:$0xf]
        %v1377 = vld [vmem:[%s1375 + $0x4] sm:$0xf]
        %v1378 = vld [vmem:[#allocation2] sm:$0xff]
        %v1379 = vld [vmem:[#allocation2 + $0x8] sm:$0xff]
        %v1380 = vld [vmem:[#allocation2 + $0x10] sm:$0xff]
        %v1381 = vld [vmem:[#allocation2 + $0x18] sm:$0xff]
        %v1382 = vld [vmem:[#allocation2 + $0x20] sm:$0xff]
        %v1385 = vunpack.c.l.b16 %v1376
        %v1386 = vunpack.c.l.b16 %v1377
        %v1387 = vpack.c.b16 %v1386, %v1385
        %v1390 = vsel %vm297, %v1378, 0
        %v1393 = vsel %vm297, %v1379, 0
        %v1396 = vsel %vm297, %v1380, 0
        %v1399 = vsel %vm297, %v1381, 0
        %v1402 = vsel %vm297, %v1382, 0
        %1404 = vmatprep.subr.bf16.mxu0 0
        %1405 = vmatpush1.bf16.msra.mxu0 %v1387
        %1406 = vmatprep.subr.bf16.mxu0 0
        %1407 = vmatpush1.bf16.msra.mxu0 0
        %1408 = vmatprep.subr.bf16.mxu0 0
        %1409 = vmatpush1.bf16.msra.mxu0 0
        %1410 = vmatprep.subr.bf16.mxu0 0
        %1411 = vmatpush1.bf16.msra.mxu0 0
        %1412 = vmatprep.subr.bf16.mxu0 0
        %1413 = vmatpush1.bf16.msra.mxu0 0
        %1414 = vmatprep.subr.bf16.mxu0 0
        %1415 = vmatpush1.bf16.msra.mxu0 0
        %1416 = vmatprep.subr.bf16.mxu0 0
        %1417 = vmatpush1.bf16.msra.mxu0 0
        %1418 = vmatprep.subr.bf16.mxu0 0
        %1419 = vmatpush1.bf16.msra.mxu0 0
        %1420 = vmatprep.subr.bf16.mxu0 0
        %1421 = vmatpush1.bf16.msra.mxu0 0
        %1422 = vmatprep.subr.bf16.mxu0 0
        %1423 = vmatpush1.bf16.msra.mxu0 0
        %1424 = vmatprep.subr.bf16.mxu0 0
        %1425 = vmatpush1.bf16.msra.mxu0 0
        %1426 = vmatprep.subr.bf16.mxu0 0
        %1427 = vmatpush1.bf16.msra.mxu0 0
        %1428 = vmatprep.subr.bf16.mxu0 0
        %1429 = vmatpush1.bf16.msra.mxu0 0
        %1430 = vmatprep.subr.bf16.mxu0 0
        %1431 = vmatpush1.bf16.msra.mxu0 0
        %1432 = vmatprep.subr.bf16.mxu0 0
        %1433 = vmatpush1.bf16.msra.mxu0 0
        %1434 = vmatprep.subr.bf16.mxu0 0
        %1435 = vmatpush1.bf16.msra.mxu0 0
        %1436 = vmatprep.mubr.bf16.mxu0 0
        %1437 = vmatmul.mubr.bf16.gmra.mrb[0].mxu0 %v1390
        %v1438 = vpop.f32.mrb[0].mxu0
        %v1439 = vadd.f32 0.0, %v1438
        %v1440 = vpop.f32.mrb[0].mxu0
        %v1441 = vpop.f32.mrb[0].mxu0
        %v1442 = vadd.f32 0.0, %v1441
        %v1443 = vpop.f32.mrb[0].mxu0
        %1444 = vmatprep.mubr.bf16.mxu0 0
        %1445 = vmatmul.mubr.bf16.gmra.mrb[0].mxu0 %v1393
        %v1446 = vpop.f32.mrb[0].mxu0
        %v1447 = vadd.f32 0.0, %v1446
        %v1448 = vpop.f32.mrb[0].mxu0
        %v1449 = vpop.f32.mrb[0].mxu0
        %v1450 = vadd.f32 0.0, %v1449
        %v1451 = vpop.f32.mrb[0].mxu0
        %1452 = vmatprep.mubr.bf16.mxu0 0
        %1453 = vmatmul.mubr.bf16.gmra.mrb[0].mxu0 %v1396
        %v1454 = vpop.f32.mrb[0].mxu0
        %v1455 = vadd.f32 0.0, %v1454
        %v1456 = vpop.f32.mrb[0].mxu0
        %v1457 = vpop.f32.mrb[0].mxu0
        %v1458 = vadd.f32 0.0, %v1457
        %v1459 = vpop.f32.mrb[0].mxu0
        %1460 = vmatprep.mubr.bf16.mxu0 0
        %1461 = vmatmul.mubr.bf16.gmra.mrb[0].mxu0 %v1399
        %v1462 = vpop.f32.mrb[0].mxu0
        %v1463 = vadd.f32 0.0, %v1462
        %v1464 = vpop.f32.mrb[0].mxu0
        %v1465 = vpop.f32.mrb[0].mxu0
        %v1466 = vadd.f32 0.0, %v1465
        %v1467 = vpop.f32.mrb[0].mxu0
        %1468 = vmatprep.mubr.bf16.mxu0 0
        %1469 = vmatmul.mubr.bf16.gmra.mrb[0].mxu0 %v1402
        %v1470 = vpop.f32.mrb[0].mxu0
        %v1471 = vadd.f32 0.0, %v1470
        %v1472 = vpop.f32.mrb[0].mxu0
        %v1473 = vpop.f32.mrb[0].mxu0
        %v1474 = vadd.f32 0.0, %v1473
        %v1475 = vpop.f32.mrb[0].mxu0
        %1476 = vdwg.mxu0
        %v1477 = vpack.c.bf16 %v1442, %v1439
        %v1478 = vpack.c.bf16 %v1450, %v1447
        %v1479 = vpack.c.bf16 %v1458, %v1455
        %v1480 = vpack.c.bf16 %v1466, %v1463
        %v1481 = vpack.c.bf16 %v1474, %v1471
        %s1482 = scalar_lea.vmem [#allocation10], 16
        %v1483 = vld [vmem:[%s1482] sm:$0xf]
        %v1484 = vld [vmem:[%s1482 + $0x4] sm:$0xf]
        %v1487 = vunpack.c.l.b16 %v1483
        %v1488 = vunpack.c.l.b16 %v1484
        %v1489 = vpack.c.b16 %v1488, %v1487
        %v1491 = vsel %vm297, %v1489, 0
        %1493 = vmatprep.subr.bf16.mxu0 0
        %1494 = vmatpush1.bf16.msra.mxu0 %v1477
        %1495 = vmatprep.subr.bf16.mxu0 0
        %1496 = vmatpush1.bf16.msra.mxu0 0
        %1497 = vmatprep.subr.bf16.mxu0 0
        %1498 = vmatpush1.bf16.msra.mxu0 0
        %1499 = vmatprep.subr.bf16.mxu0 0
        %1500 = vmatpush1.bf16.msra.mxu0 0
        %1501 = vmatprep.subr.bf16.mxu0 0
        %1502 = vmatpush1.bf16.msra.mxu0 0
        %1503 = vmatprep.subr.bf16.mxu0 0
        %1504 = vmatpush1.bf16.msra.mxu0 0
        %1505 = vmatprep.subr.bf16.mxu0 0
        %1506 = vmatpush1.bf16.msra.mxu0 0
        %1507 = vmatprep.subr.bf16.mxu0 0
        %1508 = vmatpush1.bf16.msra.mxu0 0
        %1509 = vmatprep.subr.bf16.mxu0 0
        %1510 = vmatpush1.bf16.msra.mxu0 0
        %1511 = vmatprep.subr.bf16.mxu0 0
        %1512 = vmatpush1.bf16.msra.mxu0 0
        %1513 = vmatprep.subr.bf16.mxu0 0
        %1514 = vmatpush1.bf16.msra.mxu0 0
        %1515 = vmatprep.subr.bf16.mxu0 0
        %1516 = vmatpush1.bf16.msra.mxu0 0
        %1517 = vmatprep.subr.bf16.mxu0 0
        %1518 = vmatpush1.bf16.msra.mxu0 0
        %1519 = vmatprep.subr.bf16.mxu0 0
        %1520 = vmatpush1.bf16.msra.mxu0 0
        %1521 = vmatprep.subr.bf16.mxu0 0
        %1522 = vmatpush1.bf16.msra.mxu0 0
        %1523 = vmatprep.subr.bf16.mxu0 0
        %1524 = vmatpush1.bf16.msra.mxu0 0
        %1525 = vmatprep.mubr.bf16.mxu0 0
        %1526 = vmatmul.mubr.bf16.gmra.mrb[0].mxu0 %v1491
        %v1527 = vpop.f32.mrb[0].mxu0
        %v1528 = vadd.f32 0.0, %v1527
        %v1529 = vpop.f32.mrb[0].mxu0
        %v1530 = vpop.f32.mrb[0].mxu0
        %v1531 = vadd.f32 0.0, %v1530
        %v1532 = vpop.f32.mrb[0].mxu0
        %1533 = vdwg.mxu0
        %1534 = vmatprep.subr.bf16.mxu0 0
        %1535 = vmatpush1.bf16.msra.mxu0 %v1478
        %1536 = vmatprep.subr.bf16.mxu0 0
        %1537 = vmatpush1.bf16.msra.mxu0 0
        %1538 = vmatprep.subr.bf16.mxu0 0
        %1539 = vmatpush1.bf16.msra.mxu0 0
        %1540 = vmatprep.subr.bf16.mxu0 0
        %1541 = vmatpush1.bf16.msra.mxu0 0
        %1542 = vmatprep.subr.bf16.mxu0 0
        %1543 = vmatpush1.bf16.msra.mxu0 0
        %1544 = vmatprep.subr.bf16.mxu0 0
        %1545 = vmatpush1.bf16.msra.mxu0 0
        %1546 = vmatprep.subr.bf16.mxu0 0
        %1547 = vmatpush1.bf16.msra.mxu0 0
        %1548 = vmatprep.subr.bf16.mxu0 0
        %1549 = vmatpush1.bf16.msra.mxu0 0
        %1550 = vmatprep.subr.bf16.mxu0 0
        %1551 = vmatpush1.bf16.msra.mxu0 0
        %1552 = vmatprep.subr.bf16.mxu0 0
        %1553 = vmatpush1.bf16.msra.mxu0 0
        %1554 = vmatprep.subr.bf16.mxu0 0
        %1555 = vmatpush1.bf16.msra.mxu0 0
        %1556 = vmatprep.subr.bf16.mxu0 0
        %1557 = vmatpush1.bf16.msra.mxu0 0
        %1558 = vmatprep.subr.bf16.mxu0 0
        %1559 = vmatpush1.bf16.msra.mxu0 0
        %1560 = vmatprep.subr.bf16.mxu0 0
        %1561 = vmatpush1.bf16.msra.mxu0 0
        %1562 = vmatprep.subr.bf16.mxu0 0
        %1563 = vmatpush1.bf16.msra.mxu0 0
        %1564 = vmatprep.subr.bf16.mxu0 0
        %1565 = vmatpush1.bf16.msra.mxu0 0
        %1566 = vmatprep.mubr.bf16.mxu0 0
        %1567 = vmatmul.mubr.bf16.gmra.mrb[0].mxu0 %v1491
        %v1568 = vpop.f32.mrb[0].mxu0
        %v1569 = vadd.f32 0.0, %v1568
        %v1570 = vpop.f32.mrb[0].mxu0
        %v1571 = vpop.f32.mrb[0].mxu0
        %v1572 = vadd.f32 0.0, %v1571
        %v1573 = vpop.f32.mrb[0].mxu0
        %1574 = vdwg.mxu0
        %v1575 = vmul.f32 %v1528, %v1528
        %v1576 = vmul.f32 %v1531, %v1531
        %v1577 = vmul.f32 %v1569, %v1569
        %v1578 = vmul.f32 %v1572, %v1572
        %v1579 = vmul.f32 %v1528, %v1569
        %v1580 = vmul.f32 %v1531, %v1572
        %1581 = vmatprep.subr.bf16.mxu0 0
        %1582 = vmatpush1.bf16.msra.mxu0 %v1479
        %1583 = vmatprep.subr.bf16.mxu0 0
        %1584 = vmatpush1.bf16.msra.mxu0 0
        %1585 = vmatprep.subr.bf16.mxu0 0
        %1586 = vmatpush1.bf16.msra.mxu0 0
        %1587 = vmatprep.subr.bf16.mxu0 0
        %1588 = vmatpush1.bf16.msra.mxu0 0
        %1589 = vmatprep.subr.bf16.mxu0 0
        %1590 = vmatpush1.bf16.msra.mxu0 0
        %1591 = vmatprep.subr.bf16.mxu0 0
        %1592 = vmatpush1.bf16.msra.mxu0 0
        %1593 = vmatprep.subr.bf16.mxu0 0
        %1594 = vmatpush1.bf16.msra.mxu0 0
        %1595 = vmatprep.subr.bf16.mxu0 0
        %1596 = vmatpush1.bf16.msra.mxu0 0
        %1597 = vmatprep.subr.bf16.mxu0 0
        %1598 = vmatpush1.bf16.msra.mxu0 0
        %1599 = vmatprep.subr.bf16.mxu0 0
        %1600 = vmatpush1.bf16.msra.mxu0 0
        %1601 = vmatprep.subr.bf16.mxu0 0
        %1602 = vmatpush1.bf16.msra.mxu0 0
        %1603 = vmatprep.subr.bf16.mxu0 0
        %1604 = vmatpush1.bf16.msra.mxu0 0
        %1605 = vmatprep.subr.bf16.mxu0 0
        %1606 = vmatpush1.bf16.msra.mxu0 0
        %1607 = vmatprep.subr.bf16.mxu0 0
        %1608 = vmatpush1.bf16.msra.mxu0 0
        %1609 = vmatprep.subr.bf16.mxu0 0
        %1610 = vmatpush1.bf16.msra.mxu0 0
        %1611 = vmatprep.subr.bf16.mxu0 0
        %1612 = vmatpush1.bf16.msra.mxu0 0
        %1613 = vmatprep.mubr.bf16.mxu0 0
        %1614 = vmatmul.mubr.bf16.gmra.mrb[0].mxu0 %v1491
        %v1615 = vpop.f32.mrb[0].mxu0
        %v1616 = vadd.f32 0.0, %v1615
        %v1617 = vpop.f32.mrb[0].mxu0
        %v1618 = vpop.f32.mrb[0].mxu0
        %v1619 = vadd.f32 0.0, %v1618
        %v1620 = vpop.f32.mrb[0].mxu0
        %1621 = vdwg.mxu0
        %v1622 = vsub.f32 %v1616, %v1575
        %v1623 = vsub.f32 %v1619, %v1576
        %1624 = vmatprep.subr.bf16.mxu0 0
        %1625 = vmatpush1.bf16.msra.mxu0 %v1480
        %1626 = vmatprep.subr.bf16.mxu0 0
        %1627 = vmatpush1.bf16.msra.mxu0 0
        %1628 = vmatprep.subr.bf16.mxu0 0
        %1629 = vmatpush1.bf16.msra.mxu0 0
        %1630 = vmatprep.subr.bf16.mxu0 0
        %1631 = vmatpush1.bf16.msra.mxu0 0
        %1632 = vmatprep.subr.bf16.mxu0 0
        %1633 = vmatpush1.bf16.msra.mxu0 0
        %1634 = vmatprep.subr.bf16.mxu0 0
        %1635 = vmatpush1.bf16.msra.mxu0 0
        %1636 = vmatprep.subr.bf16.mxu0 0
        %1637 = vmatpush1.bf16.msra.mxu0 0
        %1638 = vmatprep.subr.bf16.mxu0 0
        %1639 = vmatpush1.bf16.msra.mxu0 0
        %1640 = vmatprep.subr.bf16.mxu0 0
        %1641 = vmatpush1.bf16.msra.mxu0 0
        %1642 = vmatprep.subr.bf16.mxu0 0
        %1643 = vmatpush1.bf16.msra.mxu0 0
        %1644 = vmatprep.subr.bf16.mxu0 0
        %1645 = vmatpush1.bf16.msra.mxu0 0
        %1646 = vmatprep.subr.bf16.mxu0 0
        %1647 = vmatpush1.bf16.msra.mxu0 0
        %1648 = vmatprep.subr.bf16.mxu0 0
        %1649 = vmatpush1.bf16.msra.mxu0 0
        %1650 = vmatprep.subr.bf16.mxu0 0
        %1651 = vmatpush1.bf16.msra.mxu0 0
        %1652 = vmatprep.subr.bf16.mxu0 0
        %1653 = vmatpush1.bf16.msra.mxu0 0
        %1654 = vmatprep.subr.bf16.mxu0 0
        %1655 = vmatpush1.bf16.msra.mxu0 0
        %1656 = vmatprep.mubr.bf16.mxu0 0
        %1657 = vmatmul.mubr.bf16.gmra.mrb[0].mxu0 %v1491
        %v1658 = vpop.f32.mrb[0].mxu0
        %v1659 = vadd.f32 0.0, %v1658
        %v1660 = vpop.f32.mrb[0].mxu0
        %v1661 = vpop.f32.mrb[0].mxu0
        %v1662 = vadd.f32 0.0, %v1661
        %v1663 = vpop.f32.mrb[0].mxu0
        %1664 = vdwg.mxu0
        %v1665 = vsub.f32 %v1659, %v1577
        %v1666 = vsub.f32 %v1662, %v1578
        %1667 = vmatprep.subr.bf16.mxu0 0
        %1668 = vmatpush1.bf16.msra.mxu0 %v1481
        %1669 = vmatprep.subr.bf16.mxu0 0
        %1670 = vmatpush1.bf16.msra.mxu0 0
        %1671 = vmatprep.subr.bf16.mxu0 0
        %1672 = vmatpush1.bf16.msra.mxu0 0
        %1673 = vmatprep.subr.bf16.mxu0 0
        %1674 = vmatpush1.bf16.msra.mxu0 0
        %1675 = vmatprep.subr.bf16.mxu0 0
        %1676 = vmatpush1.bf16.msra.mxu0 0
        %1677 = vmatprep.subr.bf16.mxu0 0
        %1678 = vmatpush1.bf16.msra.mxu0 0
        %1679 = vmatprep.subr.bf16.mxu0 0
        %1680 = vmatpush1.bf16.msra.mxu0 0
        %1681 = vmatprep.subr.bf16.mxu0 0
        %1682 = vmatpush1.bf16.msra.mxu0 0
        %1683 = vmatprep.subr.bf16.mxu0 0
        %1684 = vmatpush1.bf16.msra.mxu0 0
        %1685 = vmatprep.subr.bf16.mxu0 0
        %1686 = vmatpush1.bf16.msra.mxu0 0
        %1687 = vmatprep.subr.bf16.mxu0 0
        %1688 = vmatpush1.bf16.msra.mxu0 0
        %1689 = vmatprep.subr.bf16.mxu0 0
        %1690 = vmatpush1.bf16.msra.mxu0 0
        %1691 = vmatprep.subr.bf16.mxu0 0
        %1692 = vmatpush1.bf16.msra.mxu0 0
        %1693 = vmatprep.subr.bf16.mxu0 0
        %1694 = vmatpush1.bf16.msra.mxu0 0
        %1695 = vmatprep.subr.bf16.mxu0 0
        %1696 = vmatpush1.bf16.msra.mxu0 0
        %1697 = vmatprep.subr.bf16.mxu0 0
        %1698 = vmatpush1.bf16.msra.mxu0 0
        %1699 = vmatprep.mubr.bf16.mxu0 0
        %1700 = vmatmul.mubr.bf16.gmra.mrb[0].mxu0 %v1491
        %v1701 = vpop.f32.mrb[0].mxu0
        %v1702 = vadd.f32 0.0, %v1701
        %v1703 = vpop.f32.mrb[0].mxu0
        %v1704 = vpop.f32.mrb[0].mxu0
        %v1705 = vadd.f32 0.0, %v1704
        %v1706 = vpop.f32.mrb[0].mxu0
        %1707 = vdwg.mxu0
        %v1708 = vsub.f32 %v1702, %v1579
        %v1709 = vsub.f32 %v1705, %v1580
        %v1710 = vmul.f32 %v1708, 2.0
        %v1711 = vmul.f32 %v1709, 2.0
        %v1712 = vadd.f32 %v1710, 0.0009
        %v1713 = vadd.f32 %v1711, 0.0009
        %v1714 = vadd.f32 %v1622, %v1665
        %v1715 = vadd.f32 %v1623, %v1666
        %v1716 = vadd.f32 %v1714, 0.0009
        %v1717 = vadd.f32 %v1715, 0.0009
        %v1718 = vrcp.pop %v1716
        %v1719 = vrcp.pop %v1717
        %v1720 = vmul.f32 %v1712, %v1718
        %v1721 = vmul.f32 %v1713, %v1719
        %v1722 = vmul.f32 %v1720, %v1720
        %v1723 = vmul.f32 %v1721, %v1721
        %v1724 = vmul.f32 %v1722, %v1720
        %v1725 = vmul.f32 %v1723, %v1721
        %v1726 = vld [vmem:[#allocation3] sm:$0xff]
        %v1727 = vld [vmem:[#allocation3 + $0x8] sm:$0xff]
        %v1728 = vmul.f32 %v1726, %v1724
        %v1729 = vmul.f32 %v1727, %v1725
        %1730 = vst.msk [vmem:[#allocation3] sm:$0xff] %vm297, %v1728
        %1731 = vst.msk [vmem:[#allocation3 + $0x8] sm:$0xff] %vm297, %v1729
        %v1732 = vld [vmem:[%s678] sm:$0xff]
        %v1733 = vld [vmem:[%s678 + $0x8] sm:$0xff]
        %v1734 = vld [vmem:[%s681] sm:$0xff]
        %v1735 = vld [vmem:[%s681 + $0x8] sm:$0xff]
        %v1736 = vmul.f32 %v1732, %v1732
        %v1737 = vmul.f32 %v1733, %v1733
        %v1738 = vmul.f32 %v1734, %v1734
        %v1739 = vmul.f32 %v1735, %v1735
        %v1740 = vmul.f32 %v1732, %v1734
        %v1741 = vmul.f32 %v1733, %v1735
        %v1742 = vpack.c.bf16 %v1733, %v1732
        %1743 = vst.msk [vmem:[#allocation2] sm:$0xff] %vm297, %v1742
        %v1744 = vpack.c.bf16 %v1735, %v1734
        %1745 = vst.msk [vmem:[#allocation2 + $0x8] sm:$0xff] %vm297, %v1744
        %v1746 = vpack.c.bf16 %v1737, %v1736
        %1747 = vst.msk [vmem:[#allocation2 + $0x10] sm:$0xff] %vm297, %v1746
        %v1748 = vpack.c.bf16 %v1739, %v1738
        %1749 = vst.msk [vmem:[#allocation2 + $0x18] sm:$0xff] %vm297, %v1748
        %v1750 = vpack.c.bf16 %v1741, %v1740
        %1751 = vst.msk [vmem:[#allocation2 + $0x20] sm:$0xff] %vm297, %v1750
        %s1752 = scalar_lea.vmem %s238, 32 [#allocation4]
        %v1753 = vld [vmem:[%s1752] sm:$0xff]
        %v1754 = vld [vmem:[%s1752 + $0x8] sm:$0xff]
        %s1755 = scalar_lea.vmem %s247, 32 [#allocation7]
        %v1756 = vld [vmem:[%s1755] sm:$0xff]
        %v1757 = vld [vmem:[%s1755 + $0x8] sm:$0xff]
        %v1758 = vmul.f32 %v1753, %v1753
        %v1759 = vmul.f32 %v1754, %v1754
        %v1760 = vmul.f32 %v1756, %v1756
        %v1761 = vmul.f32 %v1757, %v1757
        %v1762 = vmul.f32 %v1753, %v1756
        %v1763 = vmul.f32 %v1754, %v1757
        %v1764 = vpack.c.bf16 %v1754, %v1753
        %1765 = vst.msk [vmem:[#allocation2 + $0x28] sm:$0xff] %vm297, %v1764
        %v1766 = vpack.c.bf16 %v1757, %v1756
        %1767 = vst.msk [vmem:[#allocation2 + $0x30] sm:$0xff] %vm297, %v1766
        %v1768 = vpack.c.bf16 %v1759, %v1758
        %1769 = vst.msk [vmem:[#allocation2 + $0x38] sm:$0xff] %vm297, %v1768
        %v1770 = vpack.c.bf16 %v1761, %v1760
        %1771 = vst.msk [vmem:[#allocation2 + $0x40] sm:$0xff] %vm297, %v1770
        %v1772 = vpack.c.bf16 %v1763, %v1762
        %1773 = vst.msk [vmem:[#allocation2 + $0x48] sm:$0xff] %vm297, %v1772
        %s1774 = scalar_lea.vmem [#allocation9], 24
        %v1775 = vld [vmem:[%s1774] sm:$0xf]
        %v1776 = vld [vmem:[%s1774 + $0x4] sm:$0xf]
        %v1777 = vld [vmem:[#allocation2] sm:$0xff]
        %v1778 = vld [vmem:[#allocation2 + $0x8] sm:$0xff]
        %v1779 = vld [vmem:[#allocation2 + $0x10] sm:$0xff]
        %v1780 = vld [vmem:[#allocation2 + $0x18] sm:$0xff]
        %v1781 = vld [vmem:[#allocation2 + $0x20] sm:$0xff]
        %v1782 = vld [vmem:[#allocation2 + $0x28] sm:$0xff]
        %v1783 = vld [vmem:[#allocation2 + $0x30] sm:$0xff]
        %v1784 = vld [vmem:[#allocation2 + $0x38] sm:$0xff]
        %v1785 = vld [vmem:[#allocation2 + $0x40] sm:$0xff]
        %v1786 = vld [vmem:[#allocation2 + $0x48] sm:$0xff]
        %v1789 = vunpack.c.l.b16 %v1775
        %v1790 = vunpack.c.l.b16 %v1776
        %v1791 = vpack.c.b16 %v1790, %v1789
        %v1794 = vsel %vm297, %v1777, 0
        %v1797 = vsel %vm297, %v1778, 0
        %v1800 = vsel %vm297, %v1779, 0
        %v1803 = vsel %vm297, %v1780, 0
        %v1806 = vsel %vm297, %v1781, 0
        %v1809 = vsel %vm297, %v1782, 0
        %v1812 = vsel %vm297, %v1783, 0
        %v1815 = vsel %vm297, %v1784, 0
        %v1818 = vsel %vm297, %v1785, 0
        %v1821 = vsel %vm297, %v1786, 0
        %1823 = vmatprep.subr.bf16.mxu0 0
        %1824 = vmatpush1.bf16.msra.mxu0 %v1791
        %1825 = vmatprep.subr.bf16.mxu0 0
        %1826 = vmatpush1.bf16.msra.mxu0 0
        %1827 = vmatprep.subr.bf16.mxu0 0
        %1828 = vmatpush1.bf16.msra.mxu0 0
        %1829 = vmatprep.subr.bf16.mxu0 0
        %1830 = vmatpush1.bf16.msra.mxu0 0
        %1831 = vmatprep.subr.bf16.mxu0 0
        %1832 = vmatpush1.bf16.msra.mxu0 0
        %1833 = vmatprep.subr.bf16.mxu0 0
        %1834 = vmatpush1.bf16.msra.mxu0 0
        %1835 = vmatprep.subr.bf16.mxu0 0
        %1836 = vmatpush1.bf16.msra.mxu0 0
        %1837 = vmatprep.subr.bf16.mxu0 0
        %1838 = vmatpush1.bf16.msra.mxu0 0
        %1839 = vmatprep.subr.bf16.mxu0 0
        %1840 = vmatpush1.bf16.msra.mxu0 0
        %1841 = vmatprep.subr.bf16.mxu0 0
        %1842 = vmatpush1.bf16.msra.mxu0 0
        %1843 = vmatprep.subr.bf16.mxu0 0
        %1844 = vmatpush1.bf16.msra.mxu0 0
        %1845 = vmatprep.subr.bf16.mxu0 0
        %1846 = vmatpush1.bf16.msra.mxu0 0
        %1847 = vmatprep.subr.bf16.mxu0 0
        %1848 = vmatpush1.bf16.msra.mxu0 0
        %1849 = vmatprep.subr.bf16.mxu0 0
        %1850 = vmatpush1.bf16.msra.mxu0 0
        %1851 = vmatprep.subr.bf16.mxu0 0
        %1852 = vmatpush1.bf16.msra.mxu0 0
        %1853 = vmatprep.subr.bf16.mxu0 0
        %1854 = vmatpush1.bf16.msra.mxu0 0
        %1855 = vmatprep.mubr.bf16.mxu0 0
        %1856 = vmatmul.mubr.bf16.gmra.mrb[0].mxu0 %v1794
        %v1857 = vpop.f32.mrb[0].mxu0
        %v1858 = vadd.f32 0.0, %v1857
        %v1859 = vpop.f32.mrb[0].mxu0
        %v1860 = vpop.f32.mrb[0].mxu0
        %v1861 = vadd.f32 0.0, %v1860
        %v1862 = vpop.f32.mrb[0].mxu0
        %1863 = vmatprep.mubr.bf16.mxu0 0
        %1864 = vmatmul.mubr.bf16.gmra.mrb[0].mxu0 %v1797
        %v1865 = vpop.f32.mrb[0].mxu0
        %v1866 = vadd.f32 0.0, %v1865
        %v1867 = vpop.f32.mrb[0].mxu0
        %v1868 = vpop.f32.mrb[0].mxu0
        %v1869 = vadd.f32 0.0, %v1868
        %v1870 = vpop.f32.mrb[0].mxu0
        %1871 = vmatprep.mubr.bf16.mxu0 0
        %1872 = vmatmul.mubr.bf16.gmra.mrb[0].mxu0 %v1800
        %v1873 = vpop.f32.mrb[0].mxu0
        %v1874 = vadd.f32 0.0, %v1873
        %v1875 = vpop.f32.mrb[0].mxu0
        %v1876 = vpop.f32.mrb[0].mxu0
        %v1877 = vadd.f32 0.0, %v1876
        %v1878 = vpop.f32.mrb[0].mxu0
        %1879 = vmatprep.mubr.bf16.mxu0 0
        %1880 = vmatmul.mubr.bf16.gmra.mrb[0].mxu0 %v1803
        %v1881 = vpop.f32.mrb[0].mxu0
        %v1882 = vadd.f32 0.0, %v1881
        %v1883 = vpop.f32.mrb[0].mxu0
        %v1884 = vpop.f32.mrb[0].mxu0
        %v1885 = vadd.f32 0.0, %v1884
        %v1886 = vpop.f32.mrb[0].mxu0
        %1887 = vmatprep.mubr.bf16.mxu0 0
        %1888 = vmatmul.mubr.bf16.gmra.mrb[0].mxu0 %v1806
        %v1889 = vpop.f32.mrb[0].mxu0
        %v1890 = vadd.f32 0.0, %v1889
        %v1891 = vpop.f32.mrb[0].mxu0
        %v1892 = vpop.f32.mrb[0].mxu0
        %v1893 = vadd.f32 0.0, %v1892
        %v1894 = vpop.f32.mrb[0].mxu0
        %1895 = vmatprep.mubr.bf16.mxu0 0
        %1896 = vmatmul.mubr.bf16.gmra.mrb[0].mxu0 %v1809
        %v1897 = vpop.f32.mrb[0].mxu0
        %v1898 = vadd.f32 0.0, %v1897
        %v1899 = vpop.f32.mrb[0].mxu0
        %v1900 = vpop.f32.mrb[0].mxu0
        %v1901 = vadd.f32 0.0, %v1900
        %v1902 = vpop.f32.mrb[0].mxu0
        %1903 = vmatprep.mubr.bf16.mxu0 0
        %1904 = vmatmul.mubr.bf16.gmra.mrb[0].mxu0 %v1812
        %v1905 = vpop.f32.mrb[0].mxu0
        %v1906 = vadd.f32 0.0, %v1905
        %v1907 = vpop.f32.mrb[0].mxu0
        %v1908 = vpop.f32.mrb[0].mxu0
        %v1909 = vadd.f32 0.0, %v1908
        %v1910 = vpop.f32.mrb[0].mxu0
        %1911 = vmatprep.mubr.bf16.mxu0 0
        %1912 = vmatmul.mubr.bf16.gmra.mrb[0].mxu0 %v1815
        %v1913 = vpop.f32.mrb[0].mxu0
        %v1914 = vadd.f32 0.0, %v1913
        %v1915 = vpop.f32.mrb[0].mxu0
        %v1916 = vpop.f32.mrb[0].mxu0
        %v1917 = vadd.f32 0.0, %v1916
        %v1918 = vpop.f32.mrb[0].mxu0
        %1919 = vmatprep.mubr.bf16.mxu0 0
        %1920 = vmatmul.mubr.bf16.gmra.mrb[0].mxu0 %v1818
        %v1921 = vpop.f32.mrb[0].mxu0
        %v1922 = vadd.f32 0.0, %v1921
        %v1923 = vpop.f32.mrb[0].mxu0
        %v1924 = vpop.f32.mrb[0].mxu0
        %v1925 = vadd.f32 0.0, %v1924
        %v1926 = vpop.f32.mrb[0].mxu0
        %1927 = vmatprep.mubr.bf16.mxu0 0
        %1928 = vmatmul.mubr.bf16.gmra.mrb[0].mxu0 %v1821
        %v1929 = vpop.f32.mrb[0].mxu0
        %v1930 = vadd.f32 0.0, %v1929
        %v1931 = vpop.f32.mrb[0].mxu0
        %v1932 = vpop.f32.mrb[0].mxu0
        %v1933 = vadd.f32 0.0, %v1932
        %v1934 = vpop.f32.mrb[0].mxu0
        %1935 = vdwg.mxu0
        %v1936 = vpack.c.bf16 %v1861, %v1858
        %v1937 = vpack.c.bf16 %v1869, %v1866
        %v1938 = vpack.c.bf16 %v1877, %v1874
        %v1939 = vpack.c.bf16 %v1885, %v1882
        %v1940 = vpack.c.bf16 %v1893, %v1890
        %v1941 = vpack.c.bf16 %v1901, %v1898
        %v1942 = vpack.c.bf16 %v1909, %v1906
        %v1943 = vpack.c.bf16 %v1917, %v1914
        %v1944 = vpack.c.bf16 %v1925, %v1922
        %v1945 = vpack.c.bf16 %v1933, %v1930
        %s1946 = scalar_lea.vmem [#allocation10], 24
        %v1947 = vld [vmem:[%s1946] sm:$0xf]
        %v1948 = vld [vmem:[%s1946 + $0x4] sm:$0xf]
        %v1951 = vunpack.c.l.b16 %v1947
        %v1952 = vunpack.c.l.b16 %v1948
        %v1953 = vpack.c.b16 %v1952, %v1951
        %v1955 = vsel %vm297, %v1953, 0
        %1957 = vmatprep.subr.bf16.mxu0 0
        %1958 = vmatpush1.bf16.msra.mxu0 %v1936
        %1959 = vmatprep.subr.bf16.mxu0 0
        %1960 = vmatpush1.bf16.msra.mxu0 0
        %1961 = vmatprep.subr.bf16.mxu0 0
        %1962 = vmatpush1.bf16.msra.mxu0 0
        %1963 = vmatprep.subr.bf16.mxu0 0
        %1964 = vmatpush1.bf16.msra.mxu0 0
        %1965 = vmatprep.subr.bf16.mxu0 0
        %1966 = vmatpush1.bf16.msra.mxu0 0
        %1967 = vmatprep.subr.bf16.mxu0 0
        %1968 = vmatpush1.bf16.msra.mxu0 0
        %1969 = vmatprep.subr.bf16.mxu0 0
        %1970 = vmatpush1.bf16.msra.mxu0 0
        %1971 = vmatprep.subr.bf16.mxu0 0
        %1972 = vmatpush1.bf16.msra.mxu0 0
        %1973 = vmatprep.subr.bf16.mxu0 0
        %1974 = vmatpush1.bf16.msra.mxu0 0
        %1975 = vmatprep.subr.bf16.mxu0 0
        %1976 = vmatpush1.bf16.msra.mxu0 0
        %1977 = vmatprep.subr.bf16.mxu0 0
        %1978 = vmatpush1.bf16.msra.mxu0 0
        %1979 = vmatprep.subr.bf16.mxu0 0
        %1980 = vmatpush1.bf16.msra.mxu0 0
        %1981 = vmatprep.subr.bf16.mxu0 0
        %1982 = vmatpush1.bf16.msra.mxu0 0
        %1983 = vmatprep.subr.bf16.mxu0 0
        %1984 = vmatpush1.bf16.msra.mxu0 0
        %1985 = vmatprep.subr.bf16.mxu0 0
        %1986 = vmatpush1.bf16.msra.mxu0 0
        %1987 = vmatprep.subr.bf16.mxu0 0
        %1988 = vmatpush1.bf16.msra.mxu0 0
        %1989 = vmatprep.mubr.bf16.mxu0 0
        %1990 = vmatmul.mubr.bf16.gmra.mrb[0].mxu0 %v1955
        %v1991 = vpop.f32.mrb[0].mxu0
        %v1992 = vadd.f32 0.0, %v1991
        %v1993 = vpop.f32.mrb[0].mxu0
        %v1994 = vpop.f32.mrb[0].mxu0
        %v1995 = vadd.f32 0.0, %v1994
        %v1996 = vpop.f32.mrb[0].mxu0
        %1997 = vdwg.mxu0
        %1998 = vmatprep.subr.bf16.mxu0 0
        %1999 = vmatpush1.bf16.msra.mxu0 %v1937
        %2000 = vmatprep.subr.bf16.mxu0 0
        %2001 = vmatpush1.bf16.msra.mxu0 0
        %2002 = vmatprep.subr.bf16.mxu0 0
        %2003 = vmatpush1.bf16.msra.mxu0 0
        %2004 = vmatprep.subr.bf16.mxu0 0
        %2005 = vmatpush1.bf16.msra.mxu0 0
        %2006 = vmatprep.subr.bf16.mxu0 0
        %2007 = vmatpush1.bf16.msra.mxu0 0
        %2008 = vmatprep.subr.bf16.mxu0 0
        %2009 = vmatpush1.bf16.msra.mxu0 0
        %2010 = vmatprep.subr.bf16.mxu0 0
        %2011 = vmatpush1.bf16.msra.mxu0 0
        %2012 = vmatprep.subr.bf16.mxu0 0
        %2013 = vmatpush1.bf16.msra.mxu0 0
        %2014 = vmatprep.subr.bf16.mxu0 0
        %2015 = vmatpush1.bf16.msra.mxu0 0
        %2016 = vmatprep.subr.bf16.mxu0 0
        %2017 = vmatpush1.bf16.msra.mxu0 0
        %2018 = vmatprep.subr.bf16.mxu0 0
        %2019 = vmatpush1.bf16.msra.mxu0 0
        %2020 = vmatprep.subr.bf16.mxu0 0
        %2021 = vmatpush1.bf16.msra.mxu0 0
        %2022 = vmatprep.subr.bf16.mxu0 0
        %2023 = vmatpush1.bf16.msra.mxu0 0
        %2024 = vmatprep.subr.bf16.mxu0 0
        %2025 = vmatpush1.bf16.msra.mxu0 0
        %2026 = vmatprep.subr.bf16.mxu0 0
        %2027 = vmatpush1.bf16.msra.mxu0 0
        %2028 = vmatprep.subr.bf16.mxu0 0
        %2029 = vmatpush1.bf16.msra.mxu0 0
        %2030 = vmatprep.mubr.bf16.mxu0 0
        %2031 = vmatmul.mubr.bf16.gmra.mrb[0].mxu0 %v1955
        %v2032 = vpop.f32.mrb[0].mxu0
        %v2033 = vadd.f32 0.0, %v2032
        %v2034 = vpop.f32.mrb[0].mxu0
        %v2035 = vpop.f32.mrb[0].mxu0
        %v2036 = vadd.f32 0.0, %v2035
        %v2037 = vpop.f32.mrb[0].mxu0
        %2038 = vdwg.mxu0
        %v2039 = vmul.f32 %v1992, %v1992
        %v2040 = vmul.f32 %v1995, %v1995
        %v2041 = vmul.f32 %v2033, %v2033
        %v2042 = vmul.f32 %v2036, %v2036
        %v2043 = vmul.f32 %v1992, %v2033
        %v2044 = vmul.f32 %v1995, %v2036
        %2045 = vmatprep.subr.bf16.mxu0 0
        %2046 = vmatpush1.bf16.msra.mxu0 %v1938
        %2047 = vmatprep.subr.bf16.mxu0 0
        %2048 = vmatpush1.bf16.msra.mxu0 0
        %2049 = vmatprep.subr.bf16.mxu0 0
        %2050 = vmatpush1.bf16.msra.mxu0 0
        %2051 = vmatprep.subr.bf16.mxu0 0
        %2052 = vmatpush1.bf16.msra.mxu0 0
        %2053 = vmatprep.subr.bf16.mxu0 0
        %2054 = vmatpush1.bf16.msra.mxu0 0
        %2055 = vmatprep.subr.bf16.mxu0 0
        %2056 = vmatpush1.bf16.msra.mxu0 0
        %2057 = vmatprep.subr.bf16.mxu0 0
        %2058 = vmatpush1.bf16.msra.mxu0 0
        %2059 = vmatprep.subr.bf16.mxu0 0
        %2060 = vmatpush1.bf16.msra.mxu0 0
        %2061 = vmatprep.subr.bf16.mxu0 0
        %2062 = vmatpush1.bf16.msra.mxu0 0
        %2063 = vmatprep.subr.bf16.mxu0 0
        %2064 = vmatpush1.bf16.msra.mxu0 0
        %2065 = vmatprep.subr.bf16.mxu0 0
        %2066 = vmatpush1.bf16.msra.mxu0 0
        %2067 = vmatprep.subr.bf16.mxu0 0
        %2068 = vmatpush1.bf16.msra.mxu0 0
        %2069 = vmatprep.subr.bf16.mxu0 0
        %2070 = vmatpush1.bf16.msra.mxu0 0
        %2071 = vmatprep.subr.bf16.mxu0 0
        %2072 = vmatpush1.bf16.msra.mxu0 0
        %2073 = vmatprep.subr.bf16.mxu0 0
        %2074 = vmatpush1.bf16.msra.mxu0 0
        %2075 = vmatprep.subr.bf16.mxu0 0
        %2076 = vmatpush1.bf16.msra.mxu0 0
        %2077 = vmatprep.mubr.bf16.mxu0 0
        %2078 = vmatmul.mubr.bf16.gmra.mrb[0].mxu0 %v1955
        %v2079 = vpop.f32.mrb[0].mxu0
        %v2080 = vadd.f32 0.0, %v2079
        %v2081 = vpop.f32.mrb[0].mxu0
        %v2082 = vpop.f32.mrb[0].mxu0
        %v2083 = vadd.f32 0.0, %v2082
        %v2084 = vpop.f32.mrb[0].mxu0
        %2085 = vdwg.mxu0
        %v2086 = vsub.f32 %v2080, %v2039
        %v2087 = vsub.f32 %v2083, %v2040
        %2088 = vmatprep.subr.bf16.mxu0 0
        %2089 = vmatpush1.bf16.msra.mxu0 %v1939
        %2090 = vmatprep.subr.bf16.mxu0 0
        %2091 = vmatpush1.bf16.msra.mxu0 0
        %2092 = vmatprep.subr.bf16.mxu0 0
        %2093 = vmatpush1.bf16.msra.mxu0 0
        %2094 = vmatprep.subr.bf16.mxu0 0
        %2095 = vmatpush1.bf16.msra.mxu0 0
        %2096 = vmatprep.subr.bf16.mxu0 0
        %2097 = vmatpush1.bf16.msra.mxu0 0
        %2098 = vmatprep.subr.bf16.mxu0 0
        %2099 = vmatpush1.bf16.msra.mxu0 0
        %2100 = vmatprep.subr.bf16.mxu0 0
        %2101 = vmatpush1.bf16.msra.mxu0 0
        %2102 = vmatprep.subr.bf16.mxu0 0
        %2103 = vmatpush1.bf16.msra.mxu0 0
        %2104 = vmatprep.subr.bf16.mxu0 0
        %2105 = vmatpush1.bf16.msra.mxu0 0
        %2106 = vmatprep.subr.bf16.mxu0 0
        %2107 = vmatpush1.bf16.msra.mxu0 0
        %2108 = vmatprep.subr.bf16.mxu0 0
        %2109 = vmatpush1.bf16.msra.mxu0 0
        %2110 = vmatprep.subr.bf16.mxu0 0
        %2111 = vmatpush1.bf16.msra.mxu0 0
        %2112 = vmatprep.subr.bf16.mxu0 0
        %2113 = vmatpush1.bf16.msra.mxu0 0
        %2114 = vmatprep.subr.bf16.mxu0 0
        %2115 = vmatpush1.bf16.msra.mxu0 0
        %2116 = vmatprep.subr.bf16.mxu0 0
        %2117 = vmatpush1.bf16.msra.mxu0 0
        %2118 = vmatprep.subr.bf16.mxu0 0
        %2119 = vmatpush1.bf16.msra.mxu0 0
        %2120 = vmatprep.mubr.bf16.mxu0 0
        %2121 = vmatmul.mubr.bf16.gmra.mrb[0].mxu0 %v1955
        %v2122 = vpop.f32.mrb[0].mxu0
        %v2123 = vadd.f32 0.0, %v2122
        %v2124 = vpop.f32.mrb[0].mxu0
        %v2125 = vpop.f32.mrb[0].mxu0
        %v2126 = vadd.f32 0.0, %v2125
        %v2127 = vpop.f32.mrb[0].mxu0
        %2128 = vdwg.mxu0
        %v2129 = vsub.f32 %v2123, %v2041
        %v2130 = vsub.f32 %v2126, %v2042
        %2131 = vmatprep.subr.bf16.mxu0 0
        %2132 = vmatpush1.bf16.msra.mxu0 %v1940
        %2133 = vmatprep.subr.bf16.mxu0 0
        %2134 = vmatpush1.bf16.msra.mxu0 0
        %2135 = vmatprep.subr.bf16.mxu0 0
        %2136 = vmatpush1.bf16.msra.mxu0 0
        %2137 = vmatprep.subr.bf16.mxu0 0
        %2138 = vmatpush1.bf16.msra.mxu0 0
        %2139 = vmatprep.subr.bf16.mxu0 0
        %2140 = vmatpush1.bf16.msra.mxu0 0
        %2141 = vmatprep.subr.bf16.mxu0 0
        %2142 = vmatpush1.bf16.msra.mxu0 0
        %2143 = vmatprep.subr.bf16.mxu0 0
        %2144 = vmatpush1.bf16.msra.mxu0 0
        %2145 = vmatprep.subr.bf16.mxu0 0
        %2146 = vmatpush1.bf16.msra.mxu0 0
        %2147 = vmatprep.subr.bf16.mxu0 0
        %2148 = vmatpush1.bf16.msra.mxu0 0
        %2149 = vmatprep.subr.bf16.mxu0 0
        %2150 = vmatpush1.bf16.msra.mxu0 0
        %2151 = vmatprep.subr.bf16.mxu0 0
        %2152 = vmatpush1.bf16.msra.mxu0 0
        %2153 = vmatprep.subr.bf16.mxu0 0
        %2154 = vmatpush1.bf16.msra.mxu0 0
        %2155 = vmatprep.subr.bf16.mxu0 0
        %2156 = vmatpush1.bf16.msra.mxu0 0
        %2157 = vmatprep.subr.bf16.mxu0 0
        %2158 = vmatpush1.bf16.msra.mxu0 0
        %2159 = vmatprep.subr.bf16.mxu0 0
        %2160 = vmatpush1.bf16.msra.mxu0 0
        %2161 = vmatprep.subr.bf16.mxu0 0
        %2162 = vmatpush1.bf16.msra.mxu0 0
        %2163 = vmatprep.mubr.bf16.mxu0 0
        %2164 = vmatmul.mubr.bf16.gmra.mrb[0].mxu0 %v1955
        %v2165 = vpop.f32.mrb[0].mxu0
        %v2166 = vadd.f32 0.0, %v2165
        %v2167 = vpop.f32.mrb[0].mxu0
        %v2168 = vpop.f32.mrb[0].mxu0
        %v2169 = vadd.f32 0.0, %v2168
        %v2170 = vpop.f32.mrb[0].mxu0
        %2171 = vdwg.mxu0
        %v2172 = vsub.f32 %v2166, %v2043
        %v2173 = vsub.f32 %v2169, %v2044
        %v2174 = vmul.f32 %v2172, 2.0
        %v2175 = vmul.f32 %v2173, 2.0
        %v2176 = vadd.f32 %v2174, 0.0009
        %v2177 = vadd.f32 %v2175, 0.0009
        %v2178 = vadd.f32 %v2086, %v2129
        %v2179 = vadd.f32 %v2087, %v2130
        %v2180 = vadd.f32 %v2178, 0.0009
        %v2181 = vadd.f32 %v2179, 0.0009
        %v2182 = vrcp.pop %v2180
        %v2183 = vrcp.pop %v2181
        %v2184 = vmul.f32 %v2176, %v2182
        %v2185 = vmul.f32 %v2177, %v2183
        %v2186 = vld [vmem:[#allocation3] sm:$0xff]
        %v2187 = vld [vmem:[#allocation3 + $0x8] sm:$0xff]
        %v2188 = vmul.f32 %v2186, %v2184
        %v2189 = vmul.f32 %v2187, %v2185
        %2190 = vst.msk [vmem:[#allocation3] sm:$0xff] %vm297, %v2188
        %2191 = vst.msk [vmem:[#allocation3 + $0x8] sm:$0xff] %vm297, %v2189
        %2192 = vmatprep.subr.bf16.mxu0 0
        %2193 = vmatpush1.bf16.msra.mxu0 %v1941
        %2194 = vmatprep.subr.bf16.mxu0 0
        %2195 = vmatpush1.bf16.msra.mxu0 0
        %2196 = vmatprep.subr.bf16.mxu0 0
        %2197 = vmatpush1.bf16.msra.mxu0 0
        %2198 = vmatprep.subr.bf16.mxu0 0
        %2199 = vmatpush1.bf16.msra.mxu0 0
        %2200 = vmatprep.subr.bf16.mxu0 0
        %2201 = vmatpush1.bf16.msra.mxu0 0
        %2202 = vmatprep.subr.bf16.mxu0 0
        %2203 = vmatpush1.bf16.msra.mxu0 0
        %2204 = vmatprep.subr.bf16.mxu0 0
        %2205 = vmatpush1.bf16.msra.mxu0 0
        %2206 = vmatprep.subr.bf16.mxu0 0
        %2207 = vmatpush1.bf16.msra.mxu0 0
        %2208 = vmatprep.subr.bf16.mxu0 0
        %2209 = vmatpush1.bf16.msra.mxu0 0
        %2210 = vmatprep.subr.bf16.mxu0 0
        %2211 = vmatpush1.bf16.msra.mxu0 0
        %2212 = vmatprep.subr.bf16.mxu0 0
        %2213 = vmatpush1.bf16.msra.mxu0 0
        %2214 = vmatprep.subr.bf16.mxu0 0
        %2215 = vmatpush1.bf16.msra.mxu0 0
        %2216 = vmatprep.subr.bf16.mxu0 0
        %2217 = vmatpush1.bf16.msra.mxu0 0
        %2218 = vmatprep.subr.bf16.mxu0 0
        %2219 = vmatpush1.bf16.msra.mxu0 0
        %2220 = vmatprep.subr.bf16.mxu0 0
        %2221 = vmatpush1.bf16.msra.mxu0 0
        %2222 = vmatprep.subr.bf16.mxu0 0
        %2223 = vmatpush1.bf16.msra.mxu0 0
        %2224 = vmatprep.mubr.bf16.mxu0 0
        %2225 = vmatmul.mubr.bf16.gmra.mrb[0].mxu0 %v1955
        %v2226 = vpop.f32.mrb[0].mxu0
        %v2227 = vadd.f32 0.0, %v2226
        %v2228 = vpop.f32.mrb[0].mxu0
        %v2229 = vpop.f32.mrb[0].mxu0
        %v2230 = vadd.f32 0.0, %v2229
        %v2231 = vpop.f32.mrb[0].mxu0
        %2232 = vdwg.mxu0
        %2233 = vmatprep.subr.bf16.mxu0 0
        %2234 = vmatpush1.bf16.msra.mxu0 %v1942
        %2235 = vmatprep.subr.bf16.mxu0 0
        %2236 = vmatpush1.bf16.msra.mxu0 0
        %2237 = vmatprep.subr.bf16.mxu0 0
        %2238 = vmatpush1.bf16.msra.mxu0 0
        %2239 = vmatprep.subr.bf16.mxu0 0
        %2240 = vmatpush1.bf16.msra.mxu0 0
        %2241 = vmatprep.subr.bf16.mxu0 0
        %2242 = vmatpush1.bf16.msra.mxu0 0
        %2243 = vmatprep.subr.bf16.mxu0 0
        %2244 = vmatpush1.bf16.msra.mxu0 0
        %2245 = vmatprep.subr.bf16.mxu0 0
        %2246 = vmatpush1.bf16.msra.mxu0 0
        %2247 = vmatprep.subr.bf16.mxu0 0
        %2248 = vmatpush1.bf16.msra.mxu0 0
        %2249 = vmatprep.subr.bf16.mxu0 0
        %2250 = vmatpush1.bf16.msra.mxu0 0
        %2251 = vmatprep.subr.bf16.mxu0 0
        %2252 = vmatpush1.bf16.msra.mxu0 0
        %2253 = vmatprep.subr.bf16.mxu0 0
        %2254 = vmatpush1.bf16.msra.mxu0 0
        %2255 = vmatprep.subr.bf16.mxu0 0
        %2256 = vmatpush1.bf16.msra.mxu0 0
        %2257 = vmatprep.subr.bf16.mxu0 0
        %2258 = vmatpush1.bf16.msra.mxu0 0
        %2259 = vmatprep.subr.bf16.mxu0 0
        %2260 = vmatpush1.bf16.msra.mxu0 0
        %2261 = vmatprep.subr.bf16.mxu0 0
        %2262 = vmatpush1.bf16.msra.mxu0 0
        %2263 = vmatprep.subr.bf16.mxu0 0
        %2264 = vmatpush1.bf16.msra.mxu0 0
        %2265 = vmatprep.mubr.bf16.mxu0 0
        %2266 = vmatmul.mubr.bf16.gmra.mrb[0].mxu0 %v1955
        %v2267 = vpop.f32.mrb[0].mxu0
        %v2268 = vadd.f32 0.0, %v2267
        %v2269 = vpop.f32.mrb[0].mxu0
        %v2270 = vpop.f32.mrb[0].mxu0
        %v2271 = vadd.f32 0.0, %v2270
        %v2272 = vpop.f32.mrb[0].mxu0
        %2273 = vdwg.mxu0
        %v2274 = vmul.f32 %v2227, %v2227
        %v2275 = vmul.f32 %v2230, %v2230
        %v2276 = vmul.f32 %v2268, %v2268
        %v2277 = vmul.f32 %v2271, %v2271
        %v2278 = vmul.f32 %v2227, %v2268
        %v2279 = vmul.f32 %v2230, %v2271
        %2280 = vmatprep.subr.bf16.mxu0 0
        %2281 = vmatpush1.bf16.msra.mxu0 %v1943
        %2282 = vmatprep.subr.bf16.mxu0 0
        %2283 = vmatpush1.bf16.msra.mxu0 0
        %2284 = vmatprep.subr.bf16.mxu0 0
        %2285 = vmatpush1.bf16.msra.mxu0 0
        %2286 = vmatprep.subr.bf16.mxu0 0
        %2287 = vmatpush1.bf16.msra.mxu0 0
        %2288 = vmatprep.subr.bf16.mxu0 0
        %2289 = vmatpush1.bf16.msra.mxu0 0
        %2290 = vmatprep.subr.bf16.mxu0 0
        %2291 = vmatpush1.bf16.msra.mxu0 0
        %2292 = vmatprep.subr.bf16.mxu0 0
        %2293 = vmatpush1.bf16.msra.mxu0 0
        %2294 = vmatprep.subr.bf16.mxu0 0
        %2295 = vmatpush1.bf16.msra.mxu0 0
        %2296 = vmatprep.subr.bf16.mxu0 0
        %2297 = vmatpush1.bf16.msra.mxu0 0
        %2298 = vmatprep.subr.bf16.mxu0 0
        %2299 = vmatpush1.bf16.msra.mxu0 0
        %2300 = vmatprep.subr.bf16.mxu0 0
        %2301 = vmatpush1.bf16.msra.mxu0 0
        %2302 = vmatprep.subr.bf16.mxu0 0
        %2303 = vmatpush1.bf16.msra.mxu0 0
        %2304 = vmatprep.subr.bf16.mxu0 0
        %2305 = vmatpush1.bf16.msra.mxu0 0
        %2306 = vmatprep.subr.bf16.mxu0 0
        %2307 = vmatpush1.bf16.msra.mxu0 0
        %2308 = vmatprep.subr.bf16.mxu0 0
        %2309 = vmatpush1.bf16.msra.mxu0 0
        %2310 = vmatprep.subr.bf16.mxu0 0
        %2311 = vmatpush1.bf16.msra.mxu0 0
        %2312 = vmatprep.mubr.bf16.mxu0 0
        %2313 = vmatmul.mubr.bf16.gmra.mrb[0].mxu0 %v1955
        %v2314 = vpop.f32.mrb[0].mxu0
        %v2315 = vadd.f32 0.0, %v2314
        %v2316 = vpop.f32.mrb[0].mxu0
        %v2317 = vpop.f32.mrb[0].mxu0
        %v2318 = vadd.f32 0.0, %v2317
        %v2319 = vpop.f32.mrb[0].mxu0
        %2320 = vdwg.mxu0
        %v2321 = vsub.f32 %v2315, %v2274
        %v2322 = vsub.f32 %v2318, %v2275
        %2323 = vmatprep.subr.bf16.mxu0 0
        %2324 = vmatpush1.bf16.msra.mxu0 %v1944
        %2325 = vmatprep.subr.bf16.mxu0 0
        %2326 = vmatpush1.bf16.msra.mxu0 0
        %2327 = vmatprep.subr.bf16.mxu0 0
        %2328 = vmatpush1.bf16.msra.mxu0 0
        %2329 = vmatprep.subr.bf16.mxu0 0
        %2330 = vmatpush1.bf16.msra.mxu0 0
        %2331 = vmatprep.subr.bf16.mxu0 0
        %2332 = vmatpush1.bf16.msra.mxu0 0
        %2333 = vmatprep.subr.bf16.mxu0 0
        %2334 = vmatpush1.bf16.msra.mxu0 0
        %2335 = vmatprep.subr.bf16.mxu0 0
        %2336 = vmatpush1.bf16.msra.mxu0 0
        %2337 = vmatprep.subr.bf16.mxu0 0
        %2338 = vmatpush1.bf16.msra.mxu0 0
        %2339 = vmatprep.subr.bf16.mxu0 0
        %2340 = vmatpush1.bf16.msra.mxu0 0
        %2341 = vmatprep.subr.bf16.mxu0 0
        %2342 = vmatpush1.bf16.msra.mxu0 0
        %2343 = vmatprep.subr.bf16.mxu0 0
        %2344 = vmatpush1.bf16.msra.mxu0 0
        %2345 = vmatprep.subr.bf16.mxu0 0
        %2346 = vmatpush1.bf16.msra.mxu0 0
        %2347 = vmatprep.subr.bf16.mxu0 0
        %2348 = vmatpush1.bf16.msra.mxu0 0
        %2349 = vmatprep.subr.bf16.mxu0 0
        %2350 = vmatpush1.bf16.msra.mxu0 0
        %2351 = vmatprep.subr.bf16.mxu0 0
        %2352 = vmatpush1.bf16.msra.mxu0 0
        %2353 = vmatprep.subr.bf16.mxu0 0
        %2354 = vmatpush1.bf16.msra.mxu0 0
        %2355 = vmatprep.mubr.bf16.mxu0 0
        %2356 = vmatmul.mubr.bf16.gmra.mrb[0].mxu0 %v1955
        %v2357 = vpop.f32.mrb[0].mxu0
        %v2358 = vadd.f32 0.0, %v2357
        %v2359 = vpop.f32.mrb[0].mxu0
        %v2360 = vpop.f32.mrb[0].mxu0
        %v2361 = vadd.f32 0.0, %v2360
        %v2362 = vpop.f32.mrb[0].mxu0
        %2363 = vdwg.mxu0
        %v2364 = vsub.f32 %v2358, %v2276
        %v2365 = vsub.f32 %v2361, %v2277
        %2366 = vmatprep.subr.bf16.mxu0 0
        %2367 = vmatpush1.bf16.msra.mxu0 %v1945
        %2368 = vmatprep.subr.bf16.mxu0 0
        %2369 = vmatpush1.bf16.msra.mxu0 0
        %2370 = vmatprep.subr.bf16.mxu0 0
        %2371 = vmatpush1.bf16.msra.mxu0 0
        %2372 = vmatprep.subr.bf16.mxu0 0
        %2373 = vmatpush1.bf16.msra.mxu0 0
        %2374 = vmatprep.subr.bf16.mxu0 0
        %2375 = vmatpush1.bf16.msra.mxu0 0
        %2376 = vmatprep.subr.bf16.mxu0 0
        %2377 = vmatpush1.bf16.msra.mxu0 0
        %2378 = vmatprep.subr.bf16.mxu0 0
        %2379 = vmatpush1.bf16.msra.mxu0 0
        %2380 = vmatprep.subr.bf16.mxu0 0
        %2381 = vmatpush1.bf16.msra.mxu0 0
        %2382 = vmatprep.subr.bf16.mxu0 0
        %2383 = vmatpush1.bf16.msra.mxu0 0
        %2384 = vmatprep.subr.bf16.mxu0 0
        %2385 = vmatpush1.bf16.msra.mxu0 0
        %2386 = vmatprep.subr.bf16.mxu0 0
        %2387 = vmatpush1.bf16.msra.mxu0 0
        %2388 = vmatprep.subr.bf16.mxu0 0
        %2389 = vmatpush1.bf16.msra.mxu0 0
        %2390 = vmatprep.subr.bf16.mxu0 0
        %2391 = vmatpush1.bf16.msra.mxu0 0
        %2392 = vmatprep.subr.bf16.mxu0 0
        %2393 = vmatpush1.bf16.msra.mxu0 0
        %2394 = vmatprep.subr.bf16.mxu0 0
        %2395 = vmatpush1.bf16.msra.mxu0 0
        %2396 = vmatprep.subr.bf16.mxu0 0
        %2397 = vmatpush1.bf16.msra.mxu0 0
        %2398 = vmatprep.mubr.bf16.mxu0 0
        %2399 = vmatmul.mubr.bf16.gmra.mrb[0].mxu0 %v1955
        %v2400 = vpop.f32.mrb[0].mxu0
        %v2401 = vadd.f32 0.0, %v2400
        %v2402 = vpop.f32.mrb[0].mxu0
        %v2403 = vpop.f32.mrb[0].mxu0
        %v2404 = vadd.f32 0.0, %v2403
        %v2405 = vpop.f32.mrb[0].mxu0
        %2406 = vdwg.mxu0
        %v2407 = vsub.f32 %v2401, %v2278
        %v2408 = vsub.f32 %v2404, %v2279
        %v2409 = vmul.f32 %v2407, 2.0
        %v2410 = vmul.f32 %v2408, 2.0
        %v2411 = vadd.f32 %v2409, 0.0009
        %v2412 = vadd.f32 %v2410, 0.0009
        %v2413 = vadd.f32 %v2321, %v2364
        %v2414 = vadd.f32 %v2322, %v2365
        %v2415 = vadd.f32 %v2413, 0.0009
        %v2416 = vadd.f32 %v2414, 0.0009
        %v2417 = vrcp.pop %v2415
        %v2418 = vrcp.pop %v2416
        %v2419 = vmul.f32 %v2411, %v2417
        %v2420 = vmul.f32 %v2412, %v2418
        %v2421 = vmul.f32 %v2419, %v2419
        %v2422 = vmul.f32 %v2420, %v2420
        %v2423 = vld [vmem:[#allocation3] sm:$0xff]
        %v2424 = vld [vmem:[#allocation3 + $0x8] sm:$0xff]
        %v2425 = vmul.f32 %v2423, %v2421
        %v2426 = vmul.f32 %v2424, %v2422
        %2427 = vst.msk [vmem:[#allocation3] sm:$0xff] %vm297, %v2425
        %2428 = vst.msk [vmem:[#allocation3 + $0x8] sm:$0xff] %vm297, %v2426
        %v2429 = vld [vmem:[%s1752] sm:$0xff]
        %v2430 = vld [vmem:[%s1752 + $0x8] sm:$0xff]
        %v2431 = vld [vmem:[%s1755] sm:$0xff]
        %v2432 = vld [vmem:[%s1755 + $0x8] sm:$0xff]
        %v2433 = vmul.f32 %v2429, %v2429
        %v2434 = vmul.f32 %v2430, %v2430
        %v2435 = vmul.f32 %v2431, %v2431
        %v2436 = vmul.f32 %v2432, %v2432
        %v2437 = vmul.f32 %v2429, %v2431
        %v2438 = vmul.f32 %v2430, %v2432
        %v2439 = vpack.c.bf16 %v2430, %v2429
        %2440 = vst.msk [vmem:[#allocation2] sm:$0xff] %vm297, %v2439
        %v2441 = vpack.c.bf16 %v2432, %v2431
        %2442 = vst.msk [vmem:[#allocation2 + $0x8] sm:$0xff] %vm297, %v2441
        %v2443 = vpack.c.bf16 %v2434, %v2433
        %2444 = vst.msk [vmem:[#allocation2 + $0x10] sm:$0xff] %vm297, %v2443
        %v2445 = vpack.c.bf16 %v2436, %v2435
        %2446 = vst.msk [vmem:[#allocation2 + $0x18] sm:$0xff] %vm297, %v2445
        %v2447 = vpack.c.bf16 %v2438, %v2437
        %2448 = vst.msk [vmem:[#allocation2 + $0x20] sm:$0xff] %vm297, %v2447
        %v2449 = vld [vmem:[%s238] sm:$0xff]
        %v2450 = vld [vmem:[%s238 + $0x8] sm:$0xff]
        %v2451 = vld [vmem:[%s247] sm:$0xff]
        %v2452 = vld [vmem:[%s247 + $0x8] sm:$0xff]
        %v2453 = vsub.f32 %v2449, %v2451
        %v2454 = vsub.f32 %v2450, %v2452
        %v2455 = vand.u32 2147483647, %v2453
        %v2456 = vand.u32 2147483647, %v2454
        %v2457 = vpack.c.bf16 %v2456, %v2455
        %2458 = vst.msk [vmem:[#allocation2 + $0x28] sm:$0xff] %vm297, %v2457
        %v2459 = vld [vmem:[%s678] sm:$0xff]
        %v2460 = vld [vmem:[%s678 + $0x8] sm:$0xff]
        %v2461 = vld [vmem:[%s681] sm:$0xff]
        %v2462 = vld [vmem:[%s681 + $0x8] sm:$0xff]
        %v2463 = vsub.f32 %v2459, %v2461
        %v2464 = vsub.f32 %v2460, %v2462
        %v2465 = vand.u32 2147483647, %v2463
        %v2466 = vand.u32 2147483647, %v2464
        %v2467 = vpack.c.bf16 %v2466, %v2465
        %2468 = vst.msk [vmem:[#allocation2 + $0x30] sm:$0xff] %vm297, %v2467
        %v2469 = vld [vmem:[%s1752] sm:$0xff]
        %v2470 = vld [vmem:[%s1752 + $0x8] sm:$0xff]
        %v2471 = vld [vmem:[%s1755] sm:$0xff]
        %v2472 = vld [vmem:[%s1755 + $0x8] sm:$0xff]
        %v2473 = vsub.f32 %v2469, %v2471
        %v2474 = vsub.f32 %v2470, %v2472
        %v2475 = vand.u32 2147483647, %v2473
        %v2476 = vand.u32 2147483647, %v2474
        %v2477 = vpack.c.bf16 %v2476, %v2475
        %2478 = vst.msk [vmem:[#allocation2 + $0x38] sm:$0xff] %vm297, %v2477
        %s2479 = scalar_lea.vmem [#allocation9], 32
        %v2480 = vld [vmem:[%s2479] sm:$0xf]
        %v2481 = vld [vmem:[%s2479 + $0x4] sm:$0xf]
        %v2482 = vld [vmem:[#allocation2] sm:$0xff]
        %v2483 = vld [vmem:[#allocation2 + $0x8] sm:$0xff]
        %v2484 = vld [vmem:[#allocation2 + $0x10] sm:$0xff]
        %v2485 = vld [vmem:[#allocation2 + $0x18] sm:$0xff]
        %v2486 = vld [vmem:[#allocation2 + $0x20] sm:$0xff]
        %v2487 = vld [vmem:[#allocation2 + $0x28] sm:$0xff]
        %v2488 = vld [vmem:[#allocation2 + $0x30] sm:$0xff]
        %v2489 = vld [vmem:[#allocation2 + $0x38] sm:$0xff]
        %v2492 = vunpack.c.l.b16 %v2480
        %v2493 = vunpack.c.l.b16 %v2481
        %v2494 = vpack.c.b16 %v2493, %v2492
        %v2497 = vsel %vm297, %v2482, 0
        %v2500 = vsel %vm297, %v2483, 0
        %v2503 = vsel %vm297, %v2484, 0
        %v2506 = vsel %vm297, %v2485, 0
        %v2509 = vsel %vm297, %v2486, 0
        %v2512 = vsel %vm297, %v2487, 0
        %v2515 = vsel %vm297, %v2488, 0
        %v2518 = vsel %vm297, %v2489, 0
        %2520 = vmatprep.subr.bf16.mxu0 0
        %2521 = vmatpush1.bf16.msra.mxu0 %v2494
        %2522 = vmatprep.subr.bf16.mxu0 0
        %2523 = vmatpush1.bf16.msra.mxu0 0
        %2524 = vmatprep.subr.bf16.mxu0 0
        %2525 = vmatpush1.bf16.msra.mxu0 0
        %2526 = vmatprep.subr.bf16.mxu0 0
        %2527 = vmatpush1.bf16.msra.mxu0 0
        %2528 = vmatprep.subr.bf16.mxu0 0
        %2529 = vmatpush1.bf16.msra.mxu0 0
        %2530 = vmatprep.subr.bf16.mxu0 0
        %2531 = vmatpush1.bf16.msra.mxu0 0
        %2532 = vmatprep.subr.bf16.mxu0 0
        %2533 = vmatpush1.bf16.msra.mxu0 0
        %2534 = vmatprep.subr.bf16.mxu0 0
        %2535 = vmatpush1.bf16.msra.mxu0 0
        %2536 = vmatprep.subr.bf16.mxu0 0
        %2537 = vmatpush1.bf16.msra.mxu0 0
        %2538 = vmatprep.subr.bf16.mxu0 0
        %2539 = vmatpush1.bf16.msra.mxu0 0
        %2540 = vmatprep.subr.bf16.mxu0 0
        %2541 = vmatpush1.bf16.msra.mxu0 0
        %2542 = vmatprep.subr.bf16.mxu0 0
        %2543 = vmatpush1.bf16.msra.mxu0 0
        %2544 = vmatprep.subr.bf16.mxu0 0
        %2545 = vmatpush1.bf16.msra.mxu0 0
        %2546 = vmatprep.subr.bf16.mxu0 0
        %2547 = vmatpush1.bf16.msra.mxu0 0
        %2548 = vmatprep.subr.bf16.mxu0 0
        %2549 = vmatpush1.bf16.msra.mxu0 0
        %2550 = vmatprep.subr.bf16.mxu0 0
        %2551 = vmatpush1.bf16.msra.mxu0 0
        %2552 = vmatprep.mubr.bf16.mxu0 0
        %2553 = vmatmul.mubr.bf16.gmra.mrb[0].mxu0 %v2497
        %v2554 = vpop.f32.mrb[0].mxu0
        %v2555 = vadd.f32 0.0, %v2554
        %v2556 = vpop.f32.mrb[0].mxu0
        %v2557 = vpop.f32.mrb[0].mxu0
        %v2558 = vadd.f32 0.0, %v2557
        %v2559 = vpop.f32.mrb[0].mxu0
        %2560 = vmatprep.mubr.bf16.mxu0 0
        %2561 = vmatmul.mubr.bf16.gmra.mrb[0].mxu0 %v2500
        %v2562 = vpop.f32.mrb[0].mxu0
        %v2563 = vadd.f32 0.0, %v2562
        %v2564 = vpop.f32.mrb[0].mxu0
        %v2565 = vpop.f32.mrb[0].mxu0
        %v2566 = vadd.f32 0.0, %v2565
        %v2567 = vpop.f32.mrb[0].mxu0
        %2568 = vmatprep.mubr.bf16.mxu0 0
        %2569 = vmatmul.mubr.bf16.gmra.mrb[0].mxu0 %v2503
        %v2570 = vpop.f32.mrb[0].mxu0
        %v2571 = vadd.f32 0.0, %v2570
        %v2572 = vpop.f32.mrb[0].mxu0
        %v2573 = vpop.f32.mrb[0].mxu0
        %v2574 = vadd.f32 0.0, %v2573
        %v2575 = vpop.f32.mrb[0].mxu0
        %2576 = vmatprep.mubr.bf16.mxu0 0
        %2577 = vmatmul.mubr.bf16.gmra.mrb[0].mxu0 %v2506
        %v2578 = vpop.f32.mrb[0].mxu0
        %v2579 = vadd.f32 0.0, %v2578
        %v2580 = vpop.f32.mrb[0].mxu0
        %v2581 = vpop.f32.mrb[0].mxu0
        %v2582 = vadd.f32 0.0, %v2581
        %v2583 = vpop.f32.mrb[0].mxu0
        %2584 = vmatprep.mubr.bf16.mxu0 0
        %2585 = vmatmul.mubr.bf16.gmra.mrb[0].mxu0 %v2509
        %v2586 = vpop.f32.mrb[0].mxu0
        %v2587 = vadd.f32 0.0, %v2586
        %v2588 = vpop.f32.mrb[0].mxu0
        %v2589 = vpop.f32.mrb[0].mxu0
        %v2590 = vadd.f32 0.0, %v2589
        %v2591 = vpop.f32.mrb[0].mxu0
        %2592 = vmatprep.mubr.bf16.mxu0 0
        %2593 = vmatmul.mubr.bf16.gmra.mrb[0].mxu0 %v2512
        %v2594 = vpop.f32.mrb[0].mxu0
        %v2595 = vadd.f32 0.0, %v2594
        %v2596 = vpop.f32.mrb[0].mxu0
        %v2597 = vpop.f32.mrb[0].mxu0
        %v2598 = vadd.f32 0.0, %v2597
        %v2599 = vpop.f32.mrb[0].mxu0
        %2600 = vmatprep.mubr.bf16.mxu0 0
        %2601 = vmatmul.mubr.bf16.gmra.mrb[0].mxu0 %v2515
        %v2602 = vpop.f32.mrb[0].mxu0
        %v2603 = vadd.f32 0.0, %v2602
        %v2604 = vpop.f32.mrb[0].mxu0
        %v2605 = vpop.f32.mrb[0].mxu0
        %v2606 = vadd.f32 0.0, %v2605
        %v2607 = vpop.f32.mrb[0].mxu0
        %2608 = vmatprep.mubr.bf16.mxu0 0
        %2609 = vmatmul.mubr.bf16.gmra.mrb[0].mxu0 %v2518
        %v2610 = vpop.f32.mrb[0].mxu0
        %v2611 = vadd.f32 0.0, %v2610
        %v2612 = vpop.f32.mrb[0].mxu0
        %v2613 = vpop.f32.mrb[0].mxu0
        %v2614 = vadd.f32 0.0, %v2613
        %v2615 = vpop.f32.mrb[0].mxu0
        %2616 = vdwg.mxu0
        %v2617 = vpack.c.bf16 %v2558, %v2555
        %v2618 = vpack.c.bf16 %v2566, %v2563
        %v2619 = vpack.c.bf16 %v2574, %v2571
        %v2620 = vpack.c.bf16 %v2582, %v2579
        %v2621 = vpack.c.bf16 %v2590, %v2587
        %v2622 = vpack.c.bf16 %v2598, %v2595
        %v2623 = vpack.c.bf16 %v2606, %v2603
        %v2624 = vpack.c.bf16 %v2614, %v2611
        %s2625 = scalar_lea.vmem [#allocation10], 32
        %v2626 = vld [vmem:[%s2625] sm:$0xf]
        %v2627 = vld [vmem:[%s2625 + $0x4] sm:$0xf]
        %v2630 = vunpack.c.l.b16 %v2626
        %v2631 = vunpack.c.l.b16 %v2627
        %v2632 = vpack.c.b16 %v2631, %v2630
        %v2634 = vsel %vm297, %v2632, 0
        %2636 = vmatprep.subr.bf16.mxu0 0
        %2637 = vmatpush1.bf16.msra.mxu0 %v2617
        %2638 = vmatprep.subr.bf16.mxu0 0
        %2639 = vmatpush1.bf16.msra.mxu0 0
        %2640 = vmatprep.subr.bf16.mxu0 0
        %2641 = vmatpush1.bf16.msra.mxu0 0
        %2642 = vmatprep.subr.bf16.mxu0 0
        %2643 = vmatpush1.bf16.msra.mxu0 0
        %2644 = vmatprep.subr.bf16.mxu0 0
        %2645 = vmatpush1.bf16.msra.mxu0 0
        %2646 = vmatprep.subr.bf16.mxu0 0
        %2647 = vmatpush1.bf16.msra.mxu0 0
        %2648 = vmatprep.subr.bf16.mxu0 0
        %2649 = vmatpush1.bf16.msra.mxu0 0
        %2650 = vmatprep.subr.bf16.mxu0 0
        %2651 = vmatpush1.bf16.msra.mxu0 0
        %2652 = vmatprep.subr.bf16.mxu0 0
        %2653 = vmatpush1.bf16.msra.mxu0 0
        %2654 = vmatprep.subr.bf16.mxu0 0
        %2655 = vmatpush1.bf16.msra.mxu0 0
        %2656 = vmatprep.subr.bf16.mxu0 0
        %2657 = vmatpush1.bf16.msra.mxu0 0
        %2658 = vmatprep.subr.bf16.mxu0 0
        %2659 = vmatpush1.bf16.msra.mxu0 0
        %2660 = vmatprep.subr.bf16.mxu0 0
        %2661 = vmatpush1.bf16.msra.mxu0 0
        %2662 = vmatprep.subr.bf16.mxu0 0
        %2663 = vmatpush1.bf16.msra.mxu0 0
        %2664 = vmatprep.subr.bf16.mxu0 0
        %2665 = vmatpush1.bf16.msra.mxu0 0
        %2666 = vmatprep.subr.bf16.mxu0 0
        %2667 = vmatpush1.bf16.msra.mxu0 0
        %2668 = vmatprep.mubr.bf16.mxu0 0
        %2669 = vmatmul.mubr.bf16.gmra.mrb[0].mxu0 %v2634
        %v2670 = vpop.f32.mrb[0].mxu0
        %v2671 = vadd.f32 0.0, %v2670
        %v2672 = vpop.f32.mrb[0].mxu0
        %v2673 = vpop.f32.mrb[0].mxu0
        %v2674 = vadd.f32 0.0, %v2673
        %v2675 = vpop.f32.mrb[0].mxu0
        %2676 = vdwg.mxu0
        %2677 = vmatprep.subr.bf16.mxu0 0
        %2678 = vmatpush1.bf16.msra.mxu0 %v2618
        %2679 = vmatprep.subr.bf16.mxu0 0
        %2680 = vmatpush1.bf16.msra.mxu0 0
        %2681 = vmatprep.subr.bf16.mxu0 0
        %2682 = vmatpush1.bf16.msra.mxu0 0
        %2683 = vmatprep.subr.bf16.mxu0 0
        %2684 = vmatpush1.bf16.msra.mxu0 0
        %2685 = vmatprep.subr.bf16.mxu0 0
        %2686 = vmatpush1.bf16.msra.mxu0 0
        %2687 = vmatprep.subr.bf16.mxu0 0
        %2688 = vmatpush1.bf16.msra.mxu0 0
        %2689 = vmatprep.subr.bf16.mxu0 0
        %2690 = vmatpush1.bf16.msra.mxu0 0
        %2691 = vmatprep.subr.bf16.mxu0 0
        %2692 = vmatpush1.bf16.msra.mxu0 0
        %2693 = vmatprep.subr.bf16.mxu0 0
        %2694 = vmatpush1.bf16.msra.mxu0 0
        %2695 = vmatprep.subr.bf16.mxu0 0
        %2696 = vmatpush1.bf16.msra.mxu0 0
        %2697 = vmatprep.subr.bf16.mxu0 0
        %2698 = vmatpush1.bf16.msra.mxu0 0
        %2699 = vmatprep.subr.bf16.mxu0 0
        %2700 = vmatpush1.bf16.msra.mxu0 0
        %2701 = vmatprep.subr.bf16.mxu0 0
        %2702 = vmatpush1.bf16.msra.mxu0 0
        %2703 = vmatprep.subr.bf16.mxu0 0
        %2704 = vmatpush1.bf16.msra.mxu0 0
        %2705 = vmatprep.subr.bf16.mxu0 0
        %2706 = vmatpush1.bf16.msra.mxu0 0
        %2707 = vmatprep.subr.bf16.mxu0 0
        %2708 = vmatpush1.bf16.msra.mxu0 0
        %2709 = vmatprep.mubr.bf16.mxu0 0
        %2710 = vmatmul.mubr.bf16.gmra.mrb[0].mxu0 %v2634
        %v2711 = vpop.f32.mrb[0].mxu0
        %v2712 = vadd.f32 0.0, %v2711
        %v2713 = vpop.f32.mrb[0].mxu0
        %v2714 = vpop.f32.mrb[0].mxu0
        %v2715 = vadd.f32 0.0, %v2714
        %v2716 = vpop.f32.mrb[0].mxu0
        %2717 = vdwg.mxu0
        %v2718 = vmul.f32 %v2671, %v2671
        %v2719 = vmul.f32 %v2674, %v2674
        %v2720 = vmul.f32 %v2712, %v2712
        %v2721 = vmul.f32 %v2715, %v2715
        %v2722 = vmul.f32 %v2671, %v2712
        %v2723 = vmul.f32 %v2674, %v2715
        %2724 = vmatprep.subr.bf16.mxu0 0
        %2725 = vmatpush1.bf16.msra.mxu0 %v2619
        %2726 = vmatprep.subr.bf16.mxu0 0
        %2727 = vmatpush1.bf16.msra.mxu0 0
        %2728 = vmatprep.subr.bf16.mxu0 0
        %2729 = vmatpush1.bf16.msra.mxu0 0
        %2730 = vmatprep.subr.bf16.mxu0 0
        %2731 = vmatpush1.bf16.msra.mxu0 0
        %2732 = vmatprep.subr.bf16.mxu0 0
        %2733 = vmatpush1.bf16.msra.mxu0 0
        %2734 = vmatprep.subr.bf16.mxu0 0
        %2735 = vmatpush1.bf16.msra.mxu0 0
        %2736 = vmatprep.subr.bf16.mxu0 0
        %2737 = vmatpush1.bf16.msra.mxu0 0
        %2738 = vmatprep.subr.bf16.mxu0 0
        %2739 = vmatpush1.bf16.msra.mxu0 0
        %2740 = vmatprep.subr.bf16.mxu0 0
        %2741 = vmatpush1.bf16.msra.mxu0 0
        %2742 = vmatprep.subr.bf16.mxu0 0
        %2743 = vmatpush1.bf16.msra.mxu0 0
        %2744 = vmatprep.subr.bf16.mxu0 0
        %2745 = vmatpush1.bf16.msra.mxu0 0
        %2746 = vmatprep.subr.bf16.mxu0 0
        %2747 = vmatpush1.bf16.msra.mxu0 0
        %2748 = vmatprep.subr.bf16.mxu0 0
        %2749 = vmatpush1.bf16.msra.mxu0 0
        %2750 = vmatprep.subr.bf16.mxu0 0
        %2751 = vmatpush1.bf16.msra.mxu0 0
        %2752 = vmatprep.subr.bf16.mxu0 0
        %2753 = vmatpush1.bf16.msra.mxu0 0
        %2754 = vmatprep.subr.bf16.mxu0 0
        %2755 = vmatpush1.bf16.msra.mxu0 0
        %2756 = vmatprep.mubr.bf16.mxu0 0
        %2757 = vmatmul.mubr.bf16.gmra.mrb[0].mxu0 %v2634
        %v2758 = vpop.f32.mrb[0].mxu0
        %v2759 = vadd.f32 0.0, %v2758
        %v2760 = vpop.f32.mrb[0].mxu0
        %v2761 = vpop.f32.mrb[0].mxu0
        %v2762 = vadd.f32 0.0, %v2761
        %v2763 = vpop.f32.mrb[0].mxu0
        %2764 = vdwg.mxu0
        %v2765 = vsub.f32 %v2759, %v2718
        %v2766 = vsub.f32 %v2762, %v2719
        %2767 = vmatprep.subr.bf16.mxu0 0
        %2768 = vmatpush1.bf16.msra.mxu0 %v2620
        %2769 = vmatprep.subr.bf16.mxu0 0
        %2770 = vmatpush1.bf16.msra.mxu0 0
        %2771 = vmatprep.subr.bf16.mxu0 0
        %2772 = vmatpush1.bf16.msra.mxu0 0
        %2773 = vmatprep.subr.bf16.mxu0 0
        %2774 = vmatpush1.bf16.msra.mxu0 0
        %2775 = vmatprep.subr.bf16.mxu0 0
        %2776 = vmatpush1.bf16.msra.mxu0 0
        %2777 = vmatprep.subr.bf16.mxu0 0
        %2778 = vmatpush1.bf16.msra.mxu0 0
        %2779 = vmatprep.subr.bf16.mxu0 0
        %2780 = vmatpush1.bf16.msra.mxu0 0
        %2781 = vmatprep.subr.bf16.mxu0 0
        %2782 = vmatpush1.bf16.msra.mxu0 0
        %2783 = vmatprep.subr.bf16.mxu0 0
        %2784 = vmatpush1.bf16.msra.mxu0 0
        %2785 = vmatprep.subr.bf16.mxu0 0
        %2786 = vmatpush1.bf16.msra.mxu0 0
        %2787 = vmatprep.subr.bf16.mxu0 0
        %2788 = vmatpush1.bf16.msra.mxu0 0
        %2789 = vmatprep.subr.bf16.mxu0 0
        %2790 = vmatpush1.bf16.msra.mxu0 0
        %2791 = vmatprep.subr.bf16.mxu0 0
        %2792 = vmatpush1.bf16.msra.mxu0 0
        %2793 = vmatprep.subr.bf16.mxu0 0
        %2794 = vmatpush1.bf16.msra.mxu0 0
        %2795 = vmatprep.subr.bf16.mxu0 0
        %2796 = vmatpush1.bf16.msra.mxu0 0
        %2797 = vmatprep.subr.bf16.mxu0 0
        %2798 = vmatpush1.bf16.msra.mxu0 0
        %2799 = vmatprep.mubr.bf16.mxu0 0
        %2800 = vmatmul.mubr.bf16.gmra.mrb[0].mxu0 %v2634
        %v2801 = vpop.f32.mrb[0].mxu0
        %v2802 = vadd.f32 0.0, %v2801
        %v2803 = vpop.f32.mrb[0].mxu0
        %v2804 = vpop.f32.mrb[0].mxu0
        %v2805 = vadd.f32 0.0, %v2804
        %v2806 = vpop.f32.mrb[0].mxu0
        %2807 = vdwg.mxu0
        %v2808 = vsub.f32 %v2802, %v2720
        %v2809 = vsub.f32 %v2805, %v2721
        %2810 = vmatprep.subr.bf16.mxu0 0
        %2811 = vmatpush1.bf16.msra.mxu0 %v2621
        %2812 = vmatprep.subr.bf16.mxu0 0
        %2813 = vmatpush1.bf16.msra.mxu0 0
        %2814 = vmatprep.subr.bf16.mxu0 0
        %2815 = vmatpush1.bf16.msra.mxu0 0
        %2816 = vmatprep.subr.bf16.mxu0 0
        %2817 = vmatpush1.bf16.msra.mxu0 0
        %2818 = vmatprep.subr.bf16.mxu0 0
        %2819 = vmatpush1.bf16.msra.mxu0 0
        %2820 = vmatprep.subr.bf16.mxu0 0
        %2821 = vmatpush1.bf16.msra.mxu0 0
        %2822 = vmatprep.subr.bf16.mxu0 0
        %2823 = vmatpush1.bf16.msra.mxu0 0
        %2824 = vmatprep.subr.bf16.mxu0 0
        %2825 = vmatpush1.bf16.msra.mxu0 0
        %2826 = vmatprep.subr.bf16.mxu0 0
        %2827 = vmatpush1.bf16.msra.mxu0 0
        %2828 = vmatprep.subr.bf16.mxu0 0
        %2829 = vmatpush1.bf16.msra.mxu0 0
        %2830 = vmatprep.subr.bf16.mxu0 0
        %2831 = vmatpush1.bf16.msra.mxu0 0
        %2832 = vmatprep.subr.bf16.mxu0 0
        %2833 = vmatpush1.bf16.msra.mxu0 0
        %2834 = vmatprep.subr.bf16.mxu0 0
        %2835 = vmatpush1.bf16.msra.mxu0 0
        %2836 = vmatprep.subr.bf16.mxu0 0
        %2837 = vmatpush1.bf16.msra.mxu0 0
        %2838 = vmatprep.subr.bf16.mxu0 0
        %2839 = vmatpush1.bf16.msra.mxu0 0
        %2840 = vmatprep.subr.bf16.mxu0 0
        %2841 = vmatpush1.bf16.msra.mxu0 0
        %2842 = vmatprep.mubr.bf16.mxu0 0
        %2843 = vmatmul.mubr.bf16.gmra.mrb[0].mxu0 %v2634
        %v2844 = vpop.f32.mrb[0].mxu0
        %v2845 = vadd.f32 0.0, %v2844
        %v2846 = vpop.f32.mrb[0].mxu0
        %v2847 = vpop.f32.mrb[0].mxu0
        %v2848 = vadd.f32 0.0, %v2847
        %v2849 = vpop.f32.mrb[0].mxu0
        %2850 = vdwg.mxu0
        %v2851 = vsub.f32 %v2845, %v2722
        %v2852 = vsub.f32 %v2848, %v2723
        %v2853 = vmul.f32 %v2851, 2.0
        %v2854 = vmul.f32 %v2852, 2.0
        %v2855 = vadd.f32 %v2853, 0.0009
        %v2856 = vadd.f32 %v2854, 0.0009
        %v2857 = vadd.f32 %v2765, %v2808
        %v2858 = vadd.f32 %v2766, %v2809
        %v2859 = vadd.f32 %v2857, 0.0009
        %v2860 = vadd.f32 %v2858, 0.0009
        %v2861 = vrcp.pop %v2859
        %v2862 = vrcp.pop %v2860
        %v2863 = vmul.f32 %v2855, %v2861
        %v2864 = vmul.f32 %v2856, %v2862
        %v2865 = vmul.f32 %v2863, %v2863
        %v2866 = vmul.f32 %v2864, %v2864
        %v2867 = vmul.f32 %v2865, %v2863
        %v2868 = vmul.f32 %v2866, %v2864
        %v2869 = vld [vmem:[#allocation3] sm:$0xff]
        %v2870 = vld [vmem:[#allocation3 + $0x8] sm:$0xff]
        %v2871 = vmul.f32 %v2869, %v2867
        %v2872 = vmul.f32 %v2870, %v2868
        %v2873 = vmul.f32 %v2722, 2.0
        %v2874 = vmul.f32 %v2723, 2.0
        %v2875 = vadd.f32 %v2873, 0.0001
        %v2876 = vadd.f32 %v2874, 0.0001
        %v2877 = vadd.f32 %v2718, %v2720
        %v2878 = vadd.f32 %v2719, %v2721
        %v2879 = vadd.f32 %v2877, 0.0001
        %v2880 = vadd.f32 %v2878, 0.0001
        %v2881 = vrcp.pop %v2879
        %v2882 = vrcp.pop %v2880
        %v2883 = vmul.f32 %v2875, %v2881
        %v2884 = vmul.f32 %v2876, %v2882
        %v2885 = vmul.f32 %v2883, %v2883
        %v2886 = vmul.f32 %v2884, %v2884
        %v2887 = vmul.f32 %v2885, %v2883
        %v2888 = vmul.f32 %v2886, %v2884
        %2889 = vmatprep.subr.bf16.mxu0 0
        %2890 = vmatpush1.bf16.msra.mxu0 %v2623
        %2891 = vmatprep.subr.bf16.mxu0 0
        %2892 = vmatpush1.bf16.msra.mxu0 0
        %2893 = vmatprep.subr.bf16.mxu0 0
        %2894 = vmatpush1.bf16.msra.mxu0 0
        %2895 = vmatprep.subr.bf16.mxu0 0
        %2896 = vmatpush1.bf16.msra.mxu0 0
        %2897 = vmatprep.subr.bf16.mxu0 0
        %2898 = vmatpush1.bf16.msra.mxu0 0
        %2899 = vmatprep.subr.bf16.mxu0 0
        %2900 = vmatpush1.bf16.msra.mxu0 0
        %2901 = vmatprep.subr.bf16.mxu0 0
        %2902 = vmatpush1.bf16.msra.mxu0 0
        %2903 = vmatprep.subr.bf16.mxu0 0
        %2904 = vmatpush1.bf16.msra.mxu0 0
        %2905 = vmatprep.subr.bf16.mxu0 0
        %2906 = vmatpush1.bf16.msra.mxu0 0
        %2907 = vmatprep.subr.bf16.mxu0 0
        %2908 = vmatpush1.bf16.msra.mxu0 0
        %2909 = vmatprep.subr.bf16.mxu0 0
        %2910 = vmatpush1.bf16.msra.mxu0 0
        %2911 = vmatprep.subr.bf16.mxu0 0
        %2912 = vmatpush1.bf16.msra.mxu0 0
        %2913 = vmatprep.subr.bf16.mxu0 0
        %2914 = vmatpush1.bf16.msra.mxu0 0
        %2915 = vmatprep.subr.bf16.mxu0 0
        %2916 = vmatpush1.bf16.msra.mxu0 0
        %2917 = vmatprep.subr.bf16.mxu0 0
        %2918 = vmatpush1.bf16.msra.mxu0 0
        %2919 = vmatprep.subr.bf16.mxu0 0
        %2920 = vmatpush1.bf16.msra.mxu0 0
        %2921 = vmatprep.mubr.bf16.mxu0 0
        %2922 = vmatmul.mubr.bf16.gmra.mrb[0].mxu0 %v2634
        %v2923 = vpop.f32.mrb[0].mxu0
        %v2924 = vadd.f32 0.0, %v2923
        %v2925 = vpop.f32.mrb[0].mxu0
        %v2926 = vpop.f32.mrb[0].mxu0
        %v2927 = vadd.f32 0.0, %v2926
        %v2928 = vpop.f32.mrb[0].mxu0
        %2929 = vdwg.mxu0
        %2930 = vmatprep.subr.bf16.mxu0 0
        %2931 = vmatpush1.bf16.msra.mxu0 %v2622
        %2932 = vmatprep.subr.bf16.mxu0 0
        %2933 = vmatpush1.bf16.msra.mxu0 0
        %2934 = vmatprep.subr.bf16.mxu0 0
        %2935 = vmatpush1.bf16.msra.mxu0 0
        %2936 = vmatprep.subr.bf16.mxu0 0
        %2937 = vmatpush1.bf16.msra.mxu0 0
        %2938 = vmatprep.subr.bf16.mxu0 0
        %2939 = vmatpush1.bf16.msra.mxu0 0
        %2940 = vmatprep.subr.bf16.mxu0 0
        %2941 = vmatpush1.bf16.msra.mxu0 0
        %2942 = vmatprep.subr.bf16.mxu0 0
        %2943 = vmatpush1.bf16.msra.mxu0 0
        %2944 = vmatprep.subr.bf16.mxu0 0
        %2945 = vmatpush1.bf16.msra.mxu0 0
        %2946 = vmatprep.subr.bf16.mxu0 0
        %2947 = vmatpush1.bf16.msra.mxu0 0
        %2948 = vmatprep.subr.bf16.mxu0 0
        %2949 = vmatpush1.bf16.msra.mxu0 0
        %2950 = vmatprep.subr.bf16.mxu0 0
        %2951 = vmatpush1.bf16.msra.mxu0 0
        %2952 = vmatprep.subr.bf16.mxu0 0
        %2953 = vmatpush1.bf16.msra.mxu0 0
        %2954 = vmatprep.subr.bf16.mxu0 0
        %2955 = vmatpush1.bf16.msra.mxu0 0
        %2956 = vmatprep.subr.bf16.mxu0 0
        %2957 = vmatpush1.bf16.msra.mxu0 0
        %2958 = vmatprep.subr.bf16.mxu0 0
        %2959 = vmatpush1.bf16.msra.mxu0 0
        %2960 = vmatprep.subr.bf16.mxu0 0
        %2961 = vmatpush1.bf16.msra.mxu0 0
        %2962 = vmatprep.mubr.bf16.mxu0 0
        %2963 = vmatmul.mubr.bf16.gmra.mrb[0].mxu0 %v2634
        %v2964 = vpop.f32.mrb[0].mxu0
        %v2965 = vadd.f32 %v2924, %v2964
        %v2966 = vpop.f32.mrb[0].mxu0
        %v2967 = vpop.f32.mrb[0].mxu0
        %v2968 = vadd.f32 %v2927, %v2967
        %v2969 = vpop.f32.mrb[0].mxu0
        %2970 = vdwg.mxu0
        %2971 = vmatprep.subr.bf16.mxu0 0
        %2972 = vmatpush1.bf16.msra.mxu0 %v2624
        %2973 = vmatprep.subr.bf16.mxu0 0
        %2974 = vmatpush1.bf16.msra.mxu0 0
        %2975 = vmatprep.subr.bf16.mxu0 0
        %2976 = vmatpush1.bf16.msra.mxu0 0
        %2977 = vmatprep.subr.bf16.mxu0 0
        %2978 = vmatpush1.bf16.msra.mxu0 0
        %2979 = vmatprep.subr.bf16.mxu0 0
        %2980 = vmatpush1.bf16.msra.mxu0 0
        %2981 = vmatprep.subr.bf16.mxu0 0
        %2982 = vmatpush1.bf16.msra.mxu0 0
        %2983 = vmatprep.subr.bf16.mxu0 0
        %2984 = vmatpush1.bf16.msra.mxu0 0
        %2985 = vmatprep.subr.bf16.mxu0 0
        %2986 = vmatpush1.bf16.msra.mxu0 0
        %2987 = vmatprep.subr.bf16.mxu0 0
        %2988 = vmatpush1.bf16.msra.mxu0 0
        %2989 = vmatprep.subr.bf16.mxu0 0
        %2990 = vmatpush1.bf16.msra.mxu0 0
        %2991 = vmatprep.subr.bf16.mxu0 0
        %2992 = vmatpush1.bf16.msra.mxu0 0
        %2993 = vmatprep.subr.bf16.mxu0 0
        %2994 = vmatpush1.bf16.msra.mxu0 0
        %2995 = vmatprep.subr.bf16.mxu0 0
        %2996 = vmatpush1.bf16.msra.mxu0 0
        %2997 = vmatprep.subr.bf16.mxu0 0
        %2998 = vmatpush1.bf16.msra.mxu0 0
        %2999 = vmatprep.subr.bf16.mxu0 0
        %3000 = vmatpush1.bf16.msra.mxu0 0
        %3001 = vmatprep.subr.bf16.mxu0 0
        %3002 = vmatpush1.bf16.msra.mxu0 0
        %3003 = vmatprep.mubr.bf16.mxu0 0
        %3004 = vmatmul.mubr.bf16.gmra.mrb[0].mxu0 %v2634
        %v3005 = vpop.f32.mrb[0].mxu0
        %v3006 = vadd.f32 0.0, %v3005
        %v3007 = vpop.f32.mrb[0].mxu0
        %v3008 = vpop.f32.mrb[0].mxu0
        %v3009 = vadd.f32 0.0, %v3008
        %v3010 = vpop.f32.mrb[0].mxu0
        %3011 = vdwg.mxu0
        %v3012 = vadd.f32 %v2965, %v3006
        %v3013 = vadd.f32 %v2968, %v3009
        %v3014 = vmul.f32 %v3012, 0.33333334
        %v3015 = vmul.f32 %v3013, 0.33333334
        %v3016 = vmul.f32 %v2887, %v2871
        %v3017 = vmul.f32 %v2888, %v2872
        %v3018 = vsub.f32 1.0, %v3016
        %v3019 = vsub.f32 1.0, %v3017
        %v3020 = vmul.f32 %v3018, 0.1
        %v3021 = vmul.f32 %v3019, 0.1
        %v3022 = vmul.f32 %v3014, 0.9
        %v3023 = vmul.f32 %v3015, 0.9
        %v3024 = vadd.f32 %v3020, %v3022
        %v3025 = vadd.f32 %v3021, %v3023
        %3026 = vst.msk [vmem:[%s284] sm:$0xff] %vm297, %v3024
        %3027 = vst.msk [vmem:[%s284 + $0x8] sm:$0xff] %vm297, %v3025
        %s3028 = sand.u32 %s127, 1
        %s3029 = scalar_lea.sflag [#allocation6], %s3028
        %s3030 = sand.u32 %s127, 1
        %s3031 = smul.addr %s3030, 16
        %s3032 = scalar_lea.vmem [#allocation12], %s3031
        // Predicated region
        $region53: #{tpu_custom_call.1} parent=35 // pred_check
          %p3033 = pneg %p137
        $region54: #{tpu_custom_call.1} parent=35 // pred_check_branch
          %3035 = sbr.rel (%p3033) target = $region56
        $region55: #{tpu_custom_call.1} parent=35 // pred_region
          %s3037 = ssub.s32 256, 256
          %3038 = vsyncadd %s3029, %s3037
          %s3039 = smul.addr %s25, 2
          %s3040 = smul.addr %s3039, 128
          %s3041 = scalar_lea.hbm %s4, %s3040
          %s3042 = sshll.u32 %s3032, 4
          %s3043 = int_to_ptr.vmem [resolvable:$true] %s3042
          %3048 = dma.vmem_to_hbm [thread:$0]  %s3043, 256, %s3041, %s3029, 128, 128, 8
        $region56: #{tpu_custom_call.1} parent=35 // pred_fallthru
          _
      $region36: #{tpu_custom_call.1} parent=5 // pred_fallthru
        _
      %p3049 = scmp.le.s32.totalorder 2, %s20
      // Predicated region
      $region57: #{tpu_custom_call.1} parent=5 // pred_check
        %p3050 = pneg %p3049
      $region58: #{tpu_custom_call.1} parent=5 // pred_check_branch
        %3052 = sbr.rel (%p3050) target = $region60
      $region59: #{tpu_custom_call.1} parent=5 // pred_region
        %s3053 = ssub.s32 %s20, 2
        // Predicated region
        $region61: #{tpu_custom_call.1} parent=59 // pred_check
          %p3054 = pneg %p143
        $region62: #{tpu_custom_call.1} parent=59 // pred_check_branch
          %3056 = sbr.rel (%p3054) target = $region64
        $region63: #{tpu_custom_call.1} parent=59 // pred_region
          %s3057 = sand.u32 %s128, 1
          %s3058 = scalar_lea.sflag [#allocation6], %s3057
          %s3059 = sand.u32 %s128, 1
          %s3060 = smul.addr %s3059, 16
          %s3061 = scalar_lea.vmem [#allocation12], %s3060
          %3062 = dma.done %s3058, 256
        $region64: #{tpu_custom_call.1} parent=59 // pred_fallthru
          _
      $region60: #{tpu_custom_call.1} parent=5 // pred_fallthru
        _
    $region6: #{tpu_custom_call.1} parent=1 // loop_footer
      %s24 = sadd.s32 1, %s20
    $region7: #{tpu_custom_call.1} parent=1 // loop_footer_branch
      %19 = sbr.rel target = $region3
    $region8: #{tpu_custom_call.1} parent=1 // loop_exit
      _
    %3063 = vsyncpa [#allocation5], 1
    %s3064 = scalar_lea.sflag [#allocation5], 1
    %3065 = vsyncpa %s3064, 1
    %3066 = vsyncpa [#allocation8], 1
    %s3067 = scalar_lea.sflag [#allocation8], 1
    %3068 = vsyncpa %s3067, 1
    %3069 = vsyncpa [#allocation11], 1
    %3070 = vsyncpa [#allocation6], 1
    %s3071 = scalar_lea.sflag [#allocation6], 1
    %3072 = vsyncpa %s3071, 1

</llo_original>
